<compile_context>
chip_gen: v7x
topology: tpu7x:2x2x1
jax: 0.10.0
libtpu: 0.0.40
codegen_flags: <defaults>
</compile_context>

<pallas_src>
import jax
import jax.numpy as jnp
from jax.experimental import pallas as pl
from jax.experimental.pallas import tpu as pltpu

LATENT_DIM = 16
LATTICE_SIZE = 8
OUTPUT_DIM = LATTICE_SIZE * LATTICE_SIZE          # 64
OUT_PADDED = 128                                  # lane-dense padded output width
HIDDEN = (512, 1024, 2048)
BN_EPS = 1e-5
LEAKY_SLOPE = 0.2

K3_CHUNK = 256                                    # w3 streamed in (256, 2048) chunks
N_W3_CHUNKS = HIDDEN[1] // K3_CHUNK               # 1024 / 256 = 4


def _leaky_relu(h):
    return jnp.where(h > 0, h, LEAKY_SLOPE * h)


def _fused_bn(h, g, be):
    """Training-mode BatchNorm1d, fused to one pass + one FMA."""
    mean = jnp.mean(h, axis=0, keepdims=True)
    mean_sq = jnp.mean(h * h, axis=0, keepdims=True)
    var = jnp.maximum(mean_sq - mean * mean, 0.0)      # biased batch variance
    s = g * jax.lax.rsqrt(var + BN_EPS)
    return h * s + (be - mean * s)


def _generator_kernel(z_ref,
                      w1_ref, b1_ref, g1_ref, be1_ref,
                      w2_ref, b2_ref, g2_ref, be2_ref,
                      w3_hbm, b3_ref, g3_ref, be3_ref,
                      w4_ref, b4_ref,
                      out_ref,
                      w3_buf, w3_sem):
    """Whole MLP forward in one invocation; w3 streamed from HBM under compute."""
    batch = z_ref.shape[0]

    def w3_copy(k, slot):
        return pltpu.make_async_copy(
            w3_hbm.at[pl.ds(k * K3_CHUNK, K3_CHUNK), :],
            w3_buf.at[slot],
            w3_sem.at[slot])

    # Prime chunk 0 so its DMA overlaps layer-1/2 compute.
    w3_copy(0, 0).start()

    def dense(x_bf16, w, b_ref):
        return jnp.dot(x_bf16, w, preferred_element_type=jnp.float32) + b_ref[...]

    # Layers 1 and 2: weights resident in VMEM (small), bf16 MXU, f32 accumulate.
    x = z_ref[...].astype(jnp.bfloat16)
    x = _fused_bn(_leaky_relu(dense(x, w1_ref[...], b1_ref)),
                  g1_ref[...], be1_ref[...]).astype(jnp.bfloat16)
    x = _fused_bn(_leaky_relu(dense(x, w2_ref[...], b2_ref)),
                  g2_ref[...], be2_ref[...]).astype(jnp.bfloat16)

    # Layer 3: double-buffered K-chunk stream of w3 from HBM (static unroll).
    acc = jnp.zeros((batch, HIDDEN[2]), jnp.float32)
    for k in range(N_W3_CHUNKS):
        slot = k % 2
        w3_copy(k, slot).wait()
        if k + 1 < N_W3_CHUNKS:
            w3_copy(k + 1, (k + 1) % 2).start()
        xk = x[:, k * K3_CHUNK:(k + 1) * K3_CHUNK]
        acc = acc + jnp.dot(xk, w3_buf[slot], preferred_element_type=jnp.float32)
    h3 = acc + b3_ref[...]
    x = _fused_bn(_leaky_relu(h3), g3_ref[...], be3_ref[...]).astype(jnp.bfloat16)

    # Layer 4 (padded to 128 lanes) + Tanh; full-width lane-dense store.
    h4 = jnp.dot(x, w4_ref[...], preferred_element_type=jnp.float32) + b4_ref[...]
    out_ref[...] = jnp.tanh(h4).astype(out_ref.dtype)


def generator_forward(z, params):
    """z: (batch, latent_dim) f32. Returns (batch, OUTPUT_DIM) f32."""
    batch = z.shape[0]
    inputs = (
        z,
        params["w1"], params["b1"], params["g1"], params["be1"],
        params["w2"], params["b2"], params["g2"], params["be2"],
        params["w3"], params["b3"], params["g3"], params["be3"],
        params["w4"], params["b4"],
    )
    w3_index = 9  # position of w3 in `inputs`: stays in HBM, streamed manually
    in_specs = [
        pl.BlockSpec(memory_space=pl.ANY) if i == w3_index
        else pl.BlockSpec(memory_space=pltpu.MemorySpace.VMEM)
        for i in range(len(inputs))
    ]

    kernel = pl.pallas_call(
        _generator_kernel,
        out_shape=jax.ShapeDtypeStruct((batch, OUT_PADDED), jnp.float32),
        in_specs=in_specs,
        out_specs=pl.BlockSpec(memory_space=pltpu.MemorySpace.VMEM),
        scratch_shapes=[
            pltpu.VMEM((2, K3_CHUNK, HIDDEN[2]), jnp.bfloat16),  # w3 double buffer
            pltpu.SemaphoreType.DMA((2,)),
        ],
        # Real footprint ~5 MiB; 32 MiB is comfortable and fits v7x's 64 MiB.
        compiler_params=pltpu.CompilerParams(vmem_limit_bytes=32 * 1024 * 1024),
    )
    out_padded = kernel(*inputs)
    return out_padded[:, :OUTPUT_DIM]


def init_params(key):
    """Deterministic synthetic parameters with the module's shapes.

    Linear weights stored (in_features, out_features) in bfloat16; biases and
    BN params stay f32 as (1, features). The final layer is zero-padded from
    64 to 128 output features for lane-dense stores (sliced off in wrapper).
    """
    dims = (LATENT_DIM,) + HIDDEN + (OUTPUT_DIM,)
    params = {}
    keys = jax.random.split(key, 8)
    for i in range(4):
        fan_in, fan_out = dims[i], dims[i + 1]
        bound = float(1.0 / (fan_in ** 0.5))
        w = jax.random.uniform(keys[2 * i], (fan_in, fan_out), jnp.float32,
                               -bound, bound)
        b = jax.random.uniform(keys[2 * i + 1], (1, fan_out), jnp.float32,
                               -bound, bound)
        if i == 3:  # pad 64 -> 128 output lanes with zeros (tanh(0) = 0)
            w = jnp.pad(w, ((0, 0), (0, OUT_PADDED - fan_out)))
            b = jnp.pad(b, ((0, 0), (0, OUT_PADDED - fan_out)))
        params[f"w{i + 1}"] = w.astype(jnp.bfloat16)
        params[f"b{i + 1}"] = b
    # BatchNorm1d default init: weight (gamma) = 1, bias (beta) = 0
    for i, h in enumerate(HIDDEN, start=1):
        params[f"g{i}"] = jnp.ones((1, h), jnp.float32)
        params[f"be{i}"] = jnp.zeros((1, h), jnp.float32)
    return params


def generator_reference(z, params):
    """Pure-JAX reference with matching precision (bf16 weights, f32 accum)."""
    x = z.astype(jnp.bfloat16)
    for i in range(1, 4):
        h = jnp.dot(x, params[f"w{i}"], preferred_element_type=jnp.float32)
        h = h + params[f"b{i}"]
        h = _leaky_relu(h)
        x = _fused_bn(h, params[f"g{i}"], params[f"be{i}"]).astype(jnp.bfloat16)
    h = jnp.dot(x, params["w4"], preferred_element_type=jnp.float32) + params["b4"]
    return jnp.tanh(h)[:, :OUTPUT_DIM]


if __name__ == "__main__":
    key = jax.random.PRNGKey(0)
    k_param, k_z = jax.random.split(key)
    params = init_params(k_param)

    batch = 8
    z = jax.random.normal(k_z, (batch, LATENT_DIM), dtype=jnp.float32)

    out = generator_forward(z, params)
    out = jax.block_until_ready(out)

    assert out.shape == (batch, OUTPUT_DIM), out.shape

    ref = generator_reference(z, params)
    max_err = float(jnp.max(jnp.abs(out - ref)))
    assert jnp.allclose(out, ref, atol=5e-3, rtol=5e-3), max_err

    print("KERNEL_OK")
</pallas_src>

<mosaic_0001>
module attributes {stable_mosaic.version = 11 : i64} {
  func.func @_generator_kernel(%arg0: memref<8x16xf32, #tpu.memory_space<vmem>>, %arg1: memref<16x512xbf16, #tpu.memory_space<vmem>>, %arg2: memref<1x512xf32, #tpu.memory_space<vmem>>, %arg3: memref<1x512xf32, #tpu.memory_space<vmem>>, %arg4: memref<1x512xf32, #tpu.memory_space<vmem>>, %arg5: memref<512x1024xbf16, #tpu.memory_space<vmem>>, %arg6: memref<1x1024xf32, #tpu.memory_space<vmem>>, %arg7: memref<1x1024xf32, #tpu.memory_space<vmem>>, %arg8: memref<1x1024xf32, #tpu.memory_space<vmem>>, %arg9: memref<1024x2048xbf16, #tpu.memory_space<any>>, %arg10: memref<1x2048xf32, #tpu.memory_space<vmem>>, %arg11: memref<1x2048xf32, #tpu.memory_space<vmem>>, %arg12: memref<1x2048xf32, #tpu.memory_space<vmem>>, %arg13: memref<2048x128xbf16, #tpu.memory_space<vmem>>, %arg14: memref<1x128xf32, #tpu.memory_space<vmem>>, %arg15: memref<8x128xf32, #tpu.memory_space<vmem>>, %arg16: memref<2x256x2048xbf16, #tpu.memory_space<vmem>>, %arg17: memref<2x!tpu.dma_semaphore, #tpu.memory_space<semaphore_mem>>) attributes {dimension_semantics = [], scalar_prefetch = 0 : i64, scratch_operands = 2 : i64, tpu.core_type = #tpu.core_type<tc>} {
    %c0_i32 = arith.constant 0 : i32
    %c0_i32_0 = arith.constant 0 : i32
    %c0_i32_1 = arith.constant 0 : i32
    %c0_i32_2 = arith.constant 0 : i32
    %0 = tpu.memref_slice %arg9[%c0_i32_1, %c0_i32_2] : memref<1024x2048xbf16, #tpu.memory_space<any>> -> memref<256x2048xbf16, #tpu.memory_space<any>>
    %c0_i32_3 = arith.constant 0 : i32
    %c0_i32_4 = arith.constant 0 : i32
    %1 = tpu.memref_slice %arg16[%c0_i32, %c0_i32_3, %c0_i32_4] : memref<2x256x2048xbf16, #tpu.memory_space<vmem>> -> memref<1x256x2048xbf16, #tpu.memory_space<vmem>>
    %2 = tpu.memref_squeeze %1 : memref<1x256x2048xbf16, #tpu.memory_space<vmem>> -> memref<256x2048xbf16, #tpu.memory_space<vmem>>
    %3 = tpu.memref_slice %arg17[%c0_i32_0] : memref<2x!tpu.dma_semaphore, #tpu.memory_space<semaphore_mem>> -> memref<1x!tpu.dma_semaphore, #tpu.memory_space<semaphore_mem>>
    %4 = tpu.memref_squeeze %3 : memref<1x!tpu.dma_semaphore, #tpu.memory_space<semaphore_mem>> -> memref<!tpu.dma_semaphore, #tpu.memory_space<semaphore_mem>>
    tpu.enqueue_dma source(%0 : memref<256x2048xbf16, #tpu.memory_space<any>>) target(%2 : memref<256x2048xbf16, #tpu.memory_space<vmem>>) target_semaphore(%4 : memref<!tpu.dma_semaphore, #tpu.memory_space<semaphore_mem>>)
    %c0 = arith.constant 0 : index
    %c0_5 = arith.constant 0 : index
    %5 = vector.load %arg0[%c0, %c0_5] : memref<8x16xf32, #tpu.memory_space<vmem>>, vector<8x16xf32>
    %6 = arith.truncf %5 : vector<8x16xf32> to vector<8x16xbf16>
    %c0_6 = arith.constant 0 : index
    %c0_7 = arith.constant 0 : index
    %7 = vector.load %arg1[%c0_6, %c0_7] : memref<16x512xbf16, #tpu.memory_space<vmem>>, vector<16x512xbf16>
    %cst = arith.constant dense<0.000000e+00> : vector<8x512xf32>
    %8 = tpu.matmul %6, %7, %cst {dimension_numbers = #tpu.dot_dimension_numbers<[1], [0], [0], [1], [0, 0, 1, 1], [], []>} : vector<8x16xbf16>, vector<16x512xbf16>, vector<8x512xf32> -> vector<8x512xf32>
    %c0_8 = arith.constant 0 : index
    %c0_9 = arith.constant 0 : index
    %9 = vector.load %arg2[%c0_8, %c0_9] : memref<1x512xf32, #tpu.memory_space<vmem>>, vector<1x512xf32>
    %10 = vector.broadcast %9 : vector<1x512xf32> to vector<8x512xf32>
    %11 = arith.addf %8, %10 : vector<8x512xf32>
    %cst_10 = arith.constant 0.000000e+00 : f32
    %12 = vector.broadcast %cst_10 : f32 to vector<8x512xf32>
    %13 = arith.cmpf ogt, %11, %12 : vector<8x512xf32>
    %cst_11 = arith.constant 2.000000e-01 : f32
    %14 = vector.broadcast %cst_11 : f32 to vector<8x512xf32>
    %15 = arith.mulf %14, %11 : vector<8x512xf32>
    %16 = arith.select %13, %11, %15 : vector<8x512xi1>, vector<8x512xf32>
    %c0_12 = arith.constant 0 : index
    %c0_13 = arith.constant 0 : index
    %17 = vector.load %arg3[%c0_12, %c0_13] : memref<1x512xf32, #tpu.memory_space<vmem>>, vector<1x512xf32>
    %c0_14 = arith.constant 0 : index
    %c0_15 = arith.constant 0 : index
    %18 = vector.load %arg4[%c0_14, %c0_15] : memref<1x512xf32, #tpu.memory_space<vmem>>, vector<1x512xf32>
    %cst_16 = arith.constant dense<0.000000e+00> : vector<512xf32>
    %19 = vector.multi_reduction <add>, %16, %cst_16 [0] : vector<8x512xf32> to vector<512xf32>
    %20 = vector.shape_cast %19 : vector<512xf32> to vector<1x512xf32>
    %cst_17 = arith.constant 8.000000e+00 : f32
    %21 = vector.broadcast %cst_17 : f32 to vector<1x512xf32>
    %22 = arith.divf %20, %21 : vector<1x512xf32>
    %23 = arith.mulf %16, %16 : vector<8x512xf32>
    %cst_18 = arith.constant dense<0.000000e+00> : vector<512xf32>
    %24 = vector.multi_reduction <add>, %23, %cst_18 [0] : vector<8x512xf32> to vector<512xf32>
    %25 = vector.shape_cast %24 : vector<512xf32> to vector<1x512xf32>
    %cst_19 = arith.constant 8.000000e+00 : f32
    %26 = vector.broadcast %cst_19 : f32 to vector<1x512xf32>
    %27 = arith.divf %25, %26 : vector<1x512xf32>
    %28 = arith.mulf %22, %22 : vector<1x512xf32>
    %29 = arith.subf %27, %28 : vector<1x512xf32>
    %cst_20 = arith.constant 0.000000e+00 : f32
    %30 = vector.broadcast %cst_20 : f32 to vector<1x512xf32>
    %31 = arith.maximumf %29, %30 : vector<1x512xf32>
    %cst_21 = arith.constant 9.99999974E-6 : f32
    %32 = vector.broadcast %cst_21 : f32 to vector<1x512xf32>
    %33 = arith.addf %31, %32 : vector<1x512xf32>
    %34 = math.rsqrt %33 : vector<1x512xf32>
    %35 = arith.mulf %17, %34 : vector<1x512xf32>
    %36 = vector.broadcast %35 : vector<1x512xf32> to vector<8x512xf32>
    %37 = arith.mulf %16, %36 : vector<8x512xf32>
    %38 = arith.mulf %22, %35 : vector<1x512xf32>
    %39 = arith.subf %18, %38 : vector<1x512xf32>
    %40 = vector.broadcast %39 : vector<1x512xf32> to vector<8x512xf32>
    %41 = arith.addf %37, %40 : vector<8x512xf32>
    %42 = arith.truncf %41 : vector<8x512xf32> to vector<8x512xbf16>
    %c0_22 = arith.constant 0 : index
    %c0_23 = arith.constant 0 : index
    %43 = vector.load %arg5[%c0_22, %c0_23] : memref<512x1024xbf16, #tpu.memory_space<vmem>>, vector<512x1024xbf16>
    %cst_24 = arith.constant dense<0.000000e+00> : vector<8x1024xf32>
    %44 = tpu.matmul %42, %43, %cst_24 {dimension_numbers = #tpu.dot_dimension_numbers<[1], [0], [0], [1], [0, 0, 1, 1], [], []>} : vector<8x512xbf16>, vector<512x1024xbf16>, vector<8x1024xf32> -> vector<8x1024xf32>
    %c0_25 = arith.constant 0 : index
    %c0_26 = arith.constant 0 : index
    %45 = vector.load %arg6[%c0_25, %c0_26] : memref<1x1024xf32, #tpu.memory_space<vmem>>, vector<1x1024xf32>
    %46 = vector.broadcast %45 : vector<1x1024xf32> to vector<8x1024xf32>
    %47 = arith.addf %44, %46 : vector<8x1024xf32>
    %cst_27 = arith.constant 0.000000e+00 : f32
    %48 = vector.broadcast %cst_27 : f32 to vector<8x1024xf32>
    %49 = arith.cmpf ogt, %47, %48 : vector<8x1024xf32>
    %cst_28 = arith.constant 2.000000e-01 : f32
    %50 = vector.broadcast %cst_28 : f32 to vector<8x1024xf32>
    %51 = arith.mulf %50, %47 : vector<8x1024xf32>
    %52 = arith.select %49, %47, %51 : vector<8x1024xi1>, vector<8x1024xf32>
    %c0_29 = arith.constant 0 : index
    %c0_30 = arith.constant 0 : index
    %53 = vector.load %arg7[%c0_29, %c0_30] : memref<1x1024xf32, #tpu.memory_space<vmem>>, vector<1x1024xf32>
    %c0_31 = arith.constant 0 : index
    %c0_32 = arith.constant 0 : index
    %54 = vector.load %arg8[%c0_31, %c0_32] : memref<1x1024xf32, #tpu.memory_space<vmem>>, vector<1x1024xf32>
    %cst_33 = arith.constant dense<0.000000e+00> : vector<1024xf32>
    %55 = vector.multi_reduction <add>, %52, %cst_33 [0] : vector<8x1024xf32> to vector<1024xf32>
    %56 = vector.shape_cast %55 : vector<1024xf32> to vector<1x1024xf32>
    %cst_34 = arith.constant 8.000000e+00 : f32
    %57 = vector.broadcast %cst_34 : f32 to vector<1x1024xf32>
    %58 = arith.divf %56, %57 : vector<1x1024xf32>
    %59 = arith.mulf %52, %52 : vector<8x1024xf32>
    %cst_35 = arith.constant dense<0.000000e+00> : vector<1024xf32>
    %60 = vector.multi_reduction <add>, %59, %cst_35 [0] : vector<8x1024xf32> to vector<1024xf32>
    %61 = vector.shape_cast %60 : vector<1024xf32> to vector<1x1024xf32>
    %cst_36 = arith.constant 8.000000e+00 : f32
    %62 = vector.broadcast %cst_36 : f32 to vector<1x1024xf32>
    %63 = arith.divf %61, %62 : vector<1x1024xf32>
    %64 = arith.mulf %58, %58 : vector<1x1024xf32>
    %65 = arith.subf %63, %64 : vector<1x1024xf32>
    %cst_37 = arith.constant 0.000000e+00 : f32
    %66 = vector.broadcast %cst_37 : f32 to vector<1x1024xf32>
    %67 = arith.maximumf %65, %66 : vector<1x1024xf32>
    %cst_38 = arith.constant 9.99999974E-6 : f32
    %68 = vector.broadcast %cst_38 : f32 to vector<1x1024xf32>
    %69 = arith.addf %67, %68 : vector<1x1024xf32>
    %70 = math.rsqrt %69 : vector<1x1024xf32>
    %71 = arith.mulf %53, %70 : vector<1x1024xf32>
    %72 = vector.broadcast %71 : vector<1x1024xf32> to vector<8x1024xf32>
    %73 = arith.mulf %52, %72 : vector<8x1024xf32>
    %74 = arith.mulf %58, %71 : vector<1x1024xf32>
    %75 = arith.subf %54, %74 : vector<1x1024xf32>
    %76 = vector.broadcast %75 : vector<1x1024xf32> to vector<8x1024xf32>
    %77 = arith.addf %73, %76 : vector<8x1024xf32>
    %78 = arith.truncf %77 : vector<8x1024xf32> to vector<8x1024xbf16>
    %cst_39 = arith.constant 0.000000e+00 : f32
    %79 = vector.broadcast %cst_39 : f32 to vector<8x2048xf32>
    %c0_i32_40 = arith.constant 0 : i32
    %c0_i32_41 = arith.constant 0 : i32
    %c0_i32_42 = arith.constant 0 : i32
    %c0_i32_43 = arith.constant 0 : i32
    %80 = tpu.memref_slice %arg9[%c0_i32_42, %c0_i32_43] : memref<1024x2048xbf16, #tpu.memory_space<any>> -> memref<256x2048xbf16, #tpu.memory_space<any>>
    %c0_i32_44 = arith.constant 0 : i32
    %c0_i32_45 = arith.constant 0 : i32
    %81 = tpu.memref_slice %arg16[%c0_i32_40, %c0_i32_44, %c0_i32_45] : memref<2x256x2048xbf16, #tpu.memory_space<vmem>> -> memref<1x256x2048xbf16, #tpu.memory_space<vmem>>
    %82 = tpu.memref_squeeze %81 : memref<1x256x2048xbf16, #tpu.memory_space<vmem>> -> memref<256x2048xbf16, #tpu.memory_space<vmem>>
    %83 = tpu.memref_slice %arg17[%c0_i32_41] : memref<2x!tpu.dma_semaphore, #tpu.memory_space<semaphore_mem>> -> memref<1x!tpu.dma_semaphore, #tpu.memory_space<semaphore_mem>>
    %84 = tpu.memref_squeeze %83 : memref<1x!tpu.dma_semaphore, #tpu.memory_space<semaphore_mem>> -> memref<!tpu.dma_semaphore, #tpu.memory_space<semaphore_mem>>
    tpu.wait_dma2 semaphore(%84 : memref<!tpu.dma_semaphore, #tpu.memory_space<semaphore_mem>>) src(%80 : memref<256x2048xbf16, #tpu.memory_space<any>>) dst(%82 : memref<256x2048xbf16, #tpu.memory_space<vmem>>)
    %c1_i32 = arith.constant 1 : i32
    %c1_i32_46 = arith.constant 1 : i32
    %c256_i32 = arith.constant 256 : i32
    %c0_i32_47 = arith.constant 0 : i32
    %85 = tpu.memref_slice %arg9[%c256_i32, %c0_i32_47] : memref<1024x2048xbf16, #tpu.memory_space<any>> -> memref<256x2048xbf16, #tpu.memory_space<any>>
    %c0_i32_48 = arith.constant 0 : i32
    %c0_i32_49 = arith.constant 0 : i32
    %86 = tpu.memref_slice %arg16[%c1_i32, %c0_i32_48, %c0_i32_49] : memref<2x256x2048xbf16, #tpu.memory_space<vmem>> -> memref<1x256x2048xbf16, #tpu.memory_space<vmem>>
    %87 = tpu.memref_squeeze %86 : memref<1x256x2048xbf16, #tpu.memory_space<vmem>> -> memref<256x2048xbf16, #tpu.memory_space<vmem>>
    %88 = tpu.memref_slice %arg17[%c1_i32_46] : memref<2x!tpu.dma_semaphore, #tpu.memory_space<semaphore_mem>> -> memref<1x!tpu.dma_semaphore, #tpu.memory_space<semaphore_mem>>
    %89 = tpu.memref_squeeze %88 : memref<1x!tpu.dma_semaphore, #tpu.memory_space<semaphore_mem>> -> memref<!tpu.dma_semaphore, #tpu.memory_space<semaphore_mem>>
    tpu.enqueue_dma source(%85 : memref<256x2048xbf16, #tpu.memory_space<any>>) target(%87 : memref<256x2048xbf16, #tpu.memory_space<vmem>>) target_semaphore(%89 : memref<!tpu.dma_semaphore, #tpu.memory_space<semaphore_mem>>)
    %90 = vector.extract_strided_slice %78 {offsets = [0, 0], sizes = [8, 256], strides = [1, 1]} : vector<8x1024xbf16> to vector<8x256xbf16>
    %c0_50 = arith.constant 0 : index
    %c0_51 = arith.constant 0 : index
    %c0_52 = arith.constant 0 : index
    %91 = vector.load %arg16[%c0_50, %c0_51, %c0_52] : memref<2x256x2048xbf16, #tpu.memory_space<vmem>>, vector<1x256x2048xbf16>
    %92 = vector.shape_cast %91 : vector<1x256x2048xbf16> to vector<256x2048xbf16>
    %cst_53 = arith.constant dense<0.000000e+00> : vector<8x2048xf32>
    %93 = tpu.matmul %90, %92, %cst_53 {dimension_numbers = #tpu.dot_dimension_numbers<[1], [0], [0], [1], [0, 0, 1, 1], [], []>} : vector<8x256xbf16>, vector<256x2048xbf16>, vector<8x2048xf32> -> vector<8x2048xf32>
    %94 = arith.addf %79, %93 : vector<8x2048xf32>
    %c1_i32_54 = arith.constant 1 : i32
    %c1_i32_55 = arith.constant 1 : i32
    %c256_i32_56 = arith.constant 256 : i32
    %c0_i32_57 = arith.constant 0 : i32
    %95 = tpu.memref_slice %arg9[%c256_i32_56, %c0_i32_57] : memref<1024x2048xbf16, #tpu.memory_space<any>> -> memref<256x2048xbf16, #tpu.memory_space<any>>
    %c0_i32_58 = arith.constant 0 : i32
    %c0_i32_59 = arith.constant 0 : i32
    %96 = tpu.memref_slice %arg16[%c1_i32_54, %c0_i32_58, %c0_i32_59] : memref<2x256x2048xbf16, #tpu.memory_space<vmem>> -> memref<1x256x2048xbf16, #tpu.memory_space<vmem>>
    %97 = tpu.memref_squeeze %96 : memref<1x256x2048xbf16, #tpu.memory_space<vmem>> -> memref<256x2048xbf16, #tpu.memory_space<vmem>>
    %98 = tpu.memref_slice %arg17[%c1_i32_55] : memref<2x!tpu.dma_semaphore, #tpu.memory_space<semaphore_mem>> -> memref<1x!tpu.dma_semaphore, #tpu.memory_space<semaphore_mem>>
    %99 = tpu.memref_squeeze %98 : memref<1x!tpu.dma_semaphore, #tpu.memory_space<semaphore_mem>> -> memref<!tpu.dma_semaphore, #tpu.memory_space<semaphore_mem>>
    tpu.wait_dma2 semaphore(%99 : memref<!tpu.dma_semaphore, #tpu.memory_space<semaphore_mem>>) src(%95 : memref<256x2048xbf16, #tpu.memory_space<any>>) dst(%97 : memref<256x2048xbf16, #tpu.memory_space<vmem>>)
    %c0_i32_60 = arith.constant 0 : i32
    %c0_i32_61 = arith.constant 0 : i32
    %c512_i32 = arith.constant 512 : i32
    %c0_i32_62 = arith.constant 0 : i32
    %100 = tpu.memref_slice %arg9[%c512_i32, %c0_i32_62] : memref<1024x2048xbf16, #tpu.memory_space<any>> -> memref<256x2048xbf16, #tpu.memory_space<any>>
    %c0_i32_63 = arith.constant 0 : i32
    %c0_i32_64 = arith.constant 0 : i32
    %101 = tpu.memref_slice %arg16[%c0_i32_60, %c0_i32_63, %c0_i32_64] : memref<2x256x2048xbf16, #tpu.memory_space<vmem>> -> memref<1x256x2048xbf16, #tpu.memory_space<vmem>>
    %102 = tpu.memref_squeeze %101 : memref<1x256x2048xbf16, #tpu.memory_space<vmem>> -> memref<256x2048xbf16, #tpu.memory_space<vmem>>
    %103 = tpu.memref_slice %arg17[%c0_i32_61] : memref<2x!tpu.dma_semaphore, #tpu.memory_space<semaphore_mem>> -> memref<1x!tpu.dma_semaphore, #tpu.memory_space<semaphore_mem>>
    %104 = tpu.memref_squeeze %103 : memref<1x!tpu.dma_semaphore, #tpu.memory_space<semaphore_mem>> -> memref<!tpu.dma_semaphore, #tpu.memory_space<semaphore_mem>>
    tpu.enqueue_dma source(%100 : memref<256x2048xbf16, #tpu.memory_space<any>>) target(%102 : memref<256x2048xbf16, #tpu.memory_space<vmem>>) target_semaphore(%104 : memref<!tpu.dma_semaphore, #tpu.memory_space<semaphore_mem>>)
    %105 = vector.extract_strided_slice %78 {offsets = [0, 256], sizes = [8, 256], strides = [1, 1]} : vector<8x1024xbf16> to vector<8x256xbf16>
    %c1 = arith.constant 1 : index
    %c0_65 = arith.constant 0 : index
    %c0_66 = arith.constant 0 : index
    %106 = vector.load %arg16[%c1, %c0_65, %c0_66] : memref<2x256x2048xbf16, #tpu.memory_space<vmem>>, vector<1x256x2048xbf16>
    %107 = vector.shape_cast %106 : vector<1x256x2048xbf16> to vector<256x2048xbf16>
    %cst_67 = arith.constant dense<0.000000e+00> : vector<8x2048xf32>
    %108 = tpu.matmul %105, %107, %cst_67 {dimension_numbers = #tpu.dot_dimension_numbers<[1], [0], [0], [1], [0, 0, 1, 1], [], []>} : vector<8x256xbf16>, vector<256x2048xbf16>, vector<8x2048xf32> -> vector<8x2048xf32>
    %109 = arith.addf %94, %108 : vector<8x2048xf32>
    %c0_i32_68 = arith.constant 0 : i32
    %c0_i32_69 = arith.constant 0 : i32
    %c512_i32_70 = arith.constant 512 : i32
    %c0_i32_71 = arith.constant 0 : i32
    %110 = tpu.memref_slice %arg9[%c512_i32_70, %c0_i32_71] : memref<1024x2048xbf16, #tpu.memory_space<any>> -> memref<256x2048xbf16, #tpu.memory_space<any>>
    %c0_i32_72 = arith.constant 0 : i32
    %c0_i32_73 = arith.constant 0 : i32
    %111 = tpu.memref_slice %arg16[%c0_i32_68, %c0_i32_72, %c0_i32_73] : memref<2x256x2048xbf16, #tpu.memory_space<vmem>> -> memref<1x256x2048xbf16, #tpu.memory_space<vmem>>
    %112 = tpu.memref_squeeze %111 : memref<1x256x2048xbf16, #tpu.memory_space<vmem>> -> memref<256x2048xbf16, #tpu.memory_space<vmem>>
    %113 = tpu.memref_slice %arg17[%c0_i32_69] : memref<2x!tpu.dma_semaphore, #tpu.memory_space<semaphore_mem>> -> memref<1x!tpu.dma_semaphore, #tpu.memory_space<semaphore_mem>>
    %114 = tpu.memref_squeeze %113 : memref<1x!tpu.dma_semaphore, #tpu.memory_space<semaphore_mem>> -> memref<!tpu.dma_semaphore, #tpu.memory_space<semaphore_mem>>
    tpu.wait_dma2 semaphore(%114 : memref<!tpu.dma_semaphore, #tpu.memory_space<semaphore_mem>>) src(%110 : memref<256x2048xbf16, #tpu.memory_space<any>>) dst(%112 : memref<256x2048xbf16, #tpu.memory_space<vmem>>)
    %c1_i32_74 = arith.constant 1 : i32
    %c1_i32_75 = arith.constant 1 : i32
    %c768_i32 = arith.constant 768 : i32
    %c0_i32_76 = arith.constant 0 : i32
    %115 = tpu.memref_slice %arg9[%c768_i32, %c0_i32_76] : memref<1024x2048xbf16, #tpu.memory_space<any>> -> memref<256x2048xbf16, #tpu.memory_space<any>>
    %c0_i32_77 = arith.constant 0 : i32
    %c0_i32_78 = arith.constant 0 : i32
    %116 = tpu.memref_slice %arg16[%c1_i32_74, %c0_i32_77, %c0_i32_78] : memref<2x256x2048xbf16, #tpu.memory_space<vmem>> -> memref<1x256x2048xbf16, #tpu.memory_space<vmem>>
    %117 = tpu.memref_squeeze %116 : memref<1x256x2048xbf16, #tpu.memory_space<vmem>> -> memref<256x2048xbf16, #tpu.memory_space<vmem>>
    %118 = tpu.memref_slice %arg17[%c1_i32_75] : memref<2x!tpu.dma_semaphore, #tpu.memory_space<semaphore_mem>> -> memref<1x!tpu.dma_semaphore, #tpu.memory_space<semaphore_mem>>
    %119 = tpu.memref_squeeze %118 : memref<1x!tpu.dma_semaphore, #tpu.memory_space<semaphore_mem>> -> memref<!tpu.dma_semaphore, #tpu.memory_space<semaphore_mem>>
    tpu.enqueue_dma source(%115 : memref<256x2048xbf16, #tpu.memory_space<any>>) target(%117 : memref<256x2048xbf16, #tpu.memory_space<vmem>>) target_semaphore(%119 : memref<!tpu.dma_semaphore, #tpu.memory_space<semaphore_mem>>)
    %120 = vector.extract_strided_slice %78 {offsets = [0, 512], sizes = [8, 256], strides = [1, 1]} : vector<8x1024xbf16> to vector<8x256xbf16>
    %c0_79 = arith.constant 0 : index
    %c0_80 = arith.constant 0 : index
    %c0_81 = arith.constant 0 : index
    %121 = vector.load %arg16[%c0_79, %c0_80, %c0_81] : memref<2x256x2048xbf16, #tpu.memory_space<vmem>>, vector<1x256x2048xbf16>
    %122 = vector.shape_cast %121 : vector<1x256x2048xbf16> to vector<256x2048xbf16>
    %cst_82 = arith.constant dense<0.000000e+00> : vector<8x2048xf32>
    %123 = tpu.matmul %120, %122, %cst_82 {dimension_numbers = #tpu.dot_dimension_numbers<[1], [0], [0], [1], [0, 0, 1, 1], [], []>} : vector<8x256xbf16>, vector<256x2048xbf16>, vector<8x2048xf32> -> vector<8x2048xf32>
    %124 = arith.addf %109, %123 : vector<8x2048xf32>
    %c1_i32_83 = arith.constant 1 : i32
    %c1_i32_84 = arith.constant 1 : i32
    %c768_i32_85 = arith.constant 768 : i32
    %c0_i32_86 = arith.constant 0 : i32
    %125 = tpu.memref_slice %arg9[%c768_i32_85, %c0_i32_86] : memref<1024x2048xbf16, #tpu.memory_space<any>> -> memref<256x2048xbf16, #tpu.memory_space<any>>
    %c0_i32_87 = arith.constant 0 : i32
    %c0_i32_88 = arith.constant 0 : i32
    %126 = tpu.memref_slice %arg16[%c1_i32_83, %c0_i32_87, %c0_i32_88] : memref<2x256x2048xbf16, #tpu.memory_space<vmem>> -> memref<1x256x2048xbf16, #tpu.memory_space<vmem>>
    %127 = tpu.memref_squeeze %126 : memref<1x256x2048xbf16, #tpu.memory_space<vmem>> -> memref<256x2048xbf16, #tpu.memory_space<vmem>>
    %128 = tpu.memref_slice %arg17[%c1_i32_84] : memref<2x!tpu.dma_semaphore, #tpu.memory_space<semaphore_mem>> -> memref<1x!tpu.dma_semaphore, #tpu.memory_space<semaphore_mem>>
    %129 = tpu.memref_squeeze %128 : memref<1x!tpu.dma_semaphore, #tpu.memory_space<semaphore_mem>> -> memref<!tpu.dma_semaphore, #tpu.memory_space<semaphore_mem>>
    tpu.wait_dma2 semaphore(%129 : memref<!tpu.dma_semaphore, #tpu.memory_space<semaphore_mem>>) src(%125 : memref<256x2048xbf16, #tpu.memory_space<any>>) dst(%127 : memref<256x2048xbf16, #tpu.memory_space<vmem>>)
    %130 = vector.extract_strided_slice %78 {offsets = [0, 768], sizes = [8, 256], strides = [1, 1]} : vector<8x1024xbf16> to vector<8x256xbf16>
    %c1_89 = arith.constant 1 : index
    %c0_90 = arith.constant 0 : index
    %c0_91 = arith.constant 0 : index
    %131 = vector.load %arg16[%c1_89, %c0_90, %c0_91] : memref<2x256x2048xbf16, #tpu.memory_space<vmem>>, vector<1x256x2048xbf16>
    %132 = vector.shape_cast %131 : vector<1x256x2048xbf16> to vector<256x2048xbf16>
    %cst_92 = arith.constant dense<0.000000e+00> : vector<8x2048xf32>
    %133 = tpu.matmul %130, %132, %cst_92 {dimension_numbers = #tpu.dot_dimension_numbers<[1], [0], [0], [1], [0, 0, 1, 1], [], []>} : vector<8x256xbf16>, vector<256x2048xbf16>, vector<8x2048xf32> -> vector<8x2048xf32>
    %134 = arith.addf %124, %133 : vector<8x2048xf32>
    %c0_93 = arith.constant 0 : index
    %c0_94 = arith.constant 0 : index
    %135 = vector.load %arg10[%c0_93, %c0_94] : memref<1x2048xf32, #tpu.memory_space<vmem>>, vector<1x2048xf32>
    %136 = vector.broadcast %135 : vector<1x2048xf32> to vector<8x2048xf32>
    %137 = arith.addf %134, %136 : vector<8x2048xf32>
    %cst_95 = arith.constant 0.000000e+00 : f32
    %138 = vector.broadcast %cst_95 : f32 to vector<8x2048xf32>
    %139 = arith.cmpf ogt, %137, %138 : vector<8x2048xf32>
    %cst_96 = arith.constant 2.000000e-01 : f32
    %140 = vector.broadcast %cst_96 : f32 to vector<8x2048xf32>
    %141 = arith.mulf %140, %137 : vector<8x2048xf32>
    %142 = arith.select %139, %137, %141 : vector<8x2048xi1>, vector<8x2048xf32>
    %c0_97 = arith.constant 0 : index
    %c0_98 = arith.constant 0 : index
    %143 = vector.load %arg11[%c0_97, %c0_98] : memref<1x2048xf32, #tpu.memory_space<vmem>>, vector<1x2048xf32>
    %c0_99 = arith.constant 0 : index
    %c0_100 = arith.constant 0 : index
    %144 = vector.load %arg12[%c0_99, %c0_100] : memref<1x2048xf32, #tpu.memory_space<vmem>>, vector<1x2048xf32>
    %cst_101 = arith.constant dense<0.000000e+00> : vector<2048xf32>
    %145 = vector.multi_reduction <add>, %142, %cst_101 [0] : vector<8x2048xf32> to vector<2048xf32>
    %146 = vector.shape_cast %145 : vector<2048xf32> to vector<1x2048xf32>
    %cst_102 = arith.constant 8.000000e+00 : f32
    %147 = vector.broadcast %cst_102 : f32 to vector<1x2048xf32>
    %148 = arith.divf %146, %147 : vector<1x2048xf32>
    %149 = arith.mulf %142, %142 : vector<8x2048xf32>
    %cst_103 = arith.constant dense<0.000000e+00> : vector<2048xf32>
    %150 = vector.multi_reduction <add>, %149, %cst_103 [0] : vector<8x2048xf32> to vector<2048xf32>
    %151 = vector.shape_cast %150 : vector<2048xf32> to vector<1x2048xf32>
    %cst_104 = arith.constant 8.000000e+00 : f32
    %152 = vector.broadcast %cst_104 : f32 to vector<1x2048xf32>
    %153 = arith.divf %151, %152 : vector<1x2048xf32>
    %154 = arith.mulf %148, %148 : vector<1x2048xf32>
    %155 = arith.subf %153, %154 : vector<1x2048xf32>
    %cst_105 = arith.constant 0.000000e+00 : f32
    %156 = vector.broadcast %cst_105 : f32 to vector<1x2048xf32>
    %157 = arith.maximumf %155, %156 : vector<1x2048xf32>
    %cst_106 = arith.constant 9.99999974E-6 : f32
    %158 = vector.broadcast %cst_106 : f32 to vector<1x2048xf32>
    %159 = arith.addf %157, %158 : vector<1x2048xf32>
    %160 = math.rsqrt %159 : vector<1x2048xf32>
    %161 = arith.mulf %143, %160 : vector<1x2048xf32>
    %162 = vector.broadcast %161 : vector<1x2048xf32> to vector<8x2048xf32>
    %163 = arith.mulf %142, %162 : vector<8x2048xf32>
    %164 = arith.mulf %148, %161 : vector<1x2048xf32>
    %165 = arith.subf %144, %164 : vector<1x2048xf32>
    %166 = vector.broadcast %165 : vector<1x2048xf32> to vector<8x2048xf32>
    %167 = arith.addf %163, %166 : vector<8x2048xf32>
    %168 = arith.truncf %167 : vector<8x2048xf32> to vector<8x2048xbf16>
    %c0_107 = arith.constant 0 : index
    %c0_108 = arith.constant 0 : index
    %169 = vector.load %arg13[%c0_107, %c0_108] : memref<2048x128xbf16, #tpu.memory_space<vmem>>, vector<2048x128xbf16>
    %cst_109 = arith.constant dense<0.000000e+00> : vector<8x128xf32>
    %170 = tpu.matmul %168, %169, %cst_109 {dimension_numbers = #tpu.dot_dimension_numbers<[1], [0], [0], [1], [0, 0, 1, 1], [], []>} : vector<8x2048xbf16>, vector<2048x128xbf16>, vector<8x128xf32> -> vector<8x128xf32>
    %c0_110 = arith.constant 0 : index
    %c0_111 = arith.constant 0 : index
    %171 = vector.load %arg14[%c0_110, %c0_111] : memref<1x128xf32, #tpu.memory_space<vmem>>, vector<1x128xf32>
    %172 = vector.broadcast %171 : vector<1x128xf32> to vector<8x128xf32>
    %173 = arith.addf %170, %172 : vector<8x128xf32>
    %174 = math.tanh %173 : vector<8x128xf32>
    %c0_112 = arith.constant 0 : index
    %c0_113 = arith.constant 0 : index
    %175 = vector.load %arg15[%c0_112, %c0_113] : memref<8x128xf32, #tpu.memory_space<vmem>>, vector<8x128xf32>
    tpu.vector_store %arg15[%c0_112, %c0_113], %174 {strides = array<i32>} : memref<8x128xf32, #tpu.memory_space<vmem>>, vector<8x128xf32>,
    return
  }
}

</mosaic_0001>

<llo_original>
// kernel: tpu_custom_call.1
$region0: #{tpu_custom_call.1}
  #allocation0 [shape = 'u32[]', space=smem, size = 0x4, offset = 0x4, fixed_abs, tag = 'smem constant byte address 0x4 - core index']
  #allocation1 [shape = 'u32[144,128]{1,0:T(1,128)}', space=vmem, size = 0x12000, scoped, tag = 'internal scratch']
  #allocation2 [shape = 'bf16[2,256,2048]{2,1,0:T(16,128)(2,1)}', space=vmem, size = 0x200000, scoped, tag = 'scratch operand']
  #allocation3 [shape = 's32[2]{0}', space=sflag, size = 0x8, scoped, tag = 'scratch operand']
  #allocation28 [shape = 's32[]', space=sflag, size = 0x4, offset = 0, fixed_abs, tag = 'sflag constant byte address 0x0 - dummy sync flag']
  #allocation30 [shape = 's32[]', space=sflag, size = 0x4, offset = 0, fixed_abs, tag = 'sflag constant byte address 0x0 - dummy sync flag']
  #allocation32 [shape = 's32[]', space=sflag, size = 0x4, offset = 0, fixed_abs, tag = 'sflag constant byte address 0x0 - dummy sync flag']
  #allocation34 [shape = 's32[]', space=sflag, size = 0x4, offset = 0, fixed_abs, tag = 'sflag constant byte address 0x0 - dummy sync flag']
  %s0 = inlined_call_operand.hbm [shape: f32[8,16], index: 0, kind: input, shape index: {}]
  %s1 = inlined_call_operand.hbm [shape: bf16[16,512], index: 1, kind: input, shape index: {}]
  %s2 = inlined_call_operand.hbm [shape: f32[1,512], index: 2, kind: input, shape index: {}]
  %s3 = inlined_call_operand.hbm [shape: f32[1,512], index: 3, kind: input, shape index: {}]
  %s4 = inlined_call_operand.hbm [shape: f32[1,512], index: 4, kind: input, shape index: {}]
  %s5 = inlined_call_operand.hbm [shape: bf16[512,1024], index: 5, kind: input, shape index: {}]
  %s6 = inlined_call_operand.hbm [shape: f32[1,1024], index: 6, kind: input, shape index: {}]
  %s7 = inlined_call_operand.hbm [shape: f32[1,1024], index: 7, kind: input, shape index: {}]
  %s8 = inlined_call_operand.hbm [shape: f32[1,1024], index: 8, kind: input, shape index: {}]
  %s9 = inlined_call_operand.hbm [shape: bf16[1024,2048], index: 9, kind: input, shape index: {}]
  %s10 = inlined_call_operand.hbm [shape: f32[1,2048], index: 10, kind: input, shape index: {}]
  %s11 = inlined_call_operand.hbm [shape: f32[1,2048], index: 11, kind: input, shape index: {}]
  %s12 = inlined_call_operand.hbm [shape: f32[1,2048], index: 12, kind: input, shape index: {}]
  %s13 = inlined_call_operand.hbm [shape: bf16[2048,128], index: 13, kind: input, shape index: {}]
  %s14 = inlined_call_operand.hbm [shape: f32[1,128], index: 14, kind: input, shape index: {}]
  %s15 = inlined_call_operand.hbm [shape: f32[8,128], index: 15, kind: output, shape index: {}]
  %s16 = sld [smem:[#allocation0]]
  $region122: #{tpu_custom_call.1} parent=0
    _
  %s18 = ssub.s32 1, %s16
  %s19 = scalar_select 0, %s18, %s16
  $region1: #{tpu_custom_call.1} parent=0
    #allocation4 [shape = 'u8[4096]{0}', space=vmem, size = 0x1000, scoped, tag = 'input window, operand 0, single buffered']
    #allocation5 [shape = 's32[1]{0}', space=sflag, size = 0x4, scoped, tag = 'scoped memory for tpu_custom_call.1']
    #allocation6 [shape = 's32[1]{0}', space=sflag, size = 0x4, scoped, tag = 'scoped memory for tpu_custom_call.1']
    #allocation7 [shape = 'u8[16384]{0}', space=vmem, size = 0x4000, scoped, tag = 'input window, operand 1, single buffered']
    #allocation8 [shape = 's32[1]{0}', space=sflag, size = 0x4, scoped, tag = 'scoped memory for tpu_custom_call.1']
    #allocation9 [shape = 'u8[2048]{0}', space=vmem, size = 0x800, scoped, tag = 'input window, operand 2, single buffered']
    #allocation10 [shape = 'u8[2048]{0}', space=vmem, size = 0x800, scoped, tag = 'input window, operand 3, single buffered']
    #allocation11 [shape = 's32[1]{0}', space=sflag, size = 0x4, scoped, tag = 'scoped memory for tpu_custom_call.1']
    #allocation12 [shape = 'u8[2048]{0}', space=vmem, size = 0x800, scoped, tag = 'input window, operand 4, single buffered']
    #allocation13 [shape = 'u8[1048576]{0}', space=vmem, size = 0x100000, scoped, tag = 'input window, operand 5, single buffered']
    #allocation14 [shape = 's32[1]{0}', space=sflag, size = 0x4, scoped, tag = 'scoped memory for tpu_custom_call.1']
    #allocation15 [shape = 'u8[4096]{0}', space=vmem, size = 0x1000, scoped, tag = 'input window, operand 6, single buffered']
    #allocation16 [shape = 'u8[4096]{0}', space=vmem, size = 0x1000, scoped, tag = 'input window, operand 7, single buffered']
    #allocation17 [shape = 's32[1]{0}', space=sflag, size = 0x4, scoped, tag = 'scoped memory for tpu_custom_call.1']
    #allocation18 [shape = 'u8[4096]{0}', space=vmem, size = 0x1000, scoped, tag = 'input window, operand 8, single buffered']
    #allocation19 [shape = 'u8[8192]{0}', space=vmem, size = 0x2000, scoped, tag = 'input window, operand 10, single buffered']
    #allocation20 [shape = 's32[1]{0}', space=sflag, size = 0x4, scoped, tag = 'scoped memory for tpu_custom_call.1']
    #allocation21 [shape = 'u8[8192]{0}', space=vmem, size = 0x2000, scoped, tag = 'input window, operand 11, single buffered']
    #allocation22 [shape = 'u8[8192]{0}', space=vmem, size = 0x2000, scoped, tag = 'input window, operand 12, single buffered']
    #allocation23 [shape = 's32[1]{0}', space=sflag, size = 0x4, scoped, tag = 'scoped memory for tpu_custom_call.1']
    #allocation24 [shape = 'u8[524288]{0}', space=vmem, size = 0x80000, scoped, tag = 'input window, operand 13, single buffered']
    #allocation25 [shape = 'u8[512]{0}', space=vmem, size = 0x400, scoped, tag = 'input window, operand 14, single buffered']
    #allocation26 [shape = 's32[1]{0}', space=sflag, size = 0x4, scoped, tag = 'scoped memory for tpu_custom_call.1']
    #allocation27 [shape = 'u8[4096]{0}', space=vmem, size = 0x1000, scoped, tag = 'output window, operand 0, single buffered']
    #allocation29 [shape = 'u32[9]{0}', space=smem, size = 0x24, scoped, tag = 'DMA stride descriptor']
    #allocation31 [shape = 'u32[9]{0}', space=smem, size = 0x24, scoped, tag = 'DMA stride descriptor']
    #allocation33 [shape = 'u32[9]{0}', space=smem, size = 0x24, scoped, tag = 'DMA stride descriptor']
    #allocation35 [shape = 'u32[9]{0}', space=smem, size = 0x24, scoped, tag = 'DMA stride descriptor']
    %20 = vsyncpa [#allocation5], 0
    %21 = vsyncpa [#allocation8], 0
    %22 = vsyncpa [#allocation11], 0
    %23 = vsyncpa [#allocation14], 0
    %24 = vsyncpa [#allocation17], 0
    %25 = vsyncpa [#allocation20], 0
    %26 = vsyncpa [#allocation23], 0
    %27 = vsyncpa [#allocation26], 0
    %28 = vsyncpa [#allocation6], 0
    // Predicated region
    $region2: #{tpu_custom_call.1} parent=1 // pred_check
      _
    $region3: #{tpu_custom_call.1} parent=1 // pred_check_branch
      %30 = sbr.rel (0) target = $region5
    $region4: #{tpu_custom_call.1} parent=1 // pred_region
      %s32 = ssub.s32 128, 128
      %33 = vsyncadd [#allocation5], %s32
      %s35 = sshll.u32 [#allocation4], 4
      %s36 = int_to_ptr.vmem [resolvable:$true] %s35
      %38 = dma.hbm_to_vmem [thread:$0]  %s0, 128, %s36, [#allocation5]
    $region5: #{tpu_custom_call.1} parent=1 // pred_fallthru
      _
    // Predicated region
    $region6: #{tpu_custom_call.1} parent=1 // pred_check
      _
    $region7: #{tpu_custom_call.1} parent=1 // pred_check_branch
      %40 = sbr.rel (0) target = $region9
    $region8: #{tpu_custom_call.1} parent=1 // pred_region
      %s42 = ssub.s32 512, 512
      %43 = vsyncadd [#allocation8], %s42
      %s44 = sshll.u32 [#allocation7], 4
      %s45 = int_to_ptr.vmem [resolvable:$true] %s44
      %50 = dma.hbm_to_vmem [thread:$0]  %s1, 512, %s45, [#allocation8], 256, 256, 16
    $region9: #{tpu_custom_call.1} parent=1 // pred_fallthru
      _
    // Predicated region
    $region10: #{tpu_custom_call.1} parent=1 // pred_check
      _
    $region11: #{tpu_custom_call.1} parent=1 // pred_check_branch
      %52 = sbr.rel (0) target = $region13
    $region12: #{tpu_custom_call.1} parent=1 // pred_region
      %s54 = ssub.s32 64, 64
      %55 = vsyncadd [#allocation8], %s54
      %s57 = sshll.u32 [#allocation9], 4
      %s58 = int_to_ptr.vmem [resolvable:$true] %s57
      %60 = dma.hbm_to_vmem [thread:$0]  %s2, 64, %s58, [#allocation8]
    $region13: #{tpu_custom_call.1} parent=1 // pred_fallthru
      _
    // Predicated region
    $region14: #{tpu_custom_call.1} parent=1 // pred_check
      _
    $region15: #{tpu_custom_call.1} parent=1 // pred_check_branch
      %62 = sbr.rel (0) target = $region17
    $region16: #{tpu_custom_call.1} parent=1 // pred_region
      %s64 = ssub.s32 64, 64
      %65 = vsyncadd [#allocation11], %s64
      %s67 = sshll.u32 [#allocation10], 4
      %s68 = int_to_ptr.vmem [resolvable:$true] %s67
      %70 = dma.hbm_to_vmem [thread:$0]  %s3, 64, %s68, [#allocation11]
    $region17: #{tpu_custom_call.1} parent=1 // pred_fallthru
      _
    // Predicated region
    $region18: #{tpu_custom_call.1} parent=1 // pred_check
      _
    $region19: #{tpu_custom_call.1} parent=1 // pred_check_branch
      %72 = sbr.rel (0) target = $region21
    $region20: #{tpu_custom_call.1} parent=1 // pred_region
      %s74 = ssub.s32 64, 64
      %75 = vsyncadd [#allocation11], %s74
      %s77 = sshll.u32 [#allocation12], 4
      %s78 = int_to_ptr.vmem [resolvable:$true] %s77
      %80 = dma.hbm_to_vmem [thread:$0]  %s4, 64, %s78, [#allocation11]
    $region21: #{tpu_custom_call.1} parent=1 // pred_fallthru
      _
    // Predicated region
    $region22: #{tpu_custom_call.1} parent=1 // pred_check
      _
    $region23: #{tpu_custom_call.1} parent=1 // pred_check_branch
      %82 = sbr.rel (0) target = $region25
    $region24: #{tpu_custom_call.1} parent=1 // pred_region
      %s84 = ssub.s32 32768, 32768
      %85 = vsyncadd [#allocation14], %s84
      %s86 = sshll.u32 [#allocation13], 4
      %s87 = int_to_ptr.vmem [resolvable:$true] %s86
      %92 = dma.hbm_to_vmem [thread:$0]  %s5, 32768, %s87, [#allocation14], 512, 512, 32
    $region25: #{tpu_custom_call.1} parent=1 // pred_fallthru
      _
    // Predicated region
    $region26: #{tpu_custom_call.1} parent=1 // pred_check
      _
    $region27: #{tpu_custom_call.1} parent=1 // pred_check_branch
      %94 = sbr.rel (0) target = $region29
    $region28: #{tpu_custom_call.1} parent=1 // pred_region
      %s96 = ssub.s32 128, 128
      %97 = vsyncadd [#allocation14], %s96
      %s99 = sshll.u32 [#allocation15], 4
      %s100 = int_to_ptr.vmem [resolvable:$true] %s99
      %102 = dma.hbm_to_vmem [thread:$0]  %s6, 128, %s100, [#allocation14]
    $region29: #{tpu_custom_call.1} parent=1 // pred_fallthru
      _
    // Predicated region
    $region30: #{tpu_custom_call.1} parent=1 // pred_check
      _
    $region31: #{tpu_custom_call.1} parent=1 // pred_check_branch
      %104 = sbr.rel (0) target = $region33
    $region32: #{tpu_custom_call.1} parent=1 // pred_region
      %s106 = ssub.s32 128, 128
      %107 = vsyncadd [#allocation17], %s106
      %s109 = sshll.u32 [#allocation16], 4
      %s110 = int_to_ptr.vmem [resolvable:$true] %s109
      %112 = dma.hbm_to_vmem [thread:$0]  %s7, 128, %s110, [#allocation17]
    $region33: #{tpu_custom_call.1} parent=1 // pred_fallthru
      _
    // Predicated region
    $region34: #{tpu_custom_call.1} parent=1 // pred_check
      _
    $region35: #{tpu_custom_call.1} parent=1 // pred_check_branch
      %114 = sbr.rel (0) target = $region37
    $region36: #{tpu_custom_call.1} parent=1 // pred_region
      %s116 = ssub.s32 128, 128
      %117 = vsyncadd [#allocation17], %s116
      %s119 = sshll.u32 [#allocation18], 4
      %s120 = int_to_ptr.vmem [resolvable:$true] %s119
      %122 = dma.hbm_to_vmem [thread:$0]  %s8, 128, %s120, [#allocation17]
    $region37: #{tpu_custom_call.1} parent=1 // pred_fallthru
      _
    // Predicated region
    $region38: #{tpu_custom_call.1} parent=1 // pred_check
      _
    $region39: #{tpu_custom_call.1} parent=1 // pred_check_branch
      %124 = sbr.rel (0) target = $region41
    $region40: #{tpu_custom_call.1} parent=1 // pred_region
      %s126 = ssub.s32 256, 256
      %127 = vsyncadd [#allocation20], %s126
      %s129 = sshll.u32 [#allocation19], 4
      %s130 = int_to_ptr.vmem [resolvable:$true] %s129
      %132 = dma.hbm_to_vmem [thread:$0]  %s10, 256, %s130, [#allocation20]
    $region41: #{tpu_custom_call.1} parent=1 // pred_fallthru
      _
    // Predicated region
    $region42: #{tpu_custom_call.1} parent=1 // pred_check
      _
    $region43: #{tpu_custom_call.1} parent=1 // pred_check_branch
      %134 = sbr.rel (0) target = $region45
    $region44: #{tpu_custom_call.1} parent=1 // pred_region
      %s136 = ssub.s32 256, 256
      %137 = vsyncadd [#allocation20], %s136
      %s139 = sshll.u32 [#allocation21], 4
      %s140 = int_to_ptr.vmem [resolvable:$true] %s139
      %142 = dma.hbm_to_vmem [thread:$0]  %s11, 256, %s140, [#allocation20]
    $region45: #{tpu_custom_call.1} parent=1 // pred_fallthru
      _
    // Predicated region
    $region46: #{tpu_custom_call.1} parent=1 // pred_check
      _
    $region47: #{tpu_custom_call.1} parent=1 // pred_check_branch
      %144 = sbr.rel (0) target = $region49
    $region48: #{tpu_custom_call.1} parent=1 // pred_region
      %s146 = ssub.s32 256, 256
      %147 = vsyncadd [#allocation23], %s146
      %s149 = sshll.u32 [#allocation22], 4
      %s150 = int_to_ptr.vmem [resolvable:$true] %s149
      %152 = dma.hbm_to_vmem [thread:$0]  %s12, 256, %s150, [#allocation23]
    $region49: #{tpu_custom_call.1} parent=1 // pred_fallthru
      _
    // Predicated region
    $region50: #{tpu_custom_call.1} parent=1 // pred_check
      _
    $region51: #{tpu_custom_call.1} parent=1 // pred_check_branch
      %154 = sbr.rel (0) target = $region53
    $region52: #{tpu_custom_call.1} parent=1 // pred_region
      %s156 = ssub.s32 16384, 16384
      %157 = vsyncadd [#allocation23], %s156
      %s158 = sshll.u32 [#allocation24], 4
      %s159 = int_to_ptr.vmem [resolvable:$true] %s158
      %164 = dma.hbm_to_vmem [thread:$0]  %s13, 16384, %s159, [#allocation23], 64, 64, 4
    $region53: #{tpu_custom_call.1} parent=1 // pred_fallthru
      _
    // Predicated region
    $region54: #{tpu_custom_call.1} parent=1 // pred_check
      _
    $region55: #{tpu_custom_call.1} parent=1 // pred_check_branch
      %166 = sbr.rel (0) target = $region57
    $region56: #{tpu_custom_call.1} parent=1 // pred_region
      %s168 = ssub.s32 16, 16
      %169 = vsyncadd [#allocation26], %s168
      %s171 = sshll.u32 [#allocation25], 4
      %s172 = int_to_ptr.vmem [resolvable:$true] %s171
      %174 = dma.hbm_to_vmem [thread:$0]  %s14, 16, %s172, [#allocation26]
    $region57: #{tpu_custom_call.1} parent=1 // pred_fallthru
      _
    // Predicated region
    $region58: #{tpu_custom_call.1} parent=1 // pred_check
      _
    $region59: #{tpu_custom_call.1} parent=1 // pred_check_branch
      %176 = sbr.rel (0) target = $region61
    $region60: #{tpu_custom_call.1} parent=1 // pred_region
      %177 = dma.done [#allocation5], 128
    $region61: #{tpu_custom_call.1} parent=1 // pred_fallthru
      _
    // Predicated region
    $region62: #{tpu_custom_call.1} parent=1 // pred_check
      _
    $region63: #{tpu_custom_call.1} parent=1 // pred_check_branch
      %179 = sbr.rel (0) target = $region65
    $region64: #{tpu_custom_call.1} parent=1 // pred_region
      %180 = dma.done [#allocation8], 512
    $region65: #{tpu_custom_call.1} parent=1 // pred_fallthru
      _
    // Predicated region
    $region66: #{tpu_custom_call.1} parent=1 // pred_check
      _
    $region67: #{tpu_custom_call.1} parent=1 // pred_check_branch
      %182 = sbr.rel (0) target = $region69
    $region68: #{tpu_custom_call.1} parent=1 // pred_region
      %183 = dma.done [#allocation8], 64
    $region69: #{tpu_custom_call.1} parent=1 // pred_fallthru
      _
    // Predicated region
    $region70: #{tpu_custom_call.1} parent=1 // pred_check
      _
    $region71: #{tpu_custom_call.1} parent=1 // pred_check_branch
      %185 = sbr.rel (0) target = $region73
    $region72: #{tpu_custom_call.1} parent=1 // pred_region
      %186 = dma.done [#allocation11], 64
    $region73: #{tpu_custom_call.1} parent=1 // pred_fallthru
      _
    // Predicated region
    $region74: #{tpu_custom_call.1} parent=1 // pred_check
      _
    $region75: #{tpu_custom_call.1} parent=1 // pred_check_branch
      %188 = sbr.rel (0) target = $region77
    $region76: #{tpu_custom_call.1} parent=1 // pred_region
      %189 = dma.done [#allocation11], 64
    $region77: #{tpu_custom_call.1} parent=1 // pred_fallthru
      _
    // Predicated region
    $region78: #{tpu_custom_call.1} parent=1 // pred_check
      _
    $region79: #{tpu_custom_call.1} parent=1 // pred_check_branch
      %191 = sbr.rel (0) target = $region81
    $region80: #{tpu_custom_call.1} parent=1 // pred_region
      %192 = dma.done [#allocation14], 32768
    $region81: #{tpu_custom_call.1} parent=1 // pred_fallthru
      _
    // Predicated region
    $region82: #{tpu_custom_call.1} parent=1 // pred_check
      _
    $region83: #{tpu_custom_call.1} parent=1 // pred_check_branch
      %194 = sbr.rel (0) target = $region85
    $region84: #{tpu_custom_call.1} parent=1 // pred_region
      %195 = dma.done [#allocation14], 128
    $region85: #{tpu_custom_call.1} parent=1 // pred_fallthru
      _
    // Predicated region
    $region86: #{tpu_custom_call.1} parent=1 // pred_check
      _
    $region87: #{tpu_custom_call.1} parent=1 // pred_check_branch
      %197 = sbr.rel (0) target = $region89
    $region88: #{tpu_custom_call.1} parent=1 // pred_region
      %198 = dma.done [#allocation17], 128
    $region89: #{tpu_custom_call.1} parent=1 // pred_fallthru
      _
    // Predicated region
    $region90: #{tpu_custom_call.1} parent=1 // pred_check
      _
    $region91: #{tpu_custom_call.1} parent=1 // pred_check_branch
      %200 = sbr.rel (0) target = $region93
    $region92: #{tpu_custom_call.1} parent=1 // pred_region
      %201 = dma.done [#allocation17], 128
    $region93: #{tpu_custom_call.1} parent=1 // pred_fallthru
      _
    // Predicated region
    $region94: #{tpu_custom_call.1} parent=1 // pred_check
      _
    $region95: #{tpu_custom_call.1} parent=1 // pred_check_branch
      %203 = sbr.rel (0) target = $region97
    $region96: #{tpu_custom_call.1} parent=1 // pred_region
      %204 = dma.done [#allocation20], 256
    $region97: #{tpu_custom_call.1} parent=1 // pred_fallthru
      _
    // Predicated region
    $region98: #{tpu_custom_call.1} parent=1 // pred_check
      _
    $region99: #{tpu_custom_call.1} parent=1 // pred_check_branch
      %206 = sbr.rel (0) target = $region101
    $region100: #{tpu_custom_call.1} parent=1 // pred_region
      %207 = dma.done [#allocation20], 256
    $region101: #{tpu_custom_call.1} parent=1 // pred_fallthru
      _
    // Predicated region
    $region102: #{tpu_custom_call.1} parent=1 // pred_check
      _
    $region103: #{tpu_custom_call.1} parent=1 // pred_check_branch
      %209 = sbr.rel (0) target = $region105
    $region104: #{tpu_custom_call.1} parent=1 // pred_region
      %210 = dma.done [#allocation23], 256
    $region105: #{tpu_custom_call.1} parent=1 // pred_fallthru
      _
    // Predicated region
    $region106: #{tpu_custom_call.1} parent=1 // pred_check
      _
    $region107: #{tpu_custom_call.1} parent=1 // pred_check_branch
      %212 = sbr.rel (0) target = $region109
    $region108: #{tpu_custom_call.1} parent=1 // pred_region
      %213 = dma.done [#allocation23], 16384
    $region109: #{tpu_custom_call.1} parent=1 // pred_fallthru
      _
    // Predicated region
    $region110: #{tpu_custom_call.1} parent=1 // pred_check
      _
    $region111: #{tpu_custom_call.1} parent=1 // pred_check_branch
      %215 = sbr.rel (0) target = $region113
    $region112: #{tpu_custom_call.1} parent=1 // pred_region
      %216 = dma.done [#allocation26], 16
    $region113: #{tpu_custom_call.1} parent=1 // pred_fallthru
      _
    %s219 = sshll.u32 1, 14
    %s220 = sxor.u32 4294967295, %s219
    %s222 = sld [smem:[#allocation0]]
    %s223 = sadd.s32 2, %s222
    %s225 = sshll.u32 7, 26
    %s226 = sxor.u32 4294967295, %s225
    %s227 = sand.u32 0, %s226
    %s228 = sshll.u32 %s223, 26
    %s229 = sor.u32 %s227, %s228
    %s230 = sshll.u32 [#allocation2], 4
    %s231 = int_to_ptr.vmem [resolvable:$true] %s230
    %234 = sst [smem:[#allocation29]] 2048
    %s235 = scalar_lea.smem [#allocation29], 1
    %236 = sst [smem:[%s235]] 2048
    %s237 = scalar_lea.smem [#allocation29], 2
    %238 = sst [smem:[%s237]] 16
    %s239 = scalar_lea.smem [#allocation29], 3
    %240 = sst [smem:[%s239]] 64
    %s241 = scalar_lea.smem [#allocation29], 4
    %242 = sst [smem:[%s241]] 128
    %s243 = scalar_lea.smem [#allocation29], 5
    %244 = sst [smem:[%s243]] 2
    %s245 = scalar_lea.smem [#allocation29], 6
    %246 = sst [smem:[%s245]] 1024
    %s247 = scalar_lea.smem [#allocation29], 7
    %248 = sst [smem:[%s247]] 64
    %s249 = scalar_lea.smem [#allocation29], 8
    %250 = sst [smem:[%s249]] 4
    %252 = dma.general %s9, 32768, %s231, [#allocation3], [#allocation28], [#allocation29], %s229, 0
    %v253 = vld [vmem:[#allocation4] sm:$0xff]
    %v254 = vpack.c.bf16 %v253, %v253
    %v255 = vld [vmem:[#allocation7] sm:$0xff]
    %v256 = vld [vmem:[#allocation7 + $0x8] sm:$0xff]
    %v257 = vld [vmem:[#allocation7 + $0x10] sm:$0xff]
    %v258 = vld [vmem:[#allocation7 + $0x18] sm:$0xff]
    %v259 = vld [vmem:[#allocation9] sm:$0xf]
    %v261 = vlaneseq
    %v262 = vshrl.u32 %v261, 7
    %v263 = vsub.s32 0, %v262
    %v264 = vrot.slane %v259, %v263
    %v265 = vlaneseq
    %v266 = vshrl.u32 %v265, 7
    %v267 = vsub.s32 1, %v266
    %v268 = vrot.slane %v259, %v267
    %v269 = vlaneseq
    %v270 = vshrl.u32 %v269, 7
    %v271 = vsub.s32 2, %v270
    %v272 = vrot.slane %v259, %v271
    %v273 = vlaneseq
    %v274 = vshrl.u32 %v273, 7
    %v275 = vsub.s32 3, %v274
    %v276 = vrot.slane %v259, %v275
    %v285 = vunpack.c.l.b16 %v255
    %v286 = vunpack.c.h.b16 %v255
    %v287 = vunpack.c.l.b16 %v256
    %v288 = vunpack.c.h.b16 %v256
    %v289 = vunpack.c.l.b16 %v257
    %v290 = vunpack.c.h.b16 %v257
    %v291 = vunpack.c.l.b16 %v258
    %v292 = vunpack.c.h.b16 %v258
    %v293 = vpack.c.b16 %v289, %v285
    %v294 = vpack.c.b16 %v290, %v286
    %v295 = vpack.c.b16 %v291, %v287
    %v296 = vpack.c.b16 %v292, %v288
    %vm301 = vcmask 130048
    %v303 = vsel %vm301, %v254, 0
    %305 = vmatprep.subr.bf16.mxu0 %v294
    %306 = vmatpush1.bf16.msra.mxu0 %v293
    %307 = vmatprep.subr.bf16.mxu0 0
    %308 = vmatpush1.bf16.msra.mxu0 0
    %309 = vmatprep.subr.bf16.mxu0 0
    %310 = vmatpush1.bf16.msra.mxu0 0
    %311 = vmatprep.subr.bf16.mxu0 0
    %312 = vmatpush1.bf16.msra.mxu0 0
    %313 = vmatprep.subr.bf16.mxu0 0
    %314 = vmatpush1.bf16.msra.mxu0 0
    %315 = vmatprep.subr.bf16.mxu0 0
    %316 = vmatpush1.bf16.msra.mxu0 0
    %317 = vmatprep.subr.bf16.mxu0 0
    %318 = vmatpush1.bf16.msra.mxu0 0
    %319 = vmatprep.subr.bf16.mxu0 0
    %320 = vmatpush1.bf16.msra.mxu0 0
    %321 = vmatprep.subr.bf16.mxu0 0
    %322 = vmatpush1.bf16.msra.mxu0 0
    %323 = vmatprep.subr.bf16.mxu0 0
    %324 = vmatpush1.bf16.msra.mxu0 0
    %325 = vmatprep.subr.bf16.mxu0 0
    %326 = vmatpush1.bf16.msra.mxu0 0
    %327 = vmatprep.subr.bf16.mxu0 0
    %328 = vmatpush1.bf16.msra.mxu0 0
    %329 = vmatprep.subr.bf16.mxu0 0
    %330 = vmatpush1.bf16.msra.mxu0 0
    %331 = vmatprep.subr.bf16.mxu0 0
    %332 = vmatpush1.bf16.msra.mxu0 0
    %333 = vmatprep.subr.bf16.mxu0 0
    %334 = vmatpush1.bf16.msra.mxu0 0
    %335 = vmatprep.subr.bf16.mxu0 0
    %336 = vmatpush1.bf16.msra.mxu0 0
    %337 = vmatprep.mubr.bf16.mxu0 0
    %338 = vmatmul.mubr.bf16.gmra.mrb[0].mxu0 %v303
    %v339 = vpop.f32.mrb[0].mxu0
    %v340 = vadd.f32 %v264, %v339
    %v341 = vpop.f32.mrb[0].mxu0
    %v342 = vadd.f32 %v268, %v341
    %v343 = vpop.f32.mrb[0].mxu0
    %v344 = vpop.f32.mrb[0].mxu0
    %345 = vdwg.mxu0
    %346 = vmatprep.subr.bf16.mxu0 %v296
    %347 = vmatpush1.bf16.msra.mxu0 %v295
    %348 = vmatprep.subr.bf16.mxu0 0
    %349 = vmatpush1.bf16.msra.mxu0 0
    %350 = vmatprep.subr.bf16.mxu0 0
    %351 = vmatpush1.bf16.msra.mxu0 0
    %352 = vmatprep.subr.bf16.mxu0 0
    %353 = vmatpush1.bf16.msra.mxu0 0
    %354 = vmatprep.subr.bf16.mxu0 0
    %355 = vmatpush1.bf16.msra.mxu0 0
    %356 = vmatprep.subr.bf16.mxu0 0
    %357 = vmatpush1.bf16.msra.mxu0 0
    %358 = vmatprep.subr.bf16.mxu0 0
    %359 = vmatpush1.bf16.msra.mxu0 0
    %360 = vmatprep.subr.bf16.mxu0 0
    %361 = vmatpush1.bf16.msra.mxu0 0
    %362 = vmatprep.subr.bf16.mxu0 0
    %363 = vmatpush1.bf16.msra.mxu0 0
    %364 = vmatprep.subr.bf16.mxu0 0
    %365 = vmatpush1.bf16.msra.mxu0 0
    %366 = vmatprep.subr.bf16.mxu0 0
    %367 = vmatpush1.bf16.msra.mxu0 0
    %368 = vmatprep.subr.bf16.mxu0 0
    %369 = vmatpush1.bf16.msra.mxu0 0
    %370 = vmatprep.subr.bf16.mxu0 0
    %371 = vmatpush1.bf16.msra.mxu0 0
    %372 = vmatprep.subr.bf16.mxu0 0
    %373 = vmatpush1.bf16.msra.mxu0 0
    %374 = vmatprep.subr.bf16.mxu0 0
    %375 = vmatpush1.bf16.msra.mxu0 0
    %376 = vmatprep.subr.bf16.mxu0 0
    %377 = vmatpush1.bf16.msra.mxu0 0
    %378 = vmatprep.mubr.bf16.mxu0 0
    %379 = vmatmul.mubr.bf16.gmra.mrb[0].mxu0 %v303
    %v380 = vpop.f32.mrb[0].mxu0
    %v381 = vadd.f32 %v272, %v380
    %v382 = vpop.f32.mrb[0].mxu0
    %v383 = vadd.f32 %v276, %v382
    %v384 = vpop.f32.mrb[0].mxu0
    %v385 = vpop.f32.mrb[0].mxu0
    %386 = vdwg.mxu0
    %vm387 = vcmp.gt.f32.partialorder %v340, 0.0
    %vm388 = vcmp.gt.f32.partialorder %v342, 0.0
    %vm389 = vcmp.gt.f32.partialorder %v381, 0.0
    %vm390 = vcmp.gt.f32.partialorder %v383, 0.0
    %v391 = vmul.f32 %v340, 0.2
    %v392 = vmul.f32 %v342, 0.2
    %v393 = vmul.f32 %v381, 0.2
    %v394 = vmul.f32 %v383, 0.2
    %v395 = vsel %vm387, %v340, %v391
    %v396 = vsel %vm388, %v342, %v392
    %v397 = vsel %vm389, %v381, %v393
    %v398 = vsel %vm390, %v383, %v394
    %v399 = vld [vmem:[#allocation10] sm:$0xf]
    %v400 = vld [vmem:[#allocation12] sm:$0xf]
    %v401 = vrot.slane %v395, 4
    %v402 = vadd.f32 %v395, %v401
    %v403 = vrot.slane %v402, 2
    %v404 = vadd.f32 %v402, %v403
    %v405 = vrot.slane %v404, 1
    %v406 = vadd.f32 %v404, %v405
    %v407 = vrot.slane %v396, 4
    %v408 = vadd.f32 %v396, %v407
    %v409 = vrot.slane %v408, 2
    %v410 = vadd.f32 %v408, %v409
    %v411 = vrot.slane %v410, 1
    %v412 = vadd.f32 %v410, %v411
    %v413 = vrot.slane %v397, 4
    %v414 = vadd.f32 %v397, %v413
    %v415 = vrot.slane %v414, 2
    %v416 = vadd.f32 %v414, %v415
    %v417 = vrot.slane %v416, 1
    %v418 = vadd.f32 %v416, %v417
    %v419 = vrot.slane %v398, 4
    %v420 = vadd.f32 %v398, %v419
    %v421 = vrot.slane %v420, 2
    %v422 = vadd.f32 %v420, %v421
    %v423 = vrot.slane %v422, 1
    %v424 = vadd.f32 %v422, %v423
    %v425 = vrcp.pop 8.0
    %v426 = vmul.f32 %v406, %v425
    %v427 = vmul.f32 %v412, %v425
    %v428 = vmul.f32 %v418, %v425
    %v429 = vmul.f32 %v424, %v425
    %v430 = vmul.f32 %v395, %v395
    %v431 = vmul.f32 %v396, %v396
    %v432 = vmul.f32 %v397, %v397
    %v433 = vmul.f32 %v398, %v398
    %v434 = vrot.slane %v430, 4
    %v435 = vadd.f32 %v430, %v434
    %v436 = vrot.slane %v435, 2
    %v437 = vadd.f32 %v435, %v436
    %v438 = vrot.slane %v437, 1
    %v439 = vadd.f32 %v437, %v438
    %v440 = vrot.slane %v431, 4
    %v441 = vadd.f32 %v431, %v440
    %v442 = vrot.slane %v441, 2
    %v443 = vadd.f32 %v441, %v442
    %v444 = vrot.slane %v443, 1
    %v445 = vadd.f32 %v443, %v444
    %v446 = vrot.slane %v432, 4
    %v447 = vadd.f32 %v432, %v446
    %v448 = vrot.slane %v447, 2
    %v449 = vadd.f32 %v447, %v448
    %v450 = vrot.slane %v449, 1
    %v451 = vadd.f32 %v449, %v450
    %v452 = vrot.slane %v433, 4
    %v453 = vadd.f32 %v433, %v452
    %v454 = vrot.slane %v453, 2
    %v455 = vadd.f32 %v453, %v454
    %v456 = vrot.slane %v455, 1
    %v457 = vadd.f32 %v455, %v456
    %v458 = vmul.f32 %v439, %v425
    %v459 = vmul.f32 %v445, %v425
    %v460 = vmul.f32 %v451, %v425
    %v461 = vmul.f32 %v457, %v425
    %v462 = vmul.f32 %v426, %v426
    %v463 = vmul.f32 %v427, %v427
    %v464 = vmul.f32 %v428, %v428
    %v465 = vmul.f32 %v429, %v429
    %v466 = vsub.f32 %v458, %v462
    %v467 = vsub.f32 %v459, %v463
    %v468 = vsub.f32 %v460, %v464
    %v469 = vsub.f32 %v461, %v465
    %v470 = vmax.f32 %v466, 0.0
    %v471 = vmax.f32 %v467, 0.0
    %v472 = vmax.f32 %v468, 0.0
    %v473 = vmax.f32 %v469, 0.0
    %v474 = vadd.f32 %v470, 1e-05
    %v475 = vadd.f32 %v471, 1e-05
    %v476 = vadd.f32 %v472, 1e-05
    %v477 = vadd.f32 %v473, 1e-05
    %v478 = vrsqrt.pop %v474
    %v479 = vrsqrt.pop %v475
    %v480 = vrsqrt.pop %v476
    %v481 = vrsqrt.pop %v477
    %v486 = vcombine.low %v478, %v479
    %v487 = vcombine.low %v480, %v481
    %v489 = vunpack.c.l.s4 1966171168
    %v490 = vunpack.c.0.s8 %v489
    %v491 = vlaneseq
    %v492 = vshrl.u32 %v491, 7
    %v493 = vsub.s32 %v490, %v492
    %v494 = vrot.slane %v486, %v493
    %v496 = vunpack.c.l.s4 1966171168
    %v497 = vunpack.c.0.s8 %v496
    %v498 = vlaneseq
    %v499 = vshrl.u32 %v498, 7
    %v500 = vsub.s32 %v497, %v499
    %v501 = vrot.slane %v487, %v500
    %v502 = vcombine.low %v494, %v501
    %v504 = vunpack.c.l.s4 1966171168
    %v505 = vunpack.c.0.s8 %v504
    %v506 = vlaneseq
    %v507 = vshrl.u32 %v506, 7
    %v508 = vsub.s32 %v505, %v507
    %v509 = vrot.slane %v502, %v508
    %v511 = vmul.f32 %v399, %v509
    %v513 = vlaneseq
    %v514 = vshrl.u32 %v513, 7
    %v515 = vsub.s32 0, %v514
    %v516 = vrot.slane %v511, %v515
    %v517 = vlaneseq
    %v518 = vshrl.u32 %v517, 7
    %v519 = vsub.s32 1, %v518
    %v520 = vrot.slane %v511, %v519
    %v521 = vlaneseq
    %v522 = vshrl.u32 %v521, 7
    %v523 = vsub.s32 2, %v522
    %v524 = vrot.slane %v511, %v523
    %v525 = vlaneseq
    %v526 = vshrl.u32 %v525, 7
    %v527 = vsub.s32 3, %v526
    %v528 = vrot.slane %v511, %v527
    %v533 = vmul.f32 %v395, %v516
    %v534 = vmul.f32 %v396, %v520
    %v535 = vmul.f32 %v397, %v524
    %v536 = vmul.f32 %v398, %v528
    %v537 = vmul.f32 %v426, %v516
    %v538 = vmul.f32 %v427, %v520
    %v539 = vmul.f32 %v428, %v524
    %v540 = vmul.f32 %v429, %v528
    %v545 = vcombine.low %v537, %v538
    %v546 = vcombine.low %v539, %v540
    %v548 = vunpack.c.l.s4 1966171168
    %v549 = vunpack.c.0.s8 %v548
    %v550 = vlaneseq
    %v551 = vshrl.u32 %v550, 7
    %v552 = vsub.s32 %v549, %v551
    %v553 = vrot.slane %v545, %v552
    %v555 = vunpack.c.l.s4 1966171168
    %v556 = vunpack.c.0.s8 %v555
    %v557 = vlaneseq
    %v558 = vshrl.u32 %v557, 7
    %v559 = vsub.s32 %v556, %v558
    %v560 = vrot.slane %v546, %v559
    %v561 = vcombine.low %v553, %v560
    %v563 = vunpack.c.l.s4 1966171168
    %v564 = vunpack.c.0.s8 %v563
    %v565 = vlaneseq
    %v566 = vshrl.u32 %v565, 7
    %v567 = vsub.s32 %v564, %v566
    %v568 = vrot.slane %v561, %v567
    %v570 = vsub.f32 %v400, %v568
    %v572 = vlaneseq
    %v573 = vshrl.u32 %v572, 7
    %v574 = vsub.s32 0, %v573
    %v575 = vrot.slane %v570, %v574
    %v576 = vlaneseq
    %v577 = vshrl.u32 %v576, 7
    %v578 = vsub.s32 1, %v577
    %v579 = vrot.slane %v570, %v578
    %v580 = vlaneseq
    %v581 = vshrl.u32 %v580, 7
    %v582 = vsub.s32 2, %v581
    %v583 = vrot.slane %v570, %v582
    %v584 = vlaneseq
    %v585 = vshrl.u32 %v584, 7
    %v586 = vsub.s32 3, %v585
    %v587 = vrot.slane %v570, %v586
    %v592 = vadd.f32 %v533, %v575
    %v593 = vadd.f32 %v534, %v579
    %v594 = vadd.f32 %v535, %v583
    %v595 = vadd.f32 %v536, %v587
    %v596 = vpack.c.bf16 %v592, %v592
    %v597 = vpack.c.bf16 %v593, %v593
    %v598 = vpack.c.bf16 %v594, %v594
    %v599 = vpack.c.bf16 %v595, %v595
    %v600 = vld [vmem:[#allocation13] sm:$0xff]
    %v601 = vld [vmem:[#allocation13 + $0x8] sm:$0xff]
    %v602 = vld [vmem:[#allocation13 + $0x10] sm:$0xff]
    %v603 = vld [vmem:[#allocation13 + $0x18] sm:$0xff]
    %v604 = vld [vmem:[#allocation13 + $0x20] sm:$0xff]
    %v605 = vld [vmem:[#allocation13 + $0x28] sm:$0xff]
    %v606 = vld [vmem:[#allocation13 + $0x30] sm:$0xff]
    %v607 = vld [vmem:[#allocation13 + $0x38] sm:$0xff]
    %v608 = vld [vmem:[#allocation13 + $0x40] sm:$0xff]
    %v609 = vld [vmem:[#allocation13 + $0x48] sm:$0xff]
    %v610 = vld [vmem:[#allocation13 + $0x50] sm:$0xff]
    %v611 = vld [vmem:[#allocation13 + $0x58] sm:$0xff]
    %v612 = vld [vmem:[#allocation13 + $0x60] sm:$0xff]
    %v613 = vld [vmem:[#allocation13 + $0x68] sm:$0xff]
    %v614 = vld [vmem:[#allocation13 + $0x70] sm:$0xff]
    %v615 = vld [vmem:[#allocation13 + $0x78] sm:$0xff]
    %v616 = vld [vmem:[#allocation13 + $0x80] sm:$0xff]
    %v617 = vld [vmem:[#allocation13 + $0x88] sm:$0xff]
    %v618 = vld [vmem:[#allocation13 + $0x90] sm:$0xff]
    %v619 = vld [vmem:[#allocation13 + $0x98] sm:$0xff]
    %v620 = vld [vmem:[#allocation13 + $0xa0] sm:$0xff]
    %v621 = vld [vmem:[#allocation13 + $0xa8] sm:$0xff]
    %v622 = vld [vmem:[#allocation13 + $0xb0] sm:$0xff]
    %v623 = vld [vmem:[#allocation13 + $0xb8] sm:$0xff]
    %v624 = vld [vmem:[#allocation13 + $0xc0] sm:$0xff]
    %v625 = vld [vmem:[#allocation13 + $0xc8] sm:$0xff]
    %v626 = vld [vmem:[#allocation13 + $0xd0] sm:$0xff]
    %v627 = vld [vmem:[#allocation13 + $0xd8] sm:$0xff]
    %v628 = vld [vmem:[#allocation13 + $0xe0] sm:$0xff]
    %v629 = vld [vmem:[#allocation13 + $0xe8] sm:$0xff]
    %v630 = vld [vmem:[#allocation13 + $0xf0] sm:$0xff]
    %v631 = vld [vmem:[#allocation13 + $0xf8] sm:$0xff]
    %v632 = vld [vmem:[#allocation13 + $0x100] sm:$0xff]
    %v633 = vld [vmem:[#allocation13 + $0x108] sm:$0xff]
    %v634 = vld [vmem:[#allocation13 + $0x110] sm:$0xff]
    %v635 = vld [vmem:[#allocation13 + $0x118] sm:$0xff]
    %v636 = vld [vmem:[#allocation13 + $0x120] sm:$0xff]
    %v637 = vld [vmem:[#allocation13 + $0x128] sm:$0xff]
    %v638 = vld [vmem:[#allocation13 + $0x130] sm:$0xff]
    %v639 = vld [vmem:[#allocation13 + $0x138] sm:$0xff]
    %v640 = vld [vmem:[#allocation13 + $0x140] sm:$0xff]
    %v641 = vld [vmem:[#allocation13 + $0x148] sm:$0xff]
    %v642 = vld [vmem:[#allocation13 + $0x150] sm:$0xff]
    %v643 = vld [vmem:[#allocation13 + $0x158] sm:$0xff]
    %v644 = vld [vmem:[#allocation13 + $0x160] sm:$0xff]
    %v645 = vld [vmem:[#allocation13 + $0x168] sm:$0xff]
    %v646 = vld [vmem:[#allocation13 + $0x170] sm:$0xff]
    %v647 = vld [vmem:[#allocation13 + $0x178] sm:$0xff]
    %v648 = vld [vmem:[#allocation13 + $0x180] sm:$0xff]
    %v649 = vld [vmem:[#allocation13 + $0x188] sm:$0xff]
    %v650 = vld [vmem:[#allocation13 + $0x190] sm:$0xff]
    %v651 = vld [vmem:[#allocation13 + $0x198] sm:$0xff]
    %v652 = vld [vmem:[#allocation13 + $0x1a0] sm:$0xff]
    %v653 = vld [vmem:[#allocation13 + $0x1a8] sm:$0xff]
    %v654 = vld [vmem:[#allocation13 + $0x1b0] sm:$0xff]
    %v655 = vld [vmem:[#allocation13 + $0x1b8] sm:$0xff]
    %v656 = vld [vmem:[#allocation13 + $0x1c0] sm:$0xff]
    %v657 = vld [vmem:[#allocation13 + $0x1c8] sm:$0xff]
    %v658 = vld [vmem:[#allocation13 + $0x1d0] sm:$0xff]
    %v659 = vld [vmem:[#allocation13 + $0x1d8] sm:$0xff]
    %v660 = vld [vmem:[#allocation13 + $0x1e0] sm:$0xff]
    %v661 = vld [vmem:[#allocation13 + $0x1e8] sm:$0xff]
    %v662 = vld [vmem:[#allocation13 + $0x1f0] sm:$0xff]
    %v663 = vld [vmem:[#allocation13 + $0x1f8] sm:$0xff]
    %v664 = vld [vmem:[#allocation13 + $0x200] sm:$0xff]
    %v665 = vld [vmem:[#allocation13 + $0x208] sm:$0xff]
    %v666 = vld [vmem:[#allocation13 + $0x210] sm:$0xff]
    %v667 = vld [vmem:[#allocation13 + $0x218] sm:$0xff]
    %v668 = vld [vmem:[#allocation13 + $0x220] sm:$0xff]
    %v669 = vld [vmem:[#allocation13 + $0x228] sm:$0xff]
    %v670 = vld [vmem:[#allocation13 + $0x230] sm:$0xff]
    %v671 = vld [vmem:[#allocation13 + $0x238] sm:$0xff]
    %v672 = vld [vmem:[#allocation13 + $0x240] sm:$0xff]
    %v673 = vld [vmem:[#allocation13 + $0x248] sm:$0xff]
    %v674 = vld [vmem:[#allocation13 + $0x250] sm:$0xff]
    %v675 = vld [vmem:[#allocation13 + $0x258] sm:$0xff]
    %v676 = vld [vmem:[#allocation13 + $0x260] sm:$0xff]
    %v677 = vld [vmem:[#allocation13 + $0x268] sm:$0xff]
    %v678 = vld [vmem:[#allocation13 + $0x270] sm:$0xff]
    %v679 = vld [vmem:[#allocation13 + $0x278] sm:$0xff]
    %v680 = vld [vmem:[#allocation13 + $0x280] sm:$0xff]
    %v681 = vld [vmem:[#allocation13 + $0x288] sm:$0xff]
    %v682 = vld [vmem:[#allocation13 + $0x290] sm:$0xff]
    %v683 = vld [vmem:[#allocation13 + $0x298] sm:$0xff]
    %v684 = vld [vmem:[#allocation13 + $0x2a0] sm:$0xff]
    %v685 = vld [vmem:[#allocation13 + $0x2a8] sm:$0xff]
    %v686 = vld [vmem:[#allocation13 + $0x2b0] sm:$0xff]
    %v687 = vld [vmem:[#allocation13 + $0x2b8] sm:$0xff]
    %v688 = vld [vmem:[#allocation13 + $0x2c0] sm:$0xff]
    %v689 = vld [vmem:[#allocation13 + $0x2c8] sm:$0xff]
    %v690 = vld [vmem:[#allocation13 + $0x2d0] sm:$0xff]
    %v691 = vld [vmem:[#allocation13 + $0x2d8] sm:$0xff]
    %v692 = vld [vmem:[#allocation13 + $0x2e0] sm:$0xff]
    %v693 = vld [vmem:[#allocation13 + $0x2e8] sm:$0xff]
    %v694 = vld [vmem:[#allocation13 + $0x2f0] sm:$0xff]
    %v695 = vld [vmem:[#allocation13 + $0x2f8] sm:$0xff]
    %v696 = vld [vmem:[#allocation13 + $0x300] sm:$0xff]
    %v697 = vld [vmem:[#allocation13 + $0x308] sm:$0xff]
    %v698 = vld [vmem:[#allocation13 + $0x310] sm:$0xff]
    %v699 = vld [vmem:[#allocation13 + $0x318] sm:$0xff]
    %v700 = vld [vmem:[#allocation13 + $0x320] sm:$0xff]
    %v701 = vld [vmem:[#allocation13 + $0x328] sm:$0xff]
    %v702 = vld [vmem:[#allocation13 + $0x330] sm:$0xff]
    %v703 = vld [vmem:[#allocation13 + $0x338] sm:$0xff]
    %v704 = vld [vmem:[#allocation13 + $0x340] sm:$0xff]
    %v705 = vld [vmem:[#allocation13 + $0x348] sm:$0xff]
    %v706 = vld [vmem:[#allocation13 + $0x350] sm:$0xff]
    %v707 = vld [vmem:[#allocation13 + $0x358] sm:$0xff]
    %v708 = vld [vmem:[#allocation13 + $0x360] sm:$0xff]
    %v709 = vld [vmem:[#allocation13 + $0x368] sm:$0xff]
    %v710 = vld [vmem:[#allocation13 + $0x370] sm:$0xff]
    %v711 = vld [vmem:[#allocation13 + $0x378] sm:$0xff]
    %v712 = vld [vmem:[#allocation13 + $0x380] sm:$0xff]
    %v713 = vld [vmem:[#allocation13 + $0x388] sm:$0xff]
    %v714 = vld [vmem:[#allocation13 + $0x390] sm:$0xff]
    %v715 = vld [vmem:[#allocation13 + $0x398] sm:$0xff]
    %v716 = vld [vmem:[#allocation13 + $0x3a0] sm:$0xff]
    %v717 = vld [vmem:[#allocation13 + $0x3a8] sm:$0xff]
    %v718 = vld [vmem:[#allocation13 + $0x3b0] sm:$0xff]
    %v719 = vld [vmem:[#allocation13 + $0x3b8] sm:$0xff]
    %v720 = vld [vmem:[#allocation13 + $0x3c0] sm:$0xff]
    %v721 = vld [vmem:[#allocation13 + $0x3c8] sm:$0xff]
    %v722 = vld [vmem:[#allocation13 + $0x3d0] sm:$0xff]
    %v723 = vld [vmem:[#allocation13 + $0x3d8] sm:$0xff]
    %v724 = vld [vmem:[#allocation13 + $0x3e0] sm:$0xff]
    %v725 = vld [vmem:[#allocation13 + $0x3e8] sm:$0xff]
    %v726 = vld [vmem:[#allocation13 + $0x3f0] sm:$0xff]
    %v727 = vld [vmem:[#allocation13 + $0x3f8] sm:$0xff]
    %v728 = vld [vmem:[#allocation13 + $0x400] sm:$0xff]
    %v729 = vld [vmem:[#allocation13 + $0x408] sm:$0xff]
    %v730 = vld [vmem:[#allocation13 + $0x410] sm:$0xff]
    %v731 = vld [vmem:[#allocation13 + $0x418] sm:$0xff]
    %v732 = vld [vmem:[#allocation13 + $0x420] sm:$0xff]
    %v733 = vld [vmem:[#allocation13 + $0x428] sm:$0xff]
    %v734 = vld [vmem:[#allocation13 + $0x430] sm:$0xff]
    %v735 = vld [vmem:[#allocation13 + $0x438] sm:$0xff]
    %v736 = vld [vmem:[#allocation13 + $0x440] sm:$0xff]
    %v737 = vld [vmem:[#allocation13 + $0x448] sm:$0xff]
    %v738 = vld [vmem:[#allocation13 + $0x450] sm:$0xff]
    %v739 = vld [vmem:[#allocation13 + $0x458] sm:$0xff]
    %v740 = vld [vmem:[#allocation13 + $0x460] sm:$0xff]
    %v741 = vld [vmem:[#allocation13 + $0x468] sm:$0xff]
    %v742 = vld [vmem:[#allocation13 + $0x470] sm:$0xff]
    %v743 = vld [vmem:[#allocation13 + $0x478] sm:$0xff]
    %v744 = vld [vmem:[#allocation13 + $0x480] sm:$0xff]
    %v745 = vld [vmem:[#allocation13 + $0x488] sm:$0xff]
    %v746 = vld [vmem:[#allocation13 + $0x490] sm:$0xff]
    %v747 = vld [vmem:[#allocation13 + $0x498] sm:$0xff]
    %v748 = vld [vmem:[#allocation13 + $0x4a0] sm:$0xff]
    %v749 = vld [vmem:[#allocation13 + $0x4a8] sm:$0xff]
    %v750 = vld [vmem:[#allocation13 + $0x4b0] sm:$0xff]
    %v751 = vld [vmem:[#allocation13 + $0x4b8] sm:$0xff]
    %v752 = vld [vmem:[#allocation13 + $0x4c0] sm:$0xff]
    %v753 = vld [vmem:[#allocation13 + $0x4c8] sm:$0xff]
    %v754 = vld [vmem:[#allocation13 + $0x4d0] sm:$0xff]
    %v755 = vld [vmem:[#allocation13 + $0x4d8] sm:$0xff]
    %v756 = vld [vmem:[#allocation13 + $0x4e0] sm:$0xff]
    %v757 = vld [vmem:[#allocation13 + $0x4e8] sm:$0xff]
    %v758 = vld [vmem:[#allocation13 + $0x4f0] sm:$0xff]
    %v759 = vld [vmem:[#allocation13 + $0x4f8] sm:$0xff]
    %v760 = vld [vmem:[#allocation13 + $0x500] sm:$0xff]
    %v761 = vld [vmem:[#allocation13 + $0x508] sm:$0xff]
    %v762 = vld [vmem:[#allocation13 + $0x510] sm:$0xff]
    %v763 = vld [vmem:[#allocation13 + $0x518] sm:$0xff]
    %v764 = vld [vmem:[#allocation13 + $0x520] sm:$0xff]
    %v765 = vld [vmem:[#allocation13 + $0x528] sm:$0xff]
    %v766 = vld [vmem:[#allocation13 + $0x530] sm:$0xff]
    %v767 = vld [vmem:[#allocation13 + $0x538] sm:$0xff]
    %v768 = vld [vmem:[#allocation13 + $0x540] sm:$0xff]
    %v769 = vld [vmem:[#allocation13 + $0x548] sm:$0xff]
    %v770 = vld [vmem:[#allocation13 + $0x550] sm:$0xff]
    %v771 = vld [vmem:[#allocation13 + $0x558] sm:$0xff]
    %v772 = vld [vmem:[#allocation13 + $0x560] sm:$0xff]
    %v773 = vld [vmem:[#allocation13 + $0x568] sm:$0xff]
    %v774 = vld [vmem:[#allocation13 + $0x570] sm:$0xff]
    %v775 = vld [vmem:[#allocation13 + $0x578] sm:$0xff]
    %v776 = vld [vmem:[#allocation13 + $0x580] sm:$0xff]
    %v777 = vld [vmem:[#allocation13 + $0x588] sm:$0xff]
    %v778 = vld [vmem:[#allocation13 + $0x590] sm:$0xff]
    %v779 = vld [vmem:[#allocation13 + $0x598] sm:$0xff]
    %v780 = vld [vmem:[#allocation13 + $0x5a0] sm:$0xff]
    %v781 = vld [vmem:[#allocation13 + $0x5a8] sm:$0xff]
    %v782 = vld [vmem:[#allocation13 + $0x5b0] sm:$0xff]
    %v783 = vld [vmem:[#allocation13 + $0x5b8] sm:$0xff]
    %v784 = vld [vmem:[#allocation13 + $0x5c0] sm:$0xff]
    %v785 = vld [vmem:[#allocation13 + $0x5c8] sm:$0xff]
    %v786 = vld [vmem:[#allocation13 + $0x5d0] sm:$0xff]
    %v787 = vld [vmem:[#allocation13 + $0x5d8] sm:$0xff]
    %v788 = vld [vmem:[#allocation13 + $0x5e0] sm:$0xff]
    %v789 = vld [vmem:[#allocation13 + $0x5e8] sm:$0xff]
    %v790 = vld [vmem:[#allocation13 + $0x5f0] sm:$0xff]
    %v791 = vld [vmem:[#allocation13 + $0x5f8] sm:$0xff]
    %v792 = vld [vmem:[#allocation13 + $0x600] sm:$0xff]
    %v793 = vld [vmem:[#allocation13 + $0x608] sm:$0xff]
    %v794 = vld [vmem:[#allocation13 + $0x610] sm:$0xff]
    %v795 = vld [vmem:[#allocation13 + $0x618] sm:$0xff]
    %v796 = vld [vmem:[#allocation13 + $0x620] sm:$0xff]
    %v797 = vld [vmem:[#allocation13 + $0x628] sm:$0xff]
    %v798 = vld [vmem:[#allocation13 + $0x630] sm:$0xff]
    %v799 = vld [vmem:[#allocation13 + $0x638] sm:$0xff]
    %v800 = vld [vmem:[#allocation13 + $0x640] sm:$0xff]
    %v801 = vld [vmem:[#allocation13 + $0x648] sm:$0xff]
    %v802 = vld [vmem:[#allocation13 + $0x650] sm:$0xff]
    %v803 = vld [vmem:[#allocation13 + $0x658] sm:$0xff]
    %v804 = vld [vmem:[#allocation13 + $0x660] sm:$0xff]
    %v805 = vld [vmem:[#allocation13 + $0x668] sm:$0xff]
    %v806 = vld [vmem:[#allocation13 + $0x670] sm:$0xff]
    %v807 = vld [vmem:[#allocation13 + $0x678] sm:$0xff]
    %v808 = vld [vmem:[#allocation13 + $0x680] sm:$0xff]
    %v809 = vld [vmem:[#allocation13 + $0x688] sm:$0xff]
    %v810 = vld [vmem:[#allocation13 + $0x690] sm:$0xff]
    %v811 = vld [vmem:[#allocation13 + $0x698] sm:$0xff]
    %v812 = vld [vmem:[#allocation13 + $0x6a0] sm:$0xff]
    %v813 = vld [vmem:[#allocation13 + $0x6a8] sm:$0xff]
    %v814 = vld [vmem:[#allocation13 + $0x6b0] sm:$0xff]
    %v815 = vld [vmem:[#allocation13 + $0x6b8] sm:$0xff]
    %v816 = vld [vmem:[#allocation13 + $0x6c0] sm:$0xff]
    %v817 = vld [vmem:[#allocation13 + $0x6c8] sm:$0xff]
    %v818 = vld [vmem:[#allocation13 + $0x6d0] sm:$0xff]
    %v819 = vld [vmem:[#allocation13 + $0x6d8] sm:$0xff]
    %v820 = vld [vmem:[#allocation13 + $0x6e0] sm:$0xff]
    %v821 = vld [vmem:[#allocation13 + $0x6e8] sm:$0xff]
    %v822 = vld [vmem:[#allocation13 + $0x6f0] sm:$0xff]
    %v823 = vld [vmem:[#allocation13 + $0x6f8] sm:$0xff]
    %v824 = vld [vmem:[#allocation13 + $0x700] sm:$0xff]
    %v825 = vld [vmem:[#allocation13 + $0x708] sm:$0xff]
    %v826 = vld [vmem:[#allocation13 + $0x710] sm:$0xff]
    %v827 = vld [vmem:[#allocation13 + $0x718] sm:$0xff]
    %v828 = vld [vmem:[#allocation13 + $0x720] sm:$0xff]
    %v829 = vld [vmem:[#allocation13 + $0x728] sm:$0xff]
    %v830 = vld [vmem:[#allocation13 + $0x730] sm:$0xff]
    %v831 = vld [vmem:[#allocation13 + $0x738] sm:$0xff]
    %v832 = vld [vmem:[#allocation13 + $0x740] sm:$0xff]
    %v833 = vld [vmem:[#allocation13 + $0x748] sm:$0xff]
    %v834 = vld [vmem:[#allocation13 + $0x750] sm:$0xff]
    %v835 = vld [vmem:[#allocation13 + $0x758] sm:$0xff]
    %v836 = vld [vmem:[#allocation13 + $0x760] sm:$0xff]
    %v837 = vld [vmem:[#allocation13 + $0x768] sm:$0xff]
    %v838 = vld [vmem:[#allocation13 + $0x770] sm:$0xff]
    %v839 = vld [vmem:[#allocation13 + $0x778] sm:$0xff]
    %v840 = vld [vmem:[#allocation13 + $0x780] sm:$0xff]
    %v841 = vld [vmem:[#allocation13 + $0x788] sm:$0xff]
    %v842 = vld [vmem:[#allocation13 + $0x790] sm:$0xff]
    %v843 = vld [vmem:[#allocation13 + $0x798] sm:$0xff]
    %v844 = vld [vmem:[#allocation13 + $0x7a0] sm:$0xff]
    %v845 = vld [vmem:[#allocation13 + $0x7a8] sm:$0xff]
    %v846 = vld [vmem:[#allocation13 + $0x7b0] sm:$0xff]
    %v847 = vld [vmem:[#allocation13 + $0x7b8] sm:$0xff]
    %v848 = vld [vmem:[#allocation13 + $0x7c0] sm:$0xff]
    %v849 = vld [vmem:[#allocation13 + $0x7c8] sm:$0xff]
    %v850 = vld [vmem:[#allocation13 + $0x7d0] sm:$0xff]
    %v851 = vld [vmem:[#allocation13 + $0x7d8] sm:$0xff]
    %v852 = vld [vmem:[#allocation13 + $0x7e0] sm:$0xff]
    %v853 = vld [vmem:[#allocation13 + $0x7e8] sm:$0xff]
    %v854 = vld [vmem:[#allocation13 + $0x7f0] sm:$0xff]
    %v855 = vld [vmem:[#allocation13 + $0x7f8] sm:$0xff]
    %v856 = vld [vmem:[#allocation15] sm:$0xff]
    %v858 = vlaneseq
    %v859 = vshrl.u32 %v858, 7
    %v860 = vsub.s32 0, %v859
    %v861 = vrot.slane %v856, %v860
    %v862 = vlaneseq
    %v863 = vshrl.u32 %v862, 7
    %v864 = vsub.s32 1, %v863
    %v865 = vrot.slane %v856, %v864
    %v866 = vlaneseq
    %v867 = vshrl.u32 %v866, 7
    %v868 = vsub.s32 2, %v867
    %v869 = vrot.slane %v856, %v868
    %v870 = vlaneseq
    %v871 = vshrl.u32 %v870, 7
    %v872 = vsub.s32 3, %v871
    %v873 = vrot.slane %v856, %v872
    %v874 = vlaneseq
    %v875 = vshrl.u32 %v874, 7
    %v876 = vsub.s32 4, %v875
    %v877 = vrot.slane %v856, %v876
    %v878 = vlaneseq
    %v879 = vshrl.u32 %v878, 7
    %v880 = vsub.s32 5, %v879
    %v881 = vrot.slane %v856, %v880
    %v882 = vlaneseq
    %v883 = vshrl.u32 %v882, 7
    %v884 = vsub.s32 6, %v883
    %v885 = vrot.slane %v856, %v884
    %v886 = vlaneseq
    %v887 = vshrl.u32 %v886, 7
    %v888 = vsub.s32 7, %v887
    %v889 = vrot.slane %v856, %v888
    %v1154 = vunpack.c.l.b16 %v600
    %v1155 = vunpack.c.h.b16 %v600
    %v1156 = vunpack.c.l.b16 %v601
    %v1157 = vunpack.c.h.b16 %v601
    %v1158 = vunpack.c.l.b16 %v602
    %v1159 = vunpack.c.h.b16 %v602
    %v1160 = vunpack.c.l.b16 %v603
    %v1161 = vunpack.c.h.b16 %v603
    %v1162 = vunpack.c.l.b16 %v604
    %v1163 = vunpack.c.h.b16 %v604
    %v1164 = vunpack.c.l.b16 %v605
    %v1165 = vunpack.c.h.b16 %v605
    %v1166 = vunpack.c.l.b16 %v606
    %v1167 = vunpack.c.h.b16 %v606
    %v1168 = vunpack.c.l.b16 %v607
    %v1169 = vunpack.c.h.b16 %v607
    %v1170 = vunpack.c.l.b16 %v608
    %v1171 = vunpack.c.h.b16 %v608
    %v1172 = vunpack.c.l.b16 %v609
    %v1173 = vunpack.c.h.b16 %v609
    %v1174 = vunpack.c.l.b16 %v610
    %v1175 = vunpack.c.h.b16 %v610
    %v1176 = vunpack.c.l.b16 %v611
    %v1177 = vunpack.c.h.b16 %v611
    %v1178 = vunpack.c.l.b16 %v612
    %v1179 = vunpack.c.h.b16 %v612
    %v1180 = vunpack.c.l.b16 %v613
    %v1181 = vunpack.c.h.b16 %v613
    %v1182 = vunpack.c.l.b16 %v614
    %v1183 = vunpack.c.h.b16 %v614
    %v1184 = vunpack.c.l.b16 %v615
    %v1185 = vunpack.c.h.b16 %v615
    %v1186 = vunpack.c.l.b16 %v616
    %v1187 = vunpack.c.h.b16 %v616
    %v1188 = vunpack.c.l.b16 %v617
    %v1189 = vunpack.c.h.b16 %v617
    %v1190 = vunpack.c.l.b16 %v618
    %v1191 = vunpack.c.h.b16 %v618
    %v1192 = vunpack.c.l.b16 %v619
    %v1193 = vunpack.c.h.b16 %v619
    %v1194 = vunpack.c.l.b16 %v620
    %v1195 = vunpack.c.h.b16 %v620
    %v1196 = vunpack.c.l.b16 %v621
    %v1197 = vunpack.c.h.b16 %v621
    %v1198 = vunpack.c.l.b16 %v622
    %v1199 = vunpack.c.h.b16 %v622
    %v1200 = vunpack.c.l.b16 %v623
    %v1201 = vunpack.c.h.b16 %v623
    %v1202 = vunpack.c.l.b16 %v624
    %v1203 = vunpack.c.h.b16 %v624
    %v1204 = vunpack.c.l.b16 %v625
    %v1205 = vunpack.c.h.b16 %v625
    %v1206 = vunpack.c.l.b16 %v626
    %v1207 = vunpack.c.h.b16 %v626
    %v1208 = vunpack.c.l.b16 %v627
    %v1209 = vunpack.c.h.b16 %v627
    %v1210 = vunpack.c.l.b16 %v628
    %v1211 = vunpack.c.h.b16 %v628
    %v1212 = vunpack.c.l.b16 %v629
    %v1213 = vunpack.c.h.b16 %v629
    %v1214 = vunpack.c.l.b16 %v630
    %v1215 = vunpack.c.h.b16 %v630
    %v1216 = vunpack.c.l.b16 %v631
    %v1217 = vunpack.c.h.b16 %v631
    %v1218 = vunpack.c.l.b16 %v632
    %v1219 = vunpack.c.h.b16 %v632
    %v1220 = vunpack.c.l.b16 %v633
    %v1221 = vunpack.c.h.b16 %v633
    %v1222 = vunpack.c.l.b16 %v634
    %v1223 = vunpack.c.h.b16 %v634
    %v1224 = vunpack.c.l.b16 %v635
    %v1225 = vunpack.c.h.b16 %v635
    %v1226 = vunpack.c.l.b16 %v636
    %v1227 = vunpack.c.h.b16 %v636
    %v1228 = vunpack.c.l.b16 %v637
    %v1229 = vunpack.c.h.b16 %v637
    %v1230 = vunpack.c.l.b16 %v638
    %v1231 = vunpack.c.h.b16 %v638
    %v1232 = vunpack.c.l.b16 %v639
    %v1233 = vunpack.c.h.b16 %v639
    %v1234 = vunpack.c.l.b16 %v640
    %v1235 = vunpack.c.h.b16 %v640
    %v1236 = vunpack.c.l.b16 %v641
    %v1237 = vunpack.c.h.b16 %v641
    %v1238 = vunpack.c.l.b16 %v642
    %v1239 = vunpack.c.h.b16 %v642
    %v1240 = vunpack.c.l.b16 %v643
    %v1241 = vunpack.c.h.b16 %v643
    %v1242 = vunpack.c.l.b16 %v644
    %v1243 = vunpack.c.h.b16 %v644
    %v1244 = vunpack.c.l.b16 %v645
    %v1245 = vunpack.c.h.b16 %v645
    %v1246 = vunpack.c.l.b16 %v646
    %v1247 = vunpack.c.h.b16 %v646
    %v1248 = vunpack.c.l.b16 %v647
    %v1249 = vunpack.c.h.b16 %v647
    %v1250 = vunpack.c.l.b16 %v648
    %v1251 = vunpack.c.h.b16 %v648
    %v1252 = vunpack.c.l.b16 %v649
    %v1253 = vunpack.c.h.b16 %v649
    %v1254 = vunpack.c.l.b16 %v650
    %v1255 = vunpack.c.h.b16 %v650
    %v1256 = vunpack.c.l.b16 %v651
    %v1257 = vunpack.c.h.b16 %v651
    %v1258 = vunpack.c.l.b16 %v652
    %v1259 = vunpack.c.h.b16 %v652
    %v1260 = vunpack.c.l.b16 %v653
    %v1261 = vunpack.c.h.b16 %v653
    %v1262 = vunpack.c.l.b16 %v654
    %v1263 = vunpack.c.h.b16 %v654
    %v1264 = vunpack.c.l.b16 %v655
    %v1265 = vunpack.c.h.b16 %v655
    %v1266 = vunpack.c.l.b16 %v656
    %v1267 = vunpack.c.h.b16 %v656
    %v1268 = vunpack.c.l.b16 %v657
    %v1269 = vunpack.c.h.b16 %v657
    %v1270 = vunpack.c.l.b16 %v658
    %v1271 = vunpack.c.h.b16 %v658
    %v1272 = vunpack.c.l.b16 %v659
    %v1273 = vunpack.c.h.b16 %v659
    %v1274 = vunpack.c.l.b16 %v660
    %v1275 = vunpack.c.h.b16 %v660
    %v1276 = vunpack.c.l.b16 %v661
    %v1277 = vunpack.c.h.b16 %v661
    %v1278 = vunpack.c.l.b16 %v662
    %v1279 = vunpack.c.h.b16 %v662
    %v1280 = vunpack.c.l.b16 %v663
    %v1281 = vunpack.c.h.b16 %v663
    %v1282 = vunpack.c.l.b16 %v664
    %v1283 = vunpack.c.h.b16 %v664
    %v1284 = vunpack.c.l.b16 %v665
    %v1285 = vunpack.c.h.b16 %v665
    %v1286 = vunpack.c.l.b16 %v666
    %v1287 = vunpack.c.h.b16 %v666
    %v1288 = vunpack.c.l.b16 %v667
    %v1289 = vunpack.c.h.b16 %v667
    %v1290 = vunpack.c.l.b16 %v668
    %v1291 = vunpack.c.h.b16 %v668
    %v1292 = vunpack.c.l.b16 %v669
    %v1293 = vunpack.c.h.b16 %v669
    %v1294 = vunpack.c.l.b16 %v670
    %v1295 = vunpack.c.h.b16 %v670
    %v1296 = vunpack.c.l.b16 %v671
    %v1297 = vunpack.c.h.b16 %v671
    %v1298 = vunpack.c.l.b16 %v672
    %v1299 = vunpack.c.h.b16 %v672
    %v1300 = vunpack.c.l.b16 %v673
    %v1301 = vunpack.c.h.b16 %v673
    %v1302 = vunpack.c.l.b16 %v674
    %v1303 = vunpack.c.h.b16 %v674
    %v1304 = vunpack.c.l.b16 %v675
    %v1305 = vunpack.c.h.b16 %v675
    %v1306 = vunpack.c.l.b16 %v676
    %v1307 = vunpack.c.h.b16 %v676
    %v1308 = vunpack.c.l.b16 %v677
    %v1309 = vunpack.c.h.b16 %v677
    %v1310 = vunpack.c.l.b16 %v678
    %v1311 = vunpack.c.h.b16 %v678
    %v1312 = vunpack.c.l.b16 %v679
    %v1313 = vunpack.c.h.b16 %v679
    %v1314 = vunpack.c.l.b16 %v680
    %v1315 = vunpack.c.h.b16 %v680
    %v1316 = vunpack.c.l.b16 %v681
    %v1317 = vunpack.c.h.b16 %v681
    %v1318 = vunpack.c.l.b16 %v682
    %v1319 = vunpack.c.h.b16 %v682
    %v1320 = vunpack.c.l.b16 %v683
    %v1321 = vunpack.c.h.b16 %v683
    %v1322 = vunpack.c.l.b16 %v684
    %v1323 = vunpack.c.h.b16 %v684
    %v1324 = vunpack.c.l.b16 %v685
    %v1325 = vunpack.c.h.b16 %v685
    %v1326 = vunpack.c.l.b16 %v686
    %v1327 = vunpack.c.h.b16 %v686
    %v1328 = vunpack.c.l.b16 %v687
    %v1329 = vunpack.c.h.b16 %v687
    %v1330 = vunpack.c.l.b16 %v688
    %v1331 = vunpack.c.h.b16 %v688
    %v1332 = vunpack.c.l.b16 %v689
    %v1333 = vunpack.c.h.b16 %v689
    %v1334 = vunpack.c.l.b16 %v690
    %v1335 = vunpack.c.h.b16 %v690
    %v1336 = vunpack.c.l.b16 %v691
    %v1337 = vunpack.c.h.b16 %v691
    %v1338 = vunpack.c.l.b16 %v692
    %v1339 = vunpack.c.h.b16 %v692
    %v1340 = vunpack.c.l.b16 %v693
    %v1341 = vunpack.c.h.b16 %v693
    %v1342 = vunpack.c.l.b16 %v694
    %v1343 = vunpack.c.h.b16 %v694
    %v1344 = vunpack.c.l.b16 %v695
    %v1345 = vunpack.c.h.b16 %v695
    %v1346 = vunpack.c.l.b16 %v696
    %v1347 = vunpack.c.h.b16 %v696
    %v1348 = vunpack.c.l.b16 %v697
    %v1349 = vunpack.c.h.b16 %v697
    %v1350 = vunpack.c.l.b16 %v698
    %v1351 = vunpack.c.h.b16 %v698
    %v1352 = vunpack.c.l.b16 %v699
    %v1353 = vunpack.c.h.b16 %v699
    %v1354 = vunpack.c.l.b16 %v700
    %v1355 = vunpack.c.h.b16 %v700
    %v1356 = vunpack.c.l.b16 %v701
    %v1357 = vunpack.c.h.b16 %v701
    %v1358 = vunpack.c.l.b16 %v702
    %v1359 = vunpack.c.h.b16 %v702
    %v1360 = vunpack.c.l.b16 %v703
    %v1361 = vunpack.c.h.b16 %v703
    %v1362 = vunpack.c.l.b16 %v704
    %v1363 = vunpack.c.h.b16 %v704
    %v1364 = vunpack.c.l.b16 %v705
    %v1365 = vunpack.c.h.b16 %v705
    %v1366 = vunpack.c.l.b16 %v706
    %v1367 = vunpack.c.h.b16 %v706
    %v1368 = vunpack.c.l.b16 %v707
    %v1369 = vunpack.c.h.b16 %v707
    %v1370 = vunpack.c.l.b16 %v708
    %v1371 = vunpack.c.h.b16 %v708
    %v1372 = vunpack.c.l.b16 %v709
    %v1373 = vunpack.c.h.b16 %v709
    %v1374 = vunpack.c.l.b16 %v710
    %v1375 = vunpack.c.h.b16 %v710
    %v1376 = vunpack.c.l.b16 %v711
    %v1377 = vunpack.c.h.b16 %v711
    %v1378 = vunpack.c.l.b16 %v712
    %v1379 = vunpack.c.h.b16 %v712
    %v1380 = vunpack.c.l.b16 %v713
    %v1381 = vunpack.c.h.b16 %v713
    %v1382 = vunpack.c.l.b16 %v714
    %v1383 = vunpack.c.h.b16 %v714
    %v1384 = vunpack.c.l.b16 %v715
    %v1385 = vunpack.c.h.b16 %v715
    %v1386 = vunpack.c.l.b16 %v716
    %v1387 = vunpack.c.h.b16 %v716
    %v1388 = vunpack.c.l.b16 %v717
    %v1389 = vunpack.c.h.b16 %v717
    %v1390 = vunpack.c.l.b16 %v718
    %v1391 = vunpack.c.h.b16 %v718
    %v1392 = vunpack.c.l.b16 %v719
    %v1393 = vunpack.c.h.b16 %v719
    %v1394 = vunpack.c.l.b16 %v720
    %v1395 = vunpack.c.h.b16 %v720
    %v1396 = vunpack.c.l.b16 %v721
    %v1397 = vunpack.c.h.b16 %v721
    %v1398 = vunpack.c.l.b16 %v722
    %v1399 = vunpack.c.h.b16 %v722
    %v1400 = vunpack.c.l.b16 %v723
    %v1401 = vunpack.c.h.b16 %v723
    %v1402 = vunpack.c.l.b16 %v724
    %v1403 = vunpack.c.h.b16 %v724
    %v1404 = vunpack.c.l.b16 %v725
    %v1405 = vunpack.c.h.b16 %v725
    %v1406 = vunpack.c.l.b16 %v726
    %v1407 = vunpack.c.h.b16 %v726
    %v1408 = vunpack.c.l.b16 %v727
    %v1409 = vunpack.c.h.b16 %v727
    %v1410 = vunpack.c.l.b16 %v728
    %v1411 = vunpack.c.h.b16 %v728
    %v1412 = vunpack.c.l.b16 %v729
    %v1413 = vunpack.c.h.b16 %v729
    %v1414 = vunpack.c.l.b16 %v730
    %v1415 = vunpack.c.h.b16 %v730
    %v1416 = vunpack.c.l.b16 %v731
    %v1417 = vunpack.c.h.b16 %v731
    %v1418 = vunpack.c.l.b16 %v732
    %v1419 = vunpack.c.h.b16 %v732
    %v1420 = vunpack.c.l.b16 %v733
    %v1421 = vunpack.c.h.b16 %v733
    %v1422 = vunpack.c.l.b16 %v734
    %v1423 = vunpack.c.h.b16 %v734
    %v1424 = vunpack.c.l.b16 %v735
    %v1425 = vunpack.c.h.b16 %v735
    %v1426 = vunpack.c.l.b16 %v736
    %v1427 = vunpack.c.h.b16 %v736
    %v1428 = vunpack.c.l.b16 %v737
    %v1429 = vunpack.c.h.b16 %v737
    %v1430 = vunpack.c.l.b16 %v738
    %v1431 = vunpack.c.h.b16 %v738
    %v1432 = vunpack.c.l.b16 %v739
    %v1433 = vunpack.c.h.b16 %v739
    %v1434 = vunpack.c.l.b16 %v740
    %v1435 = vunpack.c.h.b16 %v740
    %v1436 = vunpack.c.l.b16 %v741
    %v1437 = vunpack.c.h.b16 %v741
    %v1438 = vunpack.c.l.b16 %v742
    %v1439 = vunpack.c.h.b16 %v742
    %v1440 = vunpack.c.l.b16 %v743
    %v1441 = vunpack.c.h.b16 %v743
    %v1442 = vunpack.c.l.b16 %v744
    %v1443 = vunpack.c.h.b16 %v744
    %v1444 = vunpack.c.l.b16 %v745
    %v1445 = vunpack.c.h.b16 %v745
    %v1446 = vunpack.c.l.b16 %v746
    %v1447 = vunpack.c.h.b16 %v746
    %v1448 = vunpack.c.l.b16 %v747
    %v1449 = vunpack.c.h.b16 %v747
    %v1450 = vunpack.c.l.b16 %v748
    %v1451 = vunpack.c.h.b16 %v748
    %v1452 = vunpack.c.l.b16 %v749
    %v1453 = vunpack.c.h.b16 %v749
    %v1454 = vunpack.c.l.b16 %v750
    %v1455 = vunpack.c.h.b16 %v750
    %v1456 = vunpack.c.l.b16 %v751
    %v1457 = vunpack.c.h.b16 %v751
    %v1458 = vunpack.c.l.b16 %v752
    %v1459 = vunpack.c.h.b16 %v752
    %v1460 = vunpack.c.l.b16 %v753
    %v1461 = vunpack.c.h.b16 %v753
    %v1462 = vunpack.c.l.b16 %v754
    %v1463 = vunpack.c.h.b16 %v754
    %v1464 = vunpack.c.l.b16 %v755
    %v1465 = vunpack.c.h.b16 %v755
    %v1466 = vunpack.c.l.b16 %v756
    %v1467 = vunpack.c.h.b16 %v756
    %v1468 = vunpack.c.l.b16 %v757
    %v1469 = vunpack.c.h.b16 %v757
    %v1470 = vunpack.c.l.b16 %v758
    %v1471 = vunpack.c.h.b16 %v758
    %v1472 = vunpack.c.l.b16 %v759
    %v1473 = vunpack.c.h.b16 %v759
    %v1474 = vunpack.c.l.b16 %v760
    %v1475 = vunpack.c.h.b16 %v760
    %v1476 = vunpack.c.l.b16 %v761
    %v1477 = vunpack.c.h.b16 %v761
    %v1478 = vunpack.c.l.b16 %v762
    %v1479 = vunpack.c.h.b16 %v762
    %v1480 = vunpack.c.l.b16 %v763
    %v1481 = vunpack.c.h.b16 %v763
    %v1482 = vunpack.c.l.b16 %v764
    %v1483 = vunpack.c.h.b16 %v764
    %v1484 = vunpack.c.l.b16 %v765
    %v1485 = vunpack.c.h.b16 %v765
    %v1486 = vunpack.c.l.b16 %v766
    %v1487 = vunpack.c.h.b16 %v766
    %v1488 = vunpack.c.l.b16 %v767
    %v1489 = vunpack.c.h.b16 %v767
    %v1490 = vunpack.c.l.b16 %v768
    %v1491 = vunpack.c.h.b16 %v768
    %v1492 = vunpack.c.l.b16 %v769
    %v1493 = vunpack.c.h.b16 %v769
    %v1494 = vunpack.c.l.b16 %v770
    %v1495 = vunpack.c.h.b16 %v770
    %v1496 = vunpack.c.l.b16 %v771
    %v1497 = vunpack.c.h.b16 %v771
    %v1498 = vunpack.c.l.b16 %v772
    %v1499 = vunpack.c.h.b16 %v772
    %v1500 = vunpack.c.l.b16 %v773
    %v1501 = vunpack.c.h.b16 %v773
    %v1502 = vunpack.c.l.b16 %v774
    %v1503 = vunpack.c.h.b16 %v774
    %v1504 = vunpack.c.l.b16 %v775
    %v1505 = vunpack.c.h.b16 %v775
    %v1506 = vunpack.c.l.b16 %v776
    %v1507 = vunpack.c.h.b16 %v776
    %v1508 = vunpack.c.l.b16 %v777
    %v1509 = vunpack.c.h.b16 %v777
    %v1510 = vunpack.c.l.b16 %v778
    %v1511 = vunpack.c.h.b16 %v778
    %v1512 = vunpack.c.l.b16 %v779
    %v1513 = vunpack.c.h.b16 %v779
    %v1514 = vunpack.c.l.b16 %v780
    %v1515 = vunpack.c.h.b16 %v780
    %v1516 = vunpack.c.l.b16 %v781
    %v1517 = vunpack.c.h.b16 %v781
    %v1518 = vunpack.c.l.b16 %v782
    %v1519 = vunpack.c.h.b16 %v782
    %v1520 = vunpack.c.l.b16 %v783
    %v1521 = vunpack.c.h.b16 %v783
    %v1522 = vunpack.c.l.b16 %v784
    %v1523 = vunpack.c.h.b16 %v784
    %v1524 = vunpack.c.l.b16 %v785
    %v1525 = vunpack.c.h.b16 %v785
    %v1526 = vunpack.c.l.b16 %v786
    %v1527 = vunpack.c.h.b16 %v786
    %v1528 = vunpack.c.l.b16 %v787
    %v1529 = vunpack.c.h.b16 %v787
    %v1530 = vunpack.c.l.b16 %v788
    %v1531 = vunpack.c.h.b16 %v788
    %v1532 = vunpack.c.l.b16 %v789
    %v1533 = vunpack.c.h.b16 %v789
    %v1534 = vunpack.c.l.b16 %v790
    %v1535 = vunpack.c.h.b16 %v790
    %v1536 = vunpack.c.l.b16 %v791
    %v1537 = vunpack.c.h.b16 %v791
    %v1538 = vunpack.c.l.b16 %v792
    %v1539 = vunpack.c.h.b16 %v792
    %v1540 = vunpack.c.l.b16 %v793
    %v1541 = vunpack.c.h.b16 %v793
    %v1542 = vunpack.c.l.b16 %v794
    %v1543 = vunpack.c.h.b16 %v794
    %v1544 = vunpack.c.l.b16 %v795
    %v1545 = vunpack.c.h.b16 %v795
    %v1546 = vunpack.c.l.b16 %v796
    %v1547 = vunpack.c.h.b16 %v796
    %v1548 = vunpack.c.l.b16 %v797
    %v1549 = vunpack.c.h.b16 %v797
    %v1550 = vunpack.c.l.b16 %v798
    %v1551 = vunpack.c.h.b16 %v798
    %v1552 = vunpack.c.l.b16 %v799
    %v1553 = vunpack.c.h.b16 %v799
    %v1554 = vunpack.c.l.b16 %v800
    %v1555 = vunpack.c.h.b16 %v800
    %v1556 = vunpack.c.l.b16 %v801
    %v1557 = vunpack.c.h.b16 %v801
    %v1558 = vunpack.c.l.b16 %v802
    %v1559 = vunpack.c.h.b16 %v802
    %v1560 = vunpack.c.l.b16 %v803
    %v1561 = vunpack.c.h.b16 %v803
    %v1562 = vunpack.c.l.b16 %v804
    %v1563 = vunpack.c.h.b16 %v804
    %v1564 = vunpack.c.l.b16 %v805
    %v1565 = vunpack.c.h.b16 %v805
    %v1566 = vunpack.c.l.b16 %v806
    %v1567 = vunpack.c.h.b16 %v806
    %v1568 = vunpack.c.l.b16 %v807
    %v1569 = vunpack.c.h.b16 %v807
    %v1570 = vunpack.c.l.b16 %v808
    %v1571 = vunpack.c.h.b16 %v808
    %v1572 = vunpack.c.l.b16 %v809
    %v1573 = vunpack.c.h.b16 %v809
    %v1574 = vunpack.c.l.b16 %v810
    %v1575 = vunpack.c.h.b16 %v810
    %v1576 = vunpack.c.l.b16 %v811
    %v1577 = vunpack.c.h.b16 %v811
    %v1578 = vunpack.c.l.b16 %v812
    %v1579 = vunpack.c.h.b16 %v812
    %v1580 = vunpack.c.l.b16 %v813
    %v1581 = vunpack.c.h.b16 %v813
    %v1582 = vunpack.c.l.b16 %v814
    %v1583 = vunpack.c.h.b16 %v814
    %v1584 = vunpack.c.l.b16 %v815
    %v1585 = vunpack.c.h.b16 %v815
    %v1586 = vunpack.c.l.b16 %v816
    %v1587 = vunpack.c.h.b16 %v816
    %v1588 = vunpack.c.l.b16 %v817
    %v1589 = vunpack.c.h.b16 %v817
    %v1590 = vunpack.c.l.b16 %v818
    %v1591 = vunpack.c.h.b16 %v818
    %v1592 = vunpack.c.l.b16 %v819
    %v1593 = vunpack.c.h.b16 %v819
    %v1594 = vunpack.c.l.b16 %v820
    %v1595 = vunpack.c.h.b16 %v820
    %v1596 = vunpack.c.l.b16 %v821
    %v1597 = vunpack.c.h.b16 %v821
    %v1598 = vunpack.c.l.b16 %v822
    %v1599 = vunpack.c.h.b16 %v822
    %v1600 = vunpack.c.l.b16 %v823
    %v1601 = vunpack.c.h.b16 %v823
    %v1602 = vunpack.c.l.b16 %v824
    %v1603 = vunpack.c.h.b16 %v824
    %v1604 = vunpack.c.l.b16 %v825
    %v1605 = vunpack.c.h.b16 %v825
    %v1606 = vunpack.c.l.b16 %v826
    %v1607 = vunpack.c.h.b16 %v826
    %v1608 = vunpack.c.l.b16 %v827
    %v1609 = vunpack.c.h.b16 %v827
    %v1610 = vunpack.c.l.b16 %v828
    %v1611 = vunpack.c.h.b16 %v828
    %v1612 = vunpack.c.l.b16 %v829
    %v1613 = vunpack.c.h.b16 %v829
    %v1614 = vunpack.c.l.b16 %v830
    %v1615 = vunpack.c.h.b16 %v830
    %v1616 = vunpack.c.l.b16 %v831
    %v1617 = vunpack.c.h.b16 %v831
    %v1618 = vunpack.c.l.b16 %v832
    %v1619 = vunpack.c.h.b16 %v832
    %v1620 = vunpack.c.l.b16 %v833
    %v1621 = vunpack.c.h.b16 %v833
    %v1622 = vunpack.c.l.b16 %v834
    %v1623 = vunpack.c.h.b16 %v834
    %v1624 = vunpack.c.l.b16 %v835
    %v1625 = vunpack.c.h.b16 %v835
    %v1626 = vunpack.c.l.b16 %v836
    %v1627 = vunpack.c.h.b16 %v836
    %v1628 = vunpack.c.l.b16 %v837
    %v1629 = vunpack.c.h.b16 %v837
    %v1630 = vunpack.c.l.b16 %v838
    %v1631 = vunpack.c.h.b16 %v838
    %v1632 = vunpack.c.l.b16 %v839
    %v1633 = vunpack.c.h.b16 %v839
    %v1634 = vunpack.c.l.b16 %v840
    %v1635 = vunpack.c.h.b16 %v840
    %v1636 = vunpack.c.l.b16 %v841
    %v1637 = vunpack.c.h.b16 %v841
    %v1638 = vunpack.c.l.b16 %v842
    %v1639 = vunpack.c.h.b16 %v842
    %v1640 = vunpack.c.l.b16 %v843
    %v1641 = vunpack.c.h.b16 %v843
    %v1642 = vunpack.c.l.b16 %v844
    %v1643 = vunpack.c.h.b16 %v844
    %v1644 = vunpack.c.l.b16 %v845
    %v1645 = vunpack.c.h.b16 %v845
    %v1646 = vunpack.c.l.b16 %v846
    %v1647 = vunpack.c.h.b16 %v846
    %v1648 = vunpack.c.l.b16 %v847
    %v1649 = vunpack.c.h.b16 %v847
    %v1650 = vunpack.c.l.b16 %v848
    %v1651 = vunpack.c.h.b16 %v848
    %v1652 = vunpack.c.l.b16 %v849
    %v1653 = vunpack.c.h.b16 %v849
    %v1654 = vunpack.c.l.b16 %v850
    %v1655 = vunpack.c.h.b16 %v850
    %v1656 = vunpack.c.l.b16 %v851
    %v1657 = vunpack.c.h.b16 %v851
    %v1658 = vunpack.c.l.b16 %v852
    %v1659 = vunpack.c.h.b16 %v852
    %v1660 = vunpack.c.l.b16 %v853
    %v1661 = vunpack.c.h.b16 %v853
    %v1662 = vunpack.c.l.b16 %v854
    %v1663 = vunpack.c.h.b16 %v854
    %v1664 = vunpack.c.l.b16 %v855
    %v1665 = vunpack.c.h.b16 %v855
    %v1666 = vpack.c.b16 %v1162, %v1154
    %v1667 = vpack.c.b16 %v1163, %v1155
    %v1668 = vpack.c.b16 %v1164, %v1156
    %v1669 = vpack.c.b16 %v1165, %v1157
    %v1670 = vpack.c.b16 %v1166, %v1158
    %v1671 = vpack.c.b16 %v1167, %v1159
    %v1672 = vpack.c.b16 %v1168, %v1160
    %v1673 = vpack.c.b16 %v1169, %v1161
    %v1674 = vpack.c.b16 %v1178, %v1170
    %v1675 = vpack.c.b16 %v1179, %v1171
    %v1676 = vpack.c.b16 %v1180, %v1172
    %v1677 = vpack.c.b16 %v1181, %v1173
    %v1678 = vpack.c.b16 %v1182, %v1174
    %v1679 = vpack.c.b16 %v1183, %v1175
    %v1680 = vpack.c.b16 %v1184, %v1176
    %v1681 = vpack.c.b16 %v1185, %v1177
    %v1682 = vpack.c.b16 %v1194, %v1186
    %v1683 = vpack.c.b16 %v1195, %v1187
    %v1684 = vpack.c.b16 %v1196, %v1188
    %v1685 = vpack.c.b16 %v1197, %v1189
    %v1686 = vpack.c.b16 %v1198, %v1190
    %v1687 = vpack.c.b16 %v1199, %v1191
    %v1688 = vpack.c.b16 %v1200, %v1192
    %v1689 = vpack.c.b16 %v1201, %v1193
    %v1690 = vpack.c.b16 %v1210, %v1202
    %v1691 = vpack.c.b16 %v1211, %v1203
    %v1692 = vpack.c.b16 %v1212, %v1204
    %v1693 = vpack.c.b16 %v1213, %v1205
    %v1694 = vpack.c.b16 %v1214, %v1206
    %v1695 = vpack.c.b16 %v1215, %v1207
    %v1696 = vpack.c.b16 %v1216, %v1208
    %v1697 = vpack.c.b16 %v1217, %v1209
    %v1698 = vpack.c.b16 %v1226, %v1218
    %v1699 = vpack.c.b16 %v1227, %v1219
    %v1700 = vpack.c.b16 %v1228, %v1220
    %v1701 = vpack.c.b16 %v1229, %v1221
    %v1702 = vpack.c.b16 %v1230, %v1222
    %v1703 = vpack.c.b16 %v1231, %v1223
    %v1704 = vpack.c.b16 %v1232, %v1224
    %v1705 = vpack.c.b16 %v1233, %v1225
    %v1706 = vpack.c.b16 %v1242, %v1234
    %v1707 = vpack.c.b16 %v1243, %v1235
    %v1708 = vpack.c.b16 %v1244, %v1236
    %v1709 = vpack.c.b16 %v1245, %v1237
    %v1710 = vpack.c.b16 %v1246, %v1238
    %v1711 = vpack.c.b16 %v1247, %v1239
    %v1712 = vpack.c.b16 %v1248, %v1240
    %v1713 = vpack.c.b16 %v1249, %v1241
    %v1714 = vpack.c.b16 %v1258, %v1250
    %v1715 = vpack.c.b16 %v1259, %v1251
    %v1716 = vpack.c.b16 %v1260, %v1252
    %v1717 = vpack.c.b16 %v1261, %v1253
    %v1718 = vpack.c.b16 %v1262, %v1254
    %v1719 = vpack.c.b16 %v1263, %v1255
    %v1720 = vpack.c.b16 %v1264, %v1256
    %v1721 = vpack.c.b16 %v1265, %v1257
    %v1722 = vpack.c.b16 %v1274, %v1266
    %v1723 = vpack.c.b16 %v1275, %v1267
    %v1724 = vpack.c.b16 %v1276, %v1268
    %v1725 = vpack.c.b16 %v1277, %v1269
    %v1726 = vpack.c.b16 %v1278, %v1270
    %v1727 = vpack.c.b16 %v1279, %v1271
    %v1728 = vpack.c.b16 %v1280, %v1272
    %v1729 = vpack.c.b16 %v1281, %v1273
    %v1730 = vpack.c.b16 %v1290, %v1282
    %v1731 = vpack.c.b16 %v1291, %v1283
    %v1732 = vpack.c.b16 %v1292, %v1284
    %v1733 = vpack.c.b16 %v1293, %v1285
    %v1734 = vpack.c.b16 %v1294, %v1286
    %v1735 = vpack.c.b16 %v1295, %v1287
    %v1736 = vpack.c.b16 %v1296, %v1288
    %v1737 = vpack.c.b16 %v1297, %v1289
    %v1738 = vpack.c.b16 %v1306, %v1298
    %v1739 = vpack.c.b16 %v1307, %v1299
    %v1740 = vpack.c.b16 %v1308, %v1300
    %v1741 = vpack.c.b16 %v1309, %v1301
    %v1742 = vpack.c.b16 %v1310, %v1302
    %v1743 = vpack.c.b16 %v1311, %v1303
    %v1744 = vpack.c.b16 %v1312, %v1304
    %v1745 = vpack.c.b16 %v1313, %v1305
    %v1746 = vpack.c.b16 %v1322, %v1314
    %v1747 = vpack.c.b16 %v1323, %v1315
    %v1748 = vpack.c.b16 %v1324, %v1316
    %v1749 = vpack.c.b16 %v1325, %v1317
    %v1750 = vpack.c.b16 %v1326, %v1318
    %v1751 = vpack.c.b16 %v1327, %v1319
    %v1752 = vpack.c.b16 %v1328, %v1320
    %v1753 = vpack.c.b16 %v1329, %v1321
    %v1754 = vpack.c.b16 %v1338, %v1330
    %v1755 = vpack.c.b16 %v1339, %v1331
    %v1756 = vpack.c.b16 %v1340, %v1332
    %v1757 = vpack.c.b16 %v1341, %v1333
    %v1758 = vpack.c.b16 %v1342, %v1334
    %v1759 = vpack.c.b16 %v1343, %v1335
    %v1760 = vpack.c.b16 %v1344, %v1336
    %v1761 = vpack.c.b16 %v1345, %v1337
    %v1762 = vpack.c.b16 %v1354, %v1346
    %v1763 = vpack.c.b16 %v1355, %v1347
    %v1764 = vpack.c.b16 %v1356, %v1348
    %v1765 = vpack.c.b16 %v1357, %v1349
    %v1766 = vpack.c.b16 %v1358, %v1350
    %v1767 = vpack.c.b16 %v1359, %v1351
    %v1768 = vpack.c.b16 %v1360, %v1352
    %v1769 = vpack.c.b16 %v1361, %v1353
    %v1770 = vpack.c.b16 %v1370, %v1362
    %v1771 = vpack.c.b16 %v1371, %v1363
    %v1772 = vpack.c.b16 %v1372, %v1364
    %v1773 = vpack.c.b16 %v1373, %v1365
    %v1774 = vpack.c.b16 %v1374, %v1366
    %v1775 = vpack.c.b16 %v1375, %v1367
    %v1776 = vpack.c.b16 %v1376, %v1368
    %v1777 = vpack.c.b16 %v1377, %v1369
    %v1778 = vpack.c.b16 %v1386, %v1378
    %v1779 = vpack.c.b16 %v1387, %v1379
    %v1780 = vpack.c.b16 %v1388, %v1380
    %v1781 = vpack.c.b16 %v1389, %v1381
    %v1782 = vpack.c.b16 %v1390, %v1382
    %v1783 = vpack.c.b16 %v1391, %v1383
    %v1784 = vpack.c.b16 %v1392, %v1384
    %v1785 = vpack.c.b16 %v1393, %v1385
    %v1786 = vpack.c.b16 %v1402, %v1394
    %v1787 = vpack.c.b16 %v1403, %v1395
    %v1788 = vpack.c.b16 %v1404, %v1396
    %v1789 = vpack.c.b16 %v1405, %v1397
    %v1790 = vpack.c.b16 %v1406, %v1398
    %v1791 = vpack.c.b16 %v1407, %v1399
    %v1792 = vpack.c.b16 %v1408, %v1400
    %v1793 = vpack.c.b16 %v1409, %v1401
    %v1794 = vpack.c.b16 %v1418, %v1410
    %v1795 = vpack.c.b16 %v1419, %v1411
    %v1796 = vpack.c.b16 %v1420, %v1412
    %v1797 = vpack.c.b16 %v1421, %v1413
    %v1798 = vpack.c.b16 %v1422, %v1414
    %v1799 = vpack.c.b16 %v1423, %v1415
    %v1800 = vpack.c.b16 %v1424, %v1416
    %v1801 = vpack.c.b16 %v1425, %v1417
    %v1802 = vpack.c.b16 %v1434, %v1426
    %v1803 = vpack.c.b16 %v1435, %v1427
    %v1804 = vpack.c.b16 %v1436, %v1428
    %v1805 = vpack.c.b16 %v1437, %v1429
    %v1806 = vpack.c.b16 %v1438, %v1430
    %v1807 = vpack.c.b16 %v1439, %v1431
    %v1808 = vpack.c.b16 %v1440, %v1432
    %v1809 = vpack.c.b16 %v1441, %v1433
    %v1810 = vpack.c.b16 %v1450, %v1442
    %v1811 = vpack.c.b16 %v1451, %v1443
    %v1812 = vpack.c.b16 %v1452, %v1444
    %v1813 = vpack.c.b16 %v1453, %v1445
    %v1814 = vpack.c.b16 %v1454, %v1446
    %v1815 = vpack.c.b16 %v1455, %v1447
    %v1816 = vpack.c.b16 %v1456, %v1448
    %v1817 = vpack.c.b16 %v1457, %v1449
    %v1818 = vpack.c.b16 %v1466, %v1458
    %v1819 = vpack.c.b16 %v1467, %v1459
    %v1820 = vpack.c.b16 %v1468, %v1460
    %v1821 = vpack.c.b16 %v1469, %v1461
    %v1822 = vpack.c.b16 %v1470, %v1462
    %v1823 = vpack.c.b16 %v1471, %v1463
    %v1824 = vpack.c.b16 %v1472, %v1464
    %v1825 = vpack.c.b16 %v1473, %v1465
    %v1826 = vpack.c.b16 %v1482, %v1474
    %v1827 = vpack.c.b16 %v1483, %v1475
    %v1828 = vpack.c.b16 %v1484, %v1476
    %v1829 = vpack.c.b16 %v1485, %v1477
    %v1830 = vpack.c.b16 %v1486, %v1478
    %v1831 = vpack.c.b16 %v1487, %v1479
    %v1832 = vpack.c.b16 %v1488, %v1480
    %v1833 = vpack.c.b16 %v1489, %v1481
    %v1834 = vpack.c.b16 %v1498, %v1490
    %v1835 = vpack.c.b16 %v1499, %v1491
    %v1836 = vpack.c.b16 %v1500, %v1492
    %v1837 = vpack.c.b16 %v1501, %v1493
    %v1838 = vpack.c.b16 %v1502, %v1494
    %v1839 = vpack.c.b16 %v1503, %v1495
    %v1840 = vpack.c.b16 %v1504, %v1496
    %v1841 = vpack.c.b16 %v1505, %v1497
    %v1842 = vpack.c.b16 %v1514, %v1506
    %v1843 = vpack.c.b16 %v1515, %v1507
    %v1844 = vpack.c.b16 %v1516, %v1508
    %v1845 = vpack.c.b16 %v1517, %v1509
    %v1846 = vpack.c.b16 %v1518, %v1510
    %v1847 = vpack.c.b16 %v1519, %v1511
    %v1848 = vpack.c.b16 %v1520, %v1512
    %v1849 = vpack.c.b16 %v1521, %v1513
    %v1850 = vpack.c.b16 %v1530, %v1522
    %v1851 = vpack.c.b16 %v1531, %v1523
    %v1852 = vpack.c.b16 %v1532, %v1524
    %v1853 = vpack.c.b16 %v1533, %v1525
    %v1854 = vpack.c.b16 %v1534, %v1526
    %v1855 = vpack.c.b16 %v1535, %v1527
    %v1856 = vpack.c.b16 %v1536, %v1528
    %v1857 = vpack.c.b16 %v1537, %v1529
    %v1858 = vpack.c.b16 %v1546, %v1538
    %v1859 = vpack.c.b16 %v1547, %v1539
    %v1860 = vpack.c.b16 %v1548, %v1540
    %v1861 = vpack.c.b16 %v1549, %v1541
    %v1862 = vpack.c.b16 %v1550, %v1542
    %v1863 = vpack.c.b16 %v1551, %v1543
    %v1864 = vpack.c.b16 %v1552, %v1544
    %v1865 = vpack.c.b16 %v1553, %v1545
    %v1866 = vpack.c.b16 %v1562, %v1554
    %v1867 = vpack.c.b16 %v1563, %v1555
    %v1868 = vpack.c.b16 %v1564, %v1556
    %v1869 = vpack.c.b16 %v1565, %v1557
    %v1870 = vpack.c.b16 %v1566, %v1558
    %v1871 = vpack.c.b16 %v1567, %v1559
    %v1872 = vpack.c.b16 %v1568, %v1560
    %v1873 = vpack.c.b16 %v1569, %v1561
    %v1874 = vpack.c.b16 %v1578, %v1570
    %v1875 = vpack.c.b16 %v1579, %v1571
    %v1876 = vpack.c.b16 %v1580, %v1572
    %v1877 = vpack.c.b16 %v1581, %v1573
    %v1878 = vpack.c.b16 %v1582, %v1574
    %v1879 = vpack.c.b16 %v1583, %v1575
    %v1880 = vpack.c.b16 %v1584, %v1576
    %v1881 = vpack.c.b16 %v1585, %v1577
    %v1882 = vpack.c.b16 %v1594, %v1586
    %v1883 = vpack.c.b16 %v1595, %v1587
    %v1884 = vpack.c.b16 %v1596, %v1588
    %v1885 = vpack.c.b16 %v1597, %v1589
    %v1886 = vpack.c.b16 %v1598, %v1590
    %v1887 = vpack.c.b16 %v1599, %v1591
    %v1888 = vpack.c.b16 %v1600, %v1592
    %v1889 = vpack.c.b16 %v1601, %v1593
    %v1890 = vpack.c.b16 %v1610, %v1602
    %v1891 = vpack.c.b16 %v1611, %v1603
    %v1892 = vpack.c.b16 %v1612, %v1604
    %v1893 = vpack.c.b16 %v1613, %v1605
    %v1894 = vpack.c.b16 %v1614, %v1606
    %v1895 = vpack.c.b16 %v1615, %v1607
    %v1896 = vpack.c.b16 %v1616, %v1608
    %v1897 = vpack.c.b16 %v1617, %v1609
    %v1898 = vpack.c.b16 %v1626, %v1618
    %v1899 = vpack.c.b16 %v1627, %v1619
    %v1900 = vpack.c.b16 %v1628, %v1620
    %v1901 = vpack.c.b16 %v1629, %v1621
    %v1902 = vpack.c.b16 %v1630, %v1622
    %v1903 = vpack.c.b16 %v1631, %v1623
    %v1904 = vpack.c.b16 %v1632, %v1624
    %v1905 = vpack.c.b16 %v1633, %v1625
    %v1906 = vpack.c.b16 %v1642, %v1634
    %v1907 = vpack.c.b16 %v1643, %v1635
    %v1908 = vpack.c.b16 %v1644, %v1636
    %v1909 = vpack.c.b16 %v1645, %v1637
    %v1910 = vpack.c.b16 %v1646, %v1638
    %v1911 = vpack.c.b16 %v1647, %v1639
    %v1912 = vpack.c.b16 %v1648, %v1640
    %v1913 = vpack.c.b16 %v1649, %v1641
    %v1914 = vpack.c.b16 %v1658, %v1650
    %v1915 = vpack.c.b16 %v1659, %v1651
    %v1916 = vpack.c.b16 %v1660, %v1652
    %v1917 = vpack.c.b16 %v1661, %v1653
    %v1918 = vpack.c.b16 %v1662, %v1654
    %v1919 = vpack.c.b16 %v1663, %v1655
    %v1920 = vpack.c.b16 %v1664, %v1656
    %v1921 = vpack.c.b16 %v1665, %v1657
    %2178 = vmatprep.subr.bf16.mxu0 %v1667
    %2179 = vmatpush1.bf16.msra.mxu0 %v1666
    %2180 = vmatprep.subr.bf16.mxu0 %v1675
    %2181 = vmatpush1.bf16.msra.mxu0 %v1674
    %2182 = vmatprep.subr.bf16.mxu0 %v1683
    %2183 = vmatpush1.bf16.msra.mxu0 %v1682
    %2184 = vmatprep.subr.bf16.mxu0 %v1691
    %2185 = vmatpush1.bf16.msra.mxu0 %v1690
    %2186 = vmatprep.subr.bf16.mxu0 %v1699
    %2187 = vmatpush1.bf16.msra.mxu0 %v1698
    %2188 = vmatprep.subr.bf16.mxu0 %v1707
    %2189 = vmatpush1.bf16.msra.mxu0 %v1706
    %2190 = vmatprep.subr.bf16.mxu0 %v1715
    %2191 = vmatpush1.bf16.msra.mxu0 %v1714
    %2192 = vmatprep.subr.bf16.mxu0 %v1723
    %2193 = vmatpush1.bf16.msra.mxu0 %v1722
    %2194 = vmatprep.subr.bf16.mxu0 %v1731
    %2195 = vmatpush1.bf16.msra.mxu0 %v1730
    %2196 = vmatprep.subr.bf16.mxu0 %v1739
    %2197 = vmatpush1.bf16.msra.mxu0 %v1738
    %2198 = vmatprep.subr.bf16.mxu0 %v1747
    %2199 = vmatpush1.bf16.msra.mxu0 %v1746
    %2200 = vmatprep.subr.bf16.mxu0 %v1755
    %2201 = vmatpush1.bf16.msra.mxu0 %v1754
    %2202 = vmatprep.subr.bf16.mxu0 %v1763
    %2203 = vmatpush1.bf16.msra.mxu0 %v1762
    %2204 = vmatprep.subr.bf16.mxu0 %v1771
    %2205 = vmatpush1.bf16.msra.mxu0 %v1770
    %2206 = vmatprep.subr.bf16.mxu0 %v1779
    %2207 = vmatpush1.bf16.msra.mxu0 %v1778
    %2208 = vmatprep.subr.bf16.mxu0 %v1787
    %2209 = vmatpush1.bf16.msra.mxu0 %v1786
    %2210 = vmatprep.mubr.bf16.mxu0 %v597
    %2211 = vmatmul.mubr.bf16.gmra.mrb[0].mxu0 %v596
    %v2212 = vpop.f32.mrb[0].mxu0
    %v2213 = vadd.f32 %v861, %v2212
    %v2214 = vpop.f32.mrb[0].mxu0
    %v2215 = vadd.f32 %v865, %v2214
    %v2216 = vpop.f32.mrb[0].mxu0
    %v2217 = vpop.f32.mrb[0].mxu0
    %2218 = vdwg.mxu0
    %2219 = vmatprep.subr.bf16.mxu0 %v1795
    %2220 = vmatpush1.bf16.msra.mxu0 %v1794
    %2221 = vmatprep.subr.bf16.mxu0 %v1803
    %2222 = vmatpush1.bf16.msra.mxu0 %v1802
    %2223 = vmatprep.subr.bf16.mxu0 %v1811
    %2224 = vmatpush1.bf16.msra.mxu0 %v1810
    %2225 = vmatprep.subr.bf16.mxu0 %v1819
    %2226 = vmatpush1.bf16.msra.mxu0 %v1818
    %2227 = vmatprep.subr.bf16.mxu0 %v1827
    %2228 = vmatpush1.bf16.msra.mxu0 %v1826
    %2229 = vmatprep.subr.bf16.mxu0 %v1835
    %2230 = vmatpush1.bf16.msra.mxu0 %v1834
    %2231 = vmatprep.subr.bf16.mxu0 %v1843
    %2232 = vmatpush1.bf16.msra.mxu0 %v1842
    %2233 = vmatprep.subr.bf16.mxu0 %v1851
    %2234 = vmatpush1.bf16.msra.mxu0 %v1850
    %2235 = vmatprep.subr.bf16.mxu0 %v1859
    %2236 = vmatpush1.bf16.msra.mxu0 %v1858
    %2237 = vmatprep.subr.bf16.mxu0 %v1867
    %2238 = vmatpush1.bf16.msra.mxu0 %v1866
    %2239 = vmatprep.subr.bf16.mxu0 %v1875
    %2240 = vmatpush1.bf16.msra.mxu0 %v1874
    %2241 = vmatprep.subr.bf16.mxu0 %v1883
    %2242 = vmatpush1.bf16.msra.mxu0 %v1882
    %2243 = vmatprep.subr.bf16.mxu0 %v1891
    %2244 = vmatpush1.bf16.msra.mxu0 %v1890
    %2245 = vmatprep.subr.bf16.mxu0 %v1899
    %2246 = vmatpush1.bf16.msra.mxu0 %v1898
    %2247 = vmatprep.subr.bf16.mxu0 %v1907
    %2248 = vmatpush1.bf16.msra.mxu0 %v1906
    %2249 = vmatprep.subr.bf16.mxu0 %v1915
    %2250 = vmatpush1.bf16.msra.mxu0 %v1914
    %2251 = vmatprep.mubr.bf16.mxu0 %v599
    %2252 = vmatmul.mubr.bf16.gmra.mrb[0].mxu0 %v598
    %v2253 = vpop.f32.mrb[0].mxu0
    %v2254 = vadd.f32 %v2213, %v2253
    %v2255 = vpop.f32.mrb[0].mxu0
    %v2256 = vadd.f32 %v2215, %v2255
    %v2257 = vpop.f32.mrb[0].mxu0
    %v2258 = vpop.f32.mrb[0].mxu0
    %2259 = vdwg.mxu0
    %2260 = vmatprep.subr.bf16.mxu0 %v1669
    %2261 = vmatpush1.bf16.msra.mxu0 %v1668
    %2262 = vmatprep.subr.bf16.mxu0 %v1677
    %2263 = vmatpush1.bf16.msra.mxu0 %v1676
    %2264 = vmatprep.subr.bf16.mxu0 %v1685
    %2265 = vmatpush1.bf16.msra.mxu0 %v1684
    %2266 = vmatprep.subr.bf16.mxu0 %v1693
    %2267 = vmatpush1.bf16.msra.mxu0 %v1692
    %2268 = vmatprep.subr.bf16.mxu0 %v1701
    %2269 = vmatpush1.bf16.msra.mxu0 %v1700
    %2270 = vmatprep.subr.bf16.mxu0 %v1709
    %2271 = vmatpush1.bf16.msra.mxu0 %v1708
    %2272 = vmatprep.subr.bf16.mxu0 %v1717
    %2273 = vmatpush1.bf16.msra.mxu0 %v1716
    %2274 = vmatprep.subr.bf16.mxu0 %v1725
    %2275 = vmatpush1.bf16.msra.mxu0 %v1724
    %2276 = vmatprep.subr.bf16.mxu0 %v1733
    %2277 = vmatpush1.bf16.msra.mxu0 %v1732
    %2278 = vmatprep.subr.bf16.mxu0 %v1741
    %2279 = vmatpush1.bf16.msra.mxu0 %v1740
    %2280 = vmatprep.subr.bf16.mxu0 %v1749
    %2281 = vmatpush1.bf16.msra.mxu0 %v1748
    %2282 = vmatprep.subr.bf16.mxu0 %v1757
    %2283 = vmatpush1.bf16.msra.mxu0 %v1756
    %2284 = vmatprep.subr.bf16.mxu0 %v1765
    %2285 = vmatpush1.bf16.msra.mxu0 %v1764
    %2286 = vmatprep.subr.bf16.mxu0 %v1773
    %2287 = vmatpush1.bf16.msra.mxu0 %v1772
    %2288 = vmatprep.subr.bf16.mxu0 %v1781
    %2289 = vmatpush1.bf16.msra.mxu0 %v1780
    %2290 = vmatprep.subr.bf16.mxu0 %v1789
    %2291 = vmatpush1.bf16.msra.mxu0 %v1788
    %2292 = vmatprep.mubr.bf16.mxu0 %v597
    %2293 = vmatmul.mubr.bf16.gmra.mrb[0].mxu0 %v596
    %v2294 = vpop.f32.mrb[0].mxu0
    %v2295 = vadd.f32 %v869, %v2294
    %v2296 = vpop.f32.mrb[0].mxu0
    %v2297 = vadd.f32 %v873, %v2296
    %v2298 = vpop.f32.mrb[0].mxu0
    %v2299 = vpop.f32.mrb[0].mxu0
    %2300 = vdwg.mxu0
    %2301 = vmatprep.subr.bf16.mxu0 %v1797
    %2302 = vmatpush1.bf16.msra.mxu0 %v1796
    %2303 = vmatprep.subr.bf16.mxu0 %v1805
    %2304 = vmatpush1.bf16.msra.mxu0 %v1804
    %2305 = vmatprep.subr.bf16.mxu0 %v1813
    %2306 = vmatpush1.bf16.msra.mxu0 %v1812
    %2307 = vmatprep.subr.bf16.mxu0 %v1821
    %2308 = vmatpush1.bf16.msra.mxu0 %v1820
    %2309 = vmatprep.subr.bf16.mxu0 %v1829
    %2310 = vmatpush1.bf16.msra.mxu0 %v1828
    %2311 = vmatprep.subr.bf16.mxu0 %v1837
    %2312 = vmatpush1.bf16.msra.mxu0 %v1836
    %2313 = vmatprep.subr.bf16.mxu0 %v1845
    %2314 = vmatpush1.bf16.msra.mxu0 %v1844
    %2315 = vmatprep.subr.bf16.mxu0 %v1853
    %2316 = vmatpush1.bf16.msra.mxu0 %v1852
    %2317 = vmatprep.subr.bf16.mxu0 %v1861
    %2318 = vmatpush1.bf16.msra.mxu0 %v1860
    %2319 = vmatprep.subr.bf16.mxu0 %v1869
    %2320 = vmatpush1.bf16.msra.mxu0 %v1868
    %2321 = vmatprep.subr.bf16.mxu0 %v1877
    %2322 = vmatpush1.bf16.msra.mxu0 %v1876
    %2323 = vmatprep.subr.bf16.mxu0 %v1885
    %2324 = vmatpush1.bf16.msra.mxu0 %v1884
    %2325 = vmatprep.subr.bf16.mxu0 %v1893
    %2326 = vmatpush1.bf16.msra.mxu0 %v1892
    %2327 = vmatprep.subr.bf16.mxu0 %v1901
    %2328 = vmatpush1.bf16.msra.mxu0 %v1900
    %2329 = vmatprep.subr.bf16.mxu0 %v1909
    %2330 = vmatpush1.bf16.msra.mxu0 %v1908
    %2331 = vmatprep.subr.bf16.mxu0 %v1917
    %2332 = vmatpush1.bf16.msra.mxu0 %v1916
    %2333 = vmatprep.mubr.bf16.mxu0 %v599
    %2334 = vmatmul.mubr.bf16.gmra.mrb[0].mxu0 %v598
    %v2335 = vpop.f32.mrb[0].mxu0
    %v2336 = vadd.f32 %v2295, %v2335
    %v2337 = vpop.f32.mrb[0].mxu0
    %v2338 = vadd.f32 %v2297, %v2337
    %v2339 = vpop.f32.mrb[0].mxu0
    %v2340 = vpop.f32.mrb[0].mxu0
    %2341 = vdwg.mxu0
    %2342 = vmatprep.subr.bf16.mxu0 %v1671
    %2343 = vmatpush1.bf16.msra.mxu0 %v1670
    %2344 = vmatprep.subr.bf16.mxu0 %v1679
    %2345 = vmatpush1.bf16.msra.mxu0 %v1678
    %2346 = vmatprep.subr.bf16.mxu0 %v1687
    %2347 = vmatpush1.bf16.msra.mxu0 %v1686
    %2348 = vmatprep.subr.bf16.mxu0 %v1695
    %2349 = vmatpush1.bf16.msra.mxu0 %v1694
    %2350 = vmatprep.subr.bf16.mxu0 %v1703
    %2351 = vmatpush1.bf16.msra.mxu0 %v1702
    %2352 = vmatprep.subr.bf16.mxu0 %v1711
    %2353 = vmatpush1.bf16.msra.mxu0 %v1710
    %2354 = vmatprep.subr.bf16.mxu0 %v1719
    %2355 = vmatpush1.bf16.msra.mxu0 %v1718
    %2356 = vmatprep.subr.bf16.mxu0 %v1727
    %2357 = vmatpush1.bf16.msra.mxu0 %v1726
    %2358 = vmatprep.subr.bf16.mxu0 %v1735
    %2359 = vmatpush1.bf16.msra.mxu0 %v1734
    %2360 = vmatprep.subr.bf16.mxu0 %v1743
    %2361 = vmatpush1.bf16.msra.mxu0 %v1742
    %2362 = vmatprep.subr.bf16.mxu0 %v1751
    %2363 = vmatpush1.bf16.msra.mxu0 %v1750
    %2364 = vmatprep.subr.bf16.mxu0 %v1759
    %2365 = vmatpush1.bf16.msra.mxu0 %v1758
    %2366 = vmatprep.subr.bf16.mxu0 %v1767
    %2367 = vmatpush1.bf16.msra.mxu0 %v1766
    %2368 = vmatprep.subr.bf16.mxu0 %v1775
    %2369 = vmatpush1.bf16.msra.mxu0 %v1774
    %2370 = vmatprep.subr.bf16.mxu0 %v1783
    %2371 = vmatpush1.bf16.msra.mxu0 %v1782
    %2372 = vmatprep.subr.bf16.mxu0 %v1791
    %2373 = vmatpush1.bf16.msra.mxu0 %v1790
    %2374 = vmatprep.mubr.bf16.mxu0 %v597
    %2375 = vmatmul.mubr.bf16.gmra.mrb[0].mxu0 %v596
    %v2376 = vpop.f32.mrb[0].mxu0
    %v2377 = vadd.f32 %v877, %v2376
    %v2378 = vpop.f32.mrb[0].mxu0
    %v2379 = vadd.f32 %v881, %v2378
    %v2380 = vpop.f32.mrb[0].mxu0
    %v2381 = vpop.f32.mrb[0].mxu0
    %2382 = vdwg.mxu0
    %2383 = vmatprep.subr.bf16.mxu0 %v1799
    %2384 = vmatpush1.bf16.msra.mxu0 %v1798
    %2385 = vmatprep.subr.bf16.mxu0 %v1807
    %2386 = vmatpush1.bf16.msra.mxu0 %v1806
    %2387 = vmatprep.subr.bf16.mxu0 %v1815
    %2388 = vmatpush1.bf16.msra.mxu0 %v1814
    %2389 = vmatprep.subr.bf16.mxu0 %v1823
    %2390 = vmatpush1.bf16.msra.mxu0 %v1822
    %2391 = vmatprep.subr.bf16.mxu0 %v1831
    %2392 = vmatpush1.bf16.msra.mxu0 %v1830
    %2393 = vmatprep.subr.bf16.mxu0 %v1839
    %2394 = vmatpush1.bf16.msra.mxu0 %v1838
    %2395 = vmatprep.subr.bf16.mxu0 %v1847
    %2396 = vmatpush1.bf16.msra.mxu0 %v1846
    %2397 = vmatprep.subr.bf16.mxu0 %v1855
    %2398 = vmatpush1.bf16.msra.mxu0 %v1854
    %2399 = vmatprep.subr.bf16.mxu0 %v1863
    %2400 = vmatpush1.bf16.msra.mxu0 %v1862
    %2401 = vmatprep.subr.bf16.mxu0 %v1871
    %2402 = vmatpush1.bf16.msra.mxu0 %v1870
    %2403 = vmatprep.subr.bf16.mxu0 %v1879
    %2404 = vmatpush1.bf16.msra.mxu0 %v1878
    %2405 = vmatprep.subr.bf16.mxu0 %v1887
    %2406 = vmatpush1.bf16.msra.mxu0 %v1886
    %2407 = vmatprep.subr.bf16.mxu0 %v1895
    %2408 = vmatpush1.bf16.msra.mxu0 %v1894
    %2409 = vmatprep.subr.bf16.mxu0 %v1903
    %2410 = vmatpush1.bf16.msra.mxu0 %v1902
    %2411 = vmatprep.subr.bf16.mxu0 %v1911
    %2412 = vmatpush1.bf16.msra.mxu0 %v1910
    %2413 = vmatprep.subr.bf16.mxu0 %v1919
    %2414 = vmatpush1.bf16.msra.mxu0 %v1918
    %2415 = vmatprep.mubr.bf16.mxu0 %v599
    %2416 = vmatmul.mubr.bf16.gmra.mrb[0].mxu0 %v598
    %v2417 = vpop.f32.mrb[0].mxu0
    %v2418 = vadd.f32 %v2377, %v2417
    %v2419 = vpop.f32.mrb[0].mxu0
    %v2420 = vadd.f32 %v2379, %v2419
    %v2421 = vpop.f32.mrb[0].mxu0
    %v2422 = vpop.f32.mrb[0].mxu0
    %2423 = vdwg.mxu0
    %2424 = vmatprep.subr.bf16.mxu0 %v1673
    %2425 = vmatpush1.bf16.msra.mxu0 %v1672
    %2426 = vmatprep.subr.bf16.mxu0 %v1681
    %2427 = vmatpush1.bf16.msra.mxu0 %v1680
    %2428 = vmatprep.subr.bf16.mxu0 %v1689
    %2429 = vmatpush1.bf16.msra.mxu0 %v1688
    %2430 = vmatprep.subr.bf16.mxu0 %v1697
    %2431 = vmatpush1.bf16.msra.mxu0 %v1696
    %2432 = vmatprep.subr.bf16.mxu0 %v1705
    %2433 = vmatpush1.bf16.msra.mxu0 %v1704
    %2434 = vmatprep.subr.bf16.mxu0 %v1713
    %2435 = vmatpush1.bf16.msra.mxu0 %v1712
    %2436 = vmatprep.subr.bf16.mxu0 %v1721
    %2437 = vmatpush1.bf16.msra.mxu0 %v1720
    %2438 = vmatprep.subr.bf16.mxu0 %v1729
    %2439 = vmatpush1.bf16.msra.mxu0 %v1728
    %2440 = vmatprep.subr.bf16.mxu0 %v1737
    %2441 = vmatpush1.bf16.msra.mxu0 %v1736
    %2442 = vmatprep.subr.bf16.mxu0 %v1745
    %2443 = vmatpush1.bf16.msra.mxu0 %v1744
    %2444 = vmatprep.subr.bf16.mxu0 %v1753
    %2445 = vmatpush1.bf16.msra.mxu0 %v1752
    %2446 = vmatprep.subr.bf16.mxu0 %v1761
    %2447 = vmatpush1.bf16.msra.mxu0 %v1760
    %2448 = vmatprep.subr.bf16.mxu0 %v1769
    %2449 = vmatpush1.bf16.msra.mxu0 %v1768
    %2450 = vmatprep.subr.bf16.mxu0 %v1777
    %2451 = vmatpush1.bf16.msra.mxu0 %v1776
    %2452 = vmatprep.subr.bf16.mxu0 %v1785
    %2453 = vmatpush1.bf16.msra.mxu0 %v1784
    %2454 = vmatprep.subr.bf16.mxu0 %v1793
    %2455 = vmatpush1.bf16.msra.mxu0 %v1792
    %2456 = vmatprep.mubr.bf16.mxu0 %v597
    %2457 = vmatmul.mubr.bf16.gmra.mrb[0].mxu0 %v596
    %v2458 = vpop.f32.mrb[0].mxu0
    %v2459 = vadd.f32 %v885, %v2458
    %v2460 = vpop.f32.mrb[0].mxu0
    %v2461 = vadd.f32 %v889, %v2460
    %v2462 = vpop.f32.mrb[0].mxu0
    %v2463 = vpop.f32.mrb[0].mxu0
    %2464 = vdwg.mxu0
    %2465 = vmatprep.subr.bf16.mxu0 %v1801
    %2466 = vmatpush1.bf16.msra.mxu0 %v1800
    %2467 = vmatprep.subr.bf16.mxu0 %v1809
    %2468 = vmatpush1.bf16.msra.mxu0 %v1808
    %2469 = vmatprep.subr.bf16.mxu0 %v1817
    %2470 = vmatpush1.bf16.msra.mxu0 %v1816
    %2471 = vmatprep.subr.bf16.mxu0 %v1825
    %2472 = vmatpush1.bf16.msra.mxu0 %v1824
    %2473 = vmatprep.subr.bf16.mxu0 %v1833
    %2474 = vmatpush1.bf16.msra.mxu0 %v1832
    %2475 = vmatprep.subr.bf16.mxu0 %v1841
    %2476 = vmatpush1.bf16.msra.mxu0 %v1840
    %2477 = vmatprep.subr.bf16.mxu0 %v1849
    %2478 = vmatpush1.bf16.msra.mxu0 %v1848
    %2479 = vmatprep.subr.bf16.mxu0 %v1857
    %2480 = vmatpush1.bf16.msra.mxu0 %v1856
    %2481 = vmatprep.subr.bf16.mxu0 %v1865
    %2482 = vmatpush1.bf16.msra.mxu0 %v1864
    %2483 = vmatprep.subr.bf16.mxu0 %v1873
    %2484 = vmatpush1.bf16.msra.mxu0 %v1872
    %2485 = vmatprep.subr.bf16.mxu0 %v1881
    %2486 = vmatpush1.bf16.msra.mxu0 %v1880
    %2487 = vmatprep.subr.bf16.mxu0 %v1889
    %2488 = vmatpush1.bf16.msra.mxu0 %v1888
    %2489 = vmatprep.subr.bf16.mxu0 %v1897
    %2490 = vmatpush1.bf16.msra.mxu0 %v1896
    %2491 = vmatprep.subr.bf16.mxu0 %v1905
    %2492 = vmatpush1.bf16.msra.mxu0 %v1904
    %2493 = vmatprep.subr.bf16.mxu0 %v1913
    %2494 = vmatpush1.bf16.msra.mxu0 %v1912
    %2495 = vmatprep.subr.bf16.mxu0 %v1921
    %2496 = vmatpush1.bf16.msra.mxu0 %v1920
    %2497 = vmatprep.mubr.bf16.mxu0 %v599
    %2498 = vmatmul.mubr.bf16.gmra.mrb[0].mxu0 %v598
    %v2499 = vpop.f32.mrb[0].mxu0
    %v2500 = vadd.f32 %v2459, %v2499
    %v2501 = vpop.f32.mrb[0].mxu0
    %v2502 = vadd.f32 %v2461, %v2501
    %v2503 = vpop.f32.mrb[0].mxu0
    %v2504 = vpop.f32.mrb[0].mxu0
    %2505 = vdwg.mxu0
    %vm2506 = vcmp.gt.f32.partialorder %v2254, 0.0
    %vm2507 = vcmp.gt.f32.partialorder %v2256, 0.0
    %vm2508 = vcmp.gt.f32.partialorder %v2336, 0.0
    %vm2509 = vcmp.gt.f32.partialorder %v2338, 0.0
    %vm2510 = vcmp.gt.f32.partialorder %v2418, 0.0
    %vm2511 = vcmp.gt.f32.partialorder %v2420, 0.0
    %vm2512 = vcmp.gt.f32.partialorder %v2500, 0.0
    %vm2513 = vcmp.gt.f32.partialorder %v2502, 0.0
    %v2514 = vmul.f32 %v2254, 0.2
    %v2515 = vmul.f32 %v2256, 0.2
    %v2516 = vmul.f32 %v2336, 0.2
    %v2517 = vmul.f32 %v2338, 0.2
    %v2518 = vmul.f32 %v2418, 0.2
    %v2519 = vmul.f32 %v2420, 0.2
    %v2520 = vmul.f32 %v2500, 0.2
    %v2521 = vmul.f32 %v2502, 0.2
    %v2522 = vsel %vm2506, %v2254, %v2514
    %v2523 = vsel %vm2507, %v2256, %v2515
    %v2524 = vsel %vm2508, %v2336, %v2516
    %v2525 = vsel %vm2509, %v2338, %v2517
    %v2526 = vsel %vm2510, %v2418, %v2518
    %v2527 = vsel %vm2511, %v2420, %v2519
    %v2528 = vsel %vm2512, %v2500, %v2520
    %v2529 = vsel %vm2513, %v2502, %v2521
    %v2530 = vld [vmem:[#allocation16] sm:$0xff]
    %v2531 = vld [vmem:[#allocation18] sm:$0xff]
    %v2532 = vrot.slane %v2522, 4
    %v2533 = vadd.f32 %v2522, %v2532
    %v2534 = vrot.slane %v2533, 2
    %v2535 = vadd.f32 %v2533, %v2534
    %v2536 = vrot.slane %v2535, 1
    %v2537 = vadd.f32 %v2535, %v2536
    %v2538 = vrot.slane %v2523, 4
    %v2539 = vadd.f32 %v2523, %v2538
    %v2540 = vrot.slane %v2539, 2
    %v2541 = vadd.f32 %v2539, %v2540
    %v2542 = vrot.slane %v2541, 1
    %v2543 = vadd.f32 %v2541, %v2542
    %v2544 = vrot.slane %v2524, 4
    %v2545 = vadd.f32 %v2524, %v2544
    %v2546 = vrot.slane %v2545, 2
    %v2547 = vadd.f32 %v2545, %v2546
    %v2548 = vrot.slane %v2547, 1
    %v2549 = vadd.f32 %v2547, %v2548
    %v2550 = vrot.slane %v2525, 4
    %v2551 = vadd.f32 %v2525, %v2550
    %v2552 = vrot.slane %v2551, 2
    %v2553 = vadd.f32 %v2551, %v2552
    %v2554 = vrot.slane %v2553, 1
    %v2555 = vadd.f32 %v2553, %v2554
    %v2556 = vrot.slane %v2526, 4
    %v2557 = vadd.f32 %v2526, %v2556
    %v2558 = vrot.slane %v2557, 2
    %v2559 = vadd.f32 %v2557, %v2558
    %v2560 = vrot.slane %v2559, 1
    %v2561 = vadd.f32 %v2559, %v2560
    %v2562 = vrot.slane %v2527, 4
    %v2563 = vadd.f32 %v2527, %v2562
    %v2564 = vrot.slane %v2563, 2
    %v2565 = vadd.f32 %v2563, %v2564
    %v2566 = vrot.slane %v2565, 1
    %v2567 = vadd.f32 %v2565, %v2566
    %v2568 = vrot.slane %v2528, 4
    %v2569 = vadd.f32 %v2528, %v2568
    %v2570 = vrot.slane %v2569, 2
    %v2571 = vadd.f32 %v2569, %v2570
    %v2572 = vrot.slane %v2571, 1
    %v2573 = vadd.f32 %v2571, %v2572
    %v2574 = vrot.slane %v2529, 4
    %v2575 = vadd.f32 %v2529, %v2574
    %v2576 = vrot.slane %v2575, 2
    %v2577 = vadd.f32 %v2575, %v2576
    %v2578 = vrot.slane %v2577, 1
    %v2579 = vadd.f32 %v2577, %v2578
    %v2580 = vmul.f32 %v2537, %v425
    %v2581 = vmul.f32 %v2543, %v425
    %v2582 = vmul.f32 %v2549, %v425
    %v2583 = vmul.f32 %v2555, %v425
    %v2584 = vmul.f32 %v2561, %v425
    %v2585 = vmul.f32 %v2567, %v425
    %v2586 = vmul.f32 %v2573, %v425
    %v2587 = vmul.f32 %v2579, %v425
    %v2588 = vmul.f32 %v2522, %v2522
    %v2589 = vmul.f32 %v2523, %v2523
    %v2590 = vmul.f32 %v2524, %v2524
    %v2591 = vmul.f32 %v2525, %v2525
    %v2592 = vmul.f32 %v2526, %v2526
    %v2593 = vmul.f32 %v2527, %v2527
    %v2594 = vmul.f32 %v2528, %v2528
    %v2595 = vmul.f32 %v2529, %v2529
    %v2596 = vrot.slane %v2588, 4
    %v2597 = vadd.f32 %v2588, %v2596
    %v2598 = vrot.slane %v2597, 2
    %v2599 = vadd.f32 %v2597, %v2598
    %v2600 = vrot.slane %v2599, 1
    %v2601 = vadd.f32 %v2599, %v2600
    %v2602 = vrot.slane %v2589, 4
    %v2603 = vadd.f32 %v2589, %v2602
    %v2604 = vrot.slane %v2603, 2
    %v2605 = vadd.f32 %v2603, %v2604
    %v2606 = vrot.slane %v2605, 1
    %v2607 = vadd.f32 %v2605, %v2606
    %v2608 = vrot.slane %v2590, 4
    %v2609 = vadd.f32 %v2590, %v2608
    %v2610 = vrot.slane %v2609, 2
    %v2611 = vadd.f32 %v2609, %v2610
    %v2612 = vrot.slane %v2611, 1
    %v2613 = vadd.f32 %v2611, %v2612
    %v2614 = vrot.slane %v2591, 4
    %v2615 = vadd.f32 %v2591, %v2614
    %v2616 = vrot.slane %v2615, 2
    %v2617 = vadd.f32 %v2615, %v2616
    %v2618 = vrot.slane %v2617, 1
    %v2619 = vadd.f32 %v2617, %v2618
    %v2620 = vrot.slane %v2592, 4
    %v2621 = vadd.f32 %v2592, %v2620
    %v2622 = vrot.slane %v2621, 2
    %v2623 = vadd.f32 %v2621, %v2622
    %v2624 = vrot.slane %v2623, 1
    %v2625 = vadd.f32 %v2623, %v2624
    %v2626 = vrot.slane %v2593, 4
    %v2627 = vadd.f32 %v2593, %v2626
    %v2628 = vrot.slane %v2627, 2
    %v2629 = vadd.f32 %v2627, %v2628
    %v2630 = vrot.slane %v2629, 1
    %v2631 = vadd.f32 %v2629, %v2630
    %v2632 = vrot.slane %v2594, 4
    %v2633 = vadd.f32 %v2594, %v2632
    %v2634 = vrot.slane %v2633, 2
    %v2635 = vadd.f32 %v2633, %v2634
    %v2636 = vrot.slane %v2635, 1
    %v2637 = vadd.f32 %v2635, %v2636
    %v2638 = vrot.slane %v2595, 4
    %v2639 = vadd.f32 %v2595, %v2638
    %v2640 = vrot.slane %v2639, 2
    %v2641 = vadd.f32 %v2639, %v2640
    %v2642 = vrot.slane %v2641, 1
    %v2643 = vadd.f32 %v2641, %v2642
    %v2644 = vmul.f32 %v2601, %v425
    %v2645 = vmul.f32 %v2607, %v425
    %v2646 = vmul.f32 %v2613, %v425
    %v2647 = vmul.f32 %v2619, %v425
    %v2648 = vmul.f32 %v2625, %v425
    %v2649 = vmul.f32 %v2631, %v425
    %v2650 = vmul.f32 %v2637, %v425
    %v2651 = vmul.f32 %v2643, %v425
    %v2652 = vmul.f32 %v2580, %v2580
    %v2653 = vmul.f32 %v2581, %v2581
    %v2654 = vmul.f32 %v2582, %v2582
    %v2655 = vmul.f32 %v2583, %v2583
    %v2656 = vmul.f32 %v2584, %v2584
    %v2657 = vmul.f32 %v2585, %v2585
    %v2658 = vmul.f32 %v2586, %v2586
    %v2659 = vmul.f32 %v2587, %v2587
    %v2660 = vsub.f32 %v2644, %v2652
    %v2661 = vsub.f32 %v2645, %v2653
    %v2662 = vsub.f32 %v2646, %v2654
    %v2663 = vsub.f32 %v2647, %v2655
    %v2664 = vsub.f32 %v2648, %v2656
    %v2665 = vsub.f32 %v2649, %v2657
    %v2666 = vsub.f32 %v2650, %v2658
    %v2667 = vsub.f32 %v2651, %v2659
    %v2668 = vmax.f32 %v2660, 0.0
    %v2669 = vmax.f32 %v2661, 0.0
    %v2670 = vmax.f32 %v2662, 0.0
    %v2671 = vmax.f32 %v2663, 0.0
    %v2672 = vmax.f32 %v2664, 0.0
    %v2673 = vmax.f32 %v2665, 0.0
    %v2674 = vmax.f32 %v2666, 0.0
    %v2675 = vmax.f32 %v2667, 0.0
    %v2676 = vadd.f32 %v2668, 1e-05
    %v2677 = vadd.f32 %v2669, 1e-05
    %v2678 = vadd.f32 %v2670, 1e-05
    %v2679 = vadd.f32 %v2671, 1e-05
    %v2680 = vadd.f32 %v2672, 1e-05
    %v2681 = vadd.f32 %v2673, 1e-05
    %v2682 = vadd.f32 %v2674, 1e-05
    %v2683 = vadd.f32 %v2675, 1e-05
    %v2684 = vrsqrt.pop %v2676
    %v2685 = vrsqrt.pop %v2677
    %v2686 = vrsqrt.pop %v2678
    %v2687 = vrsqrt.pop %v2679
    %v2688 = vrsqrt.pop %v2680
    %v2689 = vrsqrt.pop %v2681
    %v2690 = vrsqrt.pop %v2682
    %v2691 = vrsqrt.pop %v2683
    %v2700 = vcombine.low %v2684, %v2685
    %v2701 = vcombine.low %v2686, %v2687
    %v2702 = vcombine.low %v2688, %v2689
    %v2703 = vcombine.low %v2690, %v2691
    %v2705 = vunpack.c.l.s4 1966171168
    %v2706 = vunpack.c.0.s8 %v2705
    %v2707 = vlaneseq
    %v2708 = vshrl.u32 %v2707, 7
    %v2709 = vsub.s32 %v2706, %v2708
    %v2710 = vrot.slane %v2700, %v2709
    %v2712 = vunpack.c.l.s4 1966171168
    %v2713 = vunpack.c.0.s8 %v2712
    %v2714 = vlaneseq
    %v2715 = vshrl.u32 %v2714, 7
    %v2716 = vsub.s32 %v2713, %v2715
    %v2717 = vrot.slane %v2701, %v2716
    %v2719 = vunpack.c.l.s4 1966171168
    %v2720 = vunpack.c.0.s8 %v2719
    %v2721 = vlaneseq
    %v2722 = vshrl.u32 %v2721, 7
    %v2723 = vsub.s32 %v2720, %v2722
    %v2724 = vrot.slane %v2702, %v2723
    %v2726 = vunpack.c.l.s4 1966171168
    %v2727 = vunpack.c.0.s8 %v2726
    %v2728 = vlaneseq
    %v2729 = vshrl.u32 %v2728, 7
    %v2730 = vsub.s32 %v2727, %v2729
    %v2731 = vrot.slane %v2703, %v2730
    %v2732 = vcombine.low %v2710, %v2717
    %v2733 = vcombine.low %v2724, %v2731
    %v2735 = vunpack.c.l.s4 1966171168
    %v2736 = vunpack.c.0.s8 %v2735
    %v2737 = vlaneseq
    %v2738 = vshrl.u32 %v2737, 7
    %v2739 = vsub.s32 %v2736, %v2738
    %v2740 = vrot.slane %v2732, %v2739
    %v2742 = vunpack.c.l.s4 1966171168
    %v2743 = vunpack.c.0.s8 %v2742
    %v2744 = vlaneseq
    %v2745 = vshrl.u32 %v2744, 7
    %v2746 = vsub.s32 %v2743, %v2745
    %v2747 = vrot.slane %v2733, %v2746
    %v2748 = vcombine.low %v2740, %v2747
    %v2750 = vmul.f32 %v2530, %v2748
    %v2752 = vlaneseq
    %v2753 = vshrl.u32 %v2752, 7
    %v2754 = vsub.s32 0, %v2753
    %v2755 = vrot.slane %v2750, %v2754
    %v2756 = vlaneseq
    %v2757 = vshrl.u32 %v2756, 7
    %v2758 = vsub.s32 1, %v2757
    %v2759 = vrot.slane %v2750, %v2758
    %v2760 = vlaneseq
    %v2761 = vshrl.u32 %v2760, 7
    %v2762 = vsub.s32 2, %v2761
    %v2763 = vrot.slane %v2750, %v2762
    %v2764 = vlaneseq
    %v2765 = vshrl.u32 %v2764, 7
    %v2766 = vsub.s32 3, %v2765
    %v2767 = vrot.slane %v2750, %v2766
    %v2768 = vlaneseq
    %v2769 = vshrl.u32 %v2768, 7
    %v2770 = vsub.s32 4, %v2769
    %v2771 = vrot.slane %v2750, %v2770
    %v2772 = vlaneseq
    %v2773 = vshrl.u32 %v2772, 7
    %v2774 = vsub.s32 5, %v2773
    %v2775 = vrot.slane %v2750, %v2774
    %v2776 = vlaneseq
    %v2777 = vshrl.u32 %v2776, 7
    %v2778 = vsub.s32 6, %v2777
    %v2779 = vrot.slane %v2750, %v2778
    %v2780 = vlaneseq
    %v2781 = vshrl.u32 %v2780, 7
    %v2782 = vsub.s32 7, %v2781
    %v2783 = vrot.slane %v2750, %v2782
    %v2792 = vmul.f32 %v2522, %v2755
    %v2793 = vmul.f32 %v2523, %v2759
    %v2794 = vmul.f32 %v2524, %v2763
    %v2795 = vmul.f32 %v2525, %v2767
    %v2796 = vmul.f32 %v2526, %v2771
    %v2797 = vmul.f32 %v2527, %v2775
    %v2798 = vmul.f32 %v2528, %v2779
    %v2799 = vmul.f32 %v2529, %v2783
    %v2800 = vmul.f32 %v2580, %v2755
    %v2801 = vmul.f32 %v2581, %v2759
    %v2802 = vmul.f32 %v2582, %v2763
    %v2803 = vmul.f32 %v2583, %v2767
    %v2804 = vmul.f32 %v2584, %v2771
    %v2805 = vmul.f32 %v2585, %v2775
    %v2806 = vmul.f32 %v2586, %v2779
    %v2807 = vmul.f32 %v2587, %v2783
    %v2816 = vcombine.low %v2800, %v2801
    %v2817 = vcombine.low %v2802, %v2803
    %v2818 = vcombine.low %v2804, %v2805
    %v2819 = vcombine.low %v2806, %v2807
    %v2821 = vunpack.c.l.s4 1966171168
    %v2822 = vunpack.c.0.s8 %v2821
    %v2823 = vlaneseq
    %v2824 = vshrl.u32 %v2823, 7
    %v2825 = vsub.s32 %v2822, %v2824
    %v2826 = vrot.slane %v2816, %v2825
    %v2828 = vunpack.c.l.s4 1966171168
    %v2829 = vunpack.c.0.s8 %v2828
    %v2830 = vlaneseq
    %v2831 = vshrl.u32 %v2830, 7
    %v2832 = vsub.s32 %v2829, %v2831
    %v2833 = vrot.slane %v2817, %v2832
    %v2835 = vunpack.c.l.s4 1966171168
    %v2836 = vunpack.c.0.s8 %v2835
    %v2837 = vlaneseq
    %v2838 = vshrl.u32 %v2837, 7
    %v2839 = vsub.s32 %v2836, %v2838
    %v2840 = vrot.slane %v2818, %v2839
    %v2842 = vunpack.c.l.s4 1966171168
    %v2843 = vunpack.c.0.s8 %v2842
    %v2844 = vlaneseq
    %v2845 = vshrl.u32 %v2844, 7
    %v2846 = vsub.s32 %v2843, %v2845
    %v2847 = vrot.slane %v2819, %v2846
    %v2848 = vcombine.low %v2826, %v2833
    %v2849 = vcombine.low %v2840, %v2847
    %v2851 = vunpack.c.l.s4 1966171168
    %v2852 = vunpack.c.0.s8 %v2851
    %v2853 = vlaneseq
    %v2854 = vshrl.u32 %v2853, 7
    %v2855 = vsub.s32 %v2852, %v2854
    %v2856 = vrot.slane %v2848, %v2855
    %v2858 = vunpack.c.l.s4 1966171168
    %v2859 = vunpack.c.0.s8 %v2858
    %v2860 = vlaneseq
    %v2861 = vshrl.u32 %v2860, 7
    %v2862 = vsub.s32 %v2859, %v2861
    %v2863 = vrot.slane %v2849, %v2862
    %v2864 = vcombine.low %v2856, %v2863
    %v2866 = vsub.f32 %v2531, %v2864
    %v2868 = vlaneseq
    %v2869 = vshrl.u32 %v2868, 7
    %v2870 = vsub.s32 0, %v2869
    %v2871 = vrot.slane %v2866, %v2870
    %v2872 = vlaneseq
    %v2873 = vshrl.u32 %v2872, 7
    %v2874 = vsub.s32 1, %v2873
    %v2875 = vrot.slane %v2866, %v2874
    %v2876 = vlaneseq
    %v2877 = vshrl.u32 %v2876, 7
    %v2878 = vsub.s32 2, %v2877
    %v2879 = vrot.slane %v2866, %v2878
    %v2880 = vlaneseq
    %v2881 = vshrl.u32 %v2880, 7
    %v2882 = vsub.s32 3, %v2881
    %v2883 = vrot.slane %v2866, %v2882
    %v2884 = vlaneseq
    %v2885 = vshrl.u32 %v2884, 7
    %v2886 = vsub.s32 4, %v2885
    %v2887 = vrot.slane %v2866, %v2886
    %v2888 = vlaneseq
    %v2889 = vshrl.u32 %v2888, 7
    %v2890 = vsub.s32 5, %v2889
    %v2891 = vrot.slane %v2866, %v2890
    %v2892 = vlaneseq
    %v2893 = vshrl.u32 %v2892, 7
    %v2894 = vsub.s32 6, %v2893
    %v2895 = vrot.slane %v2866, %v2894
    %v2896 = vlaneseq
    %v2897 = vshrl.u32 %v2896, 7
    %v2898 = vsub.s32 7, %v2897
    %v2899 = vrot.slane %v2866, %v2898
    %v2908 = vadd.f32 %v2792, %v2871
    %v2909 = vadd.f32 %v2793, %v2875
    %v2910 = vadd.f32 %v2794, %v2879
    %v2911 = vadd.f32 %v2795, %v2883
    %v2912 = vadd.f32 %v2796, %v2887
    %v2913 = vadd.f32 %v2797, %v2891
    %v2914 = vadd.f32 %v2798, %v2895
    %v2915 = vadd.f32 %v2799, %v2899
    %v2916 = vpack.c.bf16 %v2908, %v2908
    %v2917 = vpack.c.bf16 %v2909, %v2909
    %v2918 = vpack.c.bf16 %v2910, %v2910
    %v2919 = vpack.c.bf16 %v2911, %v2911
    %v2920 = vpack.c.bf16 %v2912, %v2912
    %v2921 = vpack.c.bf16 %v2913, %v2913
    %v2922 = vpack.c.bf16 %v2914, %v2914
    %v2923 = vpack.c.bf16 %v2915, %v2915
    %s2924 = smul.u32 4, 32
    %s2925 = smul.u32 %s2924, 16
    %s2926 = sshll.u32 %s2925, 4
    %2927 = dma.done [#allocation3], %s2926
    %s2928 = scalar_lea.hbm %s9, 32768
    %s2929 = scalar_lea.vmem [#allocation2], 2048
    %s2930 = scalar_lea.sflag [#allocation3], 1
    %s2932 = sshll.u32 1, 14
    %s2933 = sxor.u32 4294967295, %s2932
    %s2935 = sadd.s32 2, %s222
    %s2937 = sshll.u32 7, 26
    %s2938 = sxor.u32 4294967295, %s2937
    %s2939 = sand.u32 0, %s2938
    %s2940 = sshll.u32 %s2935, 26
    %s2941 = sor.u32 %s2939, %s2940
    %s2942 = sshll.u32 %s2929, 4
    %s2943 = int_to_ptr.vmem [resolvable:$true] %s2942
    %2946 = sst [smem:[#allocation31]] 2048
    %s2947 = scalar_lea.smem [#allocation31], 1
    %2948 = sst [smem:[%s2947]] 2048
    %s2949 = scalar_lea.smem [#allocation31], 2
    %2950 = sst [smem:[%s2949]] 16
    %s2951 = scalar_lea.smem [#allocation31], 3
    %2952 = sst [smem:[%s2951]] 64
    %s2953 = scalar_lea.smem [#allocation31], 4
    %2954 = sst [smem:[%s2953]] 128
    %s2955 = scalar_lea.smem [#allocation31], 5
    %2956 = sst [smem:[%s2955]] 2
    %s2957 = scalar_lea.smem [#allocation31], 6
    %2958 = sst [smem:[%s2957]] 1024
    %s2959 = scalar_lea.smem [#allocation31], 7
    %2960 = sst [smem:[%s2959]] 64
    %s2961 = scalar_lea.smem [#allocation31], 8
    %2962 = sst [smem:[%s2961]] 4
    %2964 = dma.general %s2928, 32768, %s2943, %s2930, [#allocation30], [#allocation31], %s2941, 0
    %v2965 = vld [vmem:[#allocation2] sm:$0xff]
    %v2966 = vld [vmem:[#allocation2 + $0x8] sm:$0xff]
    %v2967 = vld [vmem:[#allocation2 + $0x10] sm:$0xff]
    %v2968 = vld [vmem:[#allocation2 + $0x18] sm:$0xff]
    %v2969 = vld [vmem:[#allocation2 + $0x20] sm:$0xff]
    %v2970 = vld [vmem:[#allocation2 + $0x28] sm:$0xff]
    %v2971 = vld [vmem:[#allocation2 + $0x30] sm:$0xff]
    %v2972 = vld [vmem:[#allocation2 + $0x38] sm:$0xff]
    %v2973 = vld [vmem:[#allocation2 + $0x40] sm:$0xff]
    %v2974 = vld [vmem:[#allocation2 + $0x48] sm:$0xff]
    %v2975 = vld [vmem:[#allocation2 + $0x50] sm:$0xff]
    %v2976 = vld [vmem:[#allocation2 + $0x58] sm:$0xff]
    %v2977 = vld [vmem:[#allocation2 + $0x60] sm:$0xff]
    %v2978 = vld [vmem:[#allocation2 + $0x68] sm:$0xff]
    %v2979 = vld [vmem:[#allocation2 + $0x70] sm:$0xff]
    %v2980 = vld [vmem:[#allocation2 + $0x78] sm:$0xff]
    %v2981 = vld [vmem:[#allocation2 + $0x80] sm:$0xff]
    %v2982 = vld [vmem:[#allocation2 + $0x88] sm:$0xff]
    %v2983 = vld [vmem:[#allocation2 + $0x90] sm:$0xff]
    %v2984 = vld [vmem:[#allocation2 + $0x98] sm:$0xff]
    %v2985 = vld [vmem:[#allocation2 + $0xa0] sm:$0xff]
    %v2986 = vld [vmem:[#allocation2 + $0xa8] sm:$0xff]
    %v2987 = vld [vmem:[#allocation2 + $0xb0] sm:$0xff]
    %v2988 = vld [vmem:[#allocation2 + $0xb8] sm:$0xff]
    %v2989 = vld [vmem:[#allocation2 + $0xc0] sm:$0xff]
    %v2990 = vld [vmem:[#allocation2 + $0xc8] sm:$0xff]
    %v2991 = vld [vmem:[#allocation2 + $0xd0] sm:$0xff]
    %v2992 = vld [vmem:[#allocation2 + $0xd8] sm:$0xff]
    %v2993 = vld [vmem:[#allocation2 + $0xe0] sm:$0xff]
    %v2994 = vld [vmem:[#allocation2 + $0xe8] sm:$0xff]
    %v2995 = vld [vmem:[#allocation2 + $0xf0] sm:$0xff]
    %v2996 = vld [vmem:[#allocation2 + $0xf8] sm:$0xff]
    %v2997 = vld [vmem:[#allocation2 + $0x100] sm:$0xff]
    %v2998 = vld [vmem:[#allocation2 + $0x108] sm:$0xff]
    %v2999 = vld [vmem:[#allocation2 + $0x110] sm:$0xff]
    %v3000 = vld [vmem:[#allocation2 + $0x118] sm:$0xff]
    %v3001 = vld [vmem:[#allocation2 + $0x120] sm:$0xff]
    %v3002 = vld [vmem:[#allocation2 + $0x128] sm:$0xff]
    %v3003 = vld [vmem:[#allocation2 + $0x130] sm:$0xff]
    %v3004 = vld [vmem:[#allocation2 + $0x138] sm:$0xff]
    %v3005 = vld [vmem:[#allocation2 + $0x140] sm:$0xff]
    %v3006 = vld [vmem:[#allocation2 + $0x148] sm:$0xff]
    %v3007 = vld [vmem:[#allocation2 + $0x150] sm:$0xff]
    %v3008 = vld [vmem:[#allocation2 + $0x158] sm:$0xff]
    %v3009 = vld [vmem:[#allocation2 + $0x160] sm:$0xff]
    %v3010 = vld [vmem:[#allocation2 + $0x168] sm:$0xff]
    %v3011 = vld [vmem:[#allocation2 + $0x170] sm:$0xff]
    %v3012 = vld [vmem:[#allocation2 + $0x178] sm:$0xff]
    %v3013 = vld [vmem:[#allocation2 + $0x180] sm:$0xff]
    %v3014 = vld [vmem:[#allocation2 + $0x188] sm:$0xff]
    %v3015 = vld [vmem:[#allocation2 + $0x190] sm:$0xff]
    %v3016 = vld [vmem:[#allocation2 + $0x198] sm:$0xff]
    %v3017 = vld [vmem:[#allocation2 + $0x1a0] sm:$0xff]
    %v3018 = vld [vmem:[#allocation2 + $0x1a8] sm:$0xff]
    %v3019 = vld [vmem:[#allocation2 + $0x1b0] sm:$0xff]
    %v3020 = vld [vmem:[#allocation2 + $0x1b8] sm:$0xff]
    %v3021 = vld [vmem:[#allocation2 + $0x1c0] sm:$0xff]
    %v3022 = vld [vmem:[#allocation2 + $0x1c8] sm:$0xff]
    %v3023 = vld [vmem:[#allocation2 + $0x1d0] sm:$0xff]
    %v3024 = vld [vmem:[#allocation2 + $0x1d8] sm:$0xff]
    %v3025 = vld [vmem:[#allocation2 + $0x1e0] sm:$0xff]
    %v3026 = vld [vmem:[#allocation2 + $0x1e8] sm:$0xff]
    %v3027 = vld [vmem:[#allocation2 + $0x1f0] sm:$0xff]
    %v3028 = vld [vmem:[#allocation2 + $0x1f8] sm:$0xff]
    %v3029 = vld [vmem:[#allocation2 + $0x200] sm:$0xff]
    %v3030 = vld [vmem:[#allocation2 + $0x208] sm:$0xff]
    %v3031 = vld [vmem:[#allocation2 + $0x210] sm:$0xff]
    %v3032 = vld [vmem:[#allocation2 + $0x218] sm:$0xff]
    %v3033 = vld [vmem:[#allocation2 + $0x220] sm:$0xff]
    %v3034 = vld [vmem:[#allocation2 + $0x228] sm:$0xff]
    %v3035 = vld [vmem:[#allocation2 + $0x230] sm:$0xff]
    %v3036 = vld [vmem:[#allocation2 + $0x238] sm:$0xff]
    %v3037 = vld [vmem:[#allocation2 + $0x240] sm:$0xff]
    %v3038 = vld [vmem:[#allocation2 + $0x248] sm:$0xff]
    %v3039 = vld [vmem:[#allocation2 + $0x250] sm:$0xff]
    %v3040 = vld [vmem:[#allocation2 + $0x258] sm:$0xff]
    %v3041 = vld [vmem:[#allocation2 + $0x260] sm:$0xff]
    %v3042 = vld [vmem:[#allocation2 + $0x268] sm:$0xff]
    %v3043 = vld [vmem:[#allocation2 + $0x270] sm:$0xff]
    %v3044 = vld [vmem:[#allocation2 + $0x278] sm:$0xff]
    %v3045 = vld [vmem:[#allocation2 + $0x280] sm:$0xff]
    %v3046 = vld [vmem:[#allocation2 + $0x288] sm:$0xff]
    %v3047 = vld [vmem:[#allocation2 + $0x290] sm:$0xff]
    %v3048 = vld [vmem:[#allocation2 + $0x298] sm:$0xff]
    %v3049 = vld [vmem:[#allocation2 + $0x2a0] sm:$0xff]
    %v3050 = vld [vmem:[#allocation2 + $0x2a8] sm:$0xff]
    %v3051 = vld [vmem:[#allocation2 + $0x2b0] sm:$0xff]
    %v3052 = vld [vmem:[#allocation2 + $0x2b8] sm:$0xff]
    %v3053 = vld [vmem:[#allocation2 + $0x2c0] sm:$0xff]
    %v3054 = vld [vmem:[#allocation2 + $0x2c8] sm:$0xff]
    %v3055 = vld [vmem:[#allocation2 + $0x2d0] sm:$0xff]
    %v3056 = vld [vmem:[#allocation2 + $0x2d8] sm:$0xff]
    %v3057 = vld [vmem:[#allocation2 + $0x2e0] sm:$0xff]
    %v3058 = vld [vmem:[#allocation2 + $0x2e8] sm:$0xff]
    %v3059 = vld [vmem:[#allocation2 + $0x2f0] sm:$0xff]
    %v3060 = vld [vmem:[#allocation2 + $0x2f8] sm:$0xff]
    %v3061 = vld [vmem:[#allocation2 + $0x300] sm:$0xff]
    %v3062 = vld [vmem:[#allocation2 + $0x308] sm:$0xff]
    %v3063 = vld [vmem:[#allocation2 + $0x310] sm:$0xff]
    %v3064 = vld [vmem:[#allocation2 + $0x318] sm:$0xff]
    %v3065 = vld [vmem:[#allocation2 + $0x320] sm:$0xff]
    %v3066 = vld [vmem:[#allocation2 + $0x328] sm:$0xff]
    %v3067 = vld [vmem:[#allocation2 + $0x330] sm:$0xff]
    %v3068 = vld [vmem:[#allocation2 + $0x338] sm:$0xff]
    %v3069 = vld [vmem:[#allocation2 + $0x340] sm:$0xff]
    %v3070 = vld [vmem:[#allocation2 + $0x348] sm:$0xff]
    %v3071 = vld [vmem:[#allocation2 + $0x350] sm:$0xff]
    %v3072 = vld [vmem:[#allocation2 + $0x358] sm:$0xff]
    %v3073 = vld [vmem:[#allocation2 + $0x360] sm:$0xff]
    %v3074 = vld [vmem:[#allocation2 + $0x368] sm:$0xff]
    %v3075 = vld [vmem:[#allocation2 + $0x370] sm:$0xff]
    %v3076 = vld [vmem:[#allocation2 + $0x378] sm:$0xff]
    %v3077 = vld [vmem:[#allocation2 + $0x380] sm:$0xff]
    %v3078 = vld [vmem:[#allocation2 + $0x388] sm:$0xff]
    %v3079 = vld [vmem:[#allocation2 + $0x390] sm:$0xff]
    %v3080 = vld [vmem:[#allocation2 + $0x398] sm:$0xff]
    %v3081 = vld [vmem:[#allocation2 + $0x3a0] sm:$0xff]
    %v3082 = vld [vmem:[#allocation2 + $0x3a8] sm:$0xff]
    %v3083 = vld [vmem:[#allocation2 + $0x3b0] sm:$0xff]
    %v3084 = vld [vmem:[#allocation2 + $0x3b8] sm:$0xff]
    %v3085 = vld [vmem:[#allocation2 + $0x3c0] sm:$0xff]
    %v3086 = vld [vmem:[#allocation2 + $0x3c8] sm:$0xff]
    %v3087 = vld [vmem:[#allocation2 + $0x3d0] sm:$0xff]
    %v3088 = vld [vmem:[#allocation2 + $0x3d8] sm:$0xff]
    %v3089 = vld [vmem:[#allocation2 + $0x3e0] sm:$0xff]
    %v3090 = vld [vmem:[#allocation2 + $0x3e8] sm:$0xff]
    %v3091 = vld [vmem:[#allocation2 + $0x3f0] sm:$0xff]
    %v3092 = vld [vmem:[#allocation2 + $0x3f8] sm:$0xff]
    %v3093 = vld [vmem:[#allocation2 + $0x400] sm:$0xff]
    %v3094 = vld [vmem:[#allocation2 + $0x408] sm:$0xff]
    %v3095 = vld [vmem:[#allocation2 + $0x410] sm:$0xff]
    %v3096 = vld [vmem:[#allocation2 + $0x418] sm:$0xff]
    %v3097 = vld [vmem:[#allocation2 + $0x420] sm:$0xff]
    %v3098 = vld [vmem:[#allocation2 + $0x428] sm:$0xff]
    %v3099 = vld [vmem:[#allocation2 + $0x430] sm:$0xff]
    %v3100 = vld [vmem:[#allocation2 + $0x438] sm:$0xff]
    %v3101 = vld [vmem:[#allocation2 + $0x440] sm:$0xff]
    %v3102 = vld [vmem:[#allocation2 + $0x448] sm:$0xff]
    %v3103 = vld [vmem:[#allocation2 + $0x450] sm:$0xff]
    %v3104 = vld [vmem:[#allocation2 + $0x458] sm:$0xff]
    %v3105 = vld [vmem:[#allocation2 + $0x460] sm:$0xff]
    %v3106 = vld [vmem:[#allocation2 + $0x468] sm:$0xff]
    %v3107 = vld [vmem:[#allocation2 + $0x470] sm:$0xff]
    %v3108 = vld [vmem:[#allocation2 + $0x478] sm:$0xff]
    %v3109 = vld [vmem:[#allocation2 + $0x480] sm:$0xff]
    %v3110 = vld [vmem:[#allocation2 + $0x488] sm:$0xff]
    %v3111 = vld [vmem:[#allocation2 + $0x490] sm:$0xff]
    %v3112 = vld [vmem:[#allocation2 + $0x498] sm:$0xff]
    %v3113 = vld [vmem:[#allocation2 + $0x4a0] sm:$0xff]
    %v3114 = vld [vmem:[#allocation2 + $0x4a8] sm:$0xff]
    %v3115 = vld [vmem:[#allocation2 + $0x4b0] sm:$0xff]
    %v3116 = vld [vmem:[#allocation2 + $0x4b8] sm:$0xff]
    %v3117 = vld [vmem:[#allocation2 + $0x4c0] sm:$0xff]
    %v3118 = vld [vmem:[#allocation2 + $0x4c8] sm:$0xff]
    %v3119 = vld [vmem:[#allocation2 + $0x4d0] sm:$0xff]
    %v3120 = vld [vmem:[#allocation2 + $0x4d8] sm:$0xff]
    %v3121 = vld [vmem:[#allocation2 + $0x4e0] sm:$0xff]
    %v3122 = vld [vmem:[#allocation2 + $0x4e8] sm:$0xff]
    %v3123 = vld [vmem:[#allocation2 + $0x4f0] sm:$0xff]
    %v3124 = vld [vmem:[#allocation2 + $0x4f8] sm:$0xff]
    %v3125 = vld [vmem:[#allocation2 + $0x500] sm:$0xff]
    %v3126 = vld [vmem:[#allocation2 + $0x508] sm:$0xff]
    %v3127 = vld [vmem:[#allocation2 + $0x510] sm:$0xff]
    %v3128 = vld [vmem:[#allocation2 + $0x518] sm:$0xff]
    %v3129 = vld [vmem:[#allocation2 + $0x520] sm:$0xff]
    %v3130 = vld [vmem:[#allocation2 + $0x528] sm:$0xff]
    %v3131 = vld [vmem:[#allocation2 + $0x530] sm:$0xff]
    %v3132 = vld [vmem:[#allocation2 + $0x538] sm:$0xff]
    %v3133 = vld [vmem:[#allocation2 + $0x540] sm:$0xff]
    %v3134 = vld [vmem:[#allocation2 + $0x548] sm:$0xff]
    %v3135 = vld [vmem:[#allocation2 + $0x550] sm:$0xff]
    %v3136 = vld [vmem:[#allocation2 + $0x558] sm:$0xff]
    %v3137 = vld [vmem:[#allocation2 + $0x560] sm:$0xff]
    %v3138 = vld [vmem:[#allocation2 + $0x568] sm:$0xff]
    %v3139 = vld [vmem:[#allocation2 + $0x570] sm:$0xff]
    %v3140 = vld [vmem:[#allocation2 + $0x578] sm:$0xff]
    %v3141 = vld [vmem:[#allocation2 + $0x580] sm:$0xff]
    %v3142 = vld [vmem:[#allocation2 + $0x588] sm:$0xff]
    %v3143 = vld [vmem:[#allocation2 + $0x590] sm:$0xff]
    %v3144 = vld [vmem:[#allocation2 + $0x598] sm:$0xff]
    %v3145 = vld [vmem:[#allocation2 + $0x5a0] sm:$0xff]
    %v3146 = vld [vmem:[#allocation2 + $0x5a8] sm:$0xff]
    %v3147 = vld [vmem:[#allocation2 + $0x5b0] sm:$0xff]
    %v3148 = vld [vmem:[#allocation2 + $0x5b8] sm:$0xff]
    %v3149 = vld [vmem:[#allocation2 + $0x5c0] sm:$0xff]
    %v3150 = vld [vmem:[#allocation2 + $0x5c8] sm:$0xff]
    %v3151 = vld [vmem:[#allocation2 + $0x5d0] sm:$0xff]
    %v3152 = vld [vmem:[#allocation2 + $0x5d8] sm:$0xff]
    %v3153 = vld [vmem:[#allocation2 + $0x5e0] sm:$0xff]
    %v3154 = vld [vmem:[#allocation2 + $0x5e8] sm:$0xff]
    %v3155 = vld [vmem:[#allocation2 + $0x5f0] sm:$0xff]
    %v3156 = vld [vmem:[#allocation2 + $0x5f8] sm:$0xff]
    %v3157 = vld [vmem:[#allocation2 + $0x600] sm:$0xff]
    %v3158 = vld [vmem:[#allocation2 + $0x608] sm:$0xff]
    %v3159 = vld [vmem:[#allocation2 + $0x610] sm:$0xff]
    %v3160 = vld [vmem:[#allocation2 + $0x618] sm:$0xff]
    %v3161 = vld [vmem:[#allocation2 + $0x620] sm:$0xff]
    %v3162 = vld [vmem:[#allocation2 + $0x628] sm:$0xff]
    %v3163 = vld [vmem:[#allocation2 + $0x630] sm:$0xff]
    %v3164 = vld [vmem:[#allocation2 + $0x638] sm:$0xff]
    %v3165 = vld [vmem:[#allocation2 + $0x640] sm:$0xff]
    %v3166 = vld [vmem:[#allocation2 + $0x648] sm:$0xff]
    %v3167 = vld [vmem:[#allocation2 + $0x650] sm:$0xff]
    %v3168 = vld [vmem:[#allocation2 + $0x658] sm:$0xff]
    %v3169 = vld [vmem:[#allocation2 + $0x660] sm:$0xff]
    %v3170 = vld [vmem:[#allocation2 + $0x668] sm:$0xff]
    %v3171 = vld [vmem:[#allocation2 + $0x670] sm:$0xff]
    %v3172 = vld [vmem:[#allocation2 + $0x678] sm:$0xff]
    %v3173 = vld [vmem:[#allocation2 + $0x680] sm:$0xff]
    %v3174 = vld [vmem:[#allocation2 + $0x688] sm:$0xff]
    %v3175 = vld [vmem:[#allocation2 + $0x690] sm:$0xff]
    %v3176 = vld [vmem:[#allocation2 + $0x698] sm:$0xff]
    %v3177 = vld [vmem:[#allocation2 + $0x6a0] sm:$0xff]
    %v3178 = vld [vmem:[#allocation2 + $0x6a8] sm:$0xff]
    %v3179 = vld [vmem:[#allocation2 + $0x6b0] sm:$0xff]
    %v3180 = vld [vmem:[#allocation2 + $0x6b8] sm:$0xff]
    %v3181 = vld [vmem:[#allocation2 + $0x6c0] sm:$0xff]
    %v3182 = vld [vmem:[#allocation2 + $0x6c8] sm:$0xff]
    %v3183 = vld [vmem:[#allocation2 + $0x6d0] sm:$0xff]
    %v3184 = vld [vmem:[#allocation2 + $0x6d8] sm:$0xff]
    %v3185 = vld [vmem:[#allocation2 + $0x6e0] sm:$0xff]
    %v3186 = vld [vmem:[#allocation2 + $0x6e8] sm:$0xff]
    %v3187 = vld [vmem:[#allocation2 + $0x6f0] sm:$0xff]
    %v3188 = vld [vmem:[#allocation2 + $0x6f8] sm:$0xff]
    %v3189 = vld [vmem:[#allocation2 + $0x700] sm:$0xff]
    %v3190 = vld [vmem:[#allocation2 + $0x708] sm:$0xff]
    %v3191 = vld [vmem:[#allocation2 + $0x710] sm:$0xff]
    %v3192 = vld [vmem:[#allocation2 + $0x718] sm:$0xff]
    %v3193 = vld [vmem:[#allocation2 + $0x720] sm:$0xff]
    %v3194 = vld [vmem:[#allocation2 + $0x728] sm:$0xff]
    %v3195 = vld [vmem:[#allocation2 + $0x730] sm:$0xff]
    %v3196 = vld [vmem:[#allocation2 + $0x738] sm:$0xff]
    %v3197 = vld [vmem:[#allocation2 + $0x740] sm:$0xff]
    %v3198 = vld [vmem:[#allocation2 + $0x748] sm:$0xff]
    %v3199 = vld [vmem:[#allocation2 + $0x750] sm:$0xff]
    %v3200 = vld [vmem:[#allocation2 + $0x758] sm:$0xff]
    %v3201 = vld [vmem:[#allocation2 + $0x760] sm:$0xff]
    %v3202 = vld [vmem:[#allocation2 + $0x768] sm:$0xff]
    %v3203 = vld [vmem:[#allocation2 + $0x770] sm:$0xff]
    %v3204 = vld [vmem:[#allocation2 + $0x778] sm:$0xff]
    %v3205 = vld [vmem:[#allocation2 + $0x780] sm:$0xff]
    %v3206 = vld [vmem:[#allocation2 + $0x788] sm:$0xff]
    %v3207 = vld [vmem:[#allocation2 + $0x790] sm:$0xff]
    %v3208 = vld [vmem:[#allocation2 + $0x798] sm:$0xff]
    %v3209 = vld [vmem:[#allocation2 + $0x7a0] sm:$0xff]
    %v3210 = vld [vmem:[#allocation2 + $0x7a8] sm:$0xff]
    %v3211 = vld [vmem:[#allocation2 + $0x7b0] sm:$0xff]
    %v3212 = vld [vmem:[#allocation2 + $0x7b8] sm:$0xff]
    %v3213 = vld [vmem:[#allocation2 + $0x7c0] sm:$0xff]
    %v3214 = vld [vmem:[#allocation2 + $0x7c8] sm:$0xff]
    %v3215 = vld [vmem:[#allocation2 + $0x7d0] sm:$0xff]
    %v3216 = vld [vmem:[#allocation2 + $0x7d8] sm:$0xff]
    %v3217 = vld [vmem:[#allocation2 + $0x7e0] sm:$0xff]
    %v3218 = vld [vmem:[#allocation2 + $0x7e8] sm:$0xff]
    %v3219 = vld [vmem:[#allocation2 + $0x7f0] sm:$0xff]
    %v3220 = vld [vmem:[#allocation2 + $0x7f8] sm:$0xff]
    %s3221 = sshll.u32 %s2925, 4
    %3222 = dma.done %s2930, %s3221
    %s3223 = scalar_lea.hbm %s9, 65536
    %s3225 = sshll.u32 1, 14
    %s3226 = sxor.u32 4294967295, %s3225
    %s3228 = sadd.s32 2, %s222
    %s3230 = sshll.u32 7, 26
    %s3231 = sxor.u32 4294967295, %s3230
    %s3232 = sand.u32 0, %s3231
    %s3233 = sshll.u32 %s3228, 26
    %s3234 = sor.u32 %s3232, %s3233
    %s3235 = sshll.u32 [#allocation2], 4
    %s3236 = int_to_ptr.vmem [resolvable:$true] %s3235
    %3239 = sst [smem:[#allocation33]] 2048
    %s3240 = scalar_lea.smem [#allocation33], 1
    %3241 = sst [smem:[%s3240]] 2048
    %s3242 = scalar_lea.smem [#allocation33], 2
    %3243 = sst [smem:[%s3242]] 16
    %s3244 = scalar_lea.smem [#allocation33], 3
    %3245 = sst [smem:[%s3244]] 64
    %s3246 = scalar_lea.smem [#allocation33], 4
    %3247 = sst [smem:[%s3246]] 128
    %s3248 = scalar_lea.smem [#allocation33], 5
    %3249 = sst [smem:[%s3248]] 2
    %s3250 = scalar_lea.smem [#allocation33], 6
    %3251 = sst [smem:[%s3250]] 1024
    %s3252 = scalar_lea.smem [#allocation33], 7
    %3253 = sst [smem:[%s3252]] 64
    %s3254 = scalar_lea.smem [#allocation33], 8
    %3255 = sst [smem:[%s3254]] 4
    %3257 = dma.general %s3223, 32768, %s3236, [#allocation3], [#allocation32], [#allocation33], %s3234, 0
    %v3258 = vld [vmem:[%s2929] sm:$0xff]
    %v3259 = vld [vmem:[%s2929 + $0x8] sm:$0xff]
    %v3260 = vld [vmem:[%s2929 + $0x10] sm:$0xff]
    %v3261 = vld [vmem:[%s2929 + $0x18] sm:$0xff]
    %v3262 = vld [vmem:[%s2929 + $0x20] sm:$0xff]
    %v3263 = vld [vmem:[%s2929 + $0x28] sm:$0xff]
    %v3264 = vld [vmem:[%s2929 + $0x30] sm:$0xff]
    %v3265 = vld [vmem:[%s2929 + $0x38] sm:$0xff]
    %v3266 = vld [vmem:[%s2929 + $0x40] sm:$0xff]
    %v3267 = vld [vmem:[%s2929 + $0x48] sm:$0xff]
    %v3268 = vld [vmem:[%s2929 + $0x50] sm:$0xff]
    %v3269 = vld [vmem:[%s2929 + $0x58] sm:$0xff]
    %v3270 = vld [vmem:[%s2929 + $0x60] sm:$0xff]
    %v3271 = vld [vmem:[%s2929 + $0x68] sm:$0xff]
    %v3272 = vld [vmem:[%s2929 + $0x70] sm:$0xff]
    %v3273 = vld [vmem:[%s2929 + $0x78] sm:$0xff]
    %v3274 = vld [vmem:[%s2929 + $0x80] sm:$0xff]
    %v3275 = vld [vmem:[%s2929 + $0x88] sm:$0xff]
    %v3276 = vld [vmem:[%s2929 + $0x90] sm:$0xff]
    %v3277 = vld [vmem:[%s2929 + $0x98] sm:$0xff]
    %v3278 = vld [vmem:[%s2929 + $0xa0] sm:$0xff]
    %v3279 = vld [vmem:[%s2929 + $0xa8] sm:$0xff]
    %v3280 = vld [vmem:[%s2929 + $0xb0] sm:$0xff]
    %v3281 = vld [vmem:[%s2929 + $0xb8] sm:$0xff]
    %v3282 = vld [vmem:[%s2929 + $0xc0] sm:$0xff]
    %v3283 = vld [vmem:[%s2929 + $0xc8] sm:$0xff]
    %v3284 = vld [vmem:[%s2929 + $0xd0] sm:$0xff]
    %v3285 = vld [vmem:[%s2929 + $0xd8] sm:$0xff]
    %v3286 = vld [vmem:[%s2929 + $0xe0] sm:$0xff]
    %v3287 = vld [vmem:[%s2929 + $0xe8] sm:$0xff]
    %v3288 = vld [vmem:[%s2929 + $0xf0] sm:$0xff]
    %v3289 = vld [vmem:[%s2929 + $0xf8] sm:$0xff]
    %v3290 = vld [vmem:[%s2929 + $0x100] sm:$0xff]
    %v3291 = vld [vmem:[%s2929 + $0x108] sm:$0xff]
    %v3292 = vld [vmem:[%s2929 + $0x110] sm:$0xff]
    %v3293 = vld [vmem:[%s2929 + $0x118] sm:$0xff]
    %v3294 = vld [vmem:[%s2929 + $0x120] sm:$0xff]
    %v3295 = vld [vmem:[%s2929 + $0x128] sm:$0xff]
    %v3296 = vld [vmem:[%s2929 + $0x130] sm:$0xff]
    %v3297 = vld [vmem:[%s2929 + $0x138] sm:$0xff]
    %v3298 = vld [vmem:[%s2929 + $0x140] sm:$0xff]
    %v3299 = vld [vmem:[%s2929 + $0x148] sm:$0xff]
    %v3300 = vld [vmem:[%s2929 + $0x150] sm:$0xff]
    %v3301 = vld [vmem:[%s2929 + $0x158] sm:$0xff]
    %v3302 = vld [vmem:[%s2929 + $0x160] sm:$0xff]
    %v3303 = vld [vmem:[%s2929 + $0x168] sm:$0xff]
    %v3304 = vld [vmem:[%s2929 + $0x170] sm:$0xff]
    %v3305 = vld [vmem:[%s2929 + $0x178] sm:$0xff]
    %v3306 = vld [vmem:[%s2929 + $0x180] sm:$0xff]
    %v3307 = vld [vmem:[%s2929 + $0x188] sm:$0xff]
    %v3308 = vld [vmem:[%s2929 + $0x190] sm:$0xff]
    %v3309 = vld [vmem:[%s2929 + $0x198] sm:$0xff]
    %v3310 = vld [vmem:[%s2929 + $0x1a0] sm:$0xff]
    %v3311 = vld [vmem:[%s2929 + $0x1a8] sm:$0xff]
    %v3312 = vld [vmem:[%s2929 + $0x1b0] sm:$0xff]
    %v3313 = vld [vmem:[%s2929 + $0x1b8] sm:$0xff]
    %v3314 = vld [vmem:[%s2929 + $0x1c0] sm:$0xff]
    %v3315 = vld [vmem:[%s2929 + $0x1c8] sm:$0xff]
    %v3316 = vld [vmem:[%s2929 + $0x1d0] sm:$0xff]
    %v3317 = vld [vmem:[%s2929 + $0x1d8] sm:$0xff]
    %v3318 = vld [vmem:[%s2929 + $0x1e0] sm:$0xff]
    %v3319 = vld [vmem:[%s2929 + $0x1e8] sm:$0xff]
    %v3320 = vld [vmem:[%s2929 + $0x1f0] sm:$0xff]
    %v3321 = vld [vmem:[%s2929 + $0x1f8] sm:$0xff]
    %v3322 = vld [vmem:[%s2929 + $0x200] sm:$0xff]
    %v3323 = vld [vmem:[%s2929 + $0x208] sm:$0xff]
    %v3324 = vld [vmem:[%s2929 + $0x210] sm:$0xff]
    %v3325 = vld [vmem:[%s2929 + $0x218] sm:$0xff]
    %v3326 = vld [vmem:[%s2929 + $0x220] sm:$0xff]
    %v3327 = vld [vmem:[%s2929 + $0x228] sm:$0xff]
    %v3328 = vld [vmem:[%s2929 + $0x230] sm:$0xff]
    %v3329 = vld [vmem:[%s2929 + $0x238] sm:$0xff]
    %v3330 = vld [vmem:[%s2929 + $0x240] sm:$0xff]
    %v3331 = vld [vmem:[%s2929 + $0x248] sm:$0xff]
    %v3332 = vld [vmem:[%s2929 + $0x250] sm:$0xff]
    %v3333 = vld [vmem:[%s2929 + $0x258] sm:$0xff]
    %v3334 = vld [vmem:[%s2929 + $0x260] sm:$0xff]
    %v3335 = vld [vmem:[%s2929 + $0x268] sm:$0xff]
    %v3336 = vld [vmem:[%s2929 + $0x270] sm:$0xff]
    %v3337 = vld [vmem:[%s2929 + $0x278] sm:$0xff]
    %v3338 = vld [vmem:[%s2929 + $0x280] sm:$0xff]
    %v3339 = vld [vmem:[%s2929 + $0x288] sm:$0xff]
    %v3340 = vld [vmem:[%s2929 + $0x290] sm:$0xff]
    %v3341 = vld [vmem:[%s2929 + $0x298] sm:$0xff]
    %v3342 = vld [vmem:[%s2929 + $0x2a0] sm:$0xff]
    %v3343 = vld [vmem:[%s2929 + $0x2a8] sm:$0xff]
    %v3344 = vld [vmem:[%s2929 + $0x2b0] sm:$0xff]
    %v3345 = vld [vmem:[%s2929 + $0x2b8] sm:$0xff]
    %v3346 = vld [vmem:[%s2929 + $0x2c0] sm:$0xff]
    %v3347 = vld [vmem:[%s2929 + $0x2c8] sm:$0xff]
    %v3348 = vld [vmem:[%s2929 + $0x2d0] sm:$0xff]
    %v3349 = vld [vmem:[%s2929 + $0x2d8] sm:$0xff]
    %v3350 = vld [vmem:[%s2929 + $0x2e0] sm:$0xff]
    %v3351 = vld [vmem:[%s2929 + $0x2e8] sm:$0xff]
    %v3352 = vld [vmem:[%s2929 + $0x2f0] sm:$0xff]
    %v3353 = vld [vmem:[%s2929 + $0x2f8] sm:$0xff]
    %v3354 = vld [vmem:[%s2929 + $0x300] sm:$0xff]
    %v3355 = vld [vmem:[%s2929 + $0x308] sm:$0xff]
    %v3356 = vld [vmem:[%s2929 + $0x310] sm:$0xff]
    %v3357 = vld [vmem:[%s2929 + $0x318] sm:$0xff]
    %v3358 = vld [vmem:[%s2929 + $0x320] sm:$0xff]
    %v3359 = vld [vmem:[%s2929 + $0x328] sm:$0xff]
    %v3360 = vld [vmem:[%s2929 + $0x330] sm:$0xff]
    %v3361 = vld [vmem:[%s2929 + $0x338] sm:$0xff]
    %v3362 = vld [vmem:[%s2929 + $0x340] sm:$0xff]
    %v3363 = vld [vmem:[%s2929 + $0x348] sm:$0xff]
    %v3364 = vld [vmem:[%s2929 + $0x350] sm:$0xff]
    %v3365 = vld [vmem:[%s2929 + $0x358] sm:$0xff]
    %v3366 = vld [vmem:[%s2929 + $0x360] sm:$0xff]
    %v3367 = vld [vmem:[%s2929 + $0x368] sm:$0xff]
    %v3368 = vld [vmem:[%s2929 + $0x370] sm:$0xff]
    %v3369 = vld [vmem:[%s2929 + $0x378] sm:$0xff]
    %v3370 = vld [vmem:[%s2929 + $0x380] sm:$0xff]
    %v3371 = vld [vmem:[%s2929 + $0x388] sm:$0xff]
    %v3372 = vld [vmem:[%s2929 + $0x390] sm:$0xff]
    %v3373 = vld [vmem:[%s2929 + $0x398] sm:$0xff]
    %v3374 = vld [vmem:[%s2929 + $0x3a0] sm:$0xff]
    %v3375 = vld [vmem:[%s2929 + $0x3a8] sm:$0xff]
    %v3376 = vld [vmem:[%s2929 + $0x3b0] sm:$0xff]
    %v3377 = vld [vmem:[%s2929 + $0x3b8] sm:$0xff]
    %v3378 = vld [vmem:[%s2929 + $0x3c0] sm:$0xff]
    %v3379 = vld [vmem:[%s2929 + $0x3c8] sm:$0xff]
    %v3380 = vld [vmem:[%s2929 + $0x3d0] sm:$0xff]
    %v3381 = vld [vmem:[%s2929 + $0x3d8] sm:$0xff]
    %v3382 = vld [vmem:[%s2929 + $0x3e0] sm:$0xff]
    %v3383 = vld [vmem:[%s2929 + $0x3e8] sm:$0xff]
    %v3384 = vld [vmem:[%s2929 + $0x3f0] sm:$0xff]
    %v3385 = vld [vmem:[%s2929 + $0x3f8] sm:$0xff]
    %v3386 = vld [vmem:[%s2929 + $0x400] sm:$0xff]
    %v3387 = vld [vmem:[%s2929 + $0x408] sm:$0xff]
    %v3388 = vld [vmem:[%s2929 + $0x410] sm:$0xff]
    %v3389 = vld [vmem:[%s2929 + $0x418] sm:$0xff]
    %v3390 = vld [vmem:[%s2929 + $0x420] sm:$0xff]
    %v3391 = vld [vmem:[%s2929 + $0x428] sm:$0xff]
    %v3392 = vld [vmem:[%s2929 + $0x430] sm:$0xff]
    %v3393 = vld [vmem:[%s2929 + $0x438] sm:$0xff]
    %v3394 = vld [vmem:[%s2929 + $0x440] sm:$0xff]
    %v3395 = vld [vmem:[%s2929 + $0x448] sm:$0xff]
    %v3396 = vld [vmem:[%s2929 + $0x450] sm:$0xff]
    %v3397 = vld [vmem:[%s2929 + $0x458] sm:$0xff]
    %v3398 = vld [vmem:[%s2929 + $0x460] sm:$0xff]
    %v3399 = vld [vmem:[%s2929 + $0x468] sm:$0xff]
    %v3400 = vld [vmem:[%s2929 + $0x470] sm:$0xff]
    %v3401 = vld [vmem:[%s2929 + $0x478] sm:$0xff]
    %v3402 = vld [vmem:[%s2929 + $0x480] sm:$0xff]
    %v3403 = vld [vmem:[%s2929 + $0x488] sm:$0xff]
    %v3404 = vld [vmem:[%s2929 + $0x490] sm:$0xff]
    %v3405 = vld [vmem:[%s2929 + $0x498] sm:$0xff]
    %v3406 = vld [vmem:[%s2929 + $0x4a0] sm:$0xff]
    %v3407 = vld [vmem:[%s2929 + $0x4a8] sm:$0xff]
    %v3408 = vld [vmem:[%s2929 + $0x4b0] sm:$0xff]
    %v3409 = vld [vmem:[%s2929 + $0x4b8] sm:$0xff]
    %v3410 = vld [vmem:[%s2929 + $0x4c0] sm:$0xff]
    %v3411 = vld [vmem:[%s2929 + $0x4c8] sm:$0xff]
    %v3412 = vld [vmem:[%s2929 + $0x4d0] sm:$0xff]
    %v3413 = vld [vmem:[%s2929 + $0x4d8] sm:$0xff]
    %v3414 = vld [vmem:[%s2929 + $0x4e0] sm:$0xff]
    %v3415 = vld [vmem:[%s2929 + $0x4e8] sm:$0xff]
    %v3416 = vld [vmem:[%s2929 + $0x4f0] sm:$0xff]
    %v3417 = vld [vmem:[%s2929 + $0x4f8] sm:$0xff]
    %v3418 = vld [vmem:[%s2929 + $0x500] sm:$0xff]
    %v3419 = vld [vmem:[%s2929 + $0x508] sm:$0xff]
    %v3420 = vld [vmem:[%s2929 + $0x510] sm:$0xff]
    %v3421 = vld [vmem:[%s2929 + $0x518] sm:$0xff]
    %v3422 = vld [vmem:[%s2929 + $0x520] sm:$0xff]
    %v3423 = vld [vmem:[%s2929 + $0x528] sm:$0xff]
    %v3424 = vld [vmem:[%s2929 + $0x530] sm:$0xff]
    %v3425 = vld [vmem:[%s2929 + $0x538] sm:$0xff]
    %v3426 = vld [vmem:[%s2929 + $0x540] sm:$0xff]
    %v3427 = vld [vmem:[%s2929 + $0x548] sm:$0xff]
    %v3428 = vld [vmem:[%s2929 + $0x550] sm:$0xff]
    %v3429 = vld [vmem:[%s2929 + $0x558] sm:$0xff]
    %v3430 = vld [vmem:[%s2929 + $0x560] sm:$0xff]
    %v3431 = vld [vmem:[%s2929 + $0x568] sm:$0xff]
    %v3432 = vld [vmem:[%s2929 + $0x570] sm:$0xff]
    %v3433 = vld [vmem:[%s2929 + $0x578] sm:$0xff]
    %v3434 = vld [vmem:[%s2929 + $0x580] sm:$0xff]
    %v3435 = vld [vmem:[%s2929 + $0x588] sm:$0xff]
    %v3436 = vld [vmem:[%s2929 + $0x590] sm:$0xff]
    %v3437 = vld [vmem:[%s2929 + $0x598] sm:$0xff]
    %v3438 = vld [vmem:[%s2929 + $0x5a0] sm:$0xff]
    %v3439 = vld [vmem:[%s2929 + $0x5a8] sm:$0xff]
    %v3440 = vld [vmem:[%s2929 + $0x5b0] sm:$0xff]
    %v3441 = vld [vmem:[%s2929 + $0x5b8] sm:$0xff]
    %v3442 = vld [vmem:[%s2929 + $0x5c0] sm:$0xff]
    %v3443 = vld [vmem:[%s2929 + $0x5c8] sm:$0xff]
    %v3444 = vld [vmem:[%s2929 + $0x5d0] sm:$0xff]
    %v3445 = vld [vmem:[%s2929 + $0x5d8] sm:$0xff]
    %v3446 = vld [vmem:[%s2929 + $0x5e0] sm:$0xff]
    %v3447 = vld [vmem:[%s2929 + $0x5e8] sm:$0xff]
    %v3448 = vld [vmem:[%s2929 + $0x5f0] sm:$0xff]
    %v3449 = vld [vmem:[%s2929 + $0x5f8] sm:$0xff]
    %v3450 = vld [vmem:[%s2929 + $0x600] sm:$0xff]
    %v3451 = vld [vmem:[%s2929 + $0x608] sm:$0xff]
    %v3452 = vld [vmem:[%s2929 + $0x610] sm:$0xff]
    %v3453 = vld [vmem:[%s2929 + $0x618] sm:$0xff]
    %v3454 = vld [vmem:[%s2929 + $0x620] sm:$0xff]
    %v3455 = vld [vmem:[%s2929 + $0x628] sm:$0xff]
    %v3456 = vld [vmem:[%s2929 + $0x630] sm:$0xff]
    %v3457 = vld [vmem:[%s2929 + $0x638] sm:$0xff]
    %v3458 = vld [vmem:[%s2929 + $0x640] sm:$0xff]
    %v3459 = vld [vmem:[%s2929 + $0x648] sm:$0xff]
    %v3460 = vld [vmem:[%s2929 + $0x650] sm:$0xff]
    %v3461 = vld [vmem:[%s2929 + $0x658] sm:$0xff]
    %v3462 = vld [vmem:[%s2929 + $0x660] sm:$0xff]
    %v3463 = vld [vmem:[%s2929 + $0x668] sm:$0xff]
    %v3464 = vld [vmem:[%s2929 + $0x670] sm:$0xff]
    %v3465 = vld [vmem:[%s2929 + $0x678] sm:$0xff]
    %v3466 = vld [vmem:[%s2929 + $0x680] sm:$0xff]
    %v3467 = vld [vmem:[%s2929 + $0x688] sm:$0xff]
    %v3468 = vld [vmem:[%s2929 + $0x690] sm:$0xff]
    %v3469 = vld [vmem:[%s2929 + $0x698] sm:$0xff]
    %v3470 = vld [vmem:[%s2929 + $0x6a0] sm:$0xff]
    %v3471 = vld [vmem:[%s2929 + $0x6a8] sm:$0xff]
    %v3472 = vld [vmem:[%s2929 + $0x6b0] sm:$0xff]
    %v3473 = vld [vmem:[%s2929 + $0x6b8] sm:$0xff]
    %v3474 = vld [vmem:[%s2929 + $0x6c0] sm:$0xff]
    %v3475 = vld [vmem:[%s2929 + $0x6c8] sm:$0xff]
    %v3476 = vld [vmem:[%s2929 + $0x6d0] sm:$0xff]
    %v3477 = vld [vmem:[%s2929 + $0x6d8] sm:$0xff]
    %v3478 = vld [vmem:[%s2929 + $0x6e0] sm:$0xff]
    %v3479 = vld [vmem:[%s2929 + $0x6e8] sm:$0xff]
    %v3480 = vld [vmem:[%s2929 + $0x6f0] sm:$0xff]
    %v3481 = vld [vmem:[%s2929 + $0x6f8] sm:$0xff]
    %v3482 = vld [vmem:[%s2929 + $0x700] sm:$0xff]
    %v3483 = vld [vmem:[%s2929 + $0x708] sm:$0xff]
    %v3484 = vld [vmem:[%s2929 + $0x710] sm:$0xff]
    %v3485 = vld [vmem:[%s2929 + $0x718] sm:$0xff]
    %v3486 = vld [vmem:[%s2929 + $0x720] sm:$0xff]
    %v3487 = vld [vmem:[%s2929 + $0x728] sm:$0xff]
    %v3488 = vld [vmem:[%s2929 + $0x730] sm:$0xff]
    %v3489 = vld [vmem:[%s2929 + $0x738] sm:$0xff]
    %v3490 = vld [vmem:[%s2929 + $0x740] sm:$0xff]
    %v3491 = vld [vmem:[%s2929 + $0x748] sm:$0xff]
    %v3492 = vld [vmem:[%s2929 + $0x750] sm:$0xff]
    %v3493 = vld [vmem:[%s2929 + $0x758] sm:$0xff]
    %v3494 = vld [vmem:[%s2929 + $0x760] sm:$0xff]
    %v3495 = vld [vmem:[%s2929 + $0x768] sm:$0xff]
    %v3496 = vld [vmem:[%s2929 + $0x770] sm:$0xff]
    %v3497 = vld [vmem:[%s2929 + $0x778] sm:$0xff]
    %v3498 = vld [vmem:[%s2929 + $0x780] sm:$0xff]
    %v3499 = vld [vmem:[%s2929 + $0x788] sm:$0xff]
    %v3500 = vld [vmem:[%s2929 + $0x790] sm:$0xff]
    %v3501 = vld [vmem:[%s2929 + $0x798] sm:$0xff]
    %v3502 = vld [vmem:[%s2929 + $0x7a0] sm:$0xff]
    %v3503 = vld [vmem:[%s2929 + $0x7a8] sm:$0xff]
    %v3504 = vld [vmem:[%s2929 + $0x7b0] sm:$0xff]
    %v3505 = vld [vmem:[%s2929 + $0x7b8] sm:$0xff]
    %v3506 = vld [vmem:[%s2929 + $0x7c0] sm:$0xff]
    %v3507 = vld [vmem:[%s2929 + $0x7c8] sm:$0xff]
    %v3508 = vld [vmem:[%s2929 + $0x7d0] sm:$0xff]
    %v3509 = vld [vmem:[%s2929 + $0x7d8] sm:$0xff]
    %v3510 = vld [vmem:[%s2929 + $0x7e0] sm:$0xff]
    %v3511 = vld [vmem:[%s2929 + $0x7e8] sm:$0xff]
    %v3512 = vld [vmem:[%s2929 + $0x7f0] sm:$0xff]
    %v3513 = vld [vmem:[%s2929 + $0x7f8] sm:$0xff]
    %3514 = vmatprep.subr.bf16.mxu0 %v3259
    %3515 = vmatpush1.bf16.msra.mxu0 %v3258
    %3516 = vmatprep.subr.bf16.mxu0 %v3275
    %3517 = vmatpush1.bf16.msra.mxu0 %v3274
    %3518 = vmatprep.subr.bf16.mxu0 %v3291
    %3519 = vmatpush1.bf16.msra.mxu0 %v3290
    %3520 = vmatprep.subr.bf16.mxu0 %v3307
    %3521 = vmatpush1.bf16.msra.mxu0 %v3306
    %3522 = vmatprep.subr.bf16.mxu0 %v3323
    %3523 = vmatpush1.bf16.msra.mxu0 %v3322
    %3524 = vmatprep.subr.bf16.mxu0 %v3339
    %3525 = vmatpush1.bf16.msra.mxu0 %v3338
    %3526 = vmatprep.subr.bf16.mxu0 %v3355
    %3527 = vmatpush1.bf16.msra.mxu0 %v3354
    %3528 = vmatprep.subr.bf16.mxu0 %v3371
    %3529 = vmatpush1.bf16.msra.mxu0 %v3370
    %3530 = vmatprep.subr.bf16.mxu0 %v3387
    %3531 = vmatpush1.bf16.msra.mxu0 %v3386
    %3532 = vmatprep.subr.bf16.mxu0 %v3403
    %3533 = vmatpush1.bf16.msra.mxu0 %v3402
    %3534 = vmatprep.subr.bf16.mxu0 %v3419
    %3535 = vmatpush1.bf16.msra.mxu0 %v3418
    %3536 = vmatprep.subr.bf16.mxu0 %v3435
    %3537 = vmatpush1.bf16.msra.mxu0 %v3434
    %3538 = vmatprep.subr.bf16.mxu0 %v3451
    %3539 = vmatpush1.bf16.msra.mxu0 %v3450
    %3540 = vmatprep.subr.bf16.mxu0 %v3467
    %3541 = vmatpush1.bf16.msra.mxu0 %v3466
    %3542 = vmatprep.subr.bf16.mxu0 %v3483
    %3543 = vmatpush1.bf16.msra.mxu0 %v3482
    %3544 = vmatprep.subr.bf16.mxu0 %v3499
    %3545 = vmatpush1.bf16.msra.mxu0 %v3498
    %3546 = vmatprep.mubr.bf16.mxu0 %v2919
    %3547 = vmatmul.mubr.bf16.gmra.mrb[0].mxu0 %v2918
    %v3548 = vpop.f32.mrb[0].mxu0
    %v3549 = vadd.f32 0.0, %v3548
    %v3550 = vpop.f32.mrb[0].mxu0
    %v3551 = vadd.f32 0.0, %v3550
    %v3552 = vpop.f32.mrb[0].mxu0
    %v3553 = vpop.f32.mrb[0].mxu0
    %3554 = vdwg.mxu0
    %3555 = vmatprep.subr.bf16.mxu0 %v3261
    %3556 = vmatpush1.bf16.msra.mxu0 %v3260
    %3557 = vmatprep.subr.bf16.mxu0 %v3277
    %3558 = vmatpush1.bf16.msra.mxu0 %v3276
    %3559 = vmatprep.subr.bf16.mxu0 %v3293
    %3560 = vmatpush1.bf16.msra.mxu0 %v3292
    %3561 = vmatprep.subr.bf16.mxu0 %v3309
    %3562 = vmatpush1.bf16.msra.mxu0 %v3308
    %3563 = vmatprep.subr.bf16.mxu0 %v3325
    %3564 = vmatpush1.bf16.msra.mxu0 %v3324
    %3565 = vmatprep.subr.bf16.mxu0 %v3341
    %3566 = vmatpush1.bf16.msra.mxu0 %v3340
    %3567 = vmatprep.subr.bf16.mxu0 %v3357
    %3568 = vmatpush1.bf16.msra.mxu0 %v3356
    %3569 = vmatprep.subr.bf16.mxu0 %v3373
    %3570 = vmatpush1.bf16.msra.mxu0 %v3372
    %3571 = vmatprep.subr.bf16.mxu0 %v3389
    %3572 = vmatpush1.bf16.msra.mxu0 %v3388
    %3573 = vmatprep.subr.bf16.mxu0 %v3405
    %3574 = vmatpush1.bf16.msra.mxu0 %v3404
    %3575 = vmatprep.subr.bf16.mxu0 %v3421
    %3576 = vmatpush1.bf16.msra.mxu0 %v3420
    %3577 = vmatprep.subr.bf16.mxu0 %v3437
    %3578 = vmatpush1.bf16.msra.mxu0 %v3436
    %3579 = vmatprep.subr.bf16.mxu0 %v3453
    %3580 = vmatpush1.bf16.msra.mxu0 %v3452
    %3581 = vmatprep.subr.bf16.mxu0 %v3469
    %3582 = vmatpush1.bf16.msra.mxu0 %v3468
    %3583 = vmatprep.subr.bf16.mxu0 %v3485
    %3584 = vmatpush1.bf16.msra.mxu0 %v3484
    %3585 = vmatprep.subr.bf16.mxu0 %v3501
    %3586 = vmatpush1.bf16.msra.mxu0 %v3500
    %3587 = vmatprep.mubr.bf16.mxu0 %v2919
    %3588 = vmatmul.mubr.bf16.gmra.mrb[0].mxu0 %v2918
    %v3589 = vpop.f32.mrb[0].mxu0
    %v3590 = vadd.f32 0.0, %v3589
    %v3591 = vpop.f32.mrb[0].mxu0
    %v3592 = vadd.f32 0.0, %v3591
    %v3593 = vpop.f32.mrb[0].mxu0
    %v3594 = vpop.f32.mrb[0].mxu0
    %3595 = vdwg.mxu0
    %3596 = vmatprep.subr.bf16.mxu0 %v3263
    %3597 = vmatpush1.bf16.msra.mxu0 %v3262
    %3598 = vmatprep.subr.bf16.mxu0 %v3279
    %3599 = vmatpush1.bf16.msra.mxu0 %v3278
    %3600 = vmatprep.subr.bf16.mxu0 %v3295
    %3601 = vmatpush1.bf16.msra.mxu0 %v3294
    %3602 = vmatprep.subr.bf16.mxu0 %v3311
    %3603 = vmatpush1.bf16.msra.mxu0 %v3310
    %3604 = vmatprep.subr.bf16.mxu0 %v3327
    %3605 = vmatpush1.bf16.msra.mxu0 %v3326
    %3606 = vmatprep.subr.bf16.mxu0 %v3343
    %3607 = vmatpush1.bf16.msra.mxu0 %v3342
    %3608 = vmatprep.subr.bf16.mxu0 %v3359
    %3609 = vmatpush1.bf16.msra.mxu0 %v3358
    %3610 = vmatprep.subr.bf16.mxu0 %v3375
    %3611 = vmatpush1.bf16.msra.mxu0 %v3374
    %3612 = vmatprep.subr.bf16.mxu0 %v3391
    %3613 = vmatpush1.bf16.msra.mxu0 %v3390
    %3614 = vmatprep.subr.bf16.mxu0 %v3407
    %3615 = vmatpush1.bf16.msra.mxu0 %v3406
    %3616 = vmatprep.subr.bf16.mxu0 %v3423
    %3617 = vmatpush1.bf16.msra.mxu0 %v3422
    %3618 = vmatprep.subr.bf16.mxu0 %v3439
    %3619 = vmatpush1.bf16.msra.mxu0 %v3438
    %3620 = vmatprep.subr.bf16.mxu0 %v3455
    %3621 = vmatpush1.bf16.msra.mxu0 %v3454
    %3622 = vmatprep.subr.bf16.mxu0 %v3471
    %3623 = vmatpush1.bf16.msra.mxu0 %v3470
    %3624 = vmatprep.subr.bf16.mxu0 %v3487
    %3625 = vmatpush1.bf16.msra.mxu0 %v3486
    %3626 = vmatprep.subr.bf16.mxu0 %v3503
    %3627 = vmatpush1.bf16.msra.mxu0 %v3502
    %3628 = vmatprep.mubr.bf16.mxu0 %v2919
    %3629 = vmatmul.mubr.bf16.gmra.mrb[0].mxu0 %v2918
    %v3630 = vpop.f32.mrb[0].mxu0
    %v3631 = vadd.f32 0.0, %v3630
    %v3632 = vpop.f32.mrb[0].mxu0
    %v3633 = vadd.f32 0.0, %v3632
    %v3634 = vpop.f32.mrb[0].mxu0
    %v3635 = vpop.f32.mrb[0].mxu0
    %3636 = vdwg.mxu0
    %3637 = vmatprep.subr.bf16.mxu0 %v3265
    %3638 = vmatpush1.bf16.msra.mxu0 %v3264
    %3639 = vmatprep.subr.bf16.mxu0 %v3281
    %3640 = vmatpush1.bf16.msra.mxu0 %v3280
    %3641 = vmatprep.subr.bf16.mxu0 %v3297
    %3642 = vmatpush1.bf16.msra.mxu0 %v3296
    %3643 = vmatprep.subr.bf16.mxu0 %v3313
    %3644 = vmatpush1.bf16.msra.mxu0 %v3312
    %3645 = vmatprep.subr.bf16.mxu0 %v3329
    %3646 = vmatpush1.bf16.msra.mxu0 %v3328
    %3647 = vmatprep.subr.bf16.mxu0 %v3345
    %3648 = vmatpush1.bf16.msra.mxu0 %v3344
    %3649 = vmatprep.subr.bf16.mxu0 %v3361
    %3650 = vmatpush1.bf16.msra.mxu0 %v3360
    %3651 = vmatprep.subr.bf16.mxu0 %v3377
    %3652 = vmatpush1.bf16.msra.mxu0 %v3376
    %3653 = vmatprep.subr.bf16.mxu0 %v3393
    %3654 = vmatpush1.bf16.msra.mxu0 %v3392
    %3655 = vmatprep.subr.bf16.mxu0 %v3409
    %3656 = vmatpush1.bf16.msra.mxu0 %v3408
    %3657 = vmatprep.subr.bf16.mxu0 %v3425
    %3658 = vmatpush1.bf16.msra.mxu0 %v3424
    %3659 = vmatprep.subr.bf16.mxu0 %v3441
    %3660 = vmatpush1.bf16.msra.mxu0 %v3440
    %3661 = vmatprep.subr.bf16.mxu0 %v3457
    %3662 = vmatpush1.bf16.msra.mxu0 %v3456
    %3663 = vmatprep.subr.bf16.mxu0 %v3473
    %3664 = vmatpush1.bf16.msra.mxu0 %v3472
    %3665 = vmatprep.subr.bf16.mxu0 %v3489
    %3666 = vmatpush1.bf16.msra.mxu0 %v3488
    %3667 = vmatprep.subr.bf16.mxu0 %v3505
    %3668 = vmatpush1.bf16.msra.mxu0 %v3504
    %3669 = vmatprep.mubr.bf16.mxu0 %v2919
    %3670 = vmatmul.mubr.bf16.gmra.mrb[0].mxu0 %v2918
    %v3671 = vpop.f32.mrb[0].mxu0
    %v3672 = vadd.f32 0.0, %v3671
    %v3673 = vpop.f32.mrb[0].mxu0
    %v3674 = vadd.f32 0.0, %v3673
    %v3675 = vpop.f32.mrb[0].mxu0
    %v3676 = vpop.f32.mrb[0].mxu0
    %3677 = vdwg.mxu0
    %3678 = vmatprep.subr.bf16.mxu0 %v3267
    %3679 = vmatpush1.bf16.msra.mxu0 %v3266
    %3680 = vmatprep.subr.bf16.mxu0 %v3283
    %3681 = vmatpush1.bf16.msra.mxu0 %v3282
    %3682 = vmatprep.subr.bf16.mxu0 %v3299
    %3683 = vmatpush1.bf16.msra.mxu0 %v3298
    %3684 = vmatprep.subr.bf16.mxu0 %v3315
    %3685 = vmatpush1.bf16.msra.mxu0 %v3314
    %3686 = vmatprep.subr.bf16.mxu0 %v3331
    %3687 = vmatpush1.bf16.msra.mxu0 %v3330
    %3688 = vmatprep.subr.bf16.mxu0 %v3347
    %3689 = vmatpush1.bf16.msra.mxu0 %v3346
    %3690 = vmatprep.subr.bf16.mxu0 %v3363
    %3691 = vmatpush1.bf16.msra.mxu0 %v3362
    %3692 = vmatprep.subr.bf16.mxu0 %v3379
    %3693 = vmatpush1.bf16.msra.mxu0 %v3378
    %3694 = vmatprep.subr.bf16.mxu0 %v3395
    %3695 = vmatpush1.bf16.msra.mxu0 %v3394
    %3696 = vmatprep.subr.bf16.mxu0 %v3411
    %3697 = vmatpush1.bf16.msra.mxu0 %v3410
    %3698 = vmatprep.subr.bf16.mxu0 %v3427
    %3699 = vmatpush1.bf16.msra.mxu0 %v3426
    %3700 = vmatprep.subr.bf16.mxu0 %v3443
    %3701 = vmatpush1.bf16.msra.mxu0 %v3442
    %3702 = vmatprep.subr.bf16.mxu0 %v3459
    %3703 = vmatpush1.bf16.msra.mxu0 %v3458
    %3704 = vmatprep.subr.bf16.mxu0 %v3475
    %3705 = vmatpush1.bf16.msra.mxu0 %v3474
    %3706 = vmatprep.subr.bf16.mxu0 %v3491
    %3707 = vmatpush1.bf16.msra.mxu0 %v3490
    %3708 = vmatprep.subr.bf16.mxu0 %v3507
    %3709 = vmatpush1.bf16.msra.mxu0 %v3506
    %3710 = vmatprep.mubr.bf16.mxu0 %v2919
    %3711 = vmatmul.mubr.bf16.gmra.mrb[0].mxu0 %v2918
    %v3712 = vpop.f32.mrb[0].mxu0
    %v3713 = vadd.f32 0.0, %v3712
    %v3714 = vpop.f32.mrb[0].mxu0
    %v3715 = vadd.f32 0.0, %v3714
    %v3716 = vpop.f32.mrb[0].mxu0
    %v3717 = vpop.f32.mrb[0].mxu0
    %3718 = vdwg.mxu0
    %3719 = vmatprep.subr.bf16.mxu0 %v3269
    %3720 = vmatpush1.bf16.msra.mxu0 %v3268
    %3721 = vmatprep.subr.bf16.mxu0 %v3285
    %3722 = vmatpush1.bf16.msra.mxu0 %v3284
    %3723 = vmatprep.subr.bf16.mxu0 %v3301
    %3724 = vmatpush1.bf16.msra.mxu0 %v3300
    %3725 = vmatprep.subr.bf16.mxu0 %v3317
    %3726 = vmatpush1.bf16.msra.mxu0 %v3316
    %3727 = vmatprep.subr.bf16.mxu0 %v3333
    %3728 = vmatpush1.bf16.msra.mxu0 %v3332
    %3729 = vmatprep.subr.bf16.mxu0 %v3349
    %3730 = vmatpush1.bf16.msra.mxu0 %v3348
    %3731 = vmatprep.subr.bf16.mxu0 %v3365
    %3732 = vmatpush1.bf16.msra.mxu0 %v3364
    %3733 = vmatprep.subr.bf16.mxu0 %v3381
    %3734 = vmatpush1.bf16.msra.mxu0 %v3380
    %3735 = vmatprep.subr.bf16.mxu0 %v3397
    %3736 = vmatpush1.bf16.msra.mxu0 %v3396
    %3737 = vmatprep.subr.bf16.mxu0 %v3413
    %3738 = vmatpush1.bf16.msra.mxu0 %v3412
    %3739 = vmatprep.subr.bf16.mxu0 %v3429
    %3740 = vmatpush1.bf16.msra.mxu0 %v3428
    %3741 = vmatprep.subr.bf16.mxu0 %v3445
    %3742 = vmatpush1.bf16.msra.mxu0 %v3444
    %3743 = vmatprep.subr.bf16.mxu0 %v3461
    %3744 = vmatpush1.bf16.msra.mxu0 %v3460
    %3745 = vmatprep.subr.bf16.mxu0 %v3477
    %3746 = vmatpush1.bf16.msra.mxu0 %v3476
    %3747 = vmatprep.subr.bf16.mxu0 %v3493
    %3748 = vmatpush1.bf16.msra.mxu0 %v3492
    %3749 = vmatprep.subr.bf16.mxu0 %v3509
    %3750 = vmatpush1.bf16.msra.mxu0 %v3508
    %3751 = vmatprep.mubr.bf16.mxu0 %v2919
    %3752 = vmatmul.mubr.bf16.gmra.mrb[0].mxu0 %v2918
    %v3753 = vpop.f32.mrb[0].mxu0
    %v3754 = vadd.f32 0.0, %v3753
    %v3755 = vpop.f32.mrb[0].mxu0
    %v3756 = vadd.f32 0.0, %v3755
    %v3757 = vpop.f32.mrb[0].mxu0
    %v3758 = vpop.f32.mrb[0].mxu0
    %3759 = vdwg.mxu0
    %3760 = vmatprep.subr.bf16.mxu0 %v3271
    %3761 = vmatpush1.bf16.msra.mxu0 %v3270
    %3762 = vmatprep.subr.bf16.mxu0 %v3287
    %3763 = vmatpush1.bf16.msra.mxu0 %v3286
    %3764 = vmatprep.subr.bf16.mxu0 %v3303
    %3765 = vmatpush1.bf16.msra.mxu0 %v3302
    %3766 = vmatprep.subr.bf16.mxu0 %v3319
    %3767 = vmatpush1.bf16.msra.mxu0 %v3318
    %3768 = vmatprep.subr.bf16.mxu0 %v3335
    %3769 = vmatpush1.bf16.msra.mxu0 %v3334
    %3770 = vmatprep.subr.bf16.mxu0 %v3351
    %3771 = vmatpush1.bf16.msra.mxu0 %v3350
    %3772 = vmatprep.subr.bf16.mxu0 %v3367
    %3773 = vmatpush1.bf16.msra.mxu0 %v3366
    %3774 = vmatprep.subr.bf16.mxu0 %v3383
    %3775 = vmatpush1.bf16.msra.mxu0 %v3382
    %3776 = vmatprep.subr.bf16.mxu0 %v3399
    %3777 = vmatpush1.bf16.msra.mxu0 %v3398
    %3778 = vmatprep.subr.bf16.mxu0 %v3415
    %3779 = vmatpush1.bf16.msra.mxu0 %v3414
    %3780 = vmatprep.subr.bf16.mxu0 %v3431
    %3781 = vmatpush1.bf16.msra.mxu0 %v3430
    %3782 = vmatprep.subr.bf16.mxu0 %v3447
    %3783 = vmatpush1.bf16.msra.mxu0 %v3446
    %3784 = vmatprep.subr.bf16.mxu0 %v3463
    %3785 = vmatpush1.bf16.msra.mxu0 %v3462
    %3786 = vmatprep.subr.bf16.mxu0 %v3479
    %3787 = vmatpush1.bf16.msra.mxu0 %v3478
    %3788 = vmatprep.subr.bf16.mxu0 %v3495
    %3789 = vmatpush1.bf16.msra.mxu0 %v3494
    %3790 = vmatprep.subr.bf16.mxu0 %v3511
    %3791 = vmatpush1.bf16.msra.mxu0 %v3510
    %3792 = vmatprep.mubr.bf16.mxu0 %v2919
    %3793 = vmatmul.mubr.bf16.gmra.mrb[0].mxu0 %v2918
    %v3794 = vpop.f32.mrb[0].mxu0
    %v3795 = vadd.f32 0.0, %v3794
    %v3796 = vpop.f32.mrb[0].mxu0
    %v3797 = vadd.f32 0.0, %v3796
    %v3798 = vpop.f32.mrb[0].mxu0
    %v3799 = vpop.f32.mrb[0].mxu0
    %3800 = vdwg.mxu0
    %3801 = vmatprep.subr.bf16.mxu0 %v3273
    %3802 = vmatpush1.bf16.msra.mxu0 %v3272
    %3803 = vmatprep.subr.bf16.mxu0 %v3289
    %3804 = vmatpush1.bf16.msra.mxu0 %v3288
    %3805 = vmatprep.subr.bf16.mxu0 %v3305
    %3806 = vmatpush1.bf16.msra.mxu0 %v3304
    %3807 = vmatprep.subr.bf16.mxu0 %v3321
    %3808 = vmatpush1.bf16.msra.mxu0 %v3320
    %3809 = vmatprep.subr.bf16.mxu0 %v3337
    %3810 = vmatpush1.bf16.msra.mxu0 %v3336
    %3811 = vmatprep.subr.bf16.mxu0 %v3353
    %3812 = vmatpush1.bf16.msra.mxu0 %v3352
    %3813 = vmatprep.subr.bf16.mxu0 %v3369
    %3814 = vmatpush1.bf16.msra.mxu0 %v3368
    %3815 = vmatprep.subr.bf16.mxu0 %v3385
    %3816 = vmatpush1.bf16.msra.mxu0 %v3384
    %3817 = vmatprep.subr.bf16.mxu0 %v3401
    %3818 = vmatpush1.bf16.msra.mxu0 %v3400
    %3819 = vmatprep.subr.bf16.mxu0 %v3417
    %3820 = vmatpush1.bf16.msra.mxu0 %v3416
    %3821 = vmatprep.subr.bf16.mxu0 %v3433
    %3822 = vmatpush1.bf16.msra.mxu0 %v3432
    %3823 = vmatprep.subr.bf16.mxu0 %v3449
    %3824 = vmatpush1.bf16.msra.mxu0 %v3448
    %3825 = vmatprep.subr.bf16.mxu0 %v3465
    %3826 = vmatpush1.bf16.msra.mxu0 %v3464
    %3827 = vmatprep.subr.bf16.mxu0 %v3481
    %3828 = vmatpush1.bf16.msra.mxu0 %v3480
    %3829 = vmatprep.subr.bf16.mxu0 %v3497
    %3830 = vmatpush1.bf16.msra.mxu0 %v3496
    %3831 = vmatprep.subr.bf16.mxu0 %v3513
    %3832 = vmatpush1.bf16.msra.mxu0 %v3512
    %3833 = vmatprep.mubr.bf16.mxu0 %v2919
    %3834 = vmatmul.mubr.bf16.gmra.mrb[0].mxu0 %v2918
    %v3835 = vpop.f32.mrb[0].mxu0
    %v3836 = vadd.f32 0.0, %v3835
    %v3837 = vpop.f32.mrb[0].mxu0
    %v3838 = vadd.f32 0.0, %v3837
    %v3839 = vpop.f32.mrb[0].mxu0
    %v3840 = vpop.f32.mrb[0].mxu0
    %3841 = vdwg.mxu0
    %3842 = vmatprep.subr.bf16.mxu0 %v2966
    %3843 = vmatpush1.bf16.msra.mxu0 %v2965
    %3844 = vmatprep.subr.bf16.mxu0 %v2982
    %3845 = vmatpush1.bf16.msra.mxu0 %v2981
    %3846 = vmatprep.subr.bf16.mxu0 %v2998
    %3847 = vmatpush1.bf16.msra.mxu0 %v2997
    %3848 = vmatprep.subr.bf16.mxu0 %v3014
    %3849 = vmatpush1.bf16.msra.mxu0 %v3013
    %3850 = vmatprep.subr.bf16.mxu0 %v3030
    %3851 = vmatpush1.bf16.msra.mxu0 %v3029
    %3852 = vmatprep.subr.bf16.mxu0 %v3046
    %3853 = vmatpush1.bf16.msra.mxu0 %v3045
    %3854 = vmatprep.subr.bf16.mxu0 %v3062
    %3855 = vmatpush1.bf16.msra.mxu0 %v3061
    %3856 = vmatprep.subr.bf16.mxu0 %v3078
    %3857 = vmatpush1.bf16.msra.mxu0 %v3077
    %3858 = vmatprep.subr.bf16.mxu0 %v3094
    %3859 = vmatpush1.bf16.msra.mxu0 %v3093
    %3860 = vmatprep.subr.bf16.mxu0 %v3110
    %3861 = vmatpush1.bf16.msra.mxu0 %v3109
    %3862 = vmatprep.subr.bf16.mxu0 %v3126
    %3863 = vmatpush1.bf16.msra.mxu0 %v3125
    %3864 = vmatprep.subr.bf16.mxu0 %v3142
    %3865 = vmatpush1.bf16.msra.mxu0 %v3141
    %3866 = vmatprep.subr.bf16.mxu0 %v3158
    %3867 = vmatpush1.bf16.msra.mxu0 %v3157
    %3868 = vmatprep.subr.bf16.mxu0 %v3174
    %3869 = vmatpush1.bf16.msra.mxu0 %v3173
    %3870 = vmatprep.subr.bf16.mxu0 %v3190
    %3871 = vmatpush1.bf16.msra.mxu0 %v3189
    %3872 = vmatprep.subr.bf16.mxu0 %v3206
    %3873 = vmatpush1.bf16.msra.mxu0 %v3205
    %3874 = vmatprep.mubr.bf16.mxu0 %v2917
    %3875 = vmatmul.mubr.bf16.gmra.mrb[0].mxu0 %v2916
    %v3876 = vpop.f32.mrb[0].mxu0
    %v3877 = vadd.f32 %v3549, %v3876
    %v3878 = vpop.f32.mrb[0].mxu0
    %v3879 = vadd.f32 %v3551, %v3878
    %v3880 = vpop.f32.mrb[0].mxu0
    %v3881 = vpop.f32.mrb[0].mxu0
    %3882 = vdwg.mxu0
    %3883 = vmatprep.subr.bf16.mxu0 %v2968
    %3884 = vmatpush1.bf16.msra.mxu0 %v2967
    %3885 = vmatprep.subr.bf16.mxu0 %v2984
    %3886 = vmatpush1.bf16.msra.mxu0 %v2983
    %3887 = vmatprep.subr.bf16.mxu0 %v3000
    %3888 = vmatpush1.bf16.msra.mxu0 %v2999
    %3889 = vmatprep.subr.bf16.mxu0 %v3016
    %3890 = vmatpush1.bf16.msra.mxu0 %v3015
    %3891 = vmatprep.subr.bf16.mxu0 %v3032
    %3892 = vmatpush1.bf16.msra.mxu0 %v3031
    %3893 = vmatprep.subr.bf16.mxu0 %v3048
    %3894 = vmatpush1.bf16.msra.mxu0 %v3047
    %3895 = vmatprep.subr.bf16.mxu0 %v3064
    %3896 = vmatpush1.bf16.msra.mxu0 %v3063
    %3897 = vmatprep.subr.bf16.mxu0 %v3080
    %3898 = vmatpush1.bf16.msra.mxu0 %v3079
    %3899 = vmatprep.subr.bf16.mxu0 %v3096
    %3900 = vmatpush1.bf16.msra.mxu0 %v3095
    %3901 = vmatprep.subr.bf16.mxu0 %v3112
    %3902 = vmatpush1.bf16.msra.mxu0 %v3111
    %3903 = vmatprep.subr.bf16.mxu0 %v3128
    %3904 = vmatpush1.bf16.msra.mxu0 %v3127
    %3905 = vmatprep.subr.bf16.mxu0 %v3144
    %3906 = vmatpush1.bf16.msra.mxu0 %v3143
    %3907 = vmatprep.subr.bf16.mxu0 %v3160
    %3908 = vmatpush1.bf16.msra.mxu0 %v3159
    %3909 = vmatprep.subr.bf16.mxu0 %v3176
    %3910 = vmatpush1.bf16.msra.mxu0 %v3175
    %3911 = vmatprep.subr.bf16.mxu0 %v3192
    %3912 = vmatpush1.bf16.msra.mxu0 %v3191
    %3913 = vmatprep.subr.bf16.mxu0 %v3208
    %3914 = vmatpush1.bf16.msra.mxu0 %v3207
    %3915 = vmatprep.mubr.bf16.mxu0 %v2917
    %3916 = vmatmul.mubr.bf16.gmra.mrb[0].mxu0 %v2916
    %v3917 = vpop.f32.mrb[0].mxu0
    %v3918 = vadd.f32 %v3590, %v3917
    %v3919 = vpop.f32.mrb[0].mxu0
    %v3920 = vadd.f32 %v3592, %v3919
    %v3921 = vpop.f32.mrb[0].mxu0
    %v3922 = vpop.f32.mrb[0].mxu0
    %3923 = vdwg.mxu0
    %3924 = vmatprep.subr.bf16.mxu0 %v2970
    %3925 = vmatpush1.bf16.msra.mxu0 %v2969
    %3926 = vmatprep.subr.bf16.mxu0 %v2986
    %3927 = vmatpush1.bf16.msra.mxu0 %v2985
    %3928 = vmatprep.subr.bf16.mxu0 %v3002
    %3929 = vmatpush1.bf16.msra.mxu0 %v3001
    %3930 = vmatprep.subr.bf16.mxu0 %v3018
    %3931 = vmatpush1.bf16.msra.mxu0 %v3017
    %3932 = vmatprep.subr.bf16.mxu0 %v3034
    %3933 = vmatpush1.bf16.msra.mxu0 %v3033
    %3934 = vmatprep.subr.bf16.mxu0 %v3050
    %3935 = vmatpush1.bf16.msra.mxu0 %v3049
    %3936 = vmatprep.subr.bf16.mxu0 %v3066
    %3937 = vmatpush1.bf16.msra.mxu0 %v3065
    %3938 = vmatprep.subr.bf16.mxu0 %v3082
    %3939 = vmatpush1.bf16.msra.mxu0 %v3081
    %3940 = vmatprep.subr.bf16.mxu0 %v3098
    %3941 = vmatpush1.bf16.msra.mxu0 %v3097
    %3942 = vmatprep.subr.bf16.mxu0 %v3114
    %3943 = vmatpush1.bf16.msra.mxu0 %v3113
    %3944 = vmatprep.subr.bf16.mxu0 %v3130
    %3945 = vmatpush1.bf16.msra.mxu0 %v3129
    %3946 = vmatprep.subr.bf16.mxu0 %v3146
    %3947 = vmatpush1.bf16.msra.mxu0 %v3145
    %3948 = vmatprep.subr.bf16.mxu0 %v3162
    %3949 = vmatpush1.bf16.msra.mxu0 %v3161
    %3950 = vmatprep.subr.bf16.mxu0 %v3178
    %3951 = vmatpush1.bf16.msra.mxu0 %v3177
    %3952 = vmatprep.subr.bf16.mxu0 %v3194
    %3953 = vmatpush1.bf16.msra.mxu0 %v3193
    %3954 = vmatprep.subr.bf16.mxu0 %v3210
    %3955 = vmatpush1.bf16.msra.mxu0 %v3209
    %3956 = vmatprep.mubr.bf16.mxu0 %v2917
    %3957 = vmatmul.mubr.bf16.gmra.mrb[0].mxu0 %v2916
    %v3958 = vpop.f32.mrb[0].mxu0
    %v3959 = vadd.f32 %v3631, %v3958
    %v3960 = vpop.f32.mrb[0].mxu0
    %v3961 = vadd.f32 %v3633, %v3960
    %v3962 = vpop.f32.mrb[0].mxu0
    %v3963 = vpop.f32.mrb[0].mxu0
    %3964 = vdwg.mxu0
    %3965 = vmatprep.subr.bf16.mxu0 %v2972
    %3966 = vmatpush1.bf16.msra.mxu0 %v2971
    %3967 = vmatprep.subr.bf16.mxu0 %v2988
    %3968 = vmatpush1.bf16.msra.mxu0 %v2987
    %3969 = vmatprep.subr.bf16.mxu0 %v3004
    %3970 = vmatpush1.bf16.msra.mxu0 %v3003
    %3971 = vmatprep.subr.bf16.mxu0 %v3020
    %3972 = vmatpush1.bf16.msra.mxu0 %v3019
    %3973 = vmatprep.subr.bf16.mxu0 %v3036
    %3974 = vmatpush1.bf16.msra.mxu0 %v3035
    %3975 = vmatprep.subr.bf16.mxu0 %v3052
    %3976 = vmatpush1.bf16.msra.mxu0 %v3051
    %3977 = vmatprep.subr.bf16.mxu0 %v3068
    %3978 = vmatpush1.bf16.msra.mxu0 %v3067
    %3979 = vmatprep.subr.bf16.mxu0 %v3084
    %3980 = vmatpush1.bf16.msra.mxu0 %v3083
    %3981 = vmatprep.subr.bf16.mxu0 %v3100
    %3982 = vmatpush1.bf16.msra.mxu0 %v3099
    %3983 = vmatprep.subr.bf16.mxu0 %v3116
    %3984 = vmatpush1.bf16.msra.mxu0 %v3115
    %3985 = vmatprep.subr.bf16.mxu0 %v3132
    %3986 = vmatpush1.bf16.msra.mxu0 %v3131
    %3987 = vmatprep.subr.bf16.mxu0 %v3148
    %3988 = vmatpush1.bf16.msra.mxu0 %v3147
    %3989 = vmatprep.subr.bf16.mxu0 %v3164
    %3990 = vmatpush1.bf16.msra.mxu0 %v3163
    %3991 = vmatprep.subr.bf16.mxu0 %v3180
    %3992 = vmatpush1.bf16.msra.mxu0 %v3179
    %3993 = vmatprep.subr.bf16.mxu0 %v3196
    %3994 = vmatpush1.bf16.msra.mxu0 %v3195
    %3995 = vmatprep.subr.bf16.mxu0 %v3212
    %3996 = vmatpush1.bf16.msra.mxu0 %v3211
    %3997 = vmatprep.mubr.bf16.mxu0 %v2917
    %3998 = vmatmul.mubr.bf16.gmra.mrb[0].mxu0 %v2916
    %v3999 = vpop.f32.mrb[0].mxu0
    %v4000 = vadd.f32 %v3672, %v3999
    %v4001 = vpop.f32.mrb[0].mxu0
    %v4002 = vadd.f32 %v3674, %v4001
    %v4003 = vpop.f32.mrb[0].mxu0
    %v4004 = vpop.f32.mrb[0].mxu0
    %4005 = vdwg.mxu0
    %4006 = vmatprep.subr.bf16.mxu0 %v2974
    %4007 = vmatpush1.bf16.msra.mxu0 %v2973
    %4008 = vmatprep.subr.bf16.mxu0 %v2990
    %4009 = vmatpush1.bf16.msra.mxu0 %v2989
    %4010 = vmatprep.subr.bf16.mxu0 %v3006
    %4011 = vmatpush1.bf16.msra.mxu0 %v3005
    %4012 = vmatprep.subr.bf16.mxu0 %v3022
    %4013 = vmatpush1.bf16.msra.mxu0 %v3021
    %4014 = vmatprep.subr.bf16.mxu0 %v3038
    %4015 = vmatpush1.bf16.msra.mxu0 %v3037
    %4016 = vmatprep.subr.bf16.mxu0 %v3054
    %4017 = vmatpush1.bf16.msra.mxu0 %v3053
    %4018 = vmatprep.subr.bf16.mxu0 %v3070
    %4019 = vmatpush1.bf16.msra.mxu0 %v3069
    %4020 = vmatprep.subr.bf16.mxu0 %v3086
    %4021 = vmatpush1.bf16.msra.mxu0 %v3085
    %4022 = vmatprep.subr.bf16.mxu0 %v3102
    %4023 = vmatpush1.bf16.msra.mxu0 %v3101
    %4024 = vmatprep.subr.bf16.mxu0 %v3118
    %4025 = vmatpush1.bf16.msra.mxu0 %v3117
    %4026 = vmatprep.subr.bf16.mxu0 %v3134
    %4027 = vmatpush1.bf16.msra.mxu0 %v3133
    %4028 = vmatprep.subr.bf16.mxu0 %v3150
    %4029 = vmatpush1.bf16.msra.mxu0 %v3149
    %4030 = vmatprep.subr.bf16.mxu0 %v3166
    %4031 = vmatpush1.bf16.msra.mxu0 %v3165
    %4032 = vmatprep.subr.bf16.mxu0 %v3182
    %4033 = vmatpush1.bf16.msra.mxu0 %v3181
    %4034 = vmatprep.subr.bf16.mxu0 %v3198
    %4035 = vmatpush1.bf16.msra.mxu0 %v3197
    %4036 = vmatprep.subr.bf16.mxu0 %v3214
    %4037 = vmatpush1.bf16.msra.mxu0 %v3213
    %4038 = vmatprep.mubr.bf16.mxu0 %v2917
    %4039 = vmatmul.mubr.bf16.gmra.mrb[0].mxu0 %v2916
    %v4040 = vpop.f32.mrb[0].mxu0
    %v4041 = vadd.f32 %v3713, %v4040
    %v4042 = vpop.f32.mrb[0].mxu0
    %v4043 = vadd.f32 %v3715, %v4042
    %v4044 = vpop.f32.mrb[0].mxu0
    %v4045 = vpop.f32.mrb[0].mxu0
    %4046 = vdwg.mxu0
    %4047 = vmatprep.subr.bf16.mxu0 %v2976
    %4048 = vmatpush1.bf16.msra.mxu0 %v2975
    %4049 = vmatprep.subr.bf16.mxu0 %v2992
    %4050 = vmatpush1.bf16.msra.mxu0 %v2991
    %4051 = vmatprep.subr.bf16.mxu0 %v3008
    %4052 = vmatpush1.bf16.msra.mxu0 %v3007
    %4053 = vmatprep.subr.bf16.mxu0 %v3024
    %4054 = vmatpush1.bf16.msra.mxu0 %v3023
    %4055 = vmatprep.subr.bf16.mxu0 %v3040
    %4056 = vmatpush1.bf16.msra.mxu0 %v3039
    %4057 = vmatprep.subr.bf16.mxu0 %v3056
    %4058 = vmatpush1.bf16.msra.mxu0 %v3055
    %4059 = vmatprep.subr.bf16.mxu0 %v3072
    %4060 = vmatpush1.bf16.msra.mxu0 %v3071
    %4061 = vmatprep.subr.bf16.mxu0 %v3088
    %4062 = vmatpush1.bf16.msra.mxu0 %v3087
    %4063 = vmatprep.subr.bf16.mxu0 %v3104
    %4064 = vmatpush1.bf16.msra.mxu0 %v3103
    %4065 = vmatprep.subr.bf16.mxu0 %v3120
    %4066 = vmatpush1.bf16.msra.mxu0 %v3119
    %4067 = vmatprep.subr.bf16.mxu0 %v3136
    %4068 = vmatpush1.bf16.msra.mxu0 %v3135
    %4069 = vmatprep.subr.bf16.mxu0 %v3152
    %4070 = vmatpush1.bf16.msra.mxu0 %v3151
    %4071 = vmatprep.subr.bf16.mxu0 %v3168
    %4072 = vmatpush1.bf16.msra.mxu0 %v3167
    %4073 = vmatprep.subr.bf16.mxu0 %v3184
    %4074 = vmatpush1.bf16.msra.mxu0 %v3183
    %4075 = vmatprep.subr.bf16.mxu0 %v3200
    %4076 = vmatpush1.bf16.msra.mxu0 %v3199
    %4077 = vmatprep.subr.bf16.mxu0 %v3216
    %4078 = vmatpush1.bf16.msra.mxu0 %v3215
    %4079 = vmatprep.mubr.bf16.mxu0 %v2917
    %4080 = vmatmul.mubr.bf16.gmra.mrb[0].mxu0 %v2916
    %v4081 = vpop.f32.mrb[0].mxu0
    %v4082 = vadd.f32 %v3754, %v4081
    %v4083 = vpop.f32.mrb[0].mxu0
    %v4084 = vadd.f32 %v3756, %v4083
    %v4085 = vpop.f32.mrb[0].mxu0
    %v4086 = vpop.f32.mrb[0].mxu0
    %4087 = vdwg.mxu0
    %4088 = vmatprep.subr.bf16.mxu0 %v2978
    %4089 = vmatpush1.bf16.msra.mxu0 %v2977
    %4090 = vmatprep.subr.bf16.mxu0 %v2994
    %4091 = vmatpush1.bf16.msra.mxu0 %v2993
    %4092 = vmatprep.subr.bf16.mxu0 %v3010
    %4093 = vmatpush1.bf16.msra.mxu0 %v3009
    %4094 = vmatprep.subr.bf16.mxu0 %v3026
    %4095 = vmatpush1.bf16.msra.mxu0 %v3025
    %4096 = vmatprep.subr.bf16.mxu0 %v3042
    %4097 = vmatpush1.bf16.msra.mxu0 %v3041
    %4098 = vmatprep.subr.bf16.mxu0 %v3058
    %4099 = vmatpush1.bf16.msra.mxu0 %v3057
    %4100 = vmatprep.subr.bf16.mxu0 %v3074
    %4101 = vmatpush1.bf16.msra.mxu0 %v3073
    %4102 = vmatprep.subr.bf16.mxu0 %v3090
    %4103 = vmatpush1.bf16.msra.mxu0 %v3089
    %4104 = vmatprep.subr.bf16.mxu0 %v3106
    %4105 = vmatpush1.bf16.msra.mxu0 %v3105
    %4106 = vmatprep.subr.bf16.mxu0 %v3122
    %4107 = vmatpush1.bf16.msra.mxu0 %v3121
    %4108 = vmatprep.subr.bf16.mxu0 %v3138
    %4109 = vmatpush1.bf16.msra.mxu0 %v3137
    %4110 = vmatprep.subr.bf16.mxu0 %v3154
    %4111 = vmatpush1.bf16.msra.mxu0 %v3153
    %4112 = vmatprep.subr.bf16.mxu0 %v3170
    %4113 = vmatpush1.bf16.msra.mxu0 %v3169
    %4114 = vmatprep.subr.bf16.mxu0 %v3186
    %4115 = vmatpush1.bf16.msra.mxu0 %v3185
    %4116 = vmatprep.subr.bf16.mxu0 %v3202
    %4117 = vmatpush1.bf16.msra.mxu0 %v3201
    %4118 = vmatprep.subr.bf16.mxu0 %v3218
    %4119 = vmatpush1.bf16.msra.mxu0 %v3217
    %4120 = vmatprep.mubr.bf16.mxu0 %v2917
    %4121 = vmatmul.mubr.bf16.gmra.mrb[0].mxu0 %v2916
    %v4122 = vpop.f32.mrb[0].mxu0
    %v4123 = vadd.f32 %v3795, %v4122
    %v4124 = vpop.f32.mrb[0].mxu0
    %v4125 = vadd.f32 %v3797, %v4124
    %v4126 = vpop.f32.mrb[0].mxu0
    %v4127 = vpop.f32.mrb[0].mxu0
    %4128 = vdwg.mxu0
    %4129 = vmatprep.subr.bf16.mxu0 %v2980
    %4130 = vmatpush1.bf16.msra.mxu0 %v2979
    %4131 = vmatprep.subr.bf16.mxu0 %v2996
    %4132 = vmatpush1.bf16.msra.mxu0 %v2995
    %4133 = vmatprep.subr.bf16.mxu0 %v3012
    %4134 = vmatpush1.bf16.msra.mxu0 %v3011
    %4135 = vmatprep.subr.bf16.mxu0 %v3028
    %4136 = vmatpush1.bf16.msra.mxu0 %v3027
    %4137 = vmatprep.subr.bf16.mxu0 %v3044
    %4138 = vmatpush1.bf16.msra.mxu0 %v3043
    %4139 = vmatprep.subr.bf16.mxu0 %v3060
    %4140 = vmatpush1.bf16.msra.mxu0 %v3059
    %4141 = vmatprep.subr.bf16.mxu0 %v3076
    %4142 = vmatpush1.bf16.msra.mxu0 %v3075
    %4143 = vmatprep.subr.bf16.mxu0 %v3092
    %4144 = vmatpush1.bf16.msra.mxu0 %v3091
    %4145 = vmatprep.subr.bf16.mxu0 %v3108
    %4146 = vmatpush1.bf16.msra.mxu0 %v3107
    %4147 = vmatprep.subr.bf16.mxu0 %v3124
    %4148 = vmatpush1.bf16.msra.mxu0 %v3123
    %4149 = vmatprep.subr.bf16.mxu0 %v3140
    %4150 = vmatpush1.bf16.msra.mxu0 %v3139
    %4151 = vmatprep.subr.bf16.mxu0 %v3156
    %4152 = vmatpush1.bf16.msra.mxu0 %v3155
    %4153 = vmatprep.subr.bf16.mxu0 %v3172
    %4154 = vmatpush1.bf16.msra.mxu0 %v3171
    %4155 = vmatprep.subr.bf16.mxu0 %v3188
    %4156 = vmatpush1.bf16.msra.mxu0 %v3187
    %4157 = vmatprep.subr.bf16.mxu0 %v3204
    %4158 = vmatpush1.bf16.msra.mxu0 %v3203
    %4159 = vmatprep.subr.bf16.mxu0 %v3220
    %4160 = vmatpush1.bf16.msra.mxu0 %v3219
    %4161 = vmatprep.mubr.bf16.mxu0 %v2917
    %4162 = vmatmul.mubr.bf16.gmra.mrb[0].mxu0 %v2916
    %v4163 = vpop.f32.mrb[0].mxu0
    %v4164 = vadd.f32 %v3836, %v4163
    %v4165 = vpop.f32.mrb[0].mxu0
    %v4166 = vadd.f32 %v3838, %v4165
    %v4167 = vpop.f32.mrb[0].mxu0
    %v4168 = vpop.f32.mrb[0].mxu0
    %4169 = vdwg.mxu0
    %s4170 = sshll.u32 %s2925, 4
    %4171 = dma.done [#allocation3], %s4170
    %s4172 = scalar_lea.hbm %s9, 98304
    %s4174 = sshll.u32 1, 14
    %s4175 = sxor.u32 4294967295, %s4174
    %s4177 = sadd.s32 2, %s222
    %s4179 = sshll.u32 7, 26
    %s4180 = sxor.u32 4294967295, %s4179
    %s4181 = sand.u32 0, %s4180
    %s4182 = sshll.u32 %s4177, 26
    %s4183 = sor.u32 %s4181, %s4182
    %s4184 = sshll.u32 %s2929, 4
    %s4185 = int_to_ptr.vmem [resolvable:$true] %s4184
    %4188 = sst [smem:[#allocation35]] 2048
    %s4189 = scalar_lea.smem [#allocation35], 1
    %4190 = sst [smem:[%s4189]] 2048
    %s4191 = scalar_lea.smem [#allocation35], 2
    %4192 = sst [smem:[%s4191]] 16
    %s4193 = scalar_lea.smem [#allocation35], 3
    %4194 = sst [smem:[%s4193]] 64
    %s4195 = scalar_lea.smem [#allocation35], 4
    %4196 = sst [smem:[%s4195]] 128
    %s4197 = scalar_lea.smem [#allocation35], 5
    %4198 = sst [smem:[%s4197]] 2
    %s4199 = scalar_lea.smem [#allocation35], 6
    %4200 = sst [smem:[%s4199]] 1024
    %s4201 = scalar_lea.smem [#allocation35], 7
    %4202 = sst [smem:[%s4201]] 64
    %s4203 = scalar_lea.smem [#allocation35], 8
    %4204 = sst [smem:[%s4203]] 4
    %4206 = dma.general %s4172, 32768, %s4185, %s2930, [#allocation34], [#allocation35], %s4183, 0
    %v4207 = vld [vmem:[#allocation2] sm:$0xff]
    %v4208 = vld [vmem:[#allocation2 + $0x8] sm:$0xff]
    %v4209 = vld [vmem:[#allocation2 + $0x10] sm:$0xff]
    %v4210 = vld [vmem:[#allocation2 + $0x18] sm:$0xff]
    %v4211 = vld [vmem:[#allocation2 + $0x20] sm:$0xff]
    %v4212 = vld [vmem:[#allocation2 + $0x28] sm:$0xff]
    %v4213 = vld [vmem:[#allocation2 + $0x30] sm:$0xff]
    %v4214 = vld [vmem:[#allocation2 + $0x38] sm:$0xff]
    %v4215 = vld [vmem:[#allocation2 + $0x40] sm:$0xff]
    %v4216 = vld [vmem:[#allocation2 + $0x48] sm:$0xff]
    %v4217 = vld [vmem:[#allocation2 + $0x50] sm:$0xff]
    %v4218 = vld [vmem:[#allocation2 + $0x58] sm:$0xff]
    %v4219 = vld [vmem:[#allocation2 + $0x60] sm:$0xff]
    %v4220 = vld [vmem:[#allocation2 + $0x68] sm:$0xff]
    %v4221 = vld [vmem:[#allocation2 + $0x70] sm:$0xff]
    %v4222 = vld [vmem:[#allocation2 + $0x78] sm:$0xff]
    %v4223 = vld [vmem:[#allocation2 + $0x80] sm:$0xff]
    %v4224 = vld [vmem:[#allocation2 + $0x88] sm:$0xff]
    %v4225 = vld [vmem:[#allocation2 + $0x90] sm:$0xff]
    %v4226 = vld [vmem:[#allocation2 + $0x98] sm:$0xff]
    %v4227 = vld [vmem:[#allocation2 + $0xa0] sm:$0xff]
    %v4228 = vld [vmem:[#allocation2 + $0xa8] sm:$0xff]
    %v4229 = vld [vmem:[#allocation2 + $0xb0] sm:$0xff]
    %v4230 = vld [vmem:[#allocation2 + $0xb8] sm:$0xff]
    %v4231 = vld [vmem:[#allocation2 + $0xc0] sm:$0xff]
    %v4232 = vld [vmem:[#allocation2 + $0xc8] sm:$0xff]
    %v4233 = vld [vmem:[#allocation2 + $0xd0] sm:$0xff]
    %v4234 = vld [vmem:[#allocation2 + $0xd8] sm:$0xff]
    %v4235 = vld [vmem:[#allocation2 + $0xe0] sm:$0xff]
    %v4236 = vld [vmem:[#allocation2 + $0xe8] sm:$0xff]
    %v4237 = vld [vmem:[#allocation2 + $0xf0] sm:$0xff]
    %v4238 = vld [vmem:[#allocation2 + $0xf8] sm:$0xff]
    %v4239 = vld [vmem:[#allocation2 + $0x100] sm:$0xff]
    %v4240 = vld [vmem:[#allocation2 + $0x108] sm:$0xff]
    %v4241 = vld [vmem:[#allocation2 + $0x110] sm:$0xff]
    %v4242 = vld [vmem:[#allocation2 + $0x118] sm:$0xff]
    %v4243 = vld [vmem:[#allocation2 + $0x120] sm:$0xff]
    %v4244 = vld [vmem:[#allocation2 + $0x128] sm:$0xff]
    %v4245 = vld [vmem:[#allocation2 + $0x130] sm:$0xff]
    %v4246 = vld [vmem:[#allocation2 + $0x138] sm:$0xff]
    %v4247 = vld [vmem:[#allocation2 + $0x140] sm:$0xff]
    %v4248 = vld [vmem:[#allocation2 + $0x148] sm:$0xff]
    %v4249 = vld [vmem:[#allocation2 + $0x150] sm:$0xff]
    %v4250 = vld [vmem:[#allocation2 + $0x158] sm:$0xff]
    %v4251 = vld [vmem:[#allocation2 + $0x160] sm:$0xff]
    %v4252 = vld [vmem:[#allocation2 + $0x168] sm:$0xff]
    %v4253 = vld [vmem:[#allocation2 + $0x170] sm:$0xff]
    %v4254 = vld [vmem:[#allocation2 + $0x178] sm:$0xff]
    %v4255 = vld [vmem:[#allocation2 + $0x180] sm:$0xff]
    %v4256 = vld [vmem:[#allocation2 + $0x188] sm:$0xff]
    %v4257 = vld [vmem:[#allocation2 + $0x190] sm:$0xff]
    %v4258 = vld [vmem:[#allocation2 + $0x198] sm:$0xff]
    %v4259 = vld [vmem:[#allocation2 + $0x1a0] sm:$0xff]
    %v4260 = vld [vmem:[#allocation2 + $0x1a8] sm:$0xff]
    %v4261 = vld [vmem:[#allocation2 + $0x1b0] sm:$0xff]
    %v4262 = vld [vmem:[#allocation2 + $0x1b8] sm:$0xff]
    %v4263 = vld [vmem:[#allocation2 + $0x1c0] sm:$0xff]
    %v4264 = vld [vmem:[#allocation2 + $0x1c8] sm:$0xff]
    %v4265 = vld [vmem:[#allocation2 + $0x1d0] sm:$0xff]
    %v4266 = vld [vmem:[#allocation2 + $0x1d8] sm:$0xff]
    %v4267 = vld [vmem:[#allocation2 + $0x1e0] sm:$0xff]
    %v4268 = vld [vmem:[#allocation2 + $0x1e8] sm:$0xff]
    %v4269 = vld [vmem:[#allocation2 + $0x1f0] sm:$0xff]
    %v4270 = vld [vmem:[#allocation2 + $0x1f8] sm:$0xff]
    %v4271 = vld [vmem:[#allocation2 + $0x200] sm:$0xff]
    %v4272 = vld [vmem:[#allocation2 + $0x208] sm:$0xff]
    %v4273 = vld [vmem:[#allocation2 + $0x210] sm:$0xff]
    %v4274 = vld [vmem:[#allocation2 + $0x218] sm:$0xff]
    %v4275 = vld [vmem:[#allocation2 + $0x220] sm:$0xff]
    %v4276 = vld [vmem:[#allocation2 + $0x228] sm:$0xff]
    %v4277 = vld [vmem:[#allocation2 + $0x230] sm:$0xff]
    %v4278 = vld [vmem:[#allocation2 + $0x238] sm:$0xff]
    %v4279 = vld [vmem:[#allocation2 + $0x240] sm:$0xff]
    %v4280 = vld [vmem:[#allocation2 + $0x248] sm:$0xff]
    %v4281 = vld [vmem:[#allocation2 + $0x250] sm:$0xff]
    %v4282 = vld [vmem:[#allocation2 + $0x258] sm:$0xff]
    %v4283 = vld [vmem:[#allocation2 + $0x260] sm:$0xff]
    %v4284 = vld [vmem:[#allocation2 + $0x268] sm:$0xff]
    %v4285 = vld [vmem:[#allocation2 + $0x270] sm:$0xff]
    %v4286 = vld [vmem:[#allocation2 + $0x278] sm:$0xff]
    %v4287 = vld [vmem:[#allocation2 + $0x280] sm:$0xff]
    %v4288 = vld [vmem:[#allocation2 + $0x288] sm:$0xff]
    %v4289 = vld [vmem:[#allocation2 + $0x290] sm:$0xff]
    %v4290 = vld [vmem:[#allocation2 + $0x298] sm:$0xff]
    %v4291 = vld [vmem:[#allocation2 + $0x2a0] sm:$0xff]
    %v4292 = vld [vmem:[#allocation2 + $0x2a8] sm:$0xff]
    %v4293 = vld [vmem:[#allocation2 + $0x2b0] sm:$0xff]
    %v4294 = vld [vmem:[#allocation2 + $0x2b8] sm:$0xff]
    %v4295 = vld [vmem:[#allocation2 + $0x2c0] sm:$0xff]
    %v4296 = vld [vmem:[#allocation2 + $0x2c8] sm:$0xff]
    %v4297 = vld [vmem:[#allocation2 + $0x2d0] sm:$0xff]
    %v4298 = vld [vmem:[#allocation2 + $0x2d8] sm:$0xff]
    %v4299 = vld [vmem:[#allocation2 + $0x2e0] sm:$0xff]
    %v4300 = vld [vmem:[#allocation2 + $0x2e8] sm:$0xff]
    %v4301 = vld [vmem:[#allocation2 + $0x2f0] sm:$0xff]
    %v4302 = vld [vmem:[#allocation2 + $0x2f8] sm:$0xff]
    %v4303 = vld [vmem:[#allocation2 + $0x300] sm:$0xff]
    %v4304 = vld [vmem:[#allocation2 + $0x308] sm:$0xff]
    %v4305 = vld [vmem:[#allocation2 + $0x310] sm:$0xff]
    %v4306 = vld [vmem:[#allocation2 + $0x318] sm:$0xff]
    %v4307 = vld [vmem:[#allocation2 + $0x320] sm:$0xff]
    %v4308 = vld [vmem:[#allocation2 + $0x328] sm:$0xff]
    %v4309 = vld [vmem:[#allocation2 + $0x330] sm:$0xff]
    %v4310 = vld [vmem:[#allocation2 + $0x338] sm:$0xff]
    %v4311 = vld [vmem:[#allocation2 + $0x340] sm:$0xff]
    %v4312 = vld [vmem:[#allocation2 + $0x348] sm:$0xff]
    %v4313 = vld [vmem:[#allocation2 + $0x350] sm:$0xff]
    %v4314 = vld [vmem:[#allocation2 + $0x358] sm:$0xff]
    %v4315 = vld [vmem:[#allocation2 + $0x360] sm:$0xff]
    %v4316 = vld [vmem:[#allocation2 + $0x368] sm:$0xff]
    %v4317 = vld [vmem:[#allocation2 + $0x370] sm:$0xff]
    %v4318 = vld [vmem:[#allocation2 + $0x378] sm:$0xff]
    %v4319 = vld [vmem:[#allocation2 + $0x380] sm:$0xff]
    %v4320 = vld [vmem:[#allocation2 + $0x388] sm:$0xff]
    %v4321 = vld [vmem:[#allocation2 + $0x390] sm:$0xff]
    %v4322 = vld [vmem:[#allocation2 + $0x398] sm:$0xff]
    %v4323 = vld [vmem:[#allocation2 + $0x3a0] sm:$0xff]
    %v4324 = vld [vmem:[#allocation2 + $0x3a8] sm:$0xff]
    %v4325 = vld [vmem:[#allocation2 + $0x3b0] sm:$0xff]
    %v4326 = vld [vmem:[#allocation2 + $0x3b8] sm:$0xff]
    %v4327 = vld [vmem:[#allocation2 + $0x3c0] sm:$0xff]
    %v4328 = vld [vmem:[#allocation2 + $0x3c8] sm:$0xff]
    %v4329 = vld [vmem:[#allocation2 + $0x3d0] sm:$0xff]
    %v4330 = vld [vmem:[#allocation2 + $0x3d8] sm:$0xff]
    %v4331 = vld [vmem:[#allocation2 + $0x3e0] sm:$0xff]
    %v4332 = vld [vmem:[#allocation2 + $0x3e8] sm:$0xff]
    %v4333 = vld [vmem:[#allocation2 + $0x3f0] sm:$0xff]
    %v4334 = vld [vmem:[#allocation2 + $0x3f8] sm:$0xff]
    %v4335 = vld [vmem:[#allocation2 + $0x400] sm:$0xff]
    %v4336 = vld [vmem:[#allocation2 + $0x408] sm:$0xff]
    %v4337 = vld [vmem:[#allocation2 + $0x410] sm:$0xff]
    %v4338 = vld [vmem:[#allocation2 + $0x418] sm:$0xff]
    %v4339 = vld [vmem:[#allocation2 + $0x420] sm:$0xff]
    %v4340 = vld [vmem:[#allocation2 + $0x428] sm:$0xff]
    %v4341 = vld [vmem:[#allocation2 + $0x430] sm:$0xff]
    %v4342 = vld [vmem:[#allocation2 + $0x438] sm:$0xff]
    %v4343 = vld [vmem:[#allocation2 + $0x440] sm:$0xff]
    %v4344 = vld [vmem:[#allocation2 + $0x448] sm:$0xff]
    %v4345 = vld [vmem:[#allocation2 + $0x450] sm:$0xff]
    %v4346 = vld [vmem:[#allocation2 + $0x458] sm:$0xff]
    %v4347 = vld [vmem:[#allocation2 + $0x460] sm:$0xff]
    %v4348 = vld [vmem:[#allocation2 + $0x468] sm:$0xff]
    %v4349 = vld [vmem:[#allocation2 + $0x470] sm:$0xff]
    %v4350 = vld [vmem:[#allocation2 + $0x478] sm:$0xff]
    %v4351 = vld [vmem:[#allocation2 + $0x480] sm:$0xff]
    %v4352 = vld [vmem:[#allocation2 + $0x488] sm:$0xff]
    %v4353 = vld [vmem:[#allocation2 + $0x490] sm:$0xff]
    %v4354 = vld [vmem:[#allocation2 + $0x498] sm:$0xff]
    %v4355 = vld [vmem:[#allocation2 + $0x4a0] sm:$0xff]
    %v4356 = vld [vmem:[#allocation2 + $0x4a8] sm:$0xff]
    %v4357 = vld [vmem:[#allocation2 + $0x4b0] sm:$0xff]
    %v4358 = vld [vmem:[#allocation2 + $0x4b8] sm:$0xff]
    %v4359 = vld [vmem:[#allocation2 + $0x4c0] sm:$0xff]
    %v4360 = vld [vmem:[#allocation2 + $0x4c8] sm:$0xff]
    %v4361 = vld [vmem:[#allocation2 + $0x4d0] sm:$0xff]
    %v4362 = vld [vmem:[#allocation2 + $0x4d8] sm:$0xff]
    %v4363 = vld [vmem:[#allocation2 + $0x4e0] sm:$0xff]
    %v4364 = vld [vmem:[#allocation2 + $0x4e8] sm:$0xff]
    %v4365 = vld [vmem:[#allocation2 + $0x4f0] sm:$0xff]
    %v4366 = vld [vmem:[#allocation2 + $0x4f8] sm:$0xff]
    %v4367 = vld [vmem:[#allocation2 + $0x500] sm:$0xff]
    %v4368 = vld [vmem:[#allocation2 + $0x508] sm:$0xff]
    %v4369 = vld [vmem:[#allocation2 + $0x510] sm:$0xff]
    %v4370 = vld [vmem:[#allocation2 + $0x518] sm:$0xff]
    %v4371 = vld [vmem:[#allocation2 + $0x520] sm:$0xff]
    %v4372 = vld [vmem:[#allocation2 + $0x528] sm:$0xff]
    %v4373 = vld [vmem:[#allocation2 + $0x530] sm:$0xff]
    %v4374 = vld [vmem:[#allocation2 + $0x538] sm:$0xff]
    %v4375 = vld [vmem:[#allocation2 + $0x540] sm:$0xff]
    %v4376 = vld [vmem:[#allocation2 + $0x548] sm:$0xff]
    %v4377 = vld [vmem:[#allocation2 + $0x550] sm:$0xff]
    %v4378 = vld [vmem:[#allocation2 + $0x558] sm:$0xff]
    %v4379 = vld [vmem:[#allocation2 + $0x560] sm:$0xff]
    %v4380 = vld [vmem:[#allocation2 + $0x568] sm:$0xff]
    %v4381 = vld [vmem:[#allocation2 + $0x570] sm:$0xff]
    %v4382 = vld [vmem:[#allocation2 + $0x578] sm:$0xff]
    %v4383 = vld [vmem:[#allocation2 + $0x580] sm:$0xff]
    %v4384 = vld [vmem:[#allocation2 + $0x588] sm:$0xff]
    %v4385 = vld [vmem:[#allocation2 + $0x590] sm:$0xff]
    %v4386 = vld [vmem:[#allocation2 + $0x598] sm:$0xff]
    %v4387 = vld [vmem:[#allocation2 + $0x5a0] sm:$0xff]
    %v4388 = vld [vmem:[#allocation2 + $0x5a8] sm:$0xff]
    %v4389 = vld [vmem:[#allocation2 + $0x5b0] sm:$0xff]
    %v4390 = vld [vmem:[#allocation2 + $0x5b8] sm:$0xff]
    %v4391 = vld [vmem:[#allocation2 + $0x5c0] sm:$0xff]
    %v4392 = vld [vmem:[#allocation2 + $0x5c8] sm:$0xff]
    %v4393 = vld [vmem:[#allocation2 + $0x5d0] sm:$0xff]
    %v4394 = vld [vmem:[#allocation2 + $0x5d8] sm:$0xff]
    %v4395 = vld [vmem:[#allocation2 + $0x5e0] sm:$0xff]
    %v4396 = vld [vmem:[#allocation2 + $0x5e8] sm:$0xff]
    %v4397 = vld [vmem:[#allocation2 + $0x5f0] sm:$0xff]
    %v4398 = vld [vmem:[#allocation2 + $0x5f8] sm:$0xff]
    %v4399 = vld [vmem:[#allocation2 + $0x600] sm:$0xff]
    %v4400 = vld [vmem:[#allocation2 + $0x608] sm:$0xff]
    %v4401 = vld [vmem:[#allocation2 + $0x610] sm:$0xff]
    %v4402 = vld [vmem:[#allocation2 + $0x618] sm:$0xff]
    %v4403 = vld [vmem:[#allocation2 + $0x620] sm:$0xff]
    %v4404 = vld [vmem:[#allocation2 + $0x628] sm:$0xff]
    %v4405 = vld [vmem:[#allocation2 + $0x630] sm:$0xff]
    %v4406 = vld [vmem:[#allocation2 + $0x638] sm:$0xff]
    %v4407 = vld [vmem:[#allocation2 + $0x640] sm:$0xff]
    %v4408 = vld [vmem:[#allocation2 + $0x648] sm:$0xff]
    %v4409 = vld [vmem:[#allocation2 + $0x650] sm:$0xff]
    %v4410 = vld [vmem:[#allocation2 + $0x658] sm:$0xff]
    %v4411 = vld [vmem:[#allocation2 + $0x660] sm:$0xff]
    %v4412 = vld [vmem:[#allocation2 + $0x668] sm:$0xff]
    %v4413 = vld [vmem:[#allocation2 + $0x670] sm:$0xff]
    %v4414 = vld [vmem:[#allocation2 + $0x678] sm:$0xff]
    %v4415 = vld [vmem:[#allocation2 + $0x680] sm:$0xff]
    %v4416 = vld [vmem:[#allocation2 + $0x688] sm:$0xff]
    %v4417 = vld [vmem:[#allocation2 + $0x690] sm:$0xff]
    %v4418 = vld [vmem:[#allocation2 + $0x698] sm:$0xff]
    %v4419 = vld [vmem:[#allocation2 + $0x6a0] sm:$0xff]
    %v4420 = vld [vmem:[#allocation2 + $0x6a8] sm:$0xff]
    %v4421 = vld [vmem:[#allocation2 + $0x6b0] sm:$0xff]
    %v4422 = vld [vmem:[#allocation2 + $0x6b8] sm:$0xff]
    %v4423 = vld [vmem:[#allocation2 + $0x6c0] sm:$0xff]
    %v4424 = vld [vmem:[#allocation2 + $0x6c8] sm:$0xff]
    %v4425 = vld [vmem:[#allocation2 + $0x6d0] sm:$0xff]
    %v4426 = vld [vmem:[#allocation2 + $0x6d8] sm:$0xff]
    %v4427 = vld [vmem:[#allocation2 + $0x6e0] sm:$0xff]
    %v4428 = vld [vmem:[#allocation2 + $0x6e8] sm:$0xff]
    %v4429 = vld [vmem:[#allocation2 + $0x6f0] sm:$0xff]
    %v4430 = vld [vmem:[#allocation2 + $0x6f8] sm:$0xff]
    %v4431 = vld [vmem:[#allocation2 + $0x700] sm:$0xff]
    %v4432 = vld [vmem:[#allocation2 + $0x708] sm:$0xff]
    %v4433 = vld [vmem:[#allocation2 + $0x710] sm:$0xff]
    %v4434 = vld [vmem:[#allocation2 + $0x718] sm:$0xff]
    %v4435 = vld [vmem:[#allocation2 + $0x720] sm:$0xff]
    %v4436 = vld [vmem:[#allocation2 + $0x728] sm:$0xff]
    %v4437 = vld [vmem:[#allocation2 + $0x730] sm:$0xff]
    %v4438 = vld [vmem:[#allocation2 + $0x738] sm:$0xff]
    %v4439 = vld [vmem:[#allocation2 + $0x740] sm:$0xff]
    %v4440 = vld [vmem:[#allocation2 + $0x748] sm:$0xff]
    %v4441 = vld [vmem:[#allocation2 + $0x750] sm:$0xff]
    %v4442 = vld [vmem:[#allocation2 + $0x758] sm:$0xff]
    %v4443 = vld [vmem:[#allocation2 + $0x760] sm:$0xff]
    %v4444 = vld [vmem:[#allocation2 + $0x768] sm:$0xff]
    %v4445 = vld [vmem:[#allocation2 + $0x770] sm:$0xff]
    %v4446 = vld [vmem:[#allocation2 + $0x778] sm:$0xff]
    %v4447 = vld [vmem:[#allocation2 + $0x780] sm:$0xff]
    %v4448 = vld [vmem:[#allocation2 + $0x788] sm:$0xff]
    %v4449 = vld [vmem:[#allocation2 + $0x790] sm:$0xff]
    %v4450 = vld [vmem:[#allocation2 + $0x798] sm:$0xff]
    %v4451 = vld [vmem:[#allocation2 + $0x7a0] sm:$0xff]
    %v4452 = vld [vmem:[#allocation2 + $0x7a8] sm:$0xff]
    %v4453 = vld [vmem:[#allocation2 + $0x7b0] sm:$0xff]
    %v4454 = vld [vmem:[#allocation2 + $0x7b8] sm:$0xff]
    %v4455 = vld [vmem:[#allocation2 + $0x7c0] sm:$0xff]
    %v4456 = vld [vmem:[#allocation2 + $0x7c8] sm:$0xff]
    %v4457 = vld [vmem:[#allocation2 + $0x7d0] sm:$0xff]
    %v4458 = vld [vmem:[#allocation2 + $0x7d8] sm:$0xff]
    %v4459 = vld [vmem:[#allocation2 + $0x7e0] sm:$0xff]
    %v4460 = vld [vmem:[#allocation2 + $0x7e8] sm:$0xff]
    %v4461 = vld [vmem:[#allocation2 + $0x7f0] sm:$0xff]
    %v4462 = vld [vmem:[#allocation2 + $0x7f8] sm:$0xff]
    %4463 = vmatprep.subr.bf16.mxu0 %v4208
    %4464 = vmatpush1.bf16.msra.mxu0 %v4207
    %4465 = vmatprep.subr.bf16.mxu0 %v4224
    %4466 = vmatpush1.bf16.msra.mxu0 %v4223
    %4467 = vmatprep.subr.bf16.mxu0 %v4240
    %4468 = vmatpush1.bf16.msra.mxu0 %v4239
    %4469 = vmatprep.subr.bf16.mxu0 %v4256
    %4470 = vmatpush1.bf16.msra.mxu0 %v4255
    %4471 = vmatprep.subr.bf16.mxu0 %v4272
    %4472 = vmatpush1.bf16.msra.mxu0 %v4271
    %4473 = vmatprep.subr.bf16.mxu0 %v4288
    %4474 = vmatpush1.bf16.msra.mxu0 %v4287
    %4475 = vmatprep.subr.bf16.mxu0 %v4304
    %4476 = vmatpush1.bf16.msra.mxu0 %v4303
    %4477 = vmatprep.subr.bf16.mxu0 %v4320
    %4478 = vmatpush1.bf16.msra.mxu0 %v4319
    %4479 = vmatprep.subr.bf16.mxu0 %v4336
    %4480 = vmatpush1.bf16.msra.mxu0 %v4335
    %4481 = vmatprep.subr.bf16.mxu0 %v4352
    %4482 = vmatpush1.bf16.msra.mxu0 %v4351
    %4483 = vmatprep.subr.bf16.mxu0 %v4368
    %4484 = vmatpush1.bf16.msra.mxu0 %v4367
    %4485 = vmatprep.subr.bf16.mxu0 %v4384
    %4486 = vmatpush1.bf16.msra.mxu0 %v4383
    %4487 = vmatprep.subr.bf16.mxu0 %v4400
    %4488 = vmatpush1.bf16.msra.mxu0 %v4399
    %4489 = vmatprep.subr.bf16.mxu0 %v4416
    %4490 = vmatpush1.bf16.msra.mxu0 %v4415
    %4491 = vmatprep.subr.bf16.mxu0 %v4432
    %4492 = vmatpush1.bf16.msra.mxu0 %v4431
    %4493 = vmatprep.subr.bf16.mxu0 %v4448
    %4494 = vmatpush1.bf16.msra.mxu0 %v4447
    %4495 = vmatprep.mubr.bf16.mxu0 %v2921
    %4496 = vmatmul.mubr.bf16.gmra.mrb[0].mxu0 %v2920
    %v4497 = vpop.f32.mrb[0].mxu0
    %v4498 = vadd.f32 0.0, %v4497
    %v4499 = vpop.f32.mrb[0].mxu0
    %v4500 = vadd.f32 0.0, %v4499
    %v4501 = vpop.f32.mrb[0].mxu0
    %v4502 = vpop.f32.mrb[0].mxu0
    %4503 = vdwg.mxu0
    %4504 = vmatprep.subr.bf16.mxu0 %v4210
    %4505 = vmatpush1.bf16.msra.mxu0 %v4209
    %4506 = vmatprep.subr.bf16.mxu0 %v4226
    %4507 = vmatpush1.bf16.msra.mxu0 %v4225
    %4508 = vmatprep.subr.bf16.mxu0 %v4242
    %4509 = vmatpush1.bf16.msra.mxu0 %v4241
    %4510 = vmatprep.subr.bf16.mxu0 %v4258
    %4511 = vmatpush1.bf16.msra.mxu0 %v4257
    %4512 = vmatprep.subr.bf16.mxu0 %v4274
    %4513 = vmatpush1.bf16.msra.mxu0 %v4273
    %4514 = vmatprep.subr.bf16.mxu0 %v4290
    %4515 = vmatpush1.bf16.msra.mxu0 %v4289
    %4516 = vmatprep.subr.bf16.mxu0 %v4306
    %4517 = vmatpush1.bf16.msra.mxu0 %v4305
    %4518 = vmatprep.subr.bf16.mxu0 %v4322
    %4519 = vmatpush1.bf16.msra.mxu0 %v4321
    %4520 = vmatprep.subr.bf16.mxu0 %v4338
    %4521 = vmatpush1.bf16.msra.mxu0 %v4337
    %4522 = vmatprep.subr.bf16.mxu0 %v4354
    %4523 = vmatpush1.bf16.msra.mxu0 %v4353
    %4524 = vmatprep.subr.bf16.mxu0 %v4370
    %4525 = vmatpush1.bf16.msra.mxu0 %v4369
    %4526 = vmatprep.subr.bf16.mxu0 %v4386
    %4527 = vmatpush1.bf16.msra.mxu0 %v4385
    %4528 = vmatprep.subr.bf16.mxu0 %v4402
    %4529 = vmatpush1.bf16.msra.mxu0 %v4401
    %4530 = vmatprep.subr.bf16.mxu0 %v4418
    %4531 = vmatpush1.bf16.msra.mxu0 %v4417
    %4532 = vmatprep.subr.bf16.mxu0 %v4434
    %4533 = vmatpush1.bf16.msra.mxu0 %v4433
    %4534 = vmatprep.subr.bf16.mxu0 %v4450
    %4535 = vmatpush1.bf16.msra.mxu0 %v4449
    %4536 = vmatprep.mubr.bf16.mxu0 %v2921
    %4537 = vmatmul.mubr.bf16.gmra.mrb[0].mxu0 %v2920
    %v4538 = vpop.f32.mrb[0].mxu0
    %v4539 = vadd.f32 0.0, %v4538
    %v4540 = vpop.f32.mrb[0].mxu0
    %v4541 = vadd.f32 0.0, %v4540
    %v4542 = vpop.f32.mrb[0].mxu0
    %v4543 = vpop.f32.mrb[0].mxu0
    %4544 = vdwg.mxu0
    %4545 = vmatprep.subr.bf16.mxu0 %v4212
    %4546 = vmatpush1.bf16.msra.mxu0 %v4211
    %4547 = vmatprep.subr.bf16.mxu0 %v4228
    %4548 = vmatpush1.bf16.msra.mxu0 %v4227
    %4549 = vmatprep.subr.bf16.mxu0 %v4244
    %4550 = vmatpush1.bf16.msra.mxu0 %v4243
    %4551 = vmatprep.subr.bf16.mxu0 %v4260
    %4552 = vmatpush1.bf16.msra.mxu0 %v4259
    %4553 = vmatprep.subr.bf16.mxu0 %v4276
    %4554 = vmatpush1.bf16.msra.mxu0 %v4275
    %4555 = vmatprep.subr.bf16.mxu0 %v4292
    %4556 = vmatpush1.bf16.msra.mxu0 %v4291
    %4557 = vmatprep.subr.bf16.mxu0 %v4308
    %4558 = vmatpush1.bf16.msra.mxu0 %v4307
    %4559 = vmatprep.subr.bf16.mxu0 %v4324
    %4560 = vmatpush1.bf16.msra.mxu0 %v4323
    %4561 = vmatprep.subr.bf16.mxu0 %v4340
    %4562 = vmatpush1.bf16.msra.mxu0 %v4339
    %4563 = vmatprep.subr.bf16.mxu0 %v4356
    %4564 = vmatpush1.bf16.msra.mxu0 %v4355
    %4565 = vmatprep.subr.bf16.mxu0 %v4372
    %4566 = vmatpush1.bf16.msra.mxu0 %v4371
    %4567 = vmatprep.subr.bf16.mxu0 %v4388
    %4568 = vmatpush1.bf16.msra.mxu0 %v4387
    %4569 = vmatprep.subr.bf16.mxu0 %v4404
    %4570 = vmatpush1.bf16.msra.mxu0 %v4403
    %4571 = vmatprep.subr.bf16.mxu0 %v4420
    %4572 = vmatpush1.bf16.msra.mxu0 %v4419
    %4573 = vmatprep.subr.bf16.mxu0 %v4436
    %4574 = vmatpush1.bf16.msra.mxu0 %v4435
    %4575 = vmatprep.subr.bf16.mxu0 %v4452
    %4576 = vmatpush1.bf16.msra.mxu0 %v4451
    %4577 = vmatprep.mubr.bf16.mxu0 %v2921
    %4578 = vmatmul.mubr.bf16.gmra.mrb[0].mxu0 %v2920
    %v4579 = vpop.f32.mrb[0].mxu0
    %v4580 = vadd.f32 0.0, %v4579
    %v4581 = vpop.f32.mrb[0].mxu0
    %v4582 = vadd.f32 0.0, %v4581
    %v4583 = vpop.f32.mrb[0].mxu0
    %v4584 = vpop.f32.mrb[0].mxu0
    %4585 = vdwg.mxu0
    %4586 = vmatprep.subr.bf16.mxu0 %v4214
    %4587 = vmatpush1.bf16.msra.mxu0 %v4213
    %4588 = vmatprep.subr.bf16.mxu0 %v4230
    %4589 = vmatpush1.bf16.msra.mxu0 %v4229
    %4590 = vmatprep.subr.bf16.mxu0 %v4246
    %4591 = vmatpush1.bf16.msra.mxu0 %v4245
    %4592 = vmatprep.subr.bf16.mxu0 %v4262
    %4593 = vmatpush1.bf16.msra.mxu0 %v4261
    %4594 = vmatprep.subr.bf16.mxu0 %v4278
    %4595 = vmatpush1.bf16.msra.mxu0 %v4277
    %4596 = vmatprep.subr.bf16.mxu0 %v4294
    %4597 = vmatpush1.bf16.msra.mxu0 %v4293
    %4598 = vmatprep.subr.bf16.mxu0 %v4310
    %4599 = vmatpush1.bf16.msra.mxu0 %v4309
    %4600 = vmatprep.subr.bf16.mxu0 %v4326
    %4601 = vmatpush1.bf16.msra.mxu0 %v4325
    %4602 = vmatprep.subr.bf16.mxu0 %v4342
    %4603 = vmatpush1.bf16.msra.mxu0 %v4341
    %4604 = vmatprep.subr.bf16.mxu0 %v4358
    %4605 = vmatpush1.bf16.msra.mxu0 %v4357
    %4606 = vmatprep.subr.bf16.mxu0 %v4374
    %4607 = vmatpush1.bf16.msra.mxu0 %v4373
    %4608 = vmatprep.subr.bf16.mxu0 %v4390
    %4609 = vmatpush1.bf16.msra.mxu0 %v4389
    %4610 = vmatprep.subr.bf16.mxu0 %v4406
    %4611 = vmatpush1.bf16.msra.mxu0 %v4405
    %4612 = vmatprep.subr.bf16.mxu0 %v4422
    %4613 = vmatpush1.bf16.msra.mxu0 %v4421
    %4614 = vmatprep.subr.bf16.mxu0 %v4438
    %4615 = vmatpush1.bf16.msra.mxu0 %v4437
    %4616 = vmatprep.subr.bf16.mxu0 %v4454
    %4617 = vmatpush1.bf16.msra.mxu0 %v4453
    %4618 = vmatprep.mubr.bf16.mxu0 %v2921
    %4619 = vmatmul.mubr.bf16.gmra.mrb[0].mxu0 %v2920
    %v4620 = vpop.f32.mrb[0].mxu0
    %v4621 = vadd.f32 0.0, %v4620
    %v4622 = vpop.f32.mrb[0].mxu0
    %v4623 = vadd.f32 0.0, %v4622
    %v4624 = vpop.f32.mrb[0].mxu0
    %v4625 = vpop.f32.mrb[0].mxu0
    %4626 = vdwg.mxu0
    %4627 = vmatprep.subr.bf16.mxu0 %v4216
    %4628 = vmatpush1.bf16.msra.mxu0 %v4215
    %4629 = vmatprep.subr.bf16.mxu0 %v4232
    %4630 = vmatpush1.bf16.msra.mxu0 %v4231
    %4631 = vmatprep.subr.bf16.mxu0 %v4248
    %4632 = vmatpush1.bf16.msra.mxu0 %v4247
    %4633 = vmatprep.subr.bf16.mxu0 %v4264
    %4634 = vmatpush1.bf16.msra.mxu0 %v4263
    %4635 = vmatprep.subr.bf16.mxu0 %v4280
    %4636 = vmatpush1.bf16.msra.mxu0 %v4279
    %4637 = vmatprep.subr.bf16.mxu0 %v4296
    %4638 = vmatpush1.bf16.msra.mxu0 %v4295
    %4639 = vmatprep.subr.bf16.mxu0 %v4312
    %4640 = vmatpush1.bf16.msra.mxu0 %v4311
    %4641 = vmatprep.subr.bf16.mxu0 %v4328
    %4642 = vmatpush1.bf16.msra.mxu0 %v4327
    %4643 = vmatprep.subr.bf16.mxu0 %v4344
    %4644 = vmatpush1.bf16.msra.mxu0 %v4343
    %4645 = vmatprep.subr.bf16.mxu0 %v4360
    %4646 = vmatpush1.bf16.msra.mxu0 %v4359
    %4647 = vmatprep.subr.bf16.mxu0 %v4376
    %4648 = vmatpush1.bf16.msra.mxu0 %v4375
    %4649 = vmatprep.subr.bf16.mxu0 %v4392
    %4650 = vmatpush1.bf16.msra.mxu0 %v4391
    %4651 = vmatprep.subr.bf16.mxu0 %v4408
    %4652 = vmatpush1.bf16.msra.mxu0 %v4407
    %4653 = vmatprep.subr.bf16.mxu0 %v4424
    %4654 = vmatpush1.bf16.msra.mxu0 %v4423
    %4655 = vmatprep.subr.bf16.mxu0 %v4440
    %4656 = vmatpush1.bf16.msra.mxu0 %v4439
    %4657 = vmatprep.subr.bf16.mxu0 %v4456
    %4658 = vmatpush1.bf16.msra.mxu0 %v4455
    %4659 = vmatprep.mubr.bf16.mxu0 %v2921
    %4660 = vmatmul.mubr.bf16.gmra.mrb[0].mxu0 %v2920
    %v4661 = vpop.f32.mrb[0].mxu0
    %v4662 = vadd.f32 0.0, %v4661
    %v4663 = vpop.f32.mrb[0].mxu0
    %v4664 = vadd.f32 0.0, %v4663
    %v4665 = vpop.f32.mrb[0].mxu0
    %v4666 = vpop.f32.mrb[0].mxu0
    %4667 = vdwg.mxu0
    %4668 = vmatprep.subr.bf16.mxu0 %v4218
    %4669 = vmatpush1.bf16.msra.mxu0 %v4217
    %4670 = vmatprep.subr.bf16.mxu0 %v4234
    %4671 = vmatpush1.bf16.msra.mxu0 %v4233
    %4672 = vmatprep.subr.bf16.mxu0 %v4250
    %4673 = vmatpush1.bf16.msra.mxu0 %v4249
    %4674 = vmatprep.subr.bf16.mxu0 %v4266
    %4675 = vmatpush1.bf16.msra.mxu0 %v4265
    %4676 = vmatprep.subr.bf16.mxu0 %v4282
    %4677 = vmatpush1.bf16.msra.mxu0 %v4281
    %4678 = vmatprep.subr.bf16.mxu0 %v4298
    %4679 = vmatpush1.bf16.msra.mxu0 %v4297
    %4680 = vmatprep.subr.bf16.mxu0 %v4314
    %4681 = vmatpush1.bf16.msra.mxu0 %v4313
    %4682 = vmatprep.subr.bf16.mxu0 %v4330
    %4683 = vmatpush1.bf16.msra.mxu0 %v4329
    %4684 = vmatprep.subr.bf16.mxu0 %v4346
    %4685 = vmatpush1.bf16.msra.mxu0 %v4345
    %4686 = vmatprep.subr.bf16.mxu0 %v4362
    %4687 = vmatpush1.bf16.msra.mxu0 %v4361
    %4688 = vmatprep.subr.bf16.mxu0 %v4378
    %4689 = vmatpush1.bf16.msra.mxu0 %v4377
    %4690 = vmatprep.subr.bf16.mxu0 %v4394
    %4691 = vmatpush1.bf16.msra.mxu0 %v4393
    %4692 = vmatprep.subr.bf16.mxu0 %v4410
    %4693 = vmatpush1.bf16.msra.mxu0 %v4409
    %4694 = vmatprep.subr.bf16.mxu0 %v4426
    %4695 = vmatpush1.bf16.msra.mxu0 %v4425
    %4696 = vmatprep.subr.bf16.mxu0 %v4442
    %4697 = vmatpush1.bf16.msra.mxu0 %v4441
    %4698 = vmatprep.subr.bf16.mxu0 %v4458
    %4699 = vmatpush1.bf16.msra.mxu0 %v4457
    %4700 = vmatprep.mubr.bf16.mxu0 %v2921
    %4701 = vmatmul.mubr.bf16.gmra.mrb[0].mxu0 %v2920
    %v4702 = vpop.f32.mrb[0].mxu0
    %v4703 = vadd.f32 0.0, %v4702
    %v4704 = vpop.f32.mrb[0].mxu0
    %v4705 = vadd.f32 0.0, %v4704
    %v4706 = vpop.f32.mrb[0].mxu0
    %v4707 = vpop.f32.mrb[0].mxu0
    %4708 = vdwg.mxu0
    %4709 = vmatprep.subr.bf16.mxu0 %v4220
    %4710 = vmatpush1.bf16.msra.mxu0 %v4219
    %4711 = vmatprep.subr.bf16.mxu0 %v4236
    %4712 = vmatpush1.bf16.msra.mxu0 %v4235
    %4713 = vmatprep.subr.bf16.mxu0 %v4252
    %4714 = vmatpush1.bf16.msra.mxu0 %v4251
    %4715 = vmatprep.subr.bf16.mxu0 %v4268
    %4716 = vmatpush1.bf16.msra.mxu0 %v4267
    %4717 = vmatprep.subr.bf16.mxu0 %v4284
    %4718 = vmatpush1.bf16.msra.mxu0 %v4283
    %4719 = vmatprep.subr.bf16.mxu0 %v4300
    %4720 = vmatpush1.bf16.msra.mxu0 %v4299
    %4721 = vmatprep.subr.bf16.mxu0 %v4316
    %4722 = vmatpush1.bf16.msra.mxu0 %v4315
    %4723 = vmatprep.subr.bf16.mxu0 %v4332
    %4724 = vmatpush1.bf16.msra.mxu0 %v4331
    %4725 = vmatprep.subr.bf16.mxu0 %v4348
    %4726 = vmatpush1.bf16.msra.mxu0 %v4347
    %4727 = vmatprep.subr.bf16.mxu0 %v4364
    %4728 = vmatpush1.bf16.msra.mxu0 %v4363
    %4729 = vmatprep.subr.bf16.mxu0 %v4380
    %4730 = vmatpush1.bf16.msra.mxu0 %v4379
    %4731 = vmatprep.subr.bf16.mxu0 %v4396
    %4732 = vmatpush1.bf16.msra.mxu0 %v4395
    %4733 = vmatprep.subr.bf16.mxu0 %v4412
    %4734 = vmatpush1.bf16.msra.mxu0 %v4411
    %4735 = vmatprep.subr.bf16.mxu0 %v4428
    %4736 = vmatpush1.bf16.msra.mxu0 %v4427
    %4737 = vmatprep.subr.bf16.mxu0 %v4444
    %4738 = vmatpush1.bf16.msra.mxu0 %v4443
    %4739 = vmatprep.subr.bf16.mxu0 %v4460
    %4740 = vmatpush1.bf16.msra.mxu0 %v4459
    %4741 = vmatprep.mubr.bf16.mxu0 %v2921
    %4742 = vmatmul.mubr.bf16.gmra.mrb[0].mxu0 %v2920
    %v4743 = vpop.f32.mrb[0].mxu0
    %v4744 = vadd.f32 0.0, %v4743
    %v4745 = vpop.f32.mrb[0].mxu0
    %v4746 = vadd.f32 0.0, %v4745
    %v4747 = vpop.f32.mrb[0].mxu0
    %v4748 = vpop.f32.mrb[0].mxu0
    %4749 = vdwg.mxu0
    %4750 = vmatprep.subr.bf16.mxu0 %v4222
    %4751 = vmatpush1.bf16.msra.mxu0 %v4221
    %4752 = vmatprep.subr.bf16.mxu0 %v4238
    %4753 = vmatpush1.bf16.msra.mxu0 %v4237
    %4754 = vmatprep.subr.bf16.mxu0 %v4254
    %4755 = vmatpush1.bf16.msra.mxu0 %v4253
    %4756 = vmatprep.subr.bf16.mxu0 %v4270
    %4757 = vmatpush1.bf16.msra.mxu0 %v4269
    %4758 = vmatprep.subr.bf16.mxu0 %v4286
    %4759 = vmatpush1.bf16.msra.mxu0 %v4285
    %4760 = vmatprep.subr.bf16.mxu0 %v4302
    %4761 = vmatpush1.bf16.msra.mxu0 %v4301
    %4762 = vmatprep.subr.bf16.mxu0 %v4318
    %4763 = vmatpush1.bf16.msra.mxu0 %v4317
    %4764 = vmatprep.subr.bf16.mxu0 %v4334
    %4765 = vmatpush1.bf16.msra.mxu0 %v4333
    %4766 = vmatprep.subr.bf16.mxu0 %v4350
    %4767 = vmatpush1.bf16.msra.mxu0 %v4349
    %4768 = vmatprep.subr.bf16.mxu0 %v4366
    %4769 = vmatpush1.bf16.msra.mxu0 %v4365
    %4770 = vmatprep.subr.bf16.mxu0 %v4382
    %4771 = vmatpush1.bf16.msra.mxu0 %v4381
    %4772 = vmatprep.subr.bf16.mxu0 %v4398
    %4773 = vmatpush1.bf16.msra.mxu0 %v4397
    %4774 = vmatprep.subr.bf16.mxu0 %v4414
    %4775 = vmatpush1.bf16.msra.mxu0 %v4413
    %4776 = vmatprep.subr.bf16.mxu0 %v4430
    %4777 = vmatpush1.bf16.msra.mxu0 %v4429
    %4778 = vmatprep.subr.bf16.mxu0 %v4446
    %4779 = vmatpush1.bf16.msra.mxu0 %v4445
    %4780 = vmatprep.subr.bf16.mxu0 %v4462
    %4781 = vmatpush1.bf16.msra.mxu0 %v4461
    %4782 = vmatprep.mubr.bf16.mxu0 %v2921
    %4783 = vmatmul.mubr.bf16.gmra.mrb[0].mxu0 %v2920
    %v4784 = vpop.f32.mrb[0].mxu0
    %v4785 = vadd.f32 0.0, %v4784
    %v4786 = vpop.f32.mrb[0].mxu0
    %v4787 = vadd.f32 0.0, %v4786
    %v4788 = vpop.f32.mrb[0].mxu0
    %v4789 = vpop.f32.mrb[0].mxu0
    %4790 = vdwg.mxu0
    %v4791 = vadd.f32 %v3877, %v4498
    %v4792 = vadd.f32 %v3879, %v4500
    %v4793 = vadd.f32 %v3918, %v4539
    %v4794 = vadd.f32 %v3920, %v4541
    %v4795 = vadd.f32 %v3959, %v4580
    %v4796 = vadd.f32 %v3961, %v4582
    %v4797 = vadd.f32 %v4000, %v4621
    %v4798 = vadd.f32 %v4002, %v4623
    %v4799 = vadd.f32 %v4041, %v4662
    %v4800 = vadd.f32 %v4043, %v4664
    %v4801 = vadd.f32 %v4082, %v4703
    %v4802 = vadd.f32 %v4084, %v4705
    %v4803 = vadd.f32 %v4123, %v4744
    %v4804 = vadd.f32 %v4125, %v4746
    %v4805 = vadd.f32 %v4164, %v4785
    %v4806 = vadd.f32 %v4166, %v4787
    %s4807 = sshll.u32 %s2925, 4
    %4808 = dma.done %s2930, %s4807
    %v4809 = vld [vmem:[%s2929] sm:$0xff]
    %v4810 = vld [vmem:[%s2929 + $0x8] sm:$0xff]
    %v4811 = vld [vmem:[%s2929 + $0x10] sm:$0xff]
    %v4812 = vld [vmem:[%s2929 + $0x18] sm:$0xff]
    %v4813 = vld [vmem:[%s2929 + $0x20] sm:$0xff]
    %v4814 = vld [vmem:[%s2929 + $0x28] sm:$0xff]
    %v4815 = vld [vmem:[%s2929 + $0x30] sm:$0xff]
    %v4816 = vld [vmem:[%s2929 + $0x38] sm:$0xff]
    %v4817 = vld [vmem:[%s2929 + $0x40] sm:$0xff]
    %v4818 = vld [vmem:[%s2929 + $0x48] sm:$0xff]
    %v4819 = vld [vmem:[%s2929 + $0x50] sm:$0xff]
    %v4820 = vld [vmem:[%s2929 + $0x58] sm:$0xff]
    %v4821 = vld [vmem:[%s2929 + $0x60] sm:$0xff]
    %v4822 = vld [vmem:[%s2929 + $0x68] sm:$0xff]
    %v4823 = vld [vmem:[%s2929 + $0x70] sm:$0xff]
    %v4824 = vld [vmem:[%s2929 + $0x78] sm:$0xff]
    %v4825 = vld [vmem:[%s2929 + $0x80] sm:$0xff]
    %v4826 = vld [vmem:[%s2929 + $0x88] sm:$0xff]
    %v4827 = vld [vmem:[%s2929 + $0x90] sm:$0xff]
    %v4828 = vld [vmem:[%s2929 + $0x98] sm:$0xff]
    %v4829 = vld [vmem:[%s2929 + $0xa0] sm:$0xff]
    %v4830 = vld [vmem:[%s2929 + $0xa8] sm:$0xff]
    %v4831 = vld [vmem:[%s2929 + $0xb0] sm:$0xff]
    %v4832 = vld [vmem:[%s2929 + $0xb8] sm:$0xff]
    %v4833 = vld [vmem:[%s2929 + $0xc0] sm:$0xff]
    %v4834 = vld [vmem:[%s2929 + $0xc8] sm:$0xff]
    %v4835 = vld [vmem:[%s2929 + $0xd0] sm:$0xff]
    %v4836 = vld [vmem:[%s2929 + $0xd8] sm:$0xff]
    %v4837 = vld [vmem:[%s2929 + $0xe0] sm:$0xff]
    %v4838 = vld [vmem:[%s2929 + $0xe8] sm:$0xff]
    %v4839 = vld [vmem:[%s2929 + $0xf0] sm:$0xff]
    %v4840 = vld [vmem:[%s2929 + $0xf8] sm:$0xff]
    %v4841 = vld [vmem:[%s2929 + $0x100] sm:$0xff]
    %v4842 = vld [vmem:[%s2929 + $0x108] sm:$0xff]
    %v4843 = vld [vmem:[%s2929 + $0x110] sm:$0xff]
    %v4844 = vld [vmem:[%s2929 + $0x118] sm:$0xff]
    %v4845 = vld [vmem:[%s2929 + $0x120] sm:$0xff]
    %v4846 = vld [vmem:[%s2929 + $0x128] sm:$0xff]
    %v4847 = vld [vmem:[%s2929 + $0x130] sm:$0xff]
    %v4848 = vld [vmem:[%s2929 + $0x138] sm:$0xff]
    %v4849 = vld [vmem:[%s2929 + $0x140] sm:$0xff]
    %v4850 = vld [vmem:[%s2929 + $0x148] sm:$0xff]
    %v4851 = vld [vmem:[%s2929 + $0x150] sm:$0xff]
    %v4852 = vld [vmem:[%s2929 + $0x158] sm:$0xff]
    %v4853 = vld [vmem:[%s2929 + $0x160] sm:$0xff]
    %v4854 = vld [vmem:[%s2929 + $0x168] sm:$0xff]
    %v4855 = vld [vmem:[%s2929 + $0x170] sm:$0xff]
    %v4856 = vld [vmem:[%s2929 + $0x178] sm:$0xff]
    %v4857 = vld [vmem:[%s2929 + $0x180] sm:$0xff]
    %v4858 = vld [vmem:[%s2929 + $0x188] sm:$0xff]
    %v4859 = vld [vmem:[%s2929 + $0x190] sm:$0xff]
    %v4860 = vld [vmem:[%s2929 + $0x198] sm:$0xff]
    %v4861 = vld [vmem:[%s2929 + $0x1a0] sm:$0xff]
    %v4862 = vld [vmem:[%s2929 + $0x1a8] sm:$0xff]
    %v4863 = vld [vmem:[%s2929 + $0x1b0] sm:$0xff]
    %v4864 = vld [vmem:[%s2929 + $0x1b8] sm:$0xff]
    %v4865 = vld [vmem:[%s2929 + $0x1c0] sm:$0xff]
    %v4866 = vld [vmem:[%s2929 + $0x1c8] sm:$0xff]
    %v4867 = vld [vmem:[%s2929 + $0x1d0] sm:$0xff]
    %v4868 = vld [vmem:[%s2929 + $0x1d8] sm:$0xff]
    %v4869 = vld [vmem:[%s2929 + $0x1e0] sm:$0xff]
    %v4870 = vld [vmem:[%s2929 + $0x1e8] sm:$0xff]
    %v4871 = vld [vmem:[%s2929 + $0x1f0] sm:$0xff]
    %v4872 = vld [vmem:[%s2929 + $0x1f8] sm:$0xff]
    %v4873 = vld [vmem:[%s2929 + $0x200] sm:$0xff]
    %v4874 = vld [vmem:[%s2929 + $0x208] sm:$0xff]
    %v4875 = vld [vmem:[%s2929 + $0x210] sm:$0xff]
    %v4876 = vld [vmem:[%s2929 + $0x218] sm:$0xff]
    %v4877 = vld [vmem:[%s2929 + $0x220] sm:$0xff]
    %v4878 = vld [vmem:[%s2929 + $0x228] sm:$0xff]
    %v4879 = vld [vmem:[%s2929 + $0x230] sm:$0xff]
    %v4880 = vld [vmem:[%s2929 + $0x238] sm:$0xff]
    %v4881 = vld [vmem:[%s2929 + $0x240] sm:$0xff]
    %v4882 = vld [vmem:[%s2929 + $0x248] sm:$0xff]
    %v4883 = vld [vmem:[%s2929 + $0x250] sm:$0xff]
    %v4884 = vld [vmem:[%s2929 + $0x258] sm:$0xff]
    %v4885 = vld [vmem:[%s2929 + $0x260] sm:$0xff]
    %v4886 = vld [vmem:[%s2929 + $0x268] sm:$0xff]
    %v4887 = vld [vmem:[%s2929 + $0x270] sm:$0xff]
    %v4888 = vld [vmem:[%s2929 + $0x278] sm:$0xff]
    %v4889 = vld [vmem:[%s2929 + $0x280] sm:$0xff]
    %v4890 = vld [vmem:[%s2929 + $0x288] sm:$0xff]
    %v4891 = vld [vmem:[%s2929 + $0x290] sm:$0xff]
    %v4892 = vld [vmem:[%s2929 + $0x298] sm:$0xff]
    %v4893 = vld [vmem:[%s2929 + $0x2a0] sm:$0xff]
    %v4894 = vld [vmem:[%s2929 + $0x2a8] sm:$0xff]
    %v4895 = vld [vmem:[%s2929 + $0x2b0] sm:$0xff]
    %v4896 = vld [vmem:[%s2929 + $0x2b8] sm:$0xff]
    %v4897 = vld [vmem:[%s2929 + $0x2c0] sm:$0xff]
    %v4898 = vld [vmem:[%s2929 + $0x2c8] sm:$0xff]
    %v4899 = vld [vmem:[%s2929 + $0x2d0] sm:$0xff]
    %v4900 = vld [vmem:[%s2929 + $0x2d8] sm:$0xff]
    %v4901 = vld [vmem:[%s2929 + $0x2e0] sm:$0xff]
    %v4902 = vld [vmem:[%s2929 + $0x2e8] sm:$0xff]
    %v4903 = vld [vmem:[%s2929 + $0x2f0] sm:$0xff]
    %v4904 = vld [vmem:[%s2929 + $0x2f8] sm:$0xff]
    %v4905 = vld [vmem:[%s2929 + $0x300] sm:$0xff]
    %v4906 = vld [vmem:[%s2929 + $0x308] sm:$0xff]
    %v4907 = vld [vmem:[%s2929 + $0x310] sm:$0xff]
    %v4908 = vld [vmem:[%s2929 + $0x318] sm:$0xff]
    %v4909 = vld [vmem:[%s2929 + $0x320] sm:$0xff]
    %v4910 = vld [vmem:[%s2929 + $0x328] sm:$0xff]
    %v4911 = vld [vmem:[%s2929 + $0x330] sm:$0xff]
    %v4912 = vld [vmem:[%s2929 + $0x338] sm:$0xff]
    %v4913 = vld [vmem:[%s2929 + $0x340] sm:$0xff]
    %v4914 = vld [vmem:[%s2929 + $0x348] sm:$0xff]
    %v4915 = vld [vmem:[%s2929 + $0x350] sm:$0xff]
    %v4916 = vld [vmem:[%s2929 + $0x358] sm:$0xff]
    %v4917 = vld [vmem:[%s2929 + $0x360] sm:$0xff]
    %v4918 = vld [vmem:[%s2929 + $0x368] sm:$0xff]
    %v4919 = vld [vmem:[%s2929 + $0x370] sm:$0xff]
    %v4920 = vld [vmem:[%s2929 + $0x378] sm:$0xff]
    %v4921 = vld [vmem:[%s2929 + $0x380] sm:$0xff]
    %v4922 = vld [vmem:[%s2929 + $0x388] sm:$0xff]
    %v4923 = vld [vmem:[%s2929 + $0x390] sm:$0xff]
    %v4924 = vld [vmem:[%s2929 + $0x398] sm:$0xff]
    %v4925 = vld [vmem:[%s2929 + $0x3a0] sm:$0xff]
    %v4926 = vld [vmem:[%s2929 + $0x3a8] sm:$0xff]
    %v4927 = vld [vmem:[%s2929 + $0x3b0] sm:$0xff]
    %v4928 = vld [vmem:[%s2929 + $0x3b8] sm:$0xff]
    %v4929 = vld [vmem:[%s2929 + $0x3c0] sm:$0xff]
    %v4930 = vld [vmem:[%s2929 + $0x3c8] sm:$0xff]
    %v4931 = vld [vmem:[%s2929 + $0x3d0] sm:$0xff]
    %v4932 = vld [vmem:[%s2929 + $0x3d8] sm:$0xff]
    %v4933 = vld [vmem:[%s2929 + $0x3e0] sm:$0xff]
    %v4934 = vld [vmem:[%s2929 + $0x3e8] sm:$0xff]
    %v4935 = vld [vmem:[%s2929 + $0x3f0] sm:$0xff]
    %v4936 = vld [vmem:[%s2929 + $0x3f8] sm:$0xff]
    %v4937 = vld [vmem:[%s2929 + $0x400] sm:$0xff]
    %v4938 = vld [vmem:[%s2929 + $0x408] sm:$0xff]
    %v4939 = vld [vmem:[%s2929 + $0x410] sm:$0xff]
    %v4940 = vld [vmem:[%s2929 + $0x418] sm:$0xff]
    %v4941 = vld [vmem:[%s2929 + $0x420] sm:$0xff]
    %v4942 = vld [vmem:[%s2929 + $0x428] sm:$0xff]
    %v4943 = vld [vmem:[%s2929 + $0x430] sm:$0xff]
    %v4944 = vld [vmem:[%s2929 + $0x438] sm:$0xff]
    %v4945 = vld [vmem:[%s2929 + $0x440] sm:$0xff]
    %v4946 = vld [vmem:[%s2929 + $0x448] sm:$0xff]
    %v4947 = vld [vmem:[%s2929 + $0x450] sm:$0xff]
    %v4948 = vld [vmem:[%s2929 + $0x458] sm:$0xff]
    %v4949 = vld [vmem:[%s2929 + $0x460] sm:$0xff]
    %v4950 = vld [vmem:[%s2929 + $0x468] sm:$0xff]
    %v4951 = vld [vmem:[%s2929 + $0x470] sm:$0xff]
    %v4952 = vld [vmem:[%s2929 + $0x478] sm:$0xff]
    %v4953 = vld [vmem:[%s2929 + $0x480] sm:$0xff]
    %v4954 = vld [vmem:[%s2929 + $0x488] sm:$0xff]
    %v4955 = vld [vmem:[%s2929 + $0x490] sm:$0xff]
    %v4956 = vld [vmem:[%s2929 + $0x498] sm:$0xff]
    %v4957 = vld [vmem:[%s2929 + $0x4a0] sm:$0xff]
    %v4958 = vld [vmem:[%s2929 + $0x4a8] sm:$0xff]
    %v4959 = vld [vmem:[%s2929 + $0x4b0] sm:$0xff]
    %v4960 = vld [vmem:[%s2929 + $0x4b8] sm:$0xff]
    %v4961 = vld [vmem:[%s2929 + $0x4c0] sm:$0xff]
    %v4962 = vld [vmem:[%s2929 + $0x4c8] sm:$0xff]
    %v4963 = vld [vmem:[%s2929 + $0x4d0] sm:$0xff]
    %v4964 = vld [vmem:[%s2929 + $0x4d8] sm:$0xff]
    %v4965 = vld [vmem:[%s2929 + $0x4e0] sm:$0xff]
    %v4966 = vld [vmem:[%s2929 + $0x4e8] sm:$0xff]
    %v4967 = vld [vmem:[%s2929 + $0x4f0] sm:$0xff]
    %v4968 = vld [vmem:[%s2929 + $0x4f8] sm:$0xff]
    %v4969 = vld [vmem:[%s2929 + $0x500] sm:$0xff]
    %v4970 = vld [vmem:[%s2929 + $0x508] sm:$0xff]
    %v4971 = vld [vmem:[%s2929 + $0x510] sm:$0xff]
    %v4972 = vld [vmem:[%s2929 + $0x518] sm:$0xff]
    %v4973 = vld [vmem:[%s2929 + $0x520] sm:$0xff]
    %v4974 = vld [vmem:[%s2929 + $0x528] sm:$0xff]
    %v4975 = vld [vmem:[%s2929 + $0x530] sm:$0xff]
    %v4976 = vld [vmem:[%s2929 + $0x538] sm:$0xff]
    %v4977 = vld [vmem:[%s2929 + $0x540] sm:$0xff]
    %v4978 = vld [vmem:[%s2929 + $0x548] sm:$0xff]
    %v4979 = vld [vmem:[%s2929 + $0x550] sm:$0xff]
    %v4980 = vld [vmem:[%s2929 + $0x558] sm:$0xff]
    %v4981 = vld [vmem:[%s2929 + $0x560] sm:$0xff]
    %v4982 = vld [vmem:[%s2929 + $0x568] sm:$0xff]
    %v4983 = vld [vmem:[%s2929 + $0x570] sm:$0xff]
    %v4984 = vld [vmem:[%s2929 + $0x578] sm:$0xff]
    %v4985 = vld [vmem:[%s2929 + $0x580] sm:$0xff]
    %v4986 = vld [vmem:[%s2929 + $0x588] sm:$0xff]
    %v4987 = vld [vmem:[%s2929 + $0x590] sm:$0xff]
    %v4988 = vld [vmem:[%s2929 + $0x598] sm:$0xff]
    %v4989 = vld [vmem:[%s2929 + $0x5a0] sm:$0xff]
    %v4990 = vld [vmem:[%s2929 + $0x5a8] sm:$0xff]
    %v4991 = vld [vmem:[%s2929 + $0x5b0] sm:$0xff]
    %v4992 = vld [vmem:[%s2929 + $0x5b8] sm:$0xff]
    %v4993 = vld [vmem:[%s2929 + $0x5c0] sm:$0xff]
    %v4994 = vld [vmem:[%s2929 + $0x5c8] sm:$0xff]
    %v4995 = vld [vmem:[%s2929 + $0x5d0] sm:$0xff]
    %v4996 = vld [vmem:[%s2929 + $0x5d8] sm:$0xff]
    %v4997 = vld [vmem:[%s2929 + $0x5e0] sm:$0xff]
    %v4998 = vld [vmem:[%s2929 + $0x5e8] sm:$0xff]
    %v4999 = vld [vmem:[%s2929 + $0x5f0] sm:$0xff]
    %v5000 = vld [vmem:[%s2929 + $0x5f8] sm:$0xff]
    %v5001 = vld [vmem:[%s2929 + $0x600] sm:$0xff]
    %v5002 = vld [vmem:[%s2929 + $0x608] sm:$0xff]
    %v5003 = vld [vmem:[%s2929 + $0x610] sm:$0xff]
    %v5004 = vld [vmem:[%s2929 + $0x618] sm:$0xff]
    %v5005 = vld [vmem:[%s2929 + $0x620] sm:$0xff]
    %v5006 = vld [vmem:[%s2929 + $0x628] sm:$0xff]
    %v5007 = vld [vmem:[%s2929 + $0x630] sm:$0xff]
    %v5008 = vld [vmem:[%s2929 + $0x638] sm:$0xff]
    %v5009 = vld [vmem:[%s2929 + $0x640] sm:$0xff]
    %v5010 = vld [vmem:[%s2929 + $0x648] sm:$0xff]
    %v5011 = vld [vmem:[%s2929 + $0x650] sm:$0xff]
    %v5012 = vld [vmem:[%s2929 + $0x658] sm:$0xff]
    %v5013 = vld [vmem:[%s2929 + $0x660] sm:$0xff]
    %v5014 = vld [vmem:[%s2929 + $0x668] sm:$0xff]
    %v5015 = vld [vmem:[%s2929 + $0x670] sm:$0xff]
    %v5016 = vld [vmem:[%s2929 + $0x678] sm:$0xff]
    %v5017 = vld [vmem:[%s2929 + $0x680] sm:$0xff]
    %v5018 = vld [vmem:[%s2929 + $0x688] sm:$0xff]
    %v5019 = vld [vmem:[%s2929 + $0x690] sm:$0xff]
    %v5020 = vld [vmem:[%s2929 + $0x698] sm:$0xff]
    %v5021 = vld [vmem:[%s2929 + $0x6a0] sm:$0xff]
    %v5022 = vld [vmem:[%s2929 + $0x6a8] sm:$0xff]
    %v5023 = vld [vmem:[%s2929 + $0x6b0] sm:$0xff]
    %v5024 = vld [vmem:[%s2929 + $0x6b8] sm:$0xff]
    %v5025 = vld [vmem:[%s2929 + $0x6c0] sm:$0xff]
    %v5026 = vld [vmem:[%s2929 + $0x6c8] sm:$0xff]
    %v5027 = vld [vmem:[%s2929 + $0x6d0] sm:$0xff]
    %v5028 = vld [vmem:[%s2929 + $0x6d8] sm:$0xff]
    %v5029 = vld [vmem:[%s2929 + $0x6e0] sm:$0xff]
    %v5030 = vld [vmem:[%s2929 + $0x6e8] sm:$0xff]
    %v5031 = vld [vmem:[%s2929 + $0x6f0] sm:$0xff]
    %v5032 = vld [vmem:[%s2929 + $0x6f8] sm:$0xff]
    %v5033 = vld [vmem:[%s2929 + $0x700] sm:$0xff]
    %v5034 = vld [vmem:[%s2929 + $0x708] sm:$0xff]
    %v5035 = vld [vmem:[%s2929 + $0x710] sm:$0xff]
    %v5036 = vld [vmem:[%s2929 + $0x718] sm:$0xff]
    %v5037 = vld [vmem:[%s2929 + $0x720] sm:$0xff]
    %v5038 = vld [vmem:[%s2929 + $0x728] sm:$0xff]
    %v5039 = vld [vmem:[%s2929 + $0x730] sm:$0xff]
    %v5040 = vld [vmem:[%s2929 + $0x738] sm:$0xff]
    %v5041 = vld [vmem:[%s2929 + $0x740] sm:$0xff]
    %v5042 = vld [vmem:[%s2929 + $0x748] sm:$0xff]
    %v5043 = vld [vmem:[%s2929 + $0x750] sm:$0xff]
    %v5044 = vld [vmem:[%s2929 + $0x758] sm:$0xff]
    %v5045 = vld [vmem:[%s2929 + $0x760] sm:$0xff]
    %v5046 = vld [vmem:[%s2929 + $0x768] sm:$0xff]
    %v5047 = vld [vmem:[%s2929 + $0x770] sm:$0xff]
    %v5048 = vld [vmem:[%s2929 + $0x778] sm:$0xff]
    %v5049 = vld [vmem:[%s2929 + $0x780] sm:$0xff]
    %v5050 = vld [vmem:[%s2929 + $0x788] sm:$0xff]
    %v5051 = vld [vmem:[%s2929 + $0x790] sm:$0xff]
    %v5052 = vld [vmem:[%s2929 + $0x798] sm:$0xff]
    %v5053 = vld [vmem:[%s2929 + $0x7a0] sm:$0xff]
    %v5054 = vld [vmem:[%s2929 + $0x7a8] sm:$0xff]
    %v5055 = vld [vmem:[%s2929 + $0x7b0] sm:$0xff]
    %v5056 = vld [vmem:[%s2929 + $0x7b8] sm:$0xff]
    %v5057 = vld [vmem:[%s2929 + $0x7c0] sm:$0xff]
    %v5058 = vld [vmem:[%s2929 + $0x7c8] sm:$0xff]
    %v5059 = vld [vmem:[%s2929 + $0x7d0] sm:$0xff]
    %v5060 = vld [vmem:[%s2929 + $0x7d8] sm:$0xff]
    %v5061 = vld [vmem:[%s2929 + $0x7e0] sm:$0xff]
    %v5062 = vld [vmem:[%s2929 + $0x7e8] sm:$0xff]
    %v5063 = vld [vmem:[%s2929 + $0x7f0] sm:$0xff]
    %v5064 = vld [vmem:[%s2929 + $0x7f8] sm:$0xff]
    %5065 = vmatprep.subr.bf16.mxu0 %v4810
    %5066 = vmatpush1.bf16.msra.mxu0 %v4809
    %5067 = vmatprep.subr.bf16.mxu0 %v4826
    %5068 = vmatpush1.bf16.msra.mxu0 %v4825
    %5069 = vmatprep.subr.bf16.mxu0 %v4842
    %5070 = vmatpush1.bf16.msra.mxu0 %v4841
    %5071 = vmatprep.subr.bf16.mxu0 %v4858
    %5072 = vmatpush1.bf16.msra.mxu0 %v4857
    %5073 = vmatprep.subr.bf16.mxu0 %v4874
    %5074 = vmatpush1.bf16.msra.mxu0 %v4873
    %5075 = vmatprep.subr.bf16.mxu0 %v4890
    %5076 = vmatpush1.bf16.msra.mxu0 %v4889
    %5077 = vmatprep.subr.bf16.mxu0 %v4906
    %5078 = vmatpush1.bf16.msra.mxu0 %v4905
    %5079 = vmatprep.subr.bf16.mxu0 %v4922
    %5080 = vmatpush1.bf16.msra.mxu0 %v4921
    %5081 = vmatprep.subr.bf16.mxu0 %v4938
    %5082 = vmatpush1.bf16.msra.mxu0 %v4937
    %5083 = vmatprep.subr.bf16.mxu0 %v4954
    %5084 = vmatpush1.bf16.msra.mxu0 %v4953
    %5085 = vmatprep.subr.bf16.mxu0 %v4970
    %5086 = vmatpush1.bf16.msra.mxu0 %v4969
    %5087 = vmatprep.subr.bf16.mxu0 %v4986
    %5088 = vmatpush1.bf16.msra.mxu0 %v4985
    %5089 = vmatprep.subr.bf16.mxu0 %v5002
    %5090 = vmatpush1.bf16.msra.mxu0 %v5001
    %5091 = vmatprep.subr.bf16.mxu0 %v5018
    %5092 = vmatpush1.bf16.msra.mxu0 %v5017
    %5093 = vmatprep.subr.bf16.mxu0 %v5034
    %5094 = vmatpush1.bf16.msra.mxu0 %v5033
    %5095 = vmatprep.subr.bf16.mxu0 %v5050
    %5096 = vmatpush1.bf16.msra.mxu0 %v5049
    %5097 = vmatprep.mubr.bf16.mxu0 %v2923
    %5098 = vmatmul.mubr.bf16.gmra.mrb[0].mxu0 %v2922
    %v5099 = vpop.f32.mrb[0].mxu0
    %v5100 = vadd.f32 0.0, %v5099
    %v5101 = vpop.f32.mrb[0].mxu0
    %v5102 = vadd.f32 0.0, %v5101
    %v5103 = vpop.f32.mrb[0].mxu0
    %v5104 = vpop.f32.mrb[0].mxu0
    %5105 = vdwg.mxu0
    %5106 = vmatprep.subr.bf16.mxu0 %v4812
    %5107 = vmatpush1.bf16.msra.mxu0 %v4811
    %5108 = vmatprep.subr.bf16.mxu0 %v4828
    %5109 = vmatpush1.bf16.msra.mxu0 %v4827
    %5110 = vmatprep.subr.bf16.mxu0 %v4844
    %5111 = vmatpush1.bf16.msra.mxu0 %v4843
    %5112 = vmatprep.subr.bf16.mxu0 %v4860
    %5113 = vmatpush1.bf16.msra.mxu0 %v4859
    %5114 = vmatprep.subr.bf16.mxu0 %v4876
    %5115 = vmatpush1.bf16.msra.mxu0 %v4875
    %5116 = vmatprep.subr.bf16.mxu0 %v4892
    %5117 = vmatpush1.bf16.msra.mxu0 %v4891
    %5118 = vmatprep.subr.bf16.mxu0 %v4908
    %5119 = vmatpush1.bf16.msra.mxu0 %v4907
    %5120 = vmatprep.subr.bf16.mxu0 %v4924
    %5121 = vmatpush1.bf16.msra.mxu0 %v4923
    %5122 = vmatprep.subr.bf16.mxu0 %v4940
    %5123 = vmatpush1.bf16.msra.mxu0 %v4939
    %5124 = vmatprep.subr.bf16.mxu0 %v4956
    %5125 = vmatpush1.bf16.msra.mxu0 %v4955
    %5126 = vmatprep.subr.bf16.mxu0 %v4972
    %5127 = vmatpush1.bf16.msra.mxu0 %v4971
    %5128 = vmatprep.subr.bf16.mxu0 %v4988
    %5129 = vmatpush1.bf16.msra.mxu0 %v4987
    %5130 = vmatprep.subr.bf16.mxu0 %v5004
    %5131 = vmatpush1.bf16.msra.mxu0 %v5003
    %5132 = vmatprep.subr.bf16.mxu0 %v5020
    %5133 = vmatpush1.bf16.msra.mxu0 %v5019
    %5134 = vmatprep.subr.bf16.mxu0 %v5036
    %5135 = vmatpush1.bf16.msra.mxu0 %v5035
    %5136 = vmatprep.subr.bf16.mxu0 %v5052
    %5137 = vmatpush1.bf16.msra.mxu0 %v5051
    %5138 = vmatprep.mubr.bf16.mxu0 %v2923
    %5139 = vmatmul.mubr.bf16.gmra.mrb[0].mxu0 %v2922
    %v5140 = vpop.f32.mrb[0].mxu0
    %v5141 = vadd.f32 0.0, %v5140
    %v5142 = vpop.f32.mrb[0].mxu0
    %v5143 = vadd.f32 0.0, %v5142
    %v5144 = vpop.f32.mrb[0].mxu0
    %v5145 = vpop.f32.mrb[0].mxu0
    %5146 = vdwg.mxu0
    %5147 = vmatprep.subr.bf16.mxu0 %v4814
    %5148 = vmatpush1.bf16.msra.mxu0 %v4813
    %5149 = vmatprep.subr.bf16.mxu0 %v4830
    %5150 = vmatpush1.bf16.msra.mxu0 %v4829
    %5151 = vmatprep.subr.bf16.mxu0 %v4846
    %5152 = vmatpush1.bf16.msra.mxu0 %v4845
    %5153 = vmatprep.subr.bf16.mxu0 %v4862
    %5154 = vmatpush1.bf16.msra.mxu0 %v4861
    %5155 = vmatprep.subr.bf16.mxu0 %v4878
    %5156 = vmatpush1.bf16.msra.mxu0 %v4877
    %5157 = vmatprep.subr.bf16.mxu0 %v4894
    %5158 = vmatpush1.bf16.msra.mxu0 %v4893
    %5159 = vmatprep.subr.bf16.mxu0 %v4910
    %5160 = vmatpush1.bf16.msra.mxu0 %v4909
    %5161 = vmatprep.subr.bf16.mxu0 %v4926
    %5162 = vmatpush1.bf16.msra.mxu0 %v4925
    %5163 = vmatprep.subr.bf16.mxu0 %v4942
    %5164 = vmatpush1.bf16.msra.mxu0 %v4941
    %5165 = vmatprep.subr.bf16.mxu0 %v4958
    %5166 = vmatpush1.bf16.msra.mxu0 %v4957
    %5167 = vmatprep.subr.bf16.mxu0 %v4974
    %5168 = vmatpush1.bf16.msra.mxu0 %v4973
    %5169 = vmatprep.subr.bf16.mxu0 %v4990
    %5170 = vmatpush1.bf16.msra.mxu0 %v4989
    %5171 = vmatprep.subr.bf16.mxu0 %v5006
    %5172 = vmatpush1.bf16.msra.mxu0 %v5005
    %5173 = vmatprep.subr.bf16.mxu0 %v5022
    %5174 = vmatpush1.bf16.msra.mxu0 %v5021
    %5175 = vmatprep.subr.bf16.mxu0 %v5038
    %5176 = vmatpush1.bf16.msra.mxu0 %v5037
    %5177 = vmatprep.subr.bf16.mxu0 %v5054
    %5178 = vmatpush1.bf16.msra.mxu0 %v5053
    %5179 = vmatprep.mubr.bf16.mxu0 %v2923
    %5180 = vmatmul.mubr.bf16.gmra.mrb[0].mxu0 %v2922
    %v5181 = vpop.f32.mrb[0].mxu0
    %v5182 = vadd.f32 0.0, %v5181
    %v5183 = vpop.f32.mrb[0].mxu0
    %v5184 = vadd.f32 0.0, %v5183
    %v5185 = vpop.f32.mrb[0].mxu0
    %v5186 = vpop.f32.mrb[0].mxu0
    %5187 = vdwg.mxu0
    %5188 = vmatprep.subr.bf16.mxu0 %v4816
    %5189 = vmatpush1.bf16.msra.mxu0 %v4815
    %5190 = vmatprep.subr.bf16.mxu0 %v4832
    %5191 = vmatpush1.bf16.msra.mxu0 %v4831
    %5192 = vmatprep.subr.bf16.mxu0 %v4848
    %5193 = vmatpush1.bf16.msra.mxu0 %v4847
    %5194 = vmatprep.subr.bf16.mxu0 %v4864
    %5195 = vmatpush1.bf16.msra.mxu0 %v4863
    %5196 = vmatprep.subr.bf16.mxu0 %v4880
    %5197 = vmatpush1.bf16.msra.mxu0 %v4879
    %5198 = vmatprep.subr.bf16.mxu0 %v4896
    %5199 = vmatpush1.bf16.msra.mxu0 %v4895
    %5200 = vmatprep.subr.bf16.mxu0 %v4912
    %5201 = vmatpush1.bf16.msra.mxu0 %v4911
    %5202 = vmatprep.subr.bf16.mxu0 %v4928
    %5203 = vmatpush1.bf16.msra.mxu0 %v4927
    %5204 = vmatprep.subr.bf16.mxu0 %v4944
    %5205 = vmatpush1.bf16.msra.mxu0 %v4943
    %5206 = vmatprep.subr.bf16.mxu0 %v4960
    %5207 = vmatpush1.bf16.msra.mxu0 %v4959
    %5208 = vmatprep.subr.bf16.mxu0 %v4976
    %5209 = vmatpush1.bf16.msra.mxu0 %v4975
    %5210 = vmatprep.subr.bf16.mxu0 %v4992
    %5211 = vmatpush1.bf16.msra.mxu0 %v4991
    %5212 = vmatprep.subr.bf16.mxu0 %v5008
    %5213 = vmatpush1.bf16.msra.mxu0 %v5007
    %5214 = vmatprep.subr.bf16.mxu0 %v5024
    %5215 = vmatpush1.bf16.msra.mxu0 %v5023
    %5216 = vmatprep.subr.bf16.mxu0 %v5040
    %5217 = vmatpush1.bf16.msra.mxu0 %v5039
    %5218 = vmatprep.subr.bf16.mxu0 %v5056
    %5219 = vmatpush1.bf16.msra.mxu0 %v5055
    %5220 = vmatprep.mubr.bf16.mxu0 %v2923
    %5221 = vmatmul.mubr.bf16.gmra.mrb[0].mxu0 %v2922
    %v5222 = vpop.f32.mrb[0].mxu0
    %v5223 = vadd.f32 0.0, %v5222
    %v5224 = vpop.f32.mrb[0].mxu0
    %v5225 = vadd.f32 0.0, %v5224
    %v5226 = vpop.f32.mrb[0].mxu0
    %v5227 = vpop.f32.mrb[0].mxu0
    %5228 = vdwg.mxu0
    %5229 = vmatprep.subr.bf16.mxu0 %v4818
    %5230 = vmatpush1.bf16.msra.mxu0 %v4817
    %5231 = vmatprep.subr.bf16.mxu0 %v4834
    %5232 = vmatpush1.bf16.msra.mxu0 %v4833
    %5233 = vmatprep.subr.bf16.mxu0 %v4850
    %5234 = vmatpush1.bf16.msra.mxu0 %v4849
    %5235 = vmatprep.subr.bf16.mxu0 %v4866
    %5236 = vmatpush1.bf16.msra.mxu0 %v4865
    %5237 = vmatprep.subr.bf16.mxu0 %v4882
    %5238 = vmatpush1.bf16.msra.mxu0 %v4881
    %5239 = vmatprep.subr.bf16.mxu0 %v4898
    %5240 = vmatpush1.bf16.msra.mxu0 %v4897
    %5241 = vmatprep.subr.bf16.mxu0 %v4914
    %5242 = vmatpush1.bf16.msra.mxu0 %v4913
    %5243 = vmatprep.subr.bf16.mxu0 %v4930
    %5244 = vmatpush1.bf16.msra.mxu0 %v4929
    %5245 = vmatprep.subr.bf16.mxu0 %v4946
    %5246 = vmatpush1.bf16.msra.mxu0 %v4945
    %5247 = vmatprep.subr.bf16.mxu0 %v4962
    %5248 = vmatpush1.bf16.msra.mxu0 %v4961
    %5249 = vmatprep.subr.bf16.mxu0 %v4978
    %5250 = vmatpush1.bf16.msra.mxu0 %v4977
    %5251 = vmatprep.subr.bf16.mxu0 %v4994
    %5252 = vmatpush1.bf16.msra.mxu0 %v4993
    %5253 = vmatprep.subr.bf16.mxu0 %v5010
    %5254 = vmatpush1.bf16.msra.mxu0 %v5009
    %5255 = vmatprep.subr.bf16.mxu0 %v5026
    %5256 = vmatpush1.bf16.msra.mxu0 %v5025
    %5257 = vmatprep.subr.bf16.mxu0 %v5042
    %5258 = vmatpush1.bf16.msra.mxu0 %v5041
    %5259 = vmatprep.subr.bf16.mxu0 %v5058
    %5260 = vmatpush1.bf16.msra.mxu0 %v5057
    %5261 = vmatprep.mubr.bf16.mxu0 %v2923
    %5262 = vmatmul.mubr.bf16.gmra.mrb[0].mxu0 %v2922
    %v5263 = vpop.f32.mrb[0].mxu0
    %v5264 = vadd.f32 0.0, %v5263
    %v5265 = vpop.f32.mrb[0].mxu0
    %v5266 = vadd.f32 0.0, %v5265
    %v5267 = vpop.f32.mrb[0].mxu0
    %v5268 = vpop.f32.mrb[0].mxu0
    %5269 = vdwg.mxu0
    %5270 = vmatprep.subr.bf16.mxu0 %v4820
    %5271 = vmatpush1.bf16.msra.mxu0 %v4819
    %5272 = vmatprep.subr.bf16.mxu0 %v4836
    %5273 = vmatpush1.bf16.msra.mxu0 %v4835
    %5274 = vmatprep.subr.bf16.mxu0 %v4852
    %5275 = vmatpush1.bf16.msra.mxu0 %v4851
    %5276 = vmatprep.subr.bf16.mxu0 %v4868
    %5277 = vmatpush1.bf16.msra.mxu0 %v4867
    %5278 = vmatprep.subr.bf16.mxu0 %v4884
    %5279 = vmatpush1.bf16.msra.mxu0 %v4883
    %5280 = vmatprep.subr.bf16.mxu0 %v4900
    %5281 = vmatpush1.bf16.msra.mxu0 %v4899
    %5282 = vmatprep.subr.bf16.mxu0 %v4916
    %5283 = vmatpush1.bf16.msra.mxu0 %v4915
    %5284 = vmatprep.subr.bf16.mxu0 %v4932
    %5285 = vmatpush1.bf16.msra.mxu0 %v4931
    %5286 = vmatprep.subr.bf16.mxu0 %v4948
    %5287 = vmatpush1.bf16.msra.mxu0 %v4947
    %5288 = vmatprep.subr.bf16.mxu0 %v4964
    %5289 = vmatpush1.bf16.msra.mxu0 %v4963
    %5290 = vmatprep.subr.bf16.mxu0 %v4980
    %5291 = vmatpush1.bf16.msra.mxu0 %v4979
    %5292 = vmatprep.subr.bf16.mxu0 %v4996
    %5293 = vmatpush1.bf16.msra.mxu0 %v4995
    %5294 = vmatprep.subr.bf16.mxu0 %v5012
    %5295 = vmatpush1.bf16.msra.mxu0 %v5011
    %5296 = vmatprep.subr.bf16.mxu0 %v5028
    %5297 = vmatpush1.bf16.msra.mxu0 %v5027
    %5298 = vmatprep.subr.bf16.mxu0 %v5044
    %5299 = vmatpush1.bf16.msra.mxu0 %v5043
    %5300 = vmatprep.subr.bf16.mxu0 %v5060
    %5301 = vmatpush1.bf16.msra.mxu0 %v5059
    %5302 = vmatprep.mubr.bf16.mxu0 %v2923
    %5303 = vmatmul.mubr.bf16.gmra.mrb[0].mxu0 %v2922
    %v5304 = vpop.f32.mrb[0].mxu0
    %v5305 = vadd.f32 0.0, %v5304
    %v5306 = vpop.f32.mrb[0].mxu0
    %v5307 = vadd.f32 0.0, %v5306
    %v5308 = vpop.f32.mrb[0].mxu0
    %v5309 = vpop.f32.mrb[0].mxu0
    %5310 = vdwg.mxu0
    %5311 = vmatprep.subr.bf16.mxu0 %v4822
    %5312 = vmatpush1.bf16.msra.mxu0 %v4821
    %5313 = vmatprep.subr.bf16.mxu0 %v4838
    %5314 = vmatpush1.bf16.msra.mxu0 %v4837
    %5315 = vmatprep.subr.bf16.mxu0 %v4854
    %5316 = vmatpush1.bf16.msra.mxu0 %v4853
    %5317 = vmatprep.subr.bf16.mxu0 %v4870
    %5318 = vmatpush1.bf16.msra.mxu0 %v4869
    %5319 = vmatprep.subr.bf16.mxu0 %v4886
    %5320 = vmatpush1.bf16.msra.mxu0 %v4885
    %5321 = vmatprep.subr.bf16.mxu0 %v4902
    %5322 = vmatpush1.bf16.msra.mxu0 %v4901
    %5323 = vmatprep.subr.bf16.mxu0 %v4918
    %5324 = vmatpush1.bf16.msra.mxu0 %v4917
    %5325 = vmatprep.subr.bf16.mxu0 %v4934
    %5326 = vmatpush1.bf16.msra.mxu0 %v4933
    %5327 = vmatprep.subr.bf16.mxu0 %v4950
    %5328 = vmatpush1.bf16.msra.mxu0 %v4949
    %5329 = vmatprep.subr.bf16.mxu0 %v4966
    %5330 = vmatpush1.bf16.msra.mxu0 %v4965
    %5331 = vmatprep.subr.bf16.mxu0 %v4982
    %5332 = vmatpush1.bf16.msra.mxu0 %v4981
    %5333 = vmatprep.subr.bf16.mxu0 %v4998
    %5334 = vmatpush1.bf16.msra.mxu0 %v4997
    %5335 = vmatprep.subr.bf16.mxu0 %v5014
    %5336 = vmatpush1.bf16.msra.mxu0 %v5013
    %5337 = vmatprep.subr.bf16.mxu0 %v5030
    %5338 = vmatpush1.bf16.msra.mxu0 %v5029
    %5339 = vmatprep.subr.bf16.mxu0 %v5046
    %5340 = vmatpush1.bf16.msra.mxu0 %v5045
    %5341 = vmatprep.subr.bf16.mxu0 %v5062
    %5342 = vmatpush1.bf16.msra.mxu0 %v5061
    %5343 = vmatprep.mubr.bf16.mxu0 %v2923
    %5344 = vmatmul.mubr.bf16.gmra.mrb[0].mxu0 %v2922
    %v5345 = vpop.f32.mrb[0].mxu0
    %v5346 = vadd.f32 0.0, %v5345
    %v5347 = vpop.f32.mrb[0].mxu0
    %v5348 = vadd.f32 0.0, %v5347
    %v5349 = vpop.f32.mrb[0].mxu0
    %v5350 = vpop.f32.mrb[0].mxu0
    %5351 = vdwg.mxu0
    %5352 = vmatprep.subr.bf16.mxu0 %v4824
    %5353 = vmatpush1.bf16.msra.mxu0 %v4823
    %5354 = vmatprep.subr.bf16.mxu0 %v4840
    %5355 = vmatpush1.bf16.msra.mxu0 %v4839
    %5356 = vmatprep.subr.bf16.mxu0 %v4856
    %5357 = vmatpush1.bf16.msra.mxu0 %v4855
    %5358 = vmatprep.subr.bf16.mxu0 %v4872
    %5359 = vmatpush1.bf16.msra.mxu0 %v4871
    %5360 = vmatprep.subr.bf16.mxu0 %v4888
    %5361 = vmatpush1.bf16.msra.mxu0 %v4887
    %5362 = vmatprep.subr.bf16.mxu0 %v4904
    %5363 = vmatpush1.bf16.msra.mxu0 %v4903
    %5364 = vmatprep.subr.bf16.mxu0 %v4920
    %5365 = vmatpush1.bf16.msra.mxu0 %v4919
    %5366 = vmatprep.subr.bf16.mxu0 %v4936
    %5367 = vmatpush1.bf16.msra.mxu0 %v4935
    %5368 = vmatprep.subr.bf16.mxu0 %v4952
    %5369 = vmatpush1.bf16.msra.mxu0 %v4951
    %5370 = vmatprep.subr.bf16.mxu0 %v4968
    %5371 = vmatpush1.bf16.msra.mxu0 %v4967
    %5372 = vmatprep.subr.bf16.mxu0 %v4984
    %5373 = vmatpush1.bf16.msra.mxu0 %v4983
    %5374 = vmatprep.subr.bf16.mxu0 %v5000
    %5375 = vmatpush1.bf16.msra.mxu0 %v4999
    %5376 = vmatprep.subr.bf16.mxu0 %v5016
    %5377 = vmatpush1.bf16.msra.mxu0 %v5015
    %5378 = vmatprep.subr.bf16.mxu0 %v5032
    %5379 = vmatpush1.bf16.msra.mxu0 %v5031
    %5380 = vmatprep.subr.bf16.mxu0 %v5048
    %5381 = vmatpush1.bf16.msra.mxu0 %v5047
    %5382 = vmatprep.subr.bf16.mxu0 %v5064
    %5383 = vmatpush1.bf16.msra.mxu0 %v5063
    %5384 = vmatprep.mubr.bf16.mxu0 %v2923
    %5385 = vmatmul.mubr.bf16.gmra.mrb[0].mxu0 %v2922
    %v5386 = vpop.f32.mrb[0].mxu0
    %v5387 = vadd.f32 0.0, %v5386
    %v5388 = vpop.f32.mrb[0].mxu0
    %v5389 = vadd.f32 0.0, %v5388
    %v5390 = vpop.f32.mrb[0].mxu0
    %v5391 = vpop.f32.mrb[0].mxu0
    %5392 = vdwg.mxu0
    %v5393 = vadd.f32 %v4791, %v5100
    %v5394 = vadd.f32 %v4792, %v5102
    %v5395 = vadd.f32 %v4793, %v5141
    %v5396 = vadd.f32 %v4794, %v5143
    %v5397 = vadd.f32 %v4795, %v5182
    %v5398 = vadd.f32 %v4796, %v5184
    %v5399 = vadd.f32 %v4797, %v5223
    %v5400 = vadd.f32 %v4798, %v5225
    %v5401 = vadd.f32 %v4799, %v5264
    %v5402 = vadd.f32 %v4800, %v5266
    %v5403 = vadd.f32 %v4801, %v5305
    %v5404 = vadd.f32 %v4802, %v5307
    %v5405 = vadd.f32 %v4803, %v5346
    %v5406 = vadd.f32 %v4804, %v5348
    %v5407 = vadd.f32 %v4805, %v5387
    %v5408 = vadd.f32 %v4806, %v5389
    %v5409 = vld [vmem:[#allocation19] sm:$0xff]
    %v5410 = vld [vmem:[#allocation19 + $0x8] sm:$0xff]
    %v5413 = vlaneseq
    %v5414 = vshrl.u32 %v5413, 7
    %v5415 = vsub.s32 0, %v5414
    %v5416 = vrot.slane %v5409, %v5415
    %v5417 = vlaneseq
    %v5418 = vshrl.u32 %v5417, 7
    %v5419 = vsub.s32 1, %v5418
    %v5420 = vrot.slane %v5409, %v5419
    %v5421 = vlaneseq
    %v5422 = vshrl.u32 %v5421, 7
    %v5423 = vsub.s32 2, %v5422
    %v5424 = vrot.slane %v5409, %v5423
    %v5425 = vlaneseq
    %v5426 = vshrl.u32 %v5425, 7
    %v5427 = vsub.s32 3, %v5426
    %v5428 = vrot.slane %v5409, %v5427
    %v5429 = vlaneseq
    %v5430 = vshrl.u32 %v5429, 7
    %v5431 = vsub.s32 4, %v5430
    %v5432 = vrot.slane %v5409, %v5431
    %v5433 = vlaneseq
    %v5434 = vshrl.u32 %v5433, 7
    %v5435 = vsub.s32 5, %v5434
    %v5436 = vrot.slane %v5409, %v5435
    %v5437 = vlaneseq
    %v5438 = vshrl.u32 %v5437, 7
    %v5439 = vsub.s32 6, %v5438
    %v5440 = vrot.slane %v5409, %v5439
    %v5441 = vlaneseq
    %v5442 = vshrl.u32 %v5441, 7
    %v5443 = vsub.s32 7, %v5442
    %v5444 = vrot.slane %v5409, %v5443
    %v5445 = vlaneseq
    %v5446 = vshrl.u32 %v5445, 7
    %v5447 = vsub.s32 0, %v5446
    %v5448 = vrot.slane %v5410, %v5447
    %v5449 = vlaneseq
    %v5450 = vshrl.u32 %v5449, 7
    %v5451 = vsub.s32 1, %v5450
    %v5452 = vrot.slane %v5410, %v5451
    %v5453 = vlaneseq
    %v5454 = vshrl.u32 %v5453, 7
    %v5455 = vsub.s32 2, %v5454
    %v5456 = vrot.slane %v5410, %v5455
    %v5457 = vlaneseq
    %v5458 = vshrl.u32 %v5457, 7
    %v5459 = vsub.s32 3, %v5458
    %v5460 = vrot.slane %v5410, %v5459
    %v5461 = vlaneseq
    %v5462 = vshrl.u32 %v5461, 7
    %v5463 = vsub.s32 4, %v5462
    %v5464 = vrot.slane %v5410, %v5463
    %v5465 = vlaneseq
    %v5466 = vshrl.u32 %v5465, 7
    %v5467 = vsub.s32 5, %v5466
    %v5468 = vrot.slane %v5410, %v5467
    %v5469 = vlaneseq
    %v5470 = vshrl.u32 %v5469, 7
    %v5471 = vsub.s32 6, %v5470
    %v5472 = vrot.slane %v5410, %v5471
    %v5473 = vlaneseq
    %v5474 = vshrl.u32 %v5473, 7
    %v5475 = vsub.s32 7, %v5474
    %v5476 = vrot.slane %v5410, %v5475
    %v5493 = vadd.f32 %v5393, %v5416
    %v5494 = vadd.f32 %v5394, %v5420
    %v5495 = vadd.f32 %v5395, %v5424
    %v5496 = vadd.f32 %v5396, %v5428
    %v5497 = vadd.f32 %v5397, %v5432
    %v5498 = vadd.f32 %v5398, %v5436
    %v5499 = vadd.f32 %v5399, %v5440
    %v5500 = vadd.f32 %v5400, %v5444
    %v5501 = vadd.f32 %v5401, %v5448
    %v5502 = vadd.f32 %v5402, %v5452
    %v5503 = vadd.f32 %v5403, %v5456
    %v5504 = vadd.f32 %v5404, %v5460
    %v5505 = vadd.f32 %v5405, %v5464
    %v5506 = vadd.f32 %v5406, %v5468
    %v5507 = vadd.f32 %v5407, %v5472
    %v5508 = vadd.f32 %v5408, %v5476
    %vm5509 = vcmp.gt.f32.partialorder %v5493, 0.0
    %vm5510 = vcmp.gt.f32.partialorder %v5494, 0.0
    %vm5511 = vcmp.gt.f32.partialorder %v5495, 0.0
    %vm5512 = vcmp.gt.f32.partialorder %v5496, 0.0
    %vm5513 = vcmp.gt.f32.partialorder %v5497, 0.0
    %vm5514 = vcmp.gt.f32.partialorder %v5498, 0.0
    %vm5515 = vcmp.gt.f32.partialorder %v5499, 0.0
    %vm5516 = vcmp.gt.f32.partialorder %v5500, 0.0
    %vm5517 = vcmp.gt.f32.partialorder %v5501, 0.0
    %vm5518 = vcmp.gt.f32.partialorder %v5502, 0.0
    %vm5519 = vcmp.gt.f32.partialorder %v5503, 0.0
    %vm5520 = vcmp.gt.f32.partialorder %v5504, 0.0
    %vm5521 = vcmp.gt.f32.partialorder %v5505, 0.0
    %vm5522 = vcmp.gt.f32.partialorder %v5506, 0.0
    %vm5523 = vcmp.gt.f32.partialorder %v5507, 0.0
    %vm5524 = vcmp.gt.f32.partialorder %v5508, 0.0
    %v5525 = vmul.f32 %v5493, 0.2
    %v5526 = vmul.f32 %v5494, 0.2
    %v5527 = vmul.f32 %v5495, 0.2
    %v5528 = vmul.f32 %v5496, 0.2
    %v5529 = vmul.f32 %v5497, 0.2
    %v5530 = vmul.f32 %v5498, 0.2
    %v5531 = vmul.f32 %v5499, 0.2
    %v5532 = vmul.f32 %v5500, 0.2
    %v5533 = vmul.f32 %v5501, 0.2
    %v5534 = vmul.f32 %v5502, 0.2
    %v5535 = vmul.f32 %v5503, 0.2
    %v5536 = vmul.f32 %v5504, 0.2
    %v5537 = vmul.f32 %v5505, 0.2
    %v5538 = vmul.f32 %v5506, 0.2
    %v5539 = vmul.f32 %v5507, 0.2
    %v5540 = vmul.f32 %v5508, 0.2
    %v5541 = vsel %vm5509, %v5493, %v5525
    %v5542 = vsel %vm5510, %v5494, %v5526
    %v5543 = vsel %vm5511, %v5495, %v5527
    %v5544 = vsel %vm5512, %v5496, %v5528
    %v5545 = vsel %vm5513, %v5497, %v5529
    %v5546 = vsel %vm5514, %v5498, %v5530
    %v5547 = vsel %vm5515, %v5499, %v5531
    %v5548 = vsel %vm5516, %v5500, %v5532
    %v5549 = vsel %vm5517, %v5501, %v5533
    %v5550 = vsel %vm5518, %v5502, %v5534
    %v5551 = vsel %vm5519, %v5503, %v5535
    %v5552 = vsel %vm5520, %v5504, %v5536
    %v5553 = vsel %vm5521, %v5505, %v5537
    %v5554 = vsel %vm5522, %v5506, %v5538
    %v5555 = vsel %vm5523, %v5507, %v5539
    %v5556 = vsel %vm5524, %v5508, %v5540
    %v5557 = vld [vmem:[#allocation21] sm:$0xff]
    %v5558 = vld [vmem:[#allocation21 + $0x8] sm:$0xff]
    %v5559 = vld [vmem:[#allocation22] sm:$0xff]
    %v5560 = vld [vmem:[#allocation22 + $0x8] sm:$0xff]
    %v5561 = vrot.slane %v5541, 4
    %v5562 = vadd.f32 %v5541, %v5561
    %v5563 = vrot.slane %v5562, 2
    %v5564 = vadd.f32 %v5562, %v5563
    %v5565 = vrot.slane %v5564, 1
    %v5566 = vadd.f32 %v5564, %v5565
    %v5567 = vrot.slane %v5542, 4
    %v5568 = vadd.f32 %v5542, %v5567
    %v5569 = vrot.slane %v5568, 2
    %v5570 = vadd.f32 %v5568, %v5569
    %v5571 = vrot.slane %v5570, 1
    %v5572 = vadd.f32 %v5570, %v5571
    %v5573 = vrot.slane %v5543, 4
    %v5574 = vadd.f32 %v5543, %v5573
    %v5575 = vrot.slane %v5574, 2
    %v5576 = vadd.f32 %v5574, %v5575
    %v5577 = vrot.slane %v5576, 1
    %v5578 = vadd.f32 %v5576, %v5577
    %v5579 = vrot.slane %v5544, 4
    %v5580 = vadd.f32 %v5544, %v5579
    %v5581 = vrot.slane %v5580, 2
    %v5582 = vadd.f32 %v5580, %v5581
    %v5583 = vrot.slane %v5582, 1
    %v5584 = vadd.f32 %v5582, %v5583
    %v5585 = vrot.slane %v5545, 4
    %v5586 = vadd.f32 %v5545, %v5585
    %v5587 = vrot.slane %v5586, 2
    %v5588 = vadd.f32 %v5586, %v5587
    %v5589 = vrot.slane %v5588, 1
    %v5590 = vadd.f32 %v5588, %v5589
    %v5591 = vrot.slane %v5546, 4
    %v5592 = vadd.f32 %v5546, %v5591
    %v5593 = vrot.slane %v5592, 2
    %v5594 = vadd.f32 %v5592, %v5593
    %v5595 = vrot.slane %v5594, 1
    %v5596 = vadd.f32 %v5594, %v5595
    %v5597 = vrot.slane %v5547, 4
    %v5598 = vadd.f32 %v5547, %v5597
    %v5599 = vrot.slane %v5598, 2
    %v5600 = vadd.f32 %v5598, %v5599
    %v5601 = vrot.slane %v5600, 1
    %v5602 = vadd.f32 %v5600, %v5601
    %v5603 = vrot.slane %v5548, 4
    %v5604 = vadd.f32 %v5548, %v5603
    %v5605 = vrot.slane %v5604, 2
    %v5606 = vadd.f32 %v5604, %v5605
    %v5607 = vrot.slane %v5606, 1
    %v5608 = vadd.f32 %v5606, %v5607
    %v5609 = vrot.slane %v5549, 4
    %v5610 = vadd.f32 %v5549, %v5609
    %v5611 = vrot.slane %v5610, 2
    %v5612 = vadd.f32 %v5610, %v5611
    %v5613 = vrot.slane %v5612, 1
    %v5614 = vadd.f32 %v5612, %v5613
    %v5615 = vrot.slane %v5550, 4
    %v5616 = vadd.f32 %v5550, %v5615
    %v5617 = vrot.slane %v5616, 2
    %v5618 = vadd.f32 %v5616, %v5617
    %v5619 = vrot.slane %v5618, 1
    %v5620 = vadd.f32 %v5618, %v5619
    %v5621 = vrot.slane %v5551, 4
    %v5622 = vadd.f32 %v5551, %v5621
    %v5623 = vrot.slane %v5622, 2
    %v5624 = vadd.f32 %v5622, %v5623
    %v5625 = vrot.slane %v5624, 1
    %v5626 = vadd.f32 %v5624, %v5625
    %v5627 = vrot.slane %v5552, 4
    %v5628 = vadd.f32 %v5552, %v5627
    %v5629 = vrot.slane %v5628, 2
    %v5630 = vadd.f32 %v5628, %v5629
    %v5631 = vrot.slane %v5630, 1
    %v5632 = vadd.f32 %v5630, %v5631
    %v5633 = vrot.slane %v5553, 4
    %v5634 = vadd.f32 %v5553, %v5633
    %v5635 = vrot.slane %v5634, 2
    %v5636 = vadd.f32 %v5634, %v5635
    %v5637 = vrot.slane %v5636, 1
    %v5638 = vadd.f32 %v5636, %v5637
    %v5639 = vrot.slane %v5554, 4
    %v5640 = vadd.f32 %v5554, %v5639
    %v5641 = vrot.slane %v5640, 2
    %v5642 = vadd.f32 %v5640, %v5641
    %v5643 = vrot.slane %v5642, 1
    %v5644 = vadd.f32 %v5642, %v5643
    %v5645 = vrot.slane %v5555, 4
    %v5646 = vadd.f32 %v5555, %v5645
    %v5647 = vrot.slane %v5646, 2
    %v5648 = vadd.f32 %v5646, %v5647
    %v5649 = vrot.slane %v5648, 1
    %v5650 = vadd.f32 %v5648, %v5649
    %v5651 = vrot.slane %v5556, 4
    %v5652 = vadd.f32 %v5556, %v5651
    %v5653 = vrot.slane %v5652, 2
    %v5654 = vadd.f32 %v5652, %v5653
    %v5655 = vrot.slane %v5654, 1
    %v5656 = vadd.f32 %v5654, %v5655
    %v5657 = vmul.f32 %v5566, %v425
    %v5658 = vmul.f32 %v5572, %v425
    %v5659 = vmul.f32 %v5578, %v425
    %v5660 = vmul.f32 %v5584, %v425
    %v5661 = vmul.f32 %v5590, %v425
    %v5662 = vmul.f32 %v5596, %v425
    %v5663 = vmul.f32 %v5602, %v425
    %v5664 = vmul.f32 %v5608, %v425
    %v5665 = vmul.f32 %v5614, %v425
    %v5666 = vmul.f32 %v5620, %v425
    %v5667 = vmul.f32 %v5626, %v425
    %v5668 = vmul.f32 %v5632, %v425
    %v5669 = vmul.f32 %v5638, %v425
    %v5670 = vmul.f32 %v5644, %v425
    %v5671 = vmul.f32 %v5650, %v425
    %v5672 = vmul.f32 %v5656, %v425
    %v5673 = vmul.f32 %v5541, %v5541
    %v5674 = vmul.f32 %v5542, %v5542
    %v5675 = vmul.f32 %v5543, %v5543
    %v5676 = vmul.f32 %v5544, %v5544
    %v5677 = vmul.f32 %v5545, %v5545
    %v5678 = vmul.f32 %v5546, %v5546
    %v5679 = vmul.f32 %v5547, %v5547
    %v5680 = vmul.f32 %v5548, %v5548
    %v5681 = vmul.f32 %v5549, %v5549
    %v5682 = vmul.f32 %v5550, %v5550
    %v5683 = vmul.f32 %v5551, %v5551
    %v5684 = vmul.f32 %v5552, %v5552
    %v5685 = vmul.f32 %v5553, %v5553
    %v5686 = vmul.f32 %v5554, %v5554
    %v5687 = vmul.f32 %v5555, %v5555
    %v5688 = vmul.f32 %v5556, %v5556
    %v5689 = vrot.slane %v5673, 4
    %v5690 = vadd.f32 %v5673, %v5689
    %v5691 = vrot.slane %v5690, 2
    %v5692 = vadd.f32 %v5690, %v5691
    %v5693 = vrot.slane %v5692, 1
    %v5694 = vadd.f32 %v5692, %v5693
    %v5695 = vrot.slane %v5674, 4
    %v5696 = vadd.f32 %v5674, %v5695
    %v5697 = vrot.slane %v5696, 2
    %v5698 = vadd.f32 %v5696, %v5697
    %v5699 = vrot.slane %v5698, 1
    %v5700 = vadd.f32 %v5698, %v5699
    %v5701 = vrot.slane %v5675, 4
    %v5702 = vadd.f32 %v5675, %v5701
    %v5703 = vrot.slane %v5702, 2
    %v5704 = vadd.f32 %v5702, %v5703
    %v5705 = vrot.slane %v5704, 1
    %v5706 = vadd.f32 %v5704, %v5705
    %v5707 = vrot.slane %v5676, 4
    %v5708 = vadd.f32 %v5676, %v5707
    %v5709 = vrot.slane %v5708, 2
    %v5710 = vadd.f32 %v5708, %v5709
    %v5711 = vrot.slane %v5710, 1
    %v5712 = vadd.f32 %v5710, %v5711
    %v5713 = vrot.slane %v5677, 4
    %v5714 = vadd.f32 %v5677, %v5713
    %v5715 = vrot.slane %v5714, 2
    %v5716 = vadd.f32 %v5714, %v5715
    %v5717 = vrot.slane %v5716, 1
    %v5718 = vadd.f32 %v5716, %v5717
    %v5719 = vrot.slane %v5678, 4
    %v5720 = vadd.f32 %v5678, %v5719
    %v5721 = vrot.slane %v5720, 2
    %v5722 = vadd.f32 %v5720, %v5721
    %v5723 = vrot.slane %v5722, 1
    %v5724 = vadd.f32 %v5722, %v5723
    %v5725 = vrot.slane %v5679, 4
    %v5726 = vadd.f32 %v5679, %v5725
    %v5727 = vrot.slane %v5726, 2
    %v5728 = vadd.f32 %v5726, %v5727
    %v5729 = vrot.slane %v5728, 1
    %v5730 = vadd.f32 %v5728, %v5729
    %v5731 = vrot.slane %v5680, 4
    %v5732 = vadd.f32 %v5680, %v5731
    %v5733 = vrot.slane %v5732, 2
    %v5734 = vadd.f32 %v5732, %v5733
    %v5735 = vrot.slane %v5734, 1
    %v5736 = vadd.f32 %v5734, %v5735
    %v5737 = vrot.slane %v5681, 4
    %v5738 = vadd.f32 %v5681, %v5737
    %v5739 = vrot.slane %v5738, 2
    %v5740 = vadd.f32 %v5738, %v5739
    %v5741 = vrot.slane %v5740, 1
    %v5742 = vadd.f32 %v5740, %v5741
    %v5743 = vrot.slane %v5682, 4
    %v5744 = vadd.f32 %v5682, %v5743
    %v5745 = vrot.slane %v5744, 2
    %v5746 = vadd.f32 %v5744, %v5745
    %v5747 = vrot.slane %v5746, 1
    %v5748 = vadd.f32 %v5746, %v5747
    %v5749 = vrot.slane %v5683, 4
    %v5750 = vadd.f32 %v5683, %v5749
    %v5751 = vrot.slane %v5750, 2
    %v5752 = vadd.f32 %v5750, %v5751
    %v5753 = vrot.slane %v5752, 1
    %v5754 = vadd.f32 %v5752, %v5753
    %v5755 = vrot.slane %v5684, 4
    %v5756 = vadd.f32 %v5684, %v5755
    %v5757 = vrot.slane %v5756, 2
    %v5758 = vadd.f32 %v5756, %v5757
    %v5759 = vrot.slane %v5758, 1
    %v5760 = vadd.f32 %v5758, %v5759
    %v5761 = vrot.slane %v5685, 4
    %v5762 = vadd.f32 %v5685, %v5761
    %v5763 = vrot.slane %v5762, 2
    %v5764 = vadd.f32 %v5762, %v5763
    %v5765 = vrot.slane %v5764, 1
    %v5766 = vadd.f32 %v5764, %v5765
    %v5767 = vrot.slane %v5686, 4
    %v5768 = vadd.f32 %v5686, %v5767
    %v5769 = vrot.slane %v5768, 2
    %v5770 = vadd.f32 %v5768, %v5769
    %v5771 = vrot.slane %v5770, 1
    %v5772 = vadd.f32 %v5770, %v5771
    %v5773 = vrot.slane %v5687, 4
    %v5774 = vadd.f32 %v5687, %v5773
    %v5775 = vrot.slane %v5774, 2
    %v5776 = vadd.f32 %v5774, %v5775
    %v5777 = vrot.slane %v5776, 1
    %v5778 = vadd.f32 %v5776, %v5777
    %v5779 = vrot.slane %v5688, 4
    %v5780 = vadd.f32 %v5688, %v5779
    %v5781 = vrot.slane %v5780, 2
    %v5782 = vadd.f32 %v5780, %v5781
    %v5783 = vrot.slane %v5782, 1
    %v5784 = vadd.f32 %v5782, %v5783
    %v5785 = vmul.f32 %v5694, %v425
    %v5786 = vmul.f32 %v5700, %v425
    %v5787 = vmul.f32 %v5706, %v425
    %v5788 = vmul.f32 %v5712, %v425
    %v5789 = vmul.f32 %v5718, %v425
    %v5790 = vmul.f32 %v5724, %v425
    %v5791 = vmul.f32 %v5730, %v425
    %v5792 = vmul.f32 %v5736, %v425
    %v5793 = vmul.f32 %v5742, %v425
    %v5794 = vmul.f32 %v5748, %v425
    %v5795 = vmul.f32 %v5754, %v425
    %v5796 = vmul.f32 %v5760, %v425
    %v5797 = vmul.f32 %v5766, %v425
    %v5798 = vmul.f32 %v5772, %v425
    %v5799 = vmul.f32 %v5778, %v425
    %v5800 = vmul.f32 %v5784, %v425
    %v5801 = vmul.f32 %v5657, %v5657
    %v5802 = vmul.f32 %v5658, %v5658
    %v5803 = vmul.f32 %v5659, %v5659
    %v5804 = vmul.f32 %v5660, %v5660
    %v5805 = vmul.f32 %v5661, %v5661
    %v5806 = vmul.f32 %v5662, %v5662
    %v5807 = vmul.f32 %v5663, %v5663
    %v5808 = vmul.f32 %v5664, %v5664
    %v5809 = vmul.f32 %v5665, %v5665
    %v5810 = vmul.f32 %v5666, %v5666
    %v5811 = vmul.f32 %v5667, %v5667
    %v5812 = vmul.f32 %v5668, %v5668
    %v5813 = vmul.f32 %v5669, %v5669
    %v5814 = vmul.f32 %v5670, %v5670
    %v5815 = vmul.f32 %v5671, %v5671
    %v5816 = vmul.f32 %v5672, %v5672
    %v5817 = vsub.f32 %v5785, %v5801
    %v5818 = vsub.f32 %v5786, %v5802
    %v5819 = vsub.f32 %v5787, %v5803
    %v5820 = vsub.f32 %v5788, %v5804
    %v5821 = vsub.f32 %v5789, %v5805
    %v5822 = vsub.f32 %v5790, %v5806
    %v5823 = vsub.f32 %v5791, %v5807
    %v5824 = vsub.f32 %v5792, %v5808
    %v5825 = vsub.f32 %v5793, %v5809
    %v5826 = vsub.f32 %v5794, %v5810
    %v5827 = vsub.f32 %v5795, %v5811
    %v5828 = vsub.f32 %v5796, %v5812
    %v5829 = vsub.f32 %v5797, %v5813
    %v5830 = vsub.f32 %v5798, %v5814
    %v5831 = vsub.f32 %v5799, %v5815
    %v5832 = vsub.f32 %v5800, %v5816
    %v5833 = vmax.f32 %v5817, 0.0
    %v5834 = vmax.f32 %v5818, 0.0
    %v5835 = vmax.f32 %v5819, 0.0
    %v5836 = vmax.f32 %v5820, 0.0
    %v5837 = vmax.f32 %v5821, 0.0
    %v5838 = vmax.f32 %v5822, 0.0
    %v5839 = vmax.f32 %v5823, 0.0
    %v5840 = vmax.f32 %v5824, 0.0
    %v5841 = vmax.f32 %v5825, 0.0
    %v5842 = vmax.f32 %v5826, 0.0
    %v5843 = vmax.f32 %v5827, 0.0
    %v5844 = vmax.f32 %v5828, 0.0
    %v5845 = vmax.f32 %v5829, 0.0
    %v5846 = vmax.f32 %v5830, 0.0
    %v5847 = vmax.f32 %v5831, 0.0
    %v5848 = vmax.f32 %v5832, 0.0
    %v5849 = vadd.f32 %v5833, 1e-05
    %v5850 = vadd.f32 %v5834, 1e-05
    %v5851 = vadd.f32 %v5835, 1e-05
    %v5852 = vadd.f32 %v5836, 1e-05
    %v5853 = vadd.f32 %v5837, 1e-05
    %v5854 = vadd.f32 %v5838, 1e-05
    %v5855 = vadd.f32 %v5839, 1e-05
    %v5856 = vadd.f32 %v5840, 1e-05
    %v5857 = vadd.f32 %v5841, 1e-05
    %v5858 = vadd.f32 %v5842, 1e-05
    %v5859 = vadd.f32 %v5843, 1e-05
    %v5860 = vadd.f32 %v5844, 1e-05
    %v5861 = vadd.f32 %v5845, 1e-05
    %v5862 = vadd.f32 %v5846, 1e-05
    %v5863 = vadd.f32 %v5847, 1e-05
    %v5864 = vadd.f32 %v5848, 1e-05
    %v5865 = vrsqrt.pop %v5849
    %v5866 = vrsqrt.pop %v5850
    %v5867 = vrsqrt.pop %v5851
    %v5868 = vrsqrt.pop %v5852
    %v5869 = vrsqrt.pop %v5853
    %v5870 = vrsqrt.pop %v5854
    %v5871 = vrsqrt.pop %v5855
    %v5872 = vrsqrt.pop %v5856
    %v5873 = vrsqrt.pop %v5857
    %v5874 = vrsqrt.pop %v5858
    %v5875 = vrsqrt.pop %v5859
    %v5876 = vrsqrt.pop %v5860
    %v5877 = vrsqrt.pop %v5861
    %v5878 = vrsqrt.pop %v5862
    %v5879 = vrsqrt.pop %v5863
    %v5880 = vrsqrt.pop %v5864
    %v5897 = vcombine.low %v5865, %v5866
    %v5898 = vcombine.low %v5867, %v5868
    %v5899 = vcombine.low %v5869, %v5870
    %v5900 = vcombine.low %v5871, %v5872
    %v5902 = vunpack.c.l.s4 1966171168
    %v5903 = vunpack.c.0.s8 %v5902
    %v5904 = vlaneseq
    %v5905 = vshrl.u32 %v5904, 7
    %v5906 = vsub.s32 %v5903, %v5905
    %v5907 = vrot.slane %v5897, %v5906
    %v5909 = vunpack.c.l.s4 1966171168
    %v5910 = vunpack.c.0.s8 %v5909
    %v5911 = vlaneseq
    %v5912 = vshrl.u32 %v5911, 7
    %v5913 = vsub.s32 %v5910, %v5912
    %v5914 = vrot.slane %v5898, %v5913
    %v5916 = vunpack.c.l.s4 1966171168
    %v5917 = vunpack.c.0.s8 %v5916
    %v5918 = vlaneseq
    %v5919 = vshrl.u32 %v5918, 7
    %v5920 = vsub.s32 %v5917, %v5919
    %v5921 = vrot.slane %v5899, %v5920
    %v5923 = vunpack.c.l.s4 1966171168
    %v5924 = vunpack.c.0.s8 %v5923
    %v5925 = vlaneseq
    %v5926 = vshrl.u32 %v5925, 7
    %v5927 = vsub.s32 %v5924, %v5926
    %v5928 = vrot.slane %v5900, %v5927
    %v5929 = vcombine.low %v5907, %v5914
    %v5930 = vcombine.low %v5921, %v5928
    %v5932 = vunpack.c.l.s4 1966171168
    %v5933 = vunpack.c.0.s8 %v5932
    %v5934 = vlaneseq
    %v5935 = vshrl.u32 %v5934, 7
    %v5936 = vsub.s32 %v5933, %v5935
    %v5937 = vrot.slane %v5929, %v5936
    %v5939 = vunpack.c.l.s4 1966171168
    %v5940 = vunpack.c.0.s8 %v5939
    %v5941 = vlaneseq
    %v5942 = vshrl.u32 %v5941, 7
    %v5943 = vsub.s32 %v5940, %v5942
    %v5944 = vrot.slane %v5930, %v5943
    %v5945 = vcombine.low %v5937, %v5944
    %v5946 = vcombine.low %v5873, %v5874
    %v5947 = vcombine.low %v5875, %v5876
    %v5948 = vcombine.low %v5877, %v5878
    %v5949 = vcombine.low %v5879, %v5880
    %v5951 = vunpack.c.l.s4 1966171168
    %v5952 = vunpack.c.0.s8 %v5951
    %v5953 = vlaneseq
    %v5954 = vshrl.u32 %v5953, 7
    %v5955 = vsub.s32 %v5952, %v5954
    %v5956 = vrot.slane %v5946, %v5955
    %v5958 = vunpack.c.l.s4 1966171168
    %v5959 = vunpack.c.0.s8 %v5958
    %v5960 = vlaneseq
    %v5961 = vshrl.u32 %v5960, 7
    %v5962 = vsub.s32 %v5959, %v5961
    %v5963 = vrot.slane %v5947, %v5962
    %v5965 = vunpack.c.l.s4 1966171168
    %v5966 = vunpack.c.0.s8 %v5965
    %v5967 = vlaneseq
    %v5968 = vshrl.u32 %v5967, 7
    %v5969 = vsub.s32 %v5966, %v5968
    %v5970 = vrot.slane %v5948, %v5969
    %v5972 = vunpack.c.l.s4 1966171168
    %v5973 = vunpack.c.0.s8 %v5972
    %v5974 = vlaneseq
    %v5975 = vshrl.u32 %v5974, 7
    %v5976 = vsub.s32 %v5973, %v5975
    %v5977 = vrot.slane %v5949, %v5976
    %v5978 = vcombine.low %v5956, %v5963
    %v5979 = vcombine.low %v5970, %v5977
    %v5981 = vunpack.c.l.s4 1966171168
    %v5982 = vunpack.c.0.s8 %v5981
    %v5983 = vlaneseq
    %v5984 = vshrl.u32 %v5983, 7
    %v5985 = vsub.s32 %v5982, %v5984
    %v5986 = vrot.slane %v5978, %v5985
    %v5988 = vunpack.c.l.s4 1966171168
    %v5989 = vunpack.c.0.s8 %v5988
    %v5990 = vlaneseq
    %v5991 = vshrl.u32 %v5990, 7
    %v5992 = vsub.s32 %v5989, %v5991
    %v5993 = vrot.slane %v5979, %v5992
    %v5994 = vcombine.low %v5986, %v5993
    %v5997 = vmul.f32 %v5557, %v5945
    %v5998 = vmul.f32 %v5558, %v5994
    %v6001 = vlaneseq
    %v6002 = vshrl.u32 %v6001, 7
    %v6003 = vsub.s32 0, %v6002
    %v6004 = vrot.slane %v5997, %v6003
    %v6005 = vlaneseq
    %v6006 = vshrl.u32 %v6005, 7
    %v6007 = vsub.s32 1, %v6006
    %v6008 = vrot.slane %v5997, %v6007
    %v6009 = vlaneseq
    %v6010 = vshrl.u32 %v6009, 7
    %v6011 = vsub.s32 2, %v6010
    %v6012 = vrot.slane %v5997, %v6011
    %v6013 = vlaneseq
    %v6014 = vshrl.u32 %v6013, 7
    %v6015 = vsub.s32 3, %v6014
    %v6016 = vrot.slane %v5997, %v6015
    %v6017 = vlaneseq
    %v6018 = vshrl.u32 %v6017, 7
    %v6019 = vsub.s32 4, %v6018
    %v6020 = vrot.slane %v5997, %v6019
    %v6021 = vlaneseq
    %v6022 = vshrl.u32 %v6021, 7
    %v6023 = vsub.s32 5, %v6022
    %v6024 = vrot.slane %v5997, %v6023
    %v6025 = vlaneseq
    %v6026 = vshrl.u32 %v6025, 7
    %v6027 = vsub.s32 6, %v6026
    %v6028 = vrot.slane %v5997, %v6027
    %v6029 = vlaneseq
    %v6030 = vshrl.u32 %v6029, 7
    %v6031 = vsub.s32 7, %v6030
    %v6032 = vrot.slane %v5997, %v6031
    %v6033 = vlaneseq
    %v6034 = vshrl.u32 %v6033, 7
    %v6035 = vsub.s32 0, %v6034
    %v6036 = vrot.slane %v5998, %v6035
    %v6037 = vlaneseq
    %v6038 = vshrl.u32 %v6037, 7
    %v6039 = vsub.s32 1, %v6038
    %v6040 = vrot.slane %v5998, %v6039
    %v6041 = vlaneseq
    %v6042 = vshrl.u32 %v6041, 7
    %v6043 = vsub.s32 2, %v6042
    %v6044 = vrot.slane %v5998, %v6043
    %v6045 = vlaneseq
    %v6046 = vshrl.u32 %v6045, 7
    %v6047 = vsub.s32 3, %v6046
    %v6048 = vrot.slane %v5998, %v6047
    %v6049 = vlaneseq
    %v6050 = vshrl.u32 %v6049, 7
    %v6051 = vsub.s32 4, %v6050
    %v6052 = vrot.slane %v5998, %v6051
    %v6053 = vlaneseq
    %v6054 = vshrl.u32 %v6053, 7
    %v6055 = vsub.s32 5, %v6054
    %v6056 = vrot.slane %v5998, %v6055
    %v6057 = vlaneseq
    %v6058 = vshrl.u32 %v6057, 7
    %v6059 = vsub.s32 6, %v6058
    %v6060 = vrot.slane %v5998, %v6059
    %v6061 = vlaneseq
    %v6062 = vshrl.u32 %v6061, 7
    %v6063 = vsub.s32 7, %v6062
    %v6064 = vrot.slane %v5998, %v6063
    %v6081 = vmul.f32 %v5541, %v6004
    %v6082 = vmul.f32 %v5542, %v6008
    %v6083 = vmul.f32 %v5543, %v6012
    %v6084 = vmul.f32 %v5544, %v6016
    %v6085 = vmul.f32 %v5545, %v6020
    %v6086 = vmul.f32 %v5546, %v6024
    %v6087 = vmul.f32 %v5547, %v6028
    %v6088 = vmul.f32 %v5548, %v6032
    %v6089 = vmul.f32 %v5549, %v6036
    %v6090 = vmul.f32 %v5550, %v6040
    %v6091 = vmul.f32 %v5551, %v6044
    %v6092 = vmul.f32 %v5552, %v6048
    %v6093 = vmul.f32 %v5553, %v6052
    %v6094 = vmul.f32 %v5554, %v6056
    %v6095 = vmul.f32 %v5555, %v6060
    %v6096 = vmul.f32 %v5556, %v6064
    %v6097 = vmul.f32 %v5657, %v6004
    %v6098 = vmul.f32 %v5658, %v6008
    %v6099 = vmul.f32 %v5659, %v6012
    %v6100 = vmul.f32 %v5660, %v6016
    %v6101 = vmul.f32 %v5661, %v6020
    %v6102 = vmul.f32 %v5662, %v6024
    %v6103 = vmul.f32 %v5663, %v6028
    %v6104 = vmul.f32 %v5664, %v6032
    %v6105 = vmul.f32 %v5665, %v6036
    %v6106 = vmul.f32 %v5666, %v6040
    %v6107 = vmul.f32 %v5667, %v6044
    %v6108 = vmul.f32 %v5668, %v6048
    %v6109 = vmul.f32 %v5669, %v6052
    %v6110 = vmul.f32 %v5670, %v6056
    %v6111 = vmul.f32 %v5671, %v6060
    %v6112 = vmul.f32 %v5672, %v6064
    %v6129 = vcombine.low %v6097, %v6098
    %v6130 = vcombine.low %v6099, %v6100
    %v6131 = vcombine.low %v6101, %v6102
    %v6132 = vcombine.low %v6103, %v6104
    %v6134 = vunpack.c.l.s4 1966171168
    %v6135 = vunpack.c.0.s8 %v6134
    %v6136 = vlaneseq
    %v6137 = vshrl.u32 %v6136, 7
    %v6138 = vsub.s32 %v6135, %v6137
    %v6139 = vrot.slane %v6129, %v6138
    %v6141 = vunpack.c.l.s4 1966171168
    %v6142 = vunpack.c.0.s8 %v6141
    %v6143 = vlaneseq
    %v6144 = vshrl.u32 %v6143, 7
    %v6145 = vsub.s32 %v6142, %v6144
    %v6146 = vrot.slane %v6130, %v6145
    %v6148 = vunpack.c.l.s4 1966171168
    %v6149 = vunpack.c.0.s8 %v6148
    %v6150 = vlaneseq
    %v6151 = vshrl.u32 %v6150, 7
    %v6152 = vsub.s32 %v6149, %v6151
    %v6153 = vrot.slane %v6131, %v6152
    %v6155 = vunpack.c.l.s4 1966171168
    %v6156 = vunpack.c.0.s8 %v6155
    %v6157 = vlaneseq
    %v6158 = vshrl.u32 %v6157, 7
    %v6159 = vsub.s32 %v6156, %v6158
    %v6160 = vrot.slane %v6132, %v6159
    %v6161 = vcombine.low %v6139, %v6146
    %v6162 = vcombine.low %v6153, %v6160
    %v6164 = vunpack.c.l.s4 1966171168
    %v6165 = vunpack.c.0.s8 %v6164
    %v6166 = vlaneseq
    %v6167 = vshrl.u32 %v6166, 7
    %v6168 = vsub.s32 %v6165, %v6167
    %v6169 = vrot.slane %v6161, %v6168
    %v6171 = vunpack.c.l.s4 1966171168
    %v6172 = vunpack.c.0.s8 %v6171
    %v6173 = vlaneseq
    %v6174 = vshrl.u32 %v6173, 7
    %v6175 = vsub.s32 %v6172, %v6174
    %v6176 = vrot.slane %v6162, %v6175
    %v6177 = vcombine.low %v6169, %v6176
    %v6178 = vcombine.low %v6105, %v6106
    %v6179 = vcombine.low %v6107, %v6108
    %v6180 = vcombine.low %v6109, %v6110
    %v6181 = vcombine.low %v6111, %v6112
    %v6183 = vunpack.c.l.s4 1966171168
    %v6184 = vunpack.c.0.s8 %v6183
    %v6185 = vlaneseq
    %v6186 = vshrl.u32 %v6185, 7
    %v6187 = vsub.s32 %v6184, %v6186
    %v6188 = vrot.slane %v6178, %v6187
    %v6190 = vunpack.c.l.s4 1966171168
    %v6191 = vunpack.c.0.s8 %v6190
    %v6192 = vlaneseq
    %v6193 = vshrl.u32 %v6192, 7
    %v6194 = vsub.s32 %v6191, %v6193
    %v6195 = vrot.slane %v6179, %v6194
    %v6197 = vunpack.c.l.s4 1966171168
    %v6198 = vunpack.c.0.s8 %v6197
    %v6199 = vlaneseq
    %v6200 = vshrl.u32 %v6199, 7
    %v6201 = vsub.s32 %v6198, %v6200
    %v6202 = vrot.slane %v6180, %v6201
    %v6204 = vunpack.c.l.s4 1966171168
    %v6205 = vunpack.c.0.s8 %v6204
    %v6206 = vlaneseq
    %v6207 = vshrl.u32 %v6206, 7
    %v6208 = vsub.s32 %v6205, %v6207
    %v6209 = vrot.slane %v6181, %v6208
    %v6210 = vcombine.low %v6188, %v6195
    %v6211 = vcombine.low %v6202, %v6209
    %v6213 = vunpack.c.l.s4 1966171168
    %v6214 = vunpack.c.0.s8 %v6213
    %v6215 = vlaneseq
    %v6216 = vshrl.u32 %v6215, 7
    %v6217 = vsub.s32 %v6214, %v6216
    %v6218 = vrot.slane %v6210, %v6217
    %v6220 = vunpack.c.l.s4 1966171168
    %v6221 = vunpack.c.0.s8 %v6220
    %v6222 = vlaneseq
    %v6223 = vshrl.u32 %v6222, 7
    %v6224 = vsub.s32 %v6221, %v6223
    %v6225 = vrot.slane %v6211, %v6224
    %v6226 = vcombine.low %v6218, %v6225
    %v6229 = vsub.f32 %v5559, %v6177
    %v6230 = vsub.f32 %v5560, %v6226
    %v6233 = vlaneseq
    %v6234 = vshrl.u32 %v6233, 7
    %v6235 = vsub.s32 0, %v6234
    %v6236 = vrot.slane %v6229, %v6235
    %v6237 = vlaneseq
    %v6238 = vshrl.u32 %v6237, 7
    %v6239 = vsub.s32 1, %v6238
    %v6240 = vrot.slane %v6229, %v6239
    %v6241 = vlaneseq
    %v6242 = vshrl.u32 %v6241, 7
    %v6243 = vsub.s32 2, %v6242
    %v6244 = vrot.slane %v6229, %v6243
    %v6245 = vlaneseq
    %v6246 = vshrl.u32 %v6245, 7
    %v6247 = vsub.s32 3, %v6246
    %v6248 = vrot.slane %v6229, %v6247
    %v6249 = vlaneseq
    %v6250 = vshrl.u32 %v6249, 7
    %v6251 = vsub.s32 4, %v6250
    %v6252 = vrot.slane %v6229, %v6251
    %v6253 = vlaneseq
    %v6254 = vshrl.u32 %v6253, 7
    %v6255 = vsub.s32 5, %v6254
    %v6256 = vrot.slane %v6229, %v6255
    %v6257 = vlaneseq
    %v6258 = vshrl.u32 %v6257, 7
    %v6259 = vsub.s32 6, %v6258
    %v6260 = vrot.slane %v6229, %v6259
    %v6261 = vlaneseq
    %v6262 = vshrl.u32 %v6261, 7
    %v6263 = vsub.s32 7, %v6262
    %v6264 = vrot.slane %v6229, %v6263
    %v6265 = vlaneseq
    %v6266 = vshrl.u32 %v6265, 7
    %v6267 = vsub.s32 0, %v6266
    %v6268 = vrot.slane %v6230, %v6267
    %v6269 = vlaneseq
    %v6270 = vshrl.u32 %v6269, 7
    %v6271 = vsub.s32 1, %v6270
    %v6272 = vrot.slane %v6230, %v6271
    %v6273 = vlaneseq
    %v6274 = vshrl.u32 %v6273, 7
    %v6275 = vsub.s32 2, %v6274
    %v6276 = vrot.slane %v6230, %v6275
    %v6277 = vlaneseq
    %v6278 = vshrl.u32 %v6277, 7
    %v6279 = vsub.s32 3, %v6278
    %v6280 = vrot.slane %v6230, %v6279
    %v6281 = vlaneseq
    %v6282 = vshrl.u32 %v6281, 7
    %v6283 = vsub.s32 4, %v6282
    %v6284 = vrot.slane %v6230, %v6283
    %v6285 = vlaneseq
    %v6286 = vshrl.u32 %v6285, 7
    %v6287 = vsub.s32 5, %v6286
    %v6288 = vrot.slane %v6230, %v6287
    %v6289 = vlaneseq
    %v6290 = vshrl.u32 %v6289, 7
    %v6291 = vsub.s32 6, %v6290
    %v6292 = vrot.slane %v6230, %v6291
    %v6293 = vlaneseq
    %v6294 = vshrl.u32 %v6293, 7
    %v6295 = vsub.s32 7, %v6294
    %v6296 = vrot.slane %v6230, %v6295
    %v6313 = vadd.f32 %v6081, %v6236
    %v6314 = vadd.f32 %v6082, %v6240
    %v6315 = vadd.f32 %v6083, %v6244
    %v6316 = vadd.f32 %v6084, %v6248
    %v6317 = vadd.f32 %v6085, %v6252
    %v6318 = vadd.f32 %v6086, %v6256
    %v6319 = vadd.f32 %v6087, %v6260
    %v6320 = vadd.f32 %v6088, %v6264
    %v6321 = vadd.f32 %v6089, %v6268
    %v6322 = vadd.f32 %v6090, %v6272
    %v6323 = vadd.f32 %v6091, %v6276
    %v6324 = vadd.f32 %v6092, %v6280
    %v6325 = vadd.f32 %v6093, %v6284
    %v6326 = vadd.f32 %v6094, %v6288
    %v6327 = vadd.f32 %v6095, %v6292
    %v6328 = vadd.f32 %v6096, %v6296
    %v6329 = vpack.c.bf16 %v6313, %v6313
    %v6330 = vpack.c.bf16 %v6314, %v6314
    %v6331 = vpack.c.bf16 %v6315, %v6315
    %v6332 = vpack.c.bf16 %v6316, %v6316
    %v6333 = vpack.c.bf16 %v6317, %v6317
    %v6334 = vpack.c.bf16 %v6318, %v6318
    %v6335 = vpack.c.bf16 %v6319, %v6319
    %v6336 = vpack.c.bf16 %v6320, %v6320
    %v6337 = vpack.c.bf16 %v6321, %v6321
    %v6338 = vpack.c.bf16 %v6322, %v6322
    %v6339 = vpack.c.bf16 %v6323, %v6323
    %v6340 = vpack.c.bf16 %v6324, %v6324
    %v6341 = vpack.c.bf16 %v6325, %v6325
    %v6342 = vpack.c.bf16 %v6326, %v6326
    %v6343 = vpack.c.bf16 %v6327, %v6327
    %v6344 = vpack.c.bf16 %v6328, %v6328
    %v6345 = vld [vmem:[#allocation24] sm:$0xf]
    %v6346 = vld [vmem:[#allocation24 + $0x4] sm:$0xf]
    %v6347 = vld [vmem:[#allocation24 + $0x8] sm:$0xf]
    %v6348 = vld [vmem:[#allocation24 + $0xc] sm:$0xf]
    %v6349 = vld [vmem:[#allocation24 + $0x10] sm:$0xf]
    %v6350 = vld [vmem:[#allocation24 + $0x14] sm:$0xf]
    %v6351 = vld [vmem:[#allocation24 + $0x18] sm:$0xf]
    %v6352 = vld [vmem:[#allocation24 + $0x1c] sm:$0xf]
    %v6353 = vld [vmem:[#allocation24 + $0x20] sm:$0xf]
    %v6354 = vld [vmem:[#allocation24 + $0x24] sm:$0xf]
    %v6355 = vld [vmem:[#allocation24 + $0x28] sm:$0xf]
    %v6356 = vld [vmem:[#allocation24 + $0x2c] sm:$0xf]
    %v6357 = vld [vmem:[#allocation24 + $0x30] sm:$0xf]
    %v6358 = vld [vmem:[#allocation24 + $0x34] sm:$0xf]
    %v6359 = vld [vmem:[#allocation24 + $0x38] sm:$0xf]
    %v6360 = vld [vmem:[#allocation24 + $0x3c] sm:$0xf]
    %v6361 = vld [vmem:[#allocation24 + $0x40] sm:$0xf]
    %v6362 = vld [vmem:[#allocation24 + $0x44] sm:$0xf]
    %v6363 = vld [vmem:[#allocation24 + $0x48] sm:$0xf]
    %v6364 = vld [vmem:[#allocation24 + $0x4c] sm:$0xf]
    %v6365 = vld [vmem:[#allocation24 + $0x50] sm:$0xf]
    %v6366 = vld [vmem:[#allocation24 + $0x54] sm:$0xf]
    %v6367 = vld [vmem:[#allocation24 + $0x58] sm:$0xf]
    %v6368 = vld [vmem:[#allocation24 + $0x5c] sm:$0xf]
    %v6369 = vld [vmem:[#allocation24 + $0x60] sm:$0xf]
    %v6370 = vld [vmem:[#allocation24 + $0x64] sm:$0xf]
    %v6371 = vld [vmem:[#allocation24 + $0x68] sm:$0xf]
    %v6372 = vld [vmem:[#allocation24 + $0x6c] sm:$0xf]
    %v6373 = vld [vmem:[#allocation24 + $0x70] sm:$0xf]
    %v6374 = vld [vmem:[#allocation24 + $0x74] sm:$0xf]
    %v6375 = vld [vmem:[#allocation24 + $0x78] sm:$0xf]
    %v6376 = vld [vmem:[#allocation24 + $0x7c] sm:$0xf]
    %v6377 = vld [vmem:[#allocation24 + $0x80] sm:$0xf]
    %v6378 = vld [vmem:[#allocation24 + $0x84] sm:$0xf]
    %v6379 = vld [vmem:[#allocation24 + $0x88] sm:$0xf]
    %v6380 = vld [vmem:[#allocation24 + $0x8c] sm:$0xf]
    %v6381 = vld [vmem:[#allocation24 + $0x90] sm:$0xf]
    %v6382 = vld [vmem:[#allocation24 + $0x94] sm:$0xf]
    %v6383 = vld [vmem:[#allocation24 + $0x98] sm:$0xf]
    %v6384 = vld [vmem:[#allocation24 + $0x9c] sm:$0xf]
    %v6385 = vld [vmem:[#allocation24 + $0xa0] sm:$0xf]
    %v6386 = vld [vmem:[#allocation24 + $0xa4] sm:$0xf]
    %v6387 = vld [vmem:[#allocation24 + $0xa8] sm:$0xf]
    %v6388 = vld [vmem:[#allocation24 + $0xac] sm:$0xf]
    %v6389 = vld [vmem:[#allocation24 + $0xb0] sm:$0xf]
    %v6390 = vld [vmem:[#allocation24 + $0xb4] sm:$0xf]
    %v6391 = vld [vmem:[#allocation24 + $0xb8] sm:$0xf]
    %v6392 = vld [vmem:[#allocation24 + $0xbc] sm:$0xf]
    %v6393 = vld [vmem:[#allocation24 + $0xc0] sm:$0xf]
    %v6394 = vld [vmem:[#allocation24 + $0xc4] sm:$0xf]
    %v6395 = vld [vmem:[#allocation24 + $0xc8] sm:$0xf]
    %v6396 = vld [vmem:[#allocation24 + $0xcc] sm:$0xf]
    %v6397 = vld [vmem:[#allocation24 + $0xd0] sm:$0xf]
    %v6398 = vld [vmem:[#allocation24 + $0xd4] sm:$0xf]
    %v6399 = vld [vmem:[#allocation24 + $0xd8] sm:$0xf]
    %v6400 = vld [vmem:[#allocation24 + $0xdc] sm:$0xf]
    %v6401 = vld [vmem:[#allocation24 + $0xe0] sm:$0xf]
    %v6402 = vld [vmem:[#allocation24 + $0xe4] sm:$0xf]
    %v6403 = vld [vmem:[#allocation24 + $0xe8] sm:$0xf]
    %v6404 = vld [vmem:[#allocation24 + $0xec] sm:$0xf]
    %v6405 = vld [vmem:[#allocation24 + $0xf0] sm:$0xf]
    %v6406 = vld [vmem:[#allocation24 + $0xf4] sm:$0xf]
    %v6407 = vld [vmem:[#allocation24 + $0xf8] sm:$0xf]
    %v6408 = vld [vmem:[#allocation24 + $0xfc] sm:$0xf]
    %v6409 = vld [vmem:[#allocation24 + $0x100] sm:$0xf]
    %v6410 = vld [vmem:[#allocation24 + $0x104] sm:$0xf]
    %v6411 = vld [vmem:[#allocation24 + $0x108] sm:$0xf]
    %v6412 = vld [vmem:[#allocation24 + $0x10c] sm:$0xf]
    %v6413 = vld [vmem:[#allocation24 + $0x110] sm:$0xf]
    %v6414 = vld [vmem:[#allocation24 + $0x114] sm:$0xf]
    %v6415 = vld [vmem:[#allocation24 + $0x118] sm:$0xf]
    %v6416 = vld [vmem:[#allocation24 + $0x11c] sm:$0xf]
    %v6417 = vld [vmem:[#allocation24 + $0x120] sm:$0xf]
    %v6418 = vld [vmem:[#allocation24 + $0x124] sm:$0xf]
    %v6419 = vld [vmem:[#allocation24 + $0x128] sm:$0xf]
    %v6420 = vld [vmem:[#allocation24 + $0x12c] sm:$0xf]
    %v6421 = vld [vmem:[#allocation24 + $0x130] sm:$0xf]
    %v6422 = vld [vmem:[#allocation24 + $0x134] sm:$0xf]
    %v6423 = vld [vmem:[#allocation24 + $0x138] sm:$0xf]
    %v6424 = vld [vmem:[#allocation24 + $0x13c] sm:$0xf]
    %v6425 = vld [vmem:[#allocation24 + $0x140] sm:$0xf]
    %v6426 = vld [vmem:[#allocation24 + $0x144] sm:$0xf]
    %v6427 = vld [vmem:[#allocation24 + $0x148] sm:$0xf]
    %v6428 = vld [vmem:[#allocation24 + $0x14c] sm:$0xf]
    %v6429 = vld [vmem:[#allocation24 + $0x150] sm:$0xf]
    %v6430 = vld [vmem:[#allocation24 + $0x154] sm:$0xf]
    %v6431 = vld [vmem:[#allocation24 + $0x158] sm:$0xf]
    %v6432 = vld [vmem:[#allocation24 + $0x15c] sm:$0xf]
    %v6433 = vld [vmem:[#allocation24 + $0x160] sm:$0xf]
    %v6434 = vld [vmem:[#allocation24 + $0x164] sm:$0xf]
    %v6435 = vld [vmem:[#allocation24 + $0x168] sm:$0xf]
    %v6436 = vld [vmem:[#allocation24 + $0x16c] sm:$0xf]
    %v6437 = vld [vmem:[#allocation24 + $0x170] sm:$0xf]
    %v6438 = vld [vmem:[#allocation24 + $0x174] sm:$0xf]
    %v6439 = vld [vmem:[#allocation24 + $0x178] sm:$0xf]
    %v6440 = vld [vmem:[#allocation24 + $0x17c] sm:$0xf]
    %v6441 = vld [vmem:[#allocation24 + $0x180] sm:$0xf]
    %v6442 = vld [vmem:[#allocation24 + $0x184] sm:$0xf]
    %v6443 = vld [vmem:[#allocation24 + $0x188] sm:$0xf]
    %v6444 = vld [vmem:[#allocation24 + $0x18c] sm:$0xf]
    %v6445 = vld [vmem:[#allocation24 + $0x190] sm:$0xf]
    %v6446 = vld [vmem:[#allocation24 + $0x194] sm:$0xf]
    %v6447 = vld [vmem:[#allocation24 + $0x198] sm:$0xf]
    %v6448 = vld [vmem:[#allocation24 + $0x19c] sm:$0xf]
    %v6449 = vld [vmem:[#allocation24 + $0x1a0] sm:$0xf]
    %v6450 = vld [vmem:[#allocation24 + $0x1a4] sm:$0xf]
    %v6451 = vld [vmem:[#allocation24 + $0x1a8] sm:$0xf]
    %v6452 = vld [vmem:[#allocation24 + $0x1ac] sm:$0xf]
    %v6453 = vld [vmem:[#allocation24 + $0x1b0] sm:$0xf]
    %v6454 = vld [vmem:[#allocation24 + $0x1b4] sm:$0xf]
    %v6455 = vld [vmem:[#allocation24 + $0x1b8] sm:$0xf]
    %v6456 = vld [vmem:[#allocation24 + $0x1bc] sm:$0xf]
    %v6457 = vld [vmem:[#allocation24 + $0x1c0] sm:$0xf]
    %v6458 = vld [vmem:[#allocation24 + $0x1c4] sm:$0xf]
    %v6459 = vld [vmem:[#allocation24 + $0x1c8] sm:$0xf]
    %v6460 = vld [vmem:[#allocation24 + $0x1cc] sm:$0xf]
    %v6461 = vld [vmem:[#allocation24 + $0x1d0] sm:$0xf]
    %v6462 = vld [vmem:[#allocation24 + $0x1d4] sm:$0xf]
    %v6463 = vld [vmem:[#allocation24 + $0x1d8] sm:$0xf]
    %v6464 = vld [vmem:[#allocation24 + $0x1dc] sm:$0xf]
    %v6465 = vld [vmem:[#allocation24 + $0x1e0] sm:$0xf]
    %v6466 = vld [vmem:[#allocation24 + $0x1e4] sm:$0xf]
    %v6467 = vld [vmem:[#allocation24 + $0x1e8] sm:$0xf]
    %v6468 = vld [vmem:[#allocation24 + $0x1ec] sm:$0xf]
    %v6469 = vld [vmem:[#allocation24 + $0x1f0] sm:$0xf]
    %v6470 = vld [vmem:[#allocation24 + $0x1f4] sm:$0xf]
    %v6471 = vld [vmem:[#allocation24 + $0x1f8] sm:$0xf]
    %v6472 = vld [vmem:[#allocation24 + $0x1fc] sm:$0xf]
    %v6473 = vld [vmem:[#allocation24 + $0x200] sm:$0xf]
    %v6474 = vld [vmem:[#allocation24 + $0x204] sm:$0xf]
    %v6475 = vld [vmem:[#allocation24 + $0x208] sm:$0xf]
    %v6476 = vld [vmem:[#allocation24 + $0x20c] sm:$0xf]
    %v6477 = vld [vmem:[#allocation24 + $0x210] sm:$0xf]
    %v6478 = vld [vmem:[#allocation24 + $0x214] sm:$0xf]
    %v6479 = vld [vmem:[#allocation24 + $0x218] sm:$0xf]
    %v6480 = vld [vmem:[#allocation24 + $0x21c] sm:$0xf]
    %v6481 = vld [vmem:[#allocation24 + $0x220] sm:$0xf]
    %v6482 = vld [vmem:[#allocation24 + $0x224] sm:$0xf]
    %v6483 = vld [vmem:[#allocation24 + $0x228] sm:$0xf]
    %v6484 = vld [vmem:[#allocation24 + $0x22c] sm:$0xf]
    %v6485 = vld [vmem:[#allocation24 + $0x230] sm:$0xf]
    %v6486 = vld [vmem:[#allocation24 + $0x234] sm:$0xf]
    %v6487 = vld [vmem:[#allocation24 + $0x238] sm:$0xf]
    %v6488 = vld [vmem:[#allocation24 + $0x23c] sm:$0xf]
    %v6489 = vld [vmem:[#allocation24 + $0x240] sm:$0xf]
    %v6490 = vld [vmem:[#allocation24 + $0x244] sm:$0xf]
    %v6491 = vld [vmem:[#allocation24 + $0x248] sm:$0xf]
    %v6492 = vld [vmem:[#allocation24 + $0x24c] sm:$0xf]
    %v6493 = vld [vmem:[#allocation24 + $0x250] sm:$0xf]
    %v6494 = vld [vmem:[#allocation24 + $0x254] sm:$0xf]
    %v6495 = vld [vmem:[#allocation24 + $0x258] sm:$0xf]
    %v6496 = vld [vmem:[#allocation24 + $0x25c] sm:$0xf]
    %v6497 = vld [vmem:[#allocation24 + $0x260] sm:$0xf]
    %v6498 = vld [vmem:[#allocation24 + $0x264] sm:$0xf]
    %v6499 = vld [vmem:[#allocation24 + $0x268] sm:$0xf]
    %v6500 = vld [vmem:[#allocation24 + $0x26c] sm:$0xf]
    %v6501 = vld [vmem:[#allocation24 + $0x270] sm:$0xf]
    %v6502 = vld [vmem:[#allocation24 + $0x274] sm:$0xf]
    %v6503 = vld [vmem:[#allocation24 + $0x278] sm:$0xf]
    %v6504 = vld [vmem:[#allocation24 + $0x27c] sm:$0xf]
    %v6505 = vld [vmem:[#allocation24 + $0x280] sm:$0xf]
    %v6506 = vld [vmem:[#allocation24 + $0x284] sm:$0xf]
    %v6507 = vld [vmem:[#allocation24 + $0x288] sm:$0xf]
    %v6508 = vld [vmem:[#allocation24 + $0x28c] sm:$0xf]
    %v6509 = vld [vmem:[#allocation24 + $0x290] sm:$0xf]
    %v6510 = vld [vmem:[#allocation24 + $0x294] sm:$0xf]
    %v6511 = vld [vmem:[#allocation24 + $0x298] sm:$0xf]
    %v6512 = vld [vmem:[#allocation24 + $0x29c] sm:$0xf]
    %v6513 = vld [vmem:[#allocation24 + $0x2a0] sm:$0xf]
    %v6514 = vld [vmem:[#allocation24 + $0x2a4] sm:$0xf]
    %v6515 = vld [vmem:[#allocation24 + $0x2a8] sm:$0xf]
    %v6516 = vld [vmem:[#allocation24 + $0x2ac] sm:$0xf]
    %v6517 = vld [vmem:[#allocation24 + $0x2b0] sm:$0xf]
    %v6518 = vld [vmem:[#allocation24 + $0x2b4] sm:$0xf]
    %v6519 = vld [vmem:[#allocation24 + $0x2b8] sm:$0xf]
    %v6520 = vld [vmem:[#allocation24 + $0x2bc] sm:$0xf]
    %v6521 = vld [vmem:[#allocation24 + $0x2c0] sm:$0xf]
    %v6522 = vld [vmem:[#allocation24 + $0x2c4] sm:$0xf]
    %v6523 = vld [vmem:[#allocation24 + $0x2c8] sm:$0xf]
    %v6524 = vld [vmem:[#allocation24 + $0x2cc] sm:$0xf]
    %v6525 = vld [vmem:[#allocation24 + $0x2d0] sm:$0xf]
    %v6526 = vld [vmem:[#allocation24 + $0x2d4] sm:$0xf]
    %v6527 = vld [vmem:[#allocation24 + $0x2d8] sm:$0xf]
    %v6528 = vld [vmem:[#allocation24 + $0x2dc] sm:$0xf]
    %v6529 = vld [vmem:[#allocation24 + $0x2e0] sm:$0xf]
    %v6530 = vld [vmem:[#allocation24 + $0x2e4] sm:$0xf]
    %v6531 = vld [vmem:[#allocation24 + $0x2e8] sm:$0xf]
    %v6532 = vld [vmem:[#allocation24 + $0x2ec] sm:$0xf]
    %v6533 = vld [vmem:[#allocation24 + $0x2f0] sm:$0xf]
    %v6534 = vld [vmem:[#allocation24 + $0x2f4] sm:$0xf]
    %v6535 = vld [vmem:[#allocation24 + $0x2f8] sm:$0xf]
    %v6536 = vld [vmem:[#allocation24 + $0x2fc] sm:$0xf]
    %v6537 = vld [vmem:[#allocation24 + $0x300] sm:$0xf]
    %v6538 = vld [vmem:[#allocation24 + $0x304] sm:$0xf]
    %v6539 = vld [vmem:[#allocation24 + $0x308] sm:$0xf]
    %v6540 = vld [vmem:[#allocation24 + $0x30c] sm:$0xf]
    %v6541 = vld [vmem:[#allocation24 + $0x310] sm:$0xf]
    %v6542 = vld [vmem:[#allocation24 + $0x314] sm:$0xf]
    %v6543 = vld [vmem:[#allocation24 + $0x318] sm:$0xf]
    %v6544 = vld [vmem:[#allocation24 + $0x31c] sm:$0xf]
    %v6545 = vld [vmem:[#allocation24 + $0x320] sm:$0xf]
    %v6546 = vld [vmem:[#allocation24 + $0x324] sm:$0xf]
    %v6547 = vld [vmem:[#allocation24 + $0x328] sm:$0xf]
    %v6548 = vld [vmem:[#allocation24 + $0x32c] sm:$0xf]
    %v6549 = vld [vmem:[#allocation24 + $0x330] sm:$0xf]
    %v6550 = vld [vmem:[#allocation24 + $0x334] sm:$0xf]
    %v6551 = vld [vmem:[#allocation24 + $0x338] sm:$0xf]
    %v6552 = vld [vmem:[#allocation24 + $0x33c] sm:$0xf]
    %v6553 = vld [vmem:[#allocation24 + $0x340] sm:$0xf]
    %v6554 = vld [vmem:[#allocation24 + $0x344] sm:$0xf]
    %v6555 = vld [vmem:[#allocation24 + $0x348] sm:$0xf]
    %v6556 = vld [vmem:[#allocation24 + $0x34c] sm:$0xf]
    %v6557 = vld [vmem:[#allocation24 + $0x350] sm:$0xf]
    %v6558 = vld [vmem:[#allocation24 + $0x354] sm:$0xf]
    %v6559 = vld [vmem:[#allocation24 + $0x358] sm:$0xf]
    %v6560 = vld [vmem:[#allocation24 + $0x35c] sm:$0xf]
    %v6561 = vld [vmem:[#allocation24 + $0x360] sm:$0xf]
    %v6562 = vld [vmem:[#allocation24 + $0x364] sm:$0xf]
    %v6563 = vld [vmem:[#allocation24 + $0x368] sm:$0xf]
    %v6564 = vld [vmem:[#allocation24 + $0x36c] sm:$0xf]
    %v6565 = vld [vmem:[#allocation24 + $0x370] sm:$0xf]
    %v6566 = vld [vmem:[#allocation24 + $0x374] sm:$0xf]
    %v6567 = vld [vmem:[#allocation24 + $0x378] sm:$0xf]
    %v6568 = vld [vmem:[#allocation24 + $0x37c] sm:$0xf]
    %v6569 = vld [vmem:[#allocation24 + $0x380] sm:$0xf]
    %v6570 = vld [vmem:[#allocation24 + $0x384] sm:$0xf]
    %v6571 = vld [vmem:[#allocation24 + $0x388] sm:$0xf]
    %v6572 = vld [vmem:[#allocation24 + $0x38c] sm:$0xf]
    %v6573 = vld [vmem:[#allocation24 + $0x390] sm:$0xf]
    %v6574 = vld [vmem:[#allocation24 + $0x394] sm:$0xf]
    %v6575 = vld [vmem:[#allocation24 + $0x398] sm:$0xf]
    %v6576 = vld [vmem:[#allocation24 + $0x39c] sm:$0xf]
    %v6577 = vld [vmem:[#allocation24 + $0x3a0] sm:$0xf]
    %v6578 = vld [vmem:[#allocation24 + $0x3a4] sm:$0xf]
    %v6579 = vld [vmem:[#allocation24 + $0x3a8] sm:$0xf]
    %v6580 = vld [vmem:[#allocation24 + $0x3ac] sm:$0xf]
    %v6581 = vld [vmem:[#allocation24 + $0x3b0] sm:$0xf]
    %v6582 = vld [vmem:[#allocation24 + $0x3b4] sm:$0xf]
    %v6583 = vld [vmem:[#allocation24 + $0x3b8] sm:$0xf]
    %v6584 = vld [vmem:[#allocation24 + $0x3bc] sm:$0xf]
    %v6585 = vld [vmem:[#allocation24 + $0x3c0] sm:$0xf]
    %v6586 = vld [vmem:[#allocation24 + $0x3c4] sm:$0xf]
    %v6587 = vld [vmem:[#allocation24 + $0x3c8] sm:$0xf]
    %v6588 = vld [vmem:[#allocation24 + $0x3cc] sm:$0xf]
    %v6589 = vld [vmem:[#allocation24 + $0x3d0] sm:$0xf]
    %v6590 = vld [vmem:[#allocation24 + $0x3d4] sm:$0xf]
    %v6591 = vld [vmem:[#allocation24 + $0x3d8] sm:$0xf]
    %v6592 = vld [vmem:[#allocation24 + $0x3dc] sm:$0xf]
    %v6593 = vld [vmem:[#allocation24 + $0x3e0] sm:$0xf]
    %v6594 = vld [vmem:[#allocation24 + $0x3e4] sm:$0xf]
    %v6595 = vld [vmem:[#allocation24 + $0x3e8] sm:$0xf]
    %v6596 = vld [vmem:[#allocation24 + $0x3ec] sm:$0xf]
    %v6597 = vld [vmem:[#allocation24 + $0x3f0] sm:$0xf]
    %v6598 = vld [vmem:[#allocation24 + $0x3f4] sm:$0xf]
    %v6599 = vld [vmem:[#allocation24 + $0x3f8] sm:$0xf]
    %v6600 = vld [vmem:[#allocation24 + $0x3fc] sm:$0xf]
    %v6601 = vld [vmem:[#allocation25] sm:$0x1]
    %v6603 = vlaneseq
    %v6604 = vshrl.u32 %v6603, 7
    %v6605 = vsub.s32 0, %v6604
    %v6606 = vrot.slane %v6601, %v6605
    %v6864 = vunpack.c.l.b16 %v6345
    %v6865 = vunpack.c.l.b16 %v6346
    %v6866 = vunpack.c.l.b16 %v6347
    %v6867 = vunpack.c.l.b16 %v6348
    %v6868 = vunpack.c.l.b16 %v6349
    %v6869 = vunpack.c.l.b16 %v6350
    %v6870 = vunpack.c.l.b16 %v6351
    %v6871 = vunpack.c.l.b16 %v6352
    %v6872 = vunpack.c.l.b16 %v6353
    %v6873 = vunpack.c.l.b16 %v6354
    %v6874 = vunpack.c.l.b16 %v6355
    %v6875 = vunpack.c.l.b16 %v6356
    %v6876 = vunpack.c.l.b16 %v6357
    %v6877 = vunpack.c.l.b16 %v6358
    %v6878 = vunpack.c.l.b16 %v6359
    %v6879 = vunpack.c.l.b16 %v6360
    %v6880 = vunpack.c.l.b16 %v6361
    %v6881 = vunpack.c.l.b16 %v6362
    %v6882 = vunpack.c.l.b16 %v6363
    %v6883 = vunpack.c.l.b16 %v6364
    %v6884 = vunpack.c.l.b16 %v6365
    %v6885 = vunpack.c.l.b16 %v6366
    %v6886 = vunpack.c.l.b16 %v6367
    %v6887 = vunpack.c.l.b16 %v6368
    %v6888 = vunpack.c.l.b16 %v6369
    %v6889 = vunpack.c.l.b16 %v6370
    %v6890 = vunpack.c.l.b16 %v6371
    %v6891 = vunpack.c.l.b16 %v6372
    %v6892 = vunpack.c.l.b16 %v6373
    %v6893 = vunpack.c.l.b16 %v6374
    %v6894 = vunpack.c.l.b16 %v6375
    %v6895 = vunpack.c.l.b16 %v6376
    %v6896 = vunpack.c.l.b16 %v6377
    %v6897 = vunpack.c.l.b16 %v6378
    %v6898 = vunpack.c.l.b16 %v6379
    %v6899 = vunpack.c.l.b16 %v6380
    %v6900 = vunpack.c.l.b16 %v6381
    %v6901 = vunpack.c.l.b16 %v6382
    %v6902 = vunpack.c.l.b16 %v6383
    %v6903 = vunpack.c.l.b16 %v6384
    %v6904 = vunpack.c.l.b16 %v6385
    %v6905 = vunpack.c.l.b16 %v6386
    %v6906 = vunpack.c.l.b16 %v6387
    %v6907 = vunpack.c.l.b16 %v6388
    %v6908 = vunpack.c.l.b16 %v6389
    %v6909 = vunpack.c.l.b16 %v6390
    %v6910 = vunpack.c.l.b16 %v6391
    %v6911 = vunpack.c.l.b16 %v6392
    %v6912 = vunpack.c.l.b16 %v6393
    %v6913 = vunpack.c.l.b16 %v6394
    %v6914 = vunpack.c.l.b16 %v6395
    %v6915 = vunpack.c.l.b16 %v6396
    %v6916 = vunpack.c.l.b16 %v6397
    %v6917 = vunpack.c.l.b16 %v6398
    %v6918 = vunpack.c.l.b16 %v6399
    %v6919 = vunpack.c.l.b16 %v6400
    %v6920 = vunpack.c.l.b16 %v6401
    %v6921 = vunpack.c.l.b16 %v6402
    %v6922 = vunpack.c.l.b16 %v6403
    %v6923 = vunpack.c.l.b16 %v6404
    %v6924 = vunpack.c.l.b16 %v6405
    %v6925 = vunpack.c.l.b16 %v6406
    %v6926 = vunpack.c.l.b16 %v6407
    %v6927 = vunpack.c.l.b16 %v6408
    %v6928 = vunpack.c.l.b16 %v6409
    %v6929 = vunpack.c.l.b16 %v6410
    %v6930 = vunpack.c.l.b16 %v6411
    %v6931 = vunpack.c.l.b16 %v6412
    %v6932 = vunpack.c.l.b16 %v6413
    %v6933 = vunpack.c.l.b16 %v6414
    %v6934 = vunpack.c.l.b16 %v6415
    %v6935 = vunpack.c.l.b16 %v6416
    %v6936 = vunpack.c.l.b16 %v6417
    %v6937 = vunpack.c.l.b16 %v6418
    %v6938 = vunpack.c.l.b16 %v6419
    %v6939 = vunpack.c.l.b16 %v6420
    %v6940 = vunpack.c.l.b16 %v6421
    %v6941 = vunpack.c.l.b16 %v6422
    %v6942 = vunpack.c.l.b16 %v6423
    %v6943 = vunpack.c.l.b16 %v6424
    %v6944 = vunpack.c.l.b16 %v6425
    %v6945 = vunpack.c.l.b16 %v6426
    %v6946 = vunpack.c.l.b16 %v6427
    %v6947 = vunpack.c.l.b16 %v6428
    %v6948 = vunpack.c.l.b16 %v6429
    %v6949 = vunpack.c.l.b16 %v6430
    %v6950 = vunpack.c.l.b16 %v6431
    %v6951 = vunpack.c.l.b16 %v6432
    %v6952 = vunpack.c.l.b16 %v6433
    %v6953 = vunpack.c.l.b16 %v6434
    %v6954 = vunpack.c.l.b16 %v6435
    %v6955 = vunpack.c.l.b16 %v6436
    %v6956 = vunpack.c.l.b16 %v6437
    %v6957 = vunpack.c.l.b16 %v6438
    %v6958 = vunpack.c.l.b16 %v6439
    %v6959 = vunpack.c.l.b16 %v6440
    %v6960 = vunpack.c.l.b16 %v6441
    %v6961 = vunpack.c.l.b16 %v6442
    %v6962 = vunpack.c.l.b16 %v6443
    %v6963 = vunpack.c.l.b16 %v6444
    %v6964 = vunpack.c.l.b16 %v6445
    %v6965 = vunpack.c.l.b16 %v6446
    %v6966 = vunpack.c.l.b16 %v6447
    %v6967 = vunpack.c.l.b16 %v6448
    %v6968 = vunpack.c.l.b16 %v6449
    %v6969 = vunpack.c.l.b16 %v6450
    %v6970 = vunpack.c.l.b16 %v6451
    %v6971 = vunpack.c.l.b16 %v6452
    %v6972 = vunpack.c.l.b16 %v6453
    %v6973 = vunpack.c.l.b16 %v6454
    %v6974 = vunpack.c.l.b16 %v6455
    %v6975 = vunpack.c.l.b16 %v6456
    %v6976 = vunpack.c.l.b16 %v6457
    %v6977 = vunpack.c.l.b16 %v6458
    %v6978 = vunpack.c.l.b16 %v6459
    %v6979 = vunpack.c.l.b16 %v6460
    %v6980 = vunpack.c.l.b16 %v6461
    %v6981 = vunpack.c.l.b16 %v6462
    %v6982 = vunpack.c.l.b16 %v6463
    %v6983 = vunpack.c.l.b16 %v6464
    %v6984 = vunpack.c.l.b16 %v6465
    %v6985 = vunpack.c.l.b16 %v6466
    %v6986 = vunpack.c.l.b16 %v6467
    %v6987 = vunpack.c.l.b16 %v6468
    %v6988 = vunpack.c.l.b16 %v6469
    %v6989 = vunpack.c.l.b16 %v6470
    %v6990 = vunpack.c.l.b16 %v6471
    %v6991 = vunpack.c.l.b16 %v6472
    %v6992 = vunpack.c.l.b16 %v6473
    %v6993 = vunpack.c.l.b16 %v6474
    %v6994 = vunpack.c.l.b16 %v6475
    %v6995 = vunpack.c.l.b16 %v6476
    %v6996 = vunpack.c.l.b16 %v6477
    %v6997 = vunpack.c.l.b16 %v6478
    %v6998 = vunpack.c.l.b16 %v6479
    %v6999 = vunpack.c.l.b16 %v6480
    %v7000 = vunpack.c.l.b16 %v6481
    %v7001 = vunpack.c.l.b16 %v6482
    %v7002 = vunpack.c.l.b16 %v6483
    %v7003 = vunpack.c.l.b16 %v6484
    %v7004 = vunpack.c.l.b16 %v6485
    %v7005 = vunpack.c.l.b16 %v6486
    %v7006 = vunpack.c.l.b16 %v6487
    %v7007 = vunpack.c.l.b16 %v6488
    %v7008 = vunpack.c.l.b16 %v6489
    %v7009 = vunpack.c.l.b16 %v6490
    %v7010 = vunpack.c.l.b16 %v6491
    %v7011 = vunpack.c.l.b16 %v6492
    %v7012 = vunpack.c.l.b16 %v6493
    %v7013 = vunpack.c.l.b16 %v6494
    %v7014 = vunpack.c.l.b16 %v6495
    %v7015 = vunpack.c.l.b16 %v6496
    %v7016 = vunpack.c.l.b16 %v6497
    %v7017 = vunpack.c.l.b16 %v6498
    %v7018 = vunpack.c.l.b16 %v6499
    %v7019 = vunpack.c.l.b16 %v6500
    %v7020 = vunpack.c.l.b16 %v6501
    %v7021 = vunpack.c.l.b16 %v6502
    %v7022 = vunpack.c.l.b16 %v6503
    %v7023 = vunpack.c.l.b16 %v6504
    %v7024 = vunpack.c.l.b16 %v6505
    %v7025 = vunpack.c.l.b16 %v6506
    %v7026 = vunpack.c.l.b16 %v6507
    %v7027 = vunpack.c.l.b16 %v6508
    %v7028 = vunpack.c.l.b16 %v6509
    %v7029 = vunpack.c.l.b16 %v6510
    %v7030 = vunpack.c.l.b16 %v6511
    %v7031 = vunpack.c.l.b16 %v6512
    %v7032 = vunpack.c.l.b16 %v6513
    %v7033 = vunpack.c.l.b16 %v6514
    %v7034 = vunpack.c.l.b16 %v6515
    %v7035 = vunpack.c.l.b16 %v6516
    %v7036 = vunpack.c.l.b16 %v6517
    %v7037 = vunpack.c.l.b16 %v6518
    %v7038 = vunpack.c.l.b16 %v6519
    %v7039 = vunpack.c.l.b16 %v6520
    %v7040 = vunpack.c.l.b16 %v6521
    %v7041 = vunpack.c.l.b16 %v6522
    %v7042 = vunpack.c.l.b16 %v6523
    %v7043 = vunpack.c.l.b16 %v6524
    %v7044 = vunpack.c.l.b16 %v6525
    %v7045 = vunpack.c.l.b16 %v6526
    %v7046 = vunpack.c.l.b16 %v6527
    %v7047 = vunpack.c.l.b16 %v6528
    %v7048 = vunpack.c.l.b16 %v6529
    %v7049 = vunpack.c.l.b16 %v6530
    %v7050 = vunpack.c.l.b16 %v6531
    %v7051 = vunpack.c.l.b16 %v6532
    %v7052 = vunpack.c.l.b16 %v6533
    %v7053 = vunpack.c.l.b16 %v6534
    %v7054 = vunpack.c.l.b16 %v6535
    %v7055 = vunpack.c.l.b16 %v6536
    %v7056 = vunpack.c.l.b16 %v6537
    %v7057 = vunpack.c.l.b16 %v6538
    %v7058 = vunpack.c.l.b16 %v6539
    %v7059 = vunpack.c.l.b16 %v6540
    %v7060 = vunpack.c.l.b16 %v6541
    %v7061 = vunpack.c.l.b16 %v6542
    %v7062 = vunpack.c.l.b16 %v6543
    %v7063 = vunpack.c.l.b16 %v6544
    %v7064 = vunpack.c.l.b16 %v6545
    %v7065 = vunpack.c.l.b16 %v6546
    %v7066 = vunpack.c.l.b16 %v6547
    %v7067 = vunpack.c.l.b16 %v6548
    %v7068 = vunpack.c.l.b16 %v6549
    %v7069 = vunpack.c.l.b16 %v6550
    %v7070 = vunpack.c.l.b16 %v6551
    %v7071 = vunpack.c.l.b16 %v6552
    %v7072 = vunpack.c.l.b16 %v6553
    %v7073 = vunpack.c.l.b16 %v6554
    %v7074 = vunpack.c.l.b16 %v6555
    %v7075 = vunpack.c.l.b16 %v6556
    %v7076 = vunpack.c.l.b16 %v6557
    %v7077 = vunpack.c.l.b16 %v6558
    %v7078 = vunpack.c.l.b16 %v6559
    %v7079 = vunpack.c.l.b16 %v6560
    %v7080 = vunpack.c.l.b16 %v6561
    %v7081 = vunpack.c.l.b16 %v6562
    %v7082 = vunpack.c.l.b16 %v6563
    %v7083 = vunpack.c.l.b16 %v6564
    %v7084 = vunpack.c.l.b16 %v6565
    %v7085 = vunpack.c.l.b16 %v6566
    %v7086 = vunpack.c.l.b16 %v6567
    %v7087 = vunpack.c.l.b16 %v6568
    %v7088 = vunpack.c.l.b16 %v6569
    %v7089 = vunpack.c.l.b16 %v6570
    %v7090 = vunpack.c.l.b16 %v6571
    %v7091 = vunpack.c.l.b16 %v6572
    %v7092 = vunpack.c.l.b16 %v6573
    %v7093 = vunpack.c.l.b16 %v6574
    %v7094 = vunpack.c.l.b16 %v6575
    %v7095 = vunpack.c.l.b16 %v6576
    %v7096 = vunpack.c.l.b16 %v6577
    %v7097 = vunpack.c.l.b16 %v6578
    %v7098 = vunpack.c.l.b16 %v6579
    %v7099 = vunpack.c.l.b16 %v6580
    %v7100 = vunpack.c.l.b16 %v6581
    %v7101 = vunpack.c.l.b16 %v6582
    %v7102 = vunpack.c.l.b16 %v6583
    %v7103 = vunpack.c.l.b16 %v6584
    %v7104 = vunpack.c.l.b16 %v6585
    %v7105 = vunpack.c.l.b16 %v6586
    %v7106 = vunpack.c.l.b16 %v6587
    %v7107 = vunpack.c.l.b16 %v6588
    %v7108 = vunpack.c.l.b16 %v6589
    %v7109 = vunpack.c.l.b16 %v6590
    %v7110 = vunpack.c.l.b16 %v6591
    %v7111 = vunpack.c.l.b16 %v6592
    %v7112 = vunpack.c.l.b16 %v6593
    %v7113 = vunpack.c.l.b16 %v6594
    %v7114 = vunpack.c.l.b16 %v6595
    %v7115 = vunpack.c.l.b16 %v6596
    %v7116 = vunpack.c.l.b16 %v6597
    %v7117 = vunpack.c.l.b16 %v6598
    %v7118 = vunpack.c.l.b16 %v6599
    %v7119 = vunpack.c.l.b16 %v6600
    %v7120 = vpack.c.b16 %v6865, %v6864
    %v7121 = vpack.c.b16 %v6867, %v6866
    %v7122 = vpack.c.b16 %v6869, %v6868
    %v7123 = vpack.c.b16 %v6871, %v6870
    %v7124 = vpack.c.b16 %v6873, %v6872
    %v7125 = vpack.c.b16 %v6875, %v6874
    %v7126 = vpack.c.b16 %v6877, %v6876
    %v7127 = vpack.c.b16 %v6879, %v6878
    %v7128 = vpack.c.b16 %v6881, %v6880
    %v7129 = vpack.c.b16 %v6883, %v6882
    %v7130 = vpack.c.b16 %v6885, %v6884
    %v7131 = vpack.c.b16 %v6887, %v6886
    %v7132 = vpack.c.b16 %v6889, %v6888
    %v7133 = vpack.c.b16 %v6891, %v6890
    %v7134 = vpack.c.b16 %v6893, %v6892
    %v7135 = vpack.c.b16 %v6895, %v6894
    %v7136 = vpack.c.b16 %v6897, %v6896
    %v7137 = vpack.c.b16 %v6899, %v6898
    %v7138 = vpack.c.b16 %v6901, %v6900
    %v7139 = vpack.c.b16 %v6903, %v6902
    %v7140 = vpack.c.b16 %v6905, %v6904
    %v7141 = vpack.c.b16 %v6907, %v6906
    %v7142 = vpack.c.b16 %v6909, %v6908
    %v7143 = vpack.c.b16 %v6911, %v6910
    %v7144 = vpack.c.b16 %v6913, %v6912
    %v7145 = vpack.c.b16 %v6915, %v6914
    %v7146 = vpack.c.b16 %v6917, %v6916
    %v7147 = vpack.c.b16 %v6919, %v6918
    %v7148 = vpack.c.b16 %v6921, %v6920
    %v7149 = vpack.c.b16 %v6923, %v6922
    %v7150 = vpack.c.b16 %v6925, %v6924
    %v7151 = vpack.c.b16 %v6927, %v6926
    %v7152 = vpack.c.b16 %v6929, %v6928
    %v7153 = vpack.c.b16 %v6931, %v6930
    %v7154 = vpack.c.b16 %v6933, %v6932
    %v7155 = vpack.c.b16 %v6935, %v6934
    %v7156 = vpack.c.b16 %v6937, %v6936
    %v7157 = vpack.c.b16 %v6939, %v6938
    %v7158 = vpack.c.b16 %v6941, %v6940
    %v7159 = vpack.c.b16 %v6943, %v6942
    %v7160 = vpack.c.b16 %v6945, %v6944
    %v7161 = vpack.c.b16 %v6947, %v6946
    %v7162 = vpack.c.b16 %v6949, %v6948
    %v7163 = vpack.c.b16 %v6951, %v6950
    %v7164 = vpack.c.b16 %v6953, %v6952
    %v7165 = vpack.c.b16 %v6955, %v6954
    %v7166 = vpack.c.b16 %v6957, %v6956
    %v7167 = vpack.c.b16 %v6959, %v6958
    %v7168 = vpack.c.b16 %v6961, %v6960
    %v7169 = vpack.c.b16 %v6963, %v6962
    %v7170 = vpack.c.b16 %v6965, %v6964
    %v7171 = vpack.c.b16 %v6967, %v6966
    %v7172 = vpack.c.b16 %v6969, %v6968
    %v7173 = vpack.c.b16 %v6971, %v6970
    %v7174 = vpack.c.b16 %v6973, %v6972
    %v7175 = vpack.c.b16 %v6975, %v6974
    %v7176 = vpack.c.b16 %v6977, %v6976
    %v7177 = vpack.c.b16 %v6979, %v6978
    %v7178 = vpack.c.b16 %v6981, %v6980
    %v7179 = vpack.c.b16 %v6983, %v6982
    %v7180 = vpack.c.b16 %v6985, %v6984
    %v7181 = vpack.c.b16 %v6987, %v6986
    %v7182 = vpack.c.b16 %v6989, %v6988
    %v7183 = vpack.c.b16 %v6991, %v6990
    %v7184 = vpack.c.b16 %v6993, %v6992
    %v7185 = vpack.c.b16 %v6995, %v6994
    %v7186 = vpack.c.b16 %v6997, %v6996
    %v7187 = vpack.c.b16 %v6999, %v6998
    %v7188 = vpack.c.b16 %v7001, %v7000
    %v7189 = vpack.c.b16 %v7003, %v7002
    %v7190 = vpack.c.b16 %v7005, %v7004
    %v7191 = vpack.c.b16 %v7007, %v7006
    %v7192 = vpack.c.b16 %v7009, %v7008
    %v7193 = vpack.c.b16 %v7011, %v7010
    %v7194 = vpack.c.b16 %v7013, %v7012
    %v7195 = vpack.c.b16 %v7015, %v7014
    %v7196 = vpack.c.b16 %v7017, %v7016
    %v7197 = vpack.c.b16 %v7019, %v7018
    %v7198 = vpack.c.b16 %v7021, %v7020
    %v7199 = vpack.c.b16 %v7023, %v7022
    %v7200 = vpack.c.b16 %v7025, %v7024
    %v7201 = vpack.c.b16 %v7027, %v7026
    %v7202 = vpack.c.b16 %v7029, %v7028
    %v7203 = vpack.c.b16 %v7031, %v7030
    %v7204 = vpack.c.b16 %v7033, %v7032
    %v7205 = vpack.c.b16 %v7035, %v7034
    %v7206 = vpack.c.b16 %v7037, %v7036
    %v7207 = vpack.c.b16 %v7039, %v7038
    %v7208 = vpack.c.b16 %v7041, %v7040
    %v7209 = vpack.c.b16 %v7043, %v7042
    %v7210 = vpack.c.b16 %v7045, %v7044
    %v7211 = vpack.c.b16 %v7047, %v7046
    %v7212 = vpack.c.b16 %v7049, %v7048
    %v7213 = vpack.c.b16 %v7051, %v7050
    %v7214 = vpack.c.b16 %v7053, %v7052
    %v7215 = vpack.c.b16 %v7055, %v7054
    %v7216 = vpack.c.b16 %v7057, %v7056
    %v7217 = vpack.c.b16 %v7059, %v7058
    %v7218 = vpack.c.b16 %v7061, %v7060
    %v7219 = vpack.c.b16 %v7063, %v7062
    %v7220 = vpack.c.b16 %v7065, %v7064
    %v7221 = vpack.c.b16 %v7067, %v7066
    %v7222 = vpack.c.b16 %v7069, %v7068
    %v7223 = vpack.c.b16 %v7071, %v7070
    %v7224 = vpack.c.b16 %v7073, %v7072
    %v7225 = vpack.c.b16 %v7075, %v7074
    %v7226 = vpack.c.b16 %v7077, %v7076
    %v7227 = vpack.c.b16 %v7079, %v7078
    %v7228 = vpack.c.b16 %v7081, %v7080
    %v7229 = vpack.c.b16 %v7083, %v7082
    %v7230 = vpack.c.b16 %v7085, %v7084
    %v7231 = vpack.c.b16 %v7087, %v7086
    %v7232 = vpack.c.b16 %v7089, %v7088
    %v7233 = vpack.c.b16 %v7091, %v7090
    %v7234 = vpack.c.b16 %v7093, %v7092
    %v7235 = vpack.c.b16 %v7095, %v7094
    %v7236 = vpack.c.b16 %v7097, %v7096
    %v7237 = vpack.c.b16 %v7099, %v7098
    %v7238 = vpack.c.b16 %v7101, %v7100
    %v7239 = vpack.c.b16 %v7103, %v7102
    %v7240 = vpack.c.b16 %v7105, %v7104
    %v7241 = vpack.c.b16 %v7107, %v7106
    %v7242 = vpack.c.b16 %v7109, %v7108
    %v7243 = vpack.c.b16 %v7111, %v7110
    %v7244 = vpack.c.b16 %v7113, %v7112
    %v7245 = vpack.c.b16 %v7115, %v7114
    %v7246 = vpack.c.b16 %v7117, %v7116
    %v7247 = vpack.c.b16 %v7119, %v7118
    %7376 = vmatprep.subr.bf16.mxu0 0
    %7377 = vmatpush1.bf16.msra.mxu0 %v7120
    %7378 = vmatprep.subr.bf16.mxu0 0
    %7379 = vmatpush1.bf16.msra.mxu0 %v7121
    %7380 = vmatprep.subr.bf16.mxu0 0
    %7381 = vmatpush1.bf16.msra.mxu0 %v7122
    %7382 = vmatprep.subr.bf16.mxu0 0
    %7383 = vmatpush1.bf16.msra.mxu0 %v7123
    %7384 = vmatprep.subr.bf16.mxu0 0
    %7385 = vmatpush1.bf16.msra.mxu0 %v7124
    %7386 = vmatprep.subr.bf16.mxu0 0
    %7387 = vmatpush1.bf16.msra.mxu0 %v7125
    %7388 = vmatprep.subr.bf16.mxu0 0
    %7389 = vmatpush1.bf16.msra.mxu0 %v7126
    %7390 = vmatprep.subr.bf16.mxu0 0
    %7391 = vmatpush1.bf16.msra.mxu0 %v7127
    %7392 = vmatprep.subr.bf16.mxu0 0
    %7393 = vmatpush1.bf16.msra.mxu0 %v7128
    %7394 = vmatprep.subr.bf16.mxu0 0
    %7395 = vmatpush1.bf16.msra.mxu0 %v7129
    %7396 = vmatprep.subr.bf16.mxu0 0
    %7397 = vmatpush1.bf16.msra.mxu0 %v7130
    %7398 = vmatprep.subr.bf16.mxu0 0
    %7399 = vmatpush1.bf16.msra.mxu0 %v7131
    %7400 = vmatprep.subr.bf16.mxu0 0
    %7401 = vmatpush1.bf16.msra.mxu0 %v7132
    %7402 = vmatprep.subr.bf16.mxu0 0
    %7403 = vmatpush1.bf16.msra.mxu0 %v7133
    %7404 = vmatprep.subr.bf16.mxu0 0
    %7405 = vmatpush1.bf16.msra.mxu0 %v7134
    %7406 = vmatprep.subr.bf16.mxu0 0
    %7407 = vmatpush1.bf16.msra.mxu0 %v7135
    %7408 = vmatprep.mubr.bf16.mxu0 %v6330
    %7409 = vmatmul.mubr.bf16.gmra.mrb[0].mxu0 %v6329
    %v7410 = vpop.f32.mrb[0].mxu0
    %v7411 = vadd.f32 %v6606, %v7410
    %v7412 = vpop.f32.mrb[0].mxu0
    %v7413 = vpop.f32.mrb[0].mxu0
    %v7414 = vpop.f32.mrb[0].mxu0
    %7415 = vdwg.mxu0
    %7416 = vmatprep.subr.bf16.mxu0 0
    %7417 = vmatpush1.bf16.msra.mxu0 %v7136
    %7418 = vmatprep.subr.bf16.mxu0 0
    %7419 = vmatpush1.bf16.msra.mxu0 %v7137
    %7420 = vmatprep.subr.bf16.mxu0 0
    %7421 = vmatpush1.bf16.msra.mxu0 %v7138
    %7422 = vmatprep.subr.bf16.mxu0 0
    %7423 = vmatpush1.bf16.msra.mxu0 %v7139
    %7424 = vmatprep.subr.bf16.mxu0 0
    %7425 = vmatpush1.bf16.msra.mxu0 %v7140
    %7426 = vmatprep.subr.bf16.mxu0 0
    %7427 = vmatpush1.bf16.msra.mxu0 %v7141
    %7428 = vmatprep.subr.bf16.mxu0 0
    %7429 = vmatpush1.bf16.msra.mxu0 %v7142
    %7430 = vmatprep.subr.bf16.mxu0 0
    %7431 = vmatpush1.bf16.msra.mxu0 %v7143
    %7432 = vmatprep.subr.bf16.mxu0 0
    %7433 = vmatpush1.bf16.msra.mxu0 %v7144
    %7434 = vmatprep.subr.bf16.mxu0 0
    %7435 = vmatpush1.bf16.msra.mxu0 %v7145
    %7436 = vmatprep.subr.bf16.mxu0 0
    %7437 = vmatpush1.bf16.msra.mxu0 %v7146
    %7438 = vmatprep.subr.bf16.mxu0 0
    %7439 = vmatpush1.bf16.msra.mxu0 %v7147
    %7440 = vmatprep.subr.bf16.mxu0 0
    %7441 = vmatpush1.bf16.msra.mxu0 %v7148
    %7442 = vmatprep.subr.bf16.mxu0 0
    %7443 = vmatpush1.bf16.msra.mxu0 %v7149
    %7444 = vmatprep.subr.bf16.mxu0 0
    %7445 = vmatpush1.bf16.msra.mxu0 %v7150
    %7446 = vmatprep.subr.bf16.mxu0 0
    %7447 = vmatpush1.bf16.msra.mxu0 %v7151
    %7448 = vmatprep.mubr.bf16.mxu0 %v6332
    %7449 = vmatmul.mubr.bf16.gmra.mrb[0].mxu0 %v6331
    %v7450 = vpop.f32.mrb[0].mxu0
    %v7451 = vadd.f32 %v7411, %v7450
    %v7452 = vpop.f32.mrb[0].mxu0
    %v7453 = vpop.f32.mrb[0].mxu0
    %v7454 = vpop.f32.mrb[0].mxu0
    %7455 = vdwg.mxu0
    %7456 = vmatprep.subr.bf16.mxu0 0
    %7457 = vmatpush1.bf16.msra.mxu0 %v7152
    %7458 = vmatprep.subr.bf16.mxu0 0
    %7459 = vmatpush1.bf16.msra.mxu0 %v7153
    %7460 = vmatprep.subr.bf16.mxu0 0
    %7461 = vmatpush1.bf16.msra.mxu0 %v7154
    %7462 = vmatprep.subr.bf16.mxu0 0
    %7463 = vmatpush1.bf16.msra.mxu0 %v7155
    %7464 = vmatprep.subr.bf16.mxu0 0
    %7465 = vmatpush1.bf16.msra.mxu0 %v7156
    %7466 = vmatprep.subr.bf16.mxu0 0
    %7467 = vmatpush1.bf16.msra.mxu0 %v7157
    %7468 = vmatprep.subr.bf16.mxu0 0
    %7469 = vmatpush1.bf16.msra.mxu0 %v7158
    %7470 = vmatprep.subr.bf16.mxu0 0
    %7471 = vmatpush1.bf16.msra.mxu0 %v7159
    %7472 = vmatprep.subr.bf16.mxu0 0
    %7473 = vmatpush1.bf16.msra.mxu0 %v7160
    %7474 = vmatprep.subr.bf16.mxu0 0
    %7475 = vmatpush1.bf16.msra.mxu0 %v7161
    %7476 = vmatprep.subr.bf16.mxu0 0
    %7477 = vmatpush1.bf16.msra.mxu0 %v7162
    %7478 = vmatprep.subr.bf16.mxu0 0
    %7479 = vmatpush1.bf16.msra.mxu0 %v7163
    %7480 = vmatprep.subr.bf16.mxu0 0
    %7481 = vmatpush1.bf16.msra.mxu0 %v7164
    %7482 = vmatprep.subr.bf16.mxu0 0
    %7483 = vmatpush1.bf16.msra.mxu0 %v7165
    %7484 = vmatprep.subr.bf16.mxu0 0
    %7485 = vmatpush1.bf16.msra.mxu0 %v7166
    %7486 = vmatprep.subr.bf16.mxu0 0
    %7487 = vmatpush1.bf16.msra.mxu0 %v7167
    %7488 = vmatprep.mubr.bf16.mxu0 %v6334
    %7489 = vmatmul.mubr.bf16.gmra.mrb[0].mxu0 %v6333
    %v7490 = vpop.f32.mrb[0].mxu0
    %v7491 = vadd.f32 %v7451, %v7490
    %v7492 = vpop.f32.mrb[0].mxu0
    %v7493 = vpop.f32.mrb[0].mxu0
    %v7494 = vpop.f32.mrb[0].mxu0
    %7495 = vdwg.mxu0
    %7496 = vmatprep.subr.bf16.mxu0 0
    %7497 = vmatpush1.bf16.msra.mxu0 %v7168
    %7498 = vmatprep.subr.bf16.mxu0 0
    %7499 = vmatpush1.bf16.msra.mxu0 %v7169
    %7500 = vmatprep.subr.bf16.mxu0 0
    %7501 = vmatpush1.bf16.msra.mxu0 %v7170
    %7502 = vmatprep.subr.bf16.mxu0 0
    %7503 = vmatpush1.bf16.msra.mxu0 %v7171
    %7504 = vmatprep.subr.bf16.mxu0 0
    %7505 = vmatpush1.bf16.msra.mxu0 %v7172
    %7506 = vmatprep.subr.bf16.mxu0 0
    %7507 = vmatpush1.bf16.msra.mxu0 %v7173
    %7508 = vmatprep.subr.bf16.mxu0 0
    %7509 = vmatpush1.bf16.msra.mxu0 %v7174
    %7510 = vmatprep.subr.bf16.mxu0 0
    %7511 = vmatpush1.bf16.msra.mxu0 %v7175
    %7512 = vmatprep.subr.bf16.mxu0 0
    %7513 = vmatpush1.bf16.msra.mxu0 %v7176
    %7514 = vmatprep.subr.bf16.mxu0 0
    %7515 = vmatpush1.bf16.msra.mxu0 %v7177
    %7516 = vmatprep.subr.bf16.mxu0 0
    %7517 = vmatpush1.bf16.msra.mxu0 %v7178
    %7518 = vmatprep.subr.bf16.mxu0 0
    %7519 = vmatpush1.bf16.msra.mxu0 %v7179
    %7520 = vmatprep.subr.bf16.mxu0 0
    %7521 = vmatpush1.bf16.msra.mxu0 %v7180
    %7522 = vmatprep.subr.bf16.mxu0 0
    %7523 = vmatpush1.bf16.msra.mxu0 %v7181
    %7524 = vmatprep.subr.bf16.mxu0 0
    %7525 = vmatpush1.bf16.msra.mxu0 %v7182
    %7526 = vmatprep.subr.bf16.mxu0 0
    %7527 = vmatpush1.bf16.msra.mxu0 %v7183
    %7528 = vmatprep.mubr.bf16.mxu0 %v6336
    %7529 = vmatmul.mubr.bf16.gmra.mrb[0].mxu0 %v6335
    %v7530 = vpop.f32.mrb[0].mxu0
    %v7531 = vadd.f32 %v7491, %v7530
    %v7532 = vpop.f32.mrb[0].mxu0
    %v7533 = vpop.f32.mrb[0].mxu0
    %v7534 = vpop.f32.mrb[0].mxu0
    %7535 = vdwg.mxu0
    %7536 = vmatprep.subr.bf16.mxu0 0
    %7537 = vmatpush1.bf16.msra.mxu0 %v7184
    %7538 = vmatprep.subr.bf16.mxu0 0
    %7539 = vmatpush1.bf16.msra.mxu0 %v7185
    %7540 = vmatprep.subr.bf16.mxu0 0
    %7541 = vmatpush1.bf16.msra.mxu0 %v7186
    %7542 = vmatprep.subr.bf16.mxu0 0
    %7543 = vmatpush1.bf16.msra.mxu0 %v7187
    %7544 = vmatprep.subr.bf16.mxu0 0
    %7545 = vmatpush1.bf16.msra.mxu0 %v7188
    %7546 = vmatprep.subr.bf16.mxu0 0
    %7547 = vmatpush1.bf16.msra.mxu0 %v7189
    %7548 = vmatprep.subr.bf16.mxu0 0
    %7549 = vmatpush1.bf16.msra.mxu0 %v7190
    %7550 = vmatprep.subr.bf16.mxu0 0
    %7551 = vmatpush1.bf16.msra.mxu0 %v7191
    %7552 = vmatprep.subr.bf16.mxu0 0
    %7553 = vmatpush1.bf16.msra.mxu0 %v7192
    %7554 = vmatprep.subr.bf16.mxu0 0
    %7555 = vmatpush1.bf16.msra.mxu0 %v7193
    %7556 = vmatprep.subr.bf16.mxu0 0
    %7557 = vmatpush1.bf16.msra.mxu0 %v7194
    %7558 = vmatprep.subr.bf16.mxu0 0
    %7559 = vmatpush1.bf16.msra.mxu0 %v7195
    %7560 = vmatprep.subr.bf16.mxu0 0
    %7561 = vmatpush1.bf16.msra.mxu0 %v7196
    %7562 = vmatprep.subr.bf16.mxu0 0
    %7563 = vmatpush1.bf16.msra.mxu0 %v7197
    %7564 = vmatprep.subr.bf16.mxu0 0
    %7565 = vmatpush1.bf16.msra.mxu0 %v7198
    %7566 = vmatprep.subr.bf16.mxu0 0
    %7567 = vmatpush1.bf16.msra.mxu0 %v7199
    %7568 = vmatprep.mubr.bf16.mxu0 %v6338
    %7569 = vmatmul.mubr.bf16.gmra.mrb[0].mxu0 %v6337
    %v7570 = vpop.f32.mrb[0].mxu0
    %v7571 = vadd.f32 %v7531, %v7570
    %v7572 = vpop.f32.mrb[0].mxu0
    %v7573 = vpop.f32.mrb[0].mxu0
    %v7574 = vpop.f32.mrb[0].mxu0
    %7575 = vdwg.mxu0
    %7576 = vmatprep.subr.bf16.mxu0 0
    %7577 = vmatpush1.bf16.msra.mxu0 %v7200
    %7578 = vmatprep.subr.bf16.mxu0 0
    %7579 = vmatpush1.bf16.msra.mxu0 %v7201
    %7580 = vmatprep.subr.bf16.mxu0 0
    %7581 = vmatpush1.bf16.msra.mxu0 %v7202
    %7582 = vmatprep.subr.bf16.mxu0 0
    %7583 = vmatpush1.bf16.msra.mxu0 %v7203
    %7584 = vmatprep.subr.bf16.mxu0 0
    %7585 = vmatpush1.bf16.msra.mxu0 %v7204
    %7586 = vmatprep.subr.bf16.mxu0 0
    %7587 = vmatpush1.bf16.msra.mxu0 %v7205
    %7588 = vmatprep.subr.bf16.mxu0 0
    %7589 = vmatpush1.bf16.msra.mxu0 %v7206
    %7590 = vmatprep.subr.bf16.mxu0 0
    %7591 = vmatpush1.bf16.msra.mxu0 %v7207
    %7592 = vmatprep.subr.bf16.mxu0 0
    %7593 = vmatpush1.bf16.msra.mxu0 %v7208
    %7594 = vmatprep.subr.bf16.mxu0 0
    %7595 = vmatpush1.bf16.msra.mxu0 %v7209
    %7596 = vmatprep.subr.bf16.mxu0 0
    %7597 = vmatpush1.bf16.msra.mxu0 %v7210
    %7598 = vmatprep.subr.bf16.mxu0 0
    %7599 = vmatpush1.bf16.msra.mxu0 %v7211
    %7600 = vmatprep.subr.bf16.mxu0 0
    %7601 = vmatpush1.bf16.msra.mxu0 %v7212
    %7602 = vmatprep.subr.bf16.mxu0 0
    %7603 = vmatpush1.bf16.msra.mxu0 %v7213
    %7604 = vmatprep.subr.bf16.mxu0 0
    %7605 = vmatpush1.bf16.msra.mxu0 %v7214
    %7606 = vmatprep.subr.bf16.mxu0 0
    %7607 = vmatpush1.bf16.msra.mxu0 %v7215
    %7608 = vmatprep.mubr.bf16.mxu0 %v6340
    %7609 = vmatmul.mubr.bf16.gmra.mrb[0].mxu0 %v6339
    %v7610 = vpop.f32.mrb[0].mxu0
    %v7611 = vadd.f32 %v7571, %v7610
    %v7612 = vpop.f32.mrb[0].mxu0
    %v7613 = vpop.f32.mrb[0].mxu0
    %v7614 = vpop.f32.mrb[0].mxu0
    %7615 = vdwg.mxu0
    %7616 = vmatprep.subr.bf16.mxu0 0
    %7617 = vmatpush1.bf16.msra.mxu0 %v7216
    %7618 = vmatprep.subr.bf16.mxu0 0
    %7619 = vmatpush1.bf16.msra.mxu0 %v7217
    %7620 = vmatprep.subr.bf16.mxu0 0
    %7621 = vmatpush1.bf16.msra.mxu0 %v7218
    %7622 = vmatprep.subr.bf16.mxu0 0
    %7623 = vmatpush1.bf16.msra.mxu0 %v7219
    %7624 = vmatprep.subr.bf16.mxu0 0
    %7625 = vmatpush1.bf16.msra.mxu0 %v7220
    %7626 = vmatprep.subr.bf16.mxu0 0
    %7627 = vmatpush1.bf16.msra.mxu0 %v7221
    %7628 = vmatprep.subr.bf16.mxu0 0
    %7629 = vmatpush1.bf16.msra.mxu0 %v7222
    %7630 = vmatprep.subr.bf16.mxu0 0
    %7631 = vmatpush1.bf16.msra.mxu0 %v7223
    %7632 = vmatprep.subr.bf16.mxu0 0
    %7633 = vmatpush1.bf16.msra.mxu0 %v7224
    %7634 = vmatprep.subr.bf16.mxu0 0
    %7635 = vmatpush1.bf16.msra.mxu0 %v7225
    %7636 = vmatprep.subr.bf16.mxu0 0
    %7637 = vmatpush1.bf16.msra.mxu0 %v7226
    %7638 = vmatprep.subr.bf16.mxu0 0
    %7639 = vmatpush1.bf16.msra.mxu0 %v7227
    %7640 = vmatprep.subr.bf16.mxu0 0
    %7641 = vmatpush1.bf16.msra.mxu0 %v7228
    %7642 = vmatprep.subr.bf16.mxu0 0
    %7643 = vmatpush1.bf16.msra.mxu0 %v7229
    %7644 = vmatprep.subr.bf16.mxu0 0
    %7645 = vmatpush1.bf16.msra.mxu0 %v7230
    %7646 = vmatprep.subr.bf16.mxu0 0
    %7647 = vmatpush1.bf16.msra.mxu0 %v7231
    %7648 = vmatprep.mubr.bf16.mxu0 %v6342
    %7649 = vmatmul.mubr.bf16.gmra.mrb[0].mxu0 %v6341
    %v7650 = vpop.f32.mrb[0].mxu0
    %v7651 = vadd.f32 %v7611, %v7650
    %v7652 = vpop.f32.mrb[0].mxu0
    %v7653 = vpop.f32.mrb[0].mxu0
    %v7654 = vpop.f32.mrb[0].mxu0
    %7655 = vdwg.mxu0
    %7656 = vmatprep.subr.bf16.mxu0 0
    %7657 = vmatpush1.bf16.msra.mxu0 %v7232
    %7658 = vmatprep.subr.bf16.mxu0 0
    %7659 = vmatpush1.bf16.msra.mxu0 %v7233
    %7660 = vmatprep.subr.bf16.mxu0 0
    %7661 = vmatpush1.bf16.msra.mxu0 %v7234
    %7662 = vmatprep.subr.bf16.mxu0 0
    %7663 = vmatpush1.bf16.msra.mxu0 %v7235
    %7664 = vmatprep.subr.bf16.mxu0 0
    %7665 = vmatpush1.bf16.msra.mxu0 %v7236
    %7666 = vmatprep.subr.bf16.mxu0 0
    %7667 = vmatpush1.bf16.msra.mxu0 %v7237
    %7668 = vmatprep.subr.bf16.mxu0 0
    %7669 = vmatpush1.bf16.msra.mxu0 %v7238
    %7670 = vmatprep.subr.bf16.mxu0 0
    %7671 = vmatpush1.bf16.msra.mxu0 %v7239
    %7672 = vmatprep.subr.bf16.mxu0 0
    %7673 = vmatpush1.bf16.msra.mxu0 %v7240
    %7674 = vmatprep.subr.bf16.mxu0 0
    %7675 = vmatpush1.bf16.msra.mxu0 %v7241
    %7676 = vmatprep.subr.bf16.mxu0 0
    %7677 = vmatpush1.bf16.msra.mxu0 %v7242
    %7678 = vmatprep.subr.bf16.mxu0 0
    %7679 = vmatpush1.bf16.msra.mxu0 %v7243
    %7680 = vmatprep.subr.bf16.mxu0 0
    %7681 = vmatpush1.bf16.msra.mxu0 %v7244
    %7682 = vmatprep.subr.bf16.mxu0 0
    %7683 = vmatpush1.bf16.msra.mxu0 %v7245
    %7684 = vmatprep.subr.bf16.mxu0 0
    %7685 = vmatpush1.bf16.msra.mxu0 %v7246
    %7686 = vmatprep.subr.bf16.mxu0 0
    %7687 = vmatpush1.bf16.msra.mxu0 %v7247
    %7688 = vmatprep.mubr.bf16.mxu0 %v6344
    %7689 = vmatmul.mubr.bf16.gmra.mrb[0].mxu0 %v6343
    %v7690 = vpop.f32.mrb[0].mxu0
    %v7691 = vadd.f32 %v7651, %v7690
    %v7692 = vpop.f32.mrb[0].mxu0
    %v7693 = vpop.f32.mrb[0].mxu0
    %v7694 = vpop.f32.mrb[0].mxu0
    %7695 = vdwg.mxu0
    %v7696 = vtanh.pop %v7691
    %7697 = vst [vmem:[#allocation27] sm:$0xff] %v7696
    // Predicated region
    $region114: #{tpu_custom_call.1} parent=1 // pred_check
      _
    $region115: #{tpu_custom_call.1} parent=1 // pred_check_branch
      %7699 = sbr.rel (0) target = $region117
    $region116: #{tpu_custom_call.1} parent=1 // pred_region
      %s7701 = ssub.s32 128, 128
      %7702 = vsyncadd [#allocation6], %s7701
      %s7704 = sshll.u32 [#allocation27], 4
      %s7705 = int_to_ptr.vmem [resolvable:$true] %s7704
      %7707 = dma.vmem_to_hbm [thread:$0]  %s7705, 128, %s15, [#allocation6]
    $region117: #{tpu_custom_call.1} parent=1 // pred_fallthru
      _
    // Predicated region
    $region118: #{tpu_custom_call.1} parent=1 // pred_check
      _
    $region119: #{tpu_custom_call.1} parent=1 // pred_check_branch
      %7709 = sbr.rel (0) target = $region121
    $region120: #{tpu_custom_call.1} parent=1 // pred_region
      %7710 = dma.done [#allocation6], 128
    $region121: #{tpu_custom_call.1} parent=1 // pred_fallthru
      _
    %7711 = vsyncpa [#allocation5], 1
    %7712 = vsyncpa [#allocation8], 1
    %7713 = vsyncpa [#allocation11], 1
    %7714 = vsyncpa [#allocation14], 1
    %7715 = vsyncpa [#allocation17], 1
    %7716 = vsyncpa [#allocation20], 1
    %7717 = vsyncpa [#allocation23], 1
    %7718 = vsyncpa [#allocation26], 1
    %7719 = vsyncpa [#allocation6], 1
  %7720 = vsyncmov [#allocation3]
  %s7721 = vpop.sfrf %7720
  %p7722 = scmp.eq.s32.totalorder %s7721, 0
  %p7723 = pneg %p7722
  %7725 = shalt.err (%p7723)
  %s7726 = scalar_lea.sflag [#allocation3], 1
  %7727 = vsyncmov %s7726
  %s7728 = vpop.sfrf %7727
  %p7729 = scmp.eq.s32.totalorder %s7728, 0
  %p7730 = pneg %p7729
  %7732 = shalt.err (%p7730)

</llo_original>
